<compile_context>
chip_gen: v7x
topology: tpu7x:2x2x1
jax: 0.10.0
libtpu: 0.0.40
codegen_flags: <defaults>
</compile_context>

<pallas_src>
import functools
import math

import jax
import jax.numpy as jnp
from jax.experimental import pallas as pl
from jax.experimental.pallas import tpu as pltpu

# ----- small BERT config -----
VOCAB_SIZE = 50
MAX_SEQ_LENGTH = 16
TYPE_VOCAB_SIZE = 2
HIDDEN_SIZE = 32
NUM_HEADS = 4
INTERMEDIATE_SIZE = 64
NUM_LAYERS = 2
LN_EPS = 1e-5  # nn.LayerNorm default eps


def bert_stack_kernel(x_ref, bias_ref,
                      wqkv_ref, bqkv_ref, wo_ref, bo_ref,
                      w1_ref, b1_ref, w2_ref, b2_ref,
                      ln_g_ref, ln_b_ref,
                      out_ref, *, num_layers, num_heads, d_k, batch, seq_len):
    """Full BERT encoder stack on (B, L, H) activations, all VMEM-resident."""
    B, L, nh, dk = batch, seq_len, num_heads, d_k
    H = nh * dk
    n = B * nh

    def layer_norm(v, g, b):
        # the reference Encoder reuses the SAME LayerNorm module twice per
        # layer, so both normalizations share gamma/beta.
        mu = jnp.mean(v, axis=-1, keepdims=True)
        var = jnp.mean((v - mu) ** 2, axis=-1, keepdims=True)
        return (v - mu) * jax.lax.rsqrt(var + LN_EPS) * g + b

    def gelu(v):  # exact (erf-based) GELU — matches nn.GELU() default numerics
        return 0.5 * v * (1.0 + jax.lax.erf(v * (1.0 / math.sqrt(2.0))))

    x = x_ref[...]            # (B, L, H) f32
    bias = bias_ref[...]      # (n, L, L) additive mask, pre-broadcast, reused by all layers

    for l in range(num_layers):          # static loop over layers (weights resident)
        ln_g = ln_g_ref[l]               # (1, H)
        ln_b = ln_b_ref[l]

        # ---- fused Q|K|V projection, head-major, batched over n = B*num_heads ----
        # replicate activations over heads (leading/major-dim broadcast only).
        x_rep = jnp.broadcast_to(x[:, None], (B, nh, L, H)).reshape(n, L, H)
        qkv = jnp.einsum('nlc,ncd->nld', x_rep, wqkv_ref[l],
                         preferred_element_type=jnp.float32) + bqkv_ref[l]   # (n, L, 3dk)
        q = qkv[..., 0 * dk:1 * dk]      # 1/sqrt(d_k) already folded into W_q, b_q
        k = qkv[..., 1 * dk:2 * dk]
        v = qkv[..., 2 * dk:3 * dk]

        # ---- attention, one shot over all (batch, head) pairs ----
        s = jnp.einsum('nqd,nkd->nqk', q, k,
                       preferred_element_type=jnp.float32) + bias            # (n, L, L)
        # max-subtraction kept for fidelity with torch.softmax (one batched reduce).
        s = s - jnp.max(s, axis=-1, keepdims=True)
        e = jnp.exp(s)
        p = e / jnp.sum(e, axis=-1, keepdims=True)     # exact division (fidelity)
        # TODO(synk): attention dropout treated as identity (inference mode).
        ctx = jnp.einsum('nqk,nkd->nqd', p, v,
                         preferred_element_type=jnp.float32)                 # (n, L, dk)

        # ---- per-head output projection + head reduction (folds the concat away) ----
        yh = jnp.einsum('nqd,ndo->nqo', ctx, wo_ref[l],
                        preferred_element_type=jnp.float32)                  # (n, L, H)
        yh4 = yh.reshape(B, nh, L, H)                  # leading-dim split only
        attn = yh4[:, 0]
        for hh in range(1, nh):
            attn = attn + yh4[:, hh]                   # num_heads-1 vector adds
        attn = attn + bo_ref[l]                        # (B, L, H)
        # TODO(synk): hidden dropout treated as identity (inference mode).

        h1 = layer_norm(x + attn, ln_g, ln_b)

        # ---- feed-forward (batched over B against batch-tiled weights) ----
        t = gelu(jnp.einsum('blh,bhi->bli', h1, w1_ref[l],
                            preferred_element_type=jnp.float32) + b1_ref[l])
        ffn = jnp.einsum('bli,bio->blo', t, w2_ref[l],
                         preferred_element_type=jnp.float32) + b2_ref[l]
        x = layer_norm(h1 + ffn, ln_g, ln_b)

    out_ref[...] = x


def prepare_kernel_inputs(params, mask, batch):
    """One-time (wrapper-side) weight prep: head-split, scale-folded, batch-tiled."""
    H, I, NL, nh = HIDDEN_SIZE, INTERMEDIATE_SIZE, NUM_LAYERS, NUM_HEADS
    dk = H // nh
    B = batch
    n = B * nh
    L = mask.shape[1]
    scale = 1.0 / math.sqrt(dk)

    def split_out_heads(w):                         # (NL,H,H) -> (NL,nh,H,dk)
        return w.reshape(NL, H, nh, dk).transpose(0, 2, 1, 3)

    # fold the attention scale into the Q weights / bias (perf review item).
    wq_h = split_out_heads(params["wq"]) * scale
    wk_h = split_out_heads(params["wk"])
    wv_h = split_out_heads(params["wv"])
    wqkv_n = jnp.tile(jnp.concatenate([wq_h, wk_h, wv_h], axis=-1),
                      (1, B, 1, 1))                                   # (NL, n, H, 3dk)

    bq_h = params["bq"].reshape(NL, nh, dk) * scale
    bk_h = params["bk"].reshape(NL, nh, dk)
    bv_h = params["bv"].reshape(NL, nh, dk)
    bqkv_n = jnp.tile(jnp.concatenate([bq_h, bk_h, bv_h], axis=-1),
                      (1, B, 1))[:, :, None, :]                       # (NL, n, 1, 3dk)

    # output projection split along its input rows per head, tiled over batch.
    wo_n = jnp.tile(params["wo"].reshape(NL, nh, dk, H), (1, B, 1, 1))  # (NL, n, dk, H)

    # FFN weights tiled over batch so the in-kernel matmuls are plain batched einsums.
    w1_b = jnp.broadcast_to(params["w1"][:, None], (NL, B, H, I))
    w2_b = jnp.broadcast_to(params["w2"][:, None], (NL, B, I, H))

    # additive attention mask, fully pre-broadcast (hoisted out of the layer loop):
    # -10000 at masked key positions, equivalent to masked_fill(mask==0, -10000).
    bias = jnp.where(mask == 0, jnp.float32(-10000.0), jnp.float32(0.0))   # (B, L)
    bias_n = jnp.broadcast_to(bias[:, None, None, :], (B, nh, L, L)).reshape(n, L, L)

    return dict(
        bias_n=bias_n, wqkv_n=wqkv_n, bqkv_n=bqkv_n, wo_n=wo_n,
        bo=params["bo"].reshape(NL, 1, H),
        w1_b=w1_b, b1=params["b1"].reshape(NL, 1, I),
        w2_b=w2_b, b2=params["b2"].reshape(NL, 1, H),
        ln_g=params["ln_g"].reshape(NL, 1, H),
        ln_b=params["ln_b"].reshape(NL, 1, H),
    )


def bert_encoder_stack(x_emb, kin):
    """x_emb: (B, L, H) f32 embeddings; kin: prepped kernel-layout tensors."""
    B, L, H = x_emb.shape
    kernel = functools.partial(
        bert_stack_kernel,
        num_layers=NUM_LAYERS, num_heads=NUM_HEADS, d_k=H // NUM_HEADS,
        batch=B, seq_len=L)

    def vmem():
        return pl.BlockSpec(memory_space=pltpu.MemorySpace.VMEM)

    # Single gridless pallas_call: activations + all layer weights (~100 KB)
    # stay VMEM-resident for the whole forward pass.  (Per review: no grid /
    # second-TensorCore split at B=2, L=8.)
    return pl.pallas_call(
        kernel,
        out_shape=jax.ShapeDtypeStruct((B, L, H), jnp.float32),
        in_specs=[vmem() for _ in range(12)],
        out_specs=vmem(),
    )(x_emb, kin["bias_n"],
      kin["wqkv_n"], kin["bqkv_n"], kin["wo_n"], kin["bo"],
      kin["w1_b"], kin["b1"], kin["w2_b"], kin["b2"],
      kin["ln_g"], kin["ln_b"])


def init_params(key):
    H, I, NL = HIDDEN_SIZE, INTERMEDIATE_SIZE, NUM_LAYERS
    keys = jax.random.split(key, 3 + NL * 6)
    ki = iter(keys)

    def w(shape, k):
        return jax.random.normal(k, shape, jnp.float32) * 0.02

    tok = w((VOCAB_SIZE, H), next(ki))
    pos = w((MAX_SEQ_LENGTH, H), next(ki))
    seg = w((TYPE_VOCAB_SIZE, H), next(ki))

    wq, wk, wv, wo, w1, w2 = [], [], [], [], [], []
    for _ in range(NL):
        wq.append(w((H, H), next(ki)))
        wk.append(w((H, H), next(ki)))
        wv.append(w((H, H), next(ki)))
        wo.append(w((H, H), next(ki)))
        w1.append(w((H, I), next(ki)))
        w2.append(w((I, H), next(ki)))

    # weights stored nn.Linear-style as (in, out) matrices so y = x @ W + b.
    return {
        "tok_emb": tok, "pos_emb": pos, "seg_emb": seg,
        "wq": jnp.stack(wq), "wk": jnp.stack(wk), "wv": jnp.stack(wv),
        "wo": jnp.stack(wo),
        "bq": jnp.zeros((NL, H), jnp.float32), "bk": jnp.zeros((NL, H), jnp.float32),
        "bv": jnp.zeros((NL, H), jnp.float32), "bo": jnp.zeros((NL, H), jnp.float32),
        "w1": jnp.stack(w1), "b1": jnp.zeros((NL, I), jnp.float32),
        "w2": jnp.stack(w2), "b2": jnp.zeros((NL, H), jnp.float32),
        "ln_g": jnp.ones((NL, H), jnp.float32),
        "ln_b": jnp.zeros((NL, H), jnp.float32),
    }


def bert_forward(params, token_ids, mask, segment_ids):
    """token_ids/mask/segment_ids: (B, L) int32."""
    B, L = token_ids.shape

    # Embedding lookups (gather) + sum: plain-JAX glue.
    te = jnp.take(params["tok_emb"], token_ids, axis=0)          # (B, L, H)
    pe = params["pos_emb"][:L][None, :, :]                       # (1, L, H)
    se = jnp.take(params["seg_emb"], segment_ids, axis=0)        # (B, L, H)
    x = te + pe + se                                             # (B, L, H)
    # TODO(synk): embedding dropout treated as identity (inference mode).

    kin = prepare_kernel_inputs(params, mask, B)
    return bert_encoder_stack(x, kin)                            # (B, L, H)


if __name__ == "__main__":
    key = jax.random.PRNGKey(0)
    pkey, xkey, skey = jax.random.split(key, 3)

    params = init_params(pkey)

    B, L = 2, 8
    token_ids = jax.random.randint(xkey, (B, L), 0, VOCAB_SIZE, dtype=jnp.int32)
    segment_ids = jax.random.randint(skey, (B, L), 0, TYPE_VOCAB_SIZE, dtype=jnp.int32)
    # attention mask: last 2 positions of batch element 1 are padding
    mask = jnp.ones((B, L), jnp.int32).at[1, -2:].set(0)

    out = bert_forward(params, token_ids, mask, segment_ids)
    jax.block_until_ready(out)
    assert out.shape == (B, L, HIDDEN_SIZE) and out.dtype == jnp.float32
    assert bool(jnp.all(jnp.isfinite(out)))
    print("KERNEL_OK")
</pallas_src>

<mosaic_0001>
module attributes {stable_mosaic.version = 11 : i64} {
  func.func @bert_stack_kernel(%arg0: memref<2x8x32xf32, #tpu.memory_space<vmem>>, %arg1: memref<8x8x8xf32, #tpu.memory_space<vmem>>, %arg2: memref<2x8x32x24xf32, #tpu.memory_space<vmem>>, %arg3: memref<2x8x1x24xf32, #tpu.memory_space<vmem>>, %arg4: memref<2x8x8x32xf32, #tpu.memory_space<vmem>>, %arg5: memref<2x1x32xf32, #tpu.memory_space<vmem>>, %arg6: memref<2x2x32x64xf32, #tpu.memory_space<vmem>>, %arg7: memref<2x1x64xf32, #tpu.memory_space<vmem>>, %arg8: memref<2x2x64x32xf32, #tpu.memory_space<vmem>>, %arg9: memref<2x1x32xf32, #tpu.memory_space<vmem>>, %arg10: memref<2x1x32xf32, #tpu.memory_space<vmem>>, %arg11: memref<2x1x32xf32, #tpu.memory_space<vmem>>, %arg12: memref<2x8x32xf32, #tpu.memory_space<vmem>>) attributes {dimension_semantics = [], scalar_prefetch = 0 : i64, scratch_operands = 0 : i64, tpu.core_type = #tpu.core_type<tc>} {
    %c0 = arith.constant 0 : index
    %c0_0 = arith.constant 0 : index
    %c0_1 = arith.constant 0 : index
    %0 = vector.load %arg0[%c0, %c0_0, %c0_1] : memref<2x8x32xf32, #tpu.memory_space<vmem>>, vector<2x8x32xf32>
    %c0_2 = arith.constant 0 : index
    %c0_3 = arith.constant 0 : index
    %c0_4 = arith.constant 0 : index
    %1 = vector.load %arg1[%c0_2, %c0_3, %c0_4] : memref<8x8x8xf32, #tpu.memory_space<vmem>>, vector<8x8x8xf32>
    %c0_5 = arith.constant 0 : index
    %c0_6 = arith.constant 0 : index
    %c0_7 = arith.constant 0 : index
    %2 = vector.load %arg10[%c0_5, %c0_6, %c0_7] : memref<2x1x32xf32, #tpu.memory_space<vmem>>, vector<1x1x32xf32>
    %3 = vector.shape_cast %2 : vector<1x1x32xf32> to vector<1x32xf32>
    %c0_8 = arith.constant 0 : index
    %c0_9 = arith.constant 0 : index
    %c0_10 = arith.constant 0 : index
    %4 = vector.load %arg11[%c0_8, %c0_9, %c0_10] : memref<2x1x32xf32, #tpu.memory_space<vmem>>, vector<1x1x32xf32>
    %5 = vector.shape_cast %4 : vector<1x1x32xf32> to vector<1x32xf32>
    %6 = vector.shape_cast %0 : vector<2x8x32xf32> to vector<2x1x8x32xf32>
    %7 = vector.shape_cast %6 : vector<2x1x8x32xf32> to vector<2x1x8x32xf32>
    %8 = vector.broadcast %7 : vector<2x1x8x32xf32> to vector<2x4x8x32xf32>
    %9 = vector.shape_cast %8 : vector<2x4x8x32xf32> to vector<8x8x32xf32>
    %c0_11 = arith.constant 0 : index
    %c0_12 = arith.constant 0 : index
    %c0_13 = arith.constant 0 : index
    %c0_14 = arith.constant 0 : index
    %10 = vector.load %arg2[%c0_11, %c0_12, %c0_13, %c0_14] : memref<2x8x32x24xf32, #tpu.memory_space<vmem>>, vector<1x8x32x24xf32>
    %11 = vector.shape_cast %10 : vector<1x8x32x24xf32> to vector<8x32x24xf32>
    "tpu.trace_start"() <{level = 10 : i32, message = "nlc,ncd->nld"}> : () -> ()
    %cst = arith.constant dense<0.000000e+00> : vector<8x8x24xf32>
    %12 = tpu.matmul %9, %11, %cst {dimension_numbers = #tpu.dot_dimension_numbers<[2], [1], [1], [2], [0, 0, 0, 1, 1, 2], [0], [0]>} : vector<8x8x32xf32>, vector<8x32x24xf32>, vector<8x8x24xf32> -> vector<8x8x24xf32>
    "tpu.trace_stop"() : () -> ()
    %c0_15 = arith.constant 0 : index
    %c0_16 = arith.constant 0 : index
    %c0_17 = arith.constant 0 : index
    %c0_18 = arith.constant 0 : index
    %13 = vector.load %arg3[%c0_15, %c0_16, %c0_17, %c0_18] : memref<2x8x1x24xf32, #tpu.memory_space<vmem>>, vector<1x8x1x24xf32>
    %14 = vector.shape_cast %13 : vector<1x8x1x24xf32> to vector<8x1x24xf32>
    %15 = vector.broadcast %14 : vector<8x1x24xf32> to vector<8x8x24xf32>
    %16 = arith.addf %12, %15 : vector<8x8x24xf32>
    %17 = vector.extract_strided_slice %16 {offsets = [0, 0, 0], sizes = [8, 8, 8], strides = [1, 1, 1]} : vector<8x8x24xf32> to vector<8x8x8xf32>
    %18 = vector.extract_strided_slice %16 {offsets = [0, 0, 8], sizes = [8, 8, 8], strides = [1, 1, 1]} : vector<8x8x24xf32> to vector<8x8x8xf32>
    %19 = vector.extract_strided_slice %16 {offsets = [0, 0, 16], sizes = [8, 8, 8], strides = [1, 1, 1]} : vector<8x8x24xf32> to vector<8x8x8xf32>
    "tpu.trace_start"() <{level = 10 : i32, message = "nqd,nkd->nqk"}> : () -> ()
    %cst_19 = arith.constant dense<0.000000e+00> : vector<8x8x8xf32>
    %20 = tpu.matmul %17, %18, %cst_19 {dimension_numbers = #tpu.dot_dimension_numbers<[2], [2], [1], [1], [0, 0, 0, 1, 1, 1], [0], [0]>} : vector<8x8x8xf32>, vector<8x8x8xf32>, vector<8x8x8xf32> -> vector<8x8x8xf32>
    "tpu.trace_stop"() : () -> ()
    %21 = arith.addf %20, %1 : vector<8x8x8xf32>
    %cst_20 = arith.constant dense<0xFF800000> : vector<8x8xf32>
    %22 = vector.multi_reduction <maximumf>, %21, %cst_20 [2] : vector<8x8x8xf32> to vector<8x8xf32>
    %23 = vector.shape_cast %22 : vector<8x8xf32> to vector<8x8x1xf32>
    %24 = vector.broadcast %23 : vector<8x8x1xf32> to vector<8x8x8xf32>
    %25 = arith.subf %21, %24 : vector<8x8x8xf32>
    %26 = math.exp %25 : vector<8x8x8xf32>
    %cst_21 = arith.constant dense<0.000000e+00> : vector<8x8xf32>
    %27 = vector.multi_reduction <add>, %26, %cst_21 [2] : vector<8x8x8xf32> to vector<8x8xf32>
    %28 = vector.shape_cast %27 : vector<8x8xf32> to vector<8x8x1xf32>
    %29 = vector.broadcast %28 : vector<8x8x1xf32> to vector<8x8x8xf32>
    %30 = arith.divf %26, %29 : vector<8x8x8xf32>
    "tpu.trace_start"() <{level = 10 : i32, message = "nqk,nkd->nqd"}> : () -> ()
    %cst_22 = arith.constant dense<0.000000e+00> : vector<8x8x8xf32>
    %31 = tpu.matmul %30, %19, %cst_22 {dimension_numbers = #tpu.dot_dimension_numbers<[2], [1], [1], [2], [0, 0, 0, 1, 1, 2], [0], [0]>} : vector<8x8x8xf32>, vector<8x8x8xf32>, vector<8x8x8xf32> -> vector<8x8x8xf32>
    "tpu.trace_stop"() : () -> ()
    %c0_23 = arith.constant 0 : index
    %c0_24 = arith.constant 0 : index
    %c0_25 = arith.constant 0 : index
    %c0_26 = arith.constant 0 : index
    %32 = vector.load %arg4[%c0_23, %c0_24, %c0_25, %c0_26] : memref<2x8x8x32xf32, #tpu.memory_space<vmem>>, vector<1x8x8x32xf32>
    %33 = vector.shape_cast %32 : vector<1x8x8x32xf32> to vector<8x8x32xf32>
    "tpu.trace_start"() <{level = 10 : i32, message = "nqd,ndo->nqo"}> : () -> ()
    %cst_27 = arith.constant dense<0.000000e+00> : vector<8x8x32xf32>
    %34 = tpu.matmul %31, %33, %cst_27 {dimension_numbers = #tpu.dot_dimension_numbers<[2], [1], [1], [2], [0, 0, 0, 1, 1, 2], [0], [0]>} : vector<8x8x8xf32>, vector<8x8x32xf32>, vector<8x8x32xf32> -> vector<8x8x32xf32>
    "tpu.trace_stop"() : () -> ()
    %35 = vector.shape_cast %34 : vector<8x8x32xf32> to vector<2x4x8x32xf32>
    %36 = vector.extract_strided_slice %35 {offsets = [0, 0, 0, 0], sizes = [2, 1, 8, 32], strides = [1, 1, 1, 1]} : vector<2x4x8x32xf32> to vector<2x1x8x32xf32>
    %37 = vector.shape_cast %36 : vector<2x1x8x32xf32> to vector<2x8x32xf32>
    %38 = vector.extract_strided_slice %35 {offsets = [0, 1, 0, 0], sizes = [2, 1, 8, 32], strides = [1, 1, 1, 1]} : vector<2x4x8x32xf32> to vector<2x1x8x32xf32>
    %39 = vector.shape_cast %38 : vector<2x1x8x32xf32> to vector<2x8x32xf32>
    %40 = arith.addf %37, %39 : vector<2x8x32xf32>
    %41 = vector.extract_strided_slice %35 {offsets = [0, 2, 0, 0], sizes = [2, 1, 8, 32], strides = [1, 1, 1, 1]} : vector<2x4x8x32xf32> to vector<2x1x8x32xf32>
    %42 = vector.shape_cast %41 : vector<2x1x8x32xf32> to vector<2x8x32xf32>
    %43 = arith.addf %40, %42 : vector<2x8x32xf32>
    %44 = vector.extract_strided_slice %35 {offsets = [0, 3, 0, 0], sizes = [2, 1, 8, 32], strides = [1, 1, 1, 1]} : vector<2x4x8x32xf32> to vector<2x1x8x32xf32>
    %45 = vector.shape_cast %44 : vector<2x1x8x32xf32> to vector<2x8x32xf32>
    %46 = arith.addf %43, %45 : vector<2x8x32xf32>
    %c0_28 = arith.constant 0 : index
    %c0_29 = arith.constant 0 : index
    %c0_30 = arith.constant 0 : index
    %47 = vector.load %arg5[%c0_28, %c0_29, %c0_30] : memref<2x1x32xf32, #tpu.memory_space<vmem>>, vector<1x1x32xf32>
    %48 = vector.shape_cast %47 : vector<1x1x32xf32> to vector<1x32xf32>
    %49 = vector.shape_cast %48 : vector<1x32xf32> to vector<1x1x32xf32>
    %50 = vector.broadcast %49 : vector<1x1x32xf32> to vector<2x8x32xf32>
    %51 = arith.addf %46, %50 : vector<2x8x32xf32>
    %52 = arith.addf %0, %51 : vector<2x8x32xf32>
    %cst_31 = arith.constant dense<0.000000e+00> : vector<2x8xf32>
    %53 = vector.multi_reduction <add>, %52, %cst_31 [2] : vector<2x8x32xf32> to vector<2x8xf32>
    %54 = vector.shape_cast %53 : vector<2x8xf32> to vector<2x8x1xf32>
    %cst_32 = arith.constant 3.200000e+01 : f32
    %55 = vector.broadcast %cst_32 : f32 to vector<2x8x1xf32>
    %56 = arith.divf %54, %55 : vector<2x8x1xf32>
    %57 = vector.broadcast %56 : vector<2x8x1xf32> to vector<2x8x32xf32>
    %58 = arith.subf %52, %57 : vector<2x8x32xf32>
    %59 = arith.mulf %58, %58 : vector<2x8x32xf32>
    %cst_33 = arith.constant dense<0.000000e+00> : vector<2x8xf32>
    %60 = vector.multi_reduction <add>, %59, %cst_33 [2] : vector<2x8x32xf32> to vector<2x8xf32>
    %61 = vector.shape_cast %60 : vector<2x8xf32> to vector<2x8x1xf32>
    %cst_34 = arith.constant 3.200000e+01 : f32
    %62 = vector.broadcast %cst_34 : f32 to vector<2x8x1xf32>
    %63 = arith.divf %61, %62 : vector<2x8x1xf32>
    %64 = vector.broadcast %56 : vector<2x8x1xf32> to vector<2x8x32xf32>
    %65 = arith.subf %52, %64 : vector<2x8x32xf32>
    %cst_35 = arith.constant 9.99999974E-6 : f32
    %66 = vector.broadcast %cst_35 : f32 to vector<2x8x1xf32>
    %67 = arith.addf %63, %66 : vector<2x8x1xf32>
    %68 = math.rsqrt %67 : vector<2x8x1xf32>
    %69 = vector.broadcast %68 : vector<2x8x1xf32> to vector<2x8x32xf32>
    %70 = arith.mulf %65, %69 : vector<2x8x32xf32>
    %71 = vector.shape_cast %3 : vector<1x32xf32> to vector<1x1x32xf32>
    %72 = vector.broadcast %71 : vector<1x1x32xf32> to vector<2x8x32xf32>
    %73 = arith.mulf %70, %72 : vector<2x8x32xf32>
    %74 = vector.shape_cast %5 : vector<1x32xf32> to vector<1x1x32xf32>
    %75 = vector.broadcast %74 : vector<1x1x32xf32> to vector<2x8x32xf32>
    %76 = arith.addf %73, %75 : vector<2x8x32xf32>
    %c0_36 = arith.constant 0 : index
    %c0_37 = arith.constant 0 : index
    %c0_38 = arith.constant 0 : index
    %c0_39 = arith.constant 0 : index
    %77 = vector.load %arg6[%c0_36, %c0_37, %c0_38, %c0_39] : memref<2x2x32x64xf32, #tpu.memory_space<vmem>>, vector<1x2x32x64xf32>
    %78 = vector.shape_cast %77 : vector<1x2x32x64xf32> to vector<2x32x64xf32>
    "tpu.trace_start"() <{level = 10 : i32, message = "blh,bhi->bli"}> : () -> ()
    %cst_40 = arith.constant dense<0.000000e+00> : vector<2x8x64xf32>
    %79 = tpu.matmul %76, %78, %cst_40 {dimension_numbers = #tpu.dot_dimension_numbers<[2], [1], [1], [2], [0, 0, 0, 1, 1, 2], [0], [0]>} : vector<2x8x32xf32>, vector<2x32x64xf32>, vector<2x8x64xf32> -> vector<2x8x64xf32>
    "tpu.trace_stop"() : () -> ()
    %c0_41 = arith.constant 0 : index
    %c0_42 = arith.constant 0 : index
    %c0_43 = arith.constant 0 : index
    %80 = vector.load %arg7[%c0_41, %c0_42, %c0_43] : memref<2x1x64xf32, #tpu.memory_space<vmem>>, vector<1x1x64xf32>
    %81 = vector.shape_cast %80 : vector<1x1x64xf32> to vector<1x64xf32>
    %82 = vector.shape_cast %81 : vector<1x64xf32> to vector<1x1x64xf32>
    %83 = vector.broadcast %82 : vector<1x1x64xf32> to vector<2x8x64xf32>
    %84 = arith.addf %79, %83 : vector<2x8x64xf32>
    %cst_44 = arith.constant 5.000000e-01 : f32
    %85 = vector.broadcast %cst_44 : f32 to vector<2x8x64xf32>
    %86 = arith.mulf %85, %84 : vector<2x8x64xf32>
    %cst_45 = arith.constant 0.707106769 : f32
    %87 = vector.broadcast %cst_45 : f32 to vector<2x8x64xf32>
    %88 = arith.mulf %84, %87 : vector<2x8x64xf32>
    %89 = math.erf %88 : vector<2x8x64xf32>
    %cst_46 = arith.constant 1.000000e+00 : f32
    %90 = vector.broadcast %cst_46 : f32 to vector<2x8x64xf32>
    %91 = arith.addf %90, %89 : vector<2x8x64xf32>
    %92 = arith.mulf %86, %91 : vector<2x8x64xf32>
    %c0_47 = arith.constant 0 : index
    %c0_48 = arith.constant 0 : index
    %c0_49 = arith.constant 0 : index
    %c0_50 = arith.constant 0 : index
    %93 = vector.load %arg8[%c0_47, %c0_48, %c0_49, %c0_50] : memref<2x2x64x32xf32, #tpu.memory_space<vmem>>, vector<1x2x64x32xf32>
    %94 = vector.shape_cast %93 : vector<1x2x64x32xf32> to vector<2x64x32xf32>
    "tpu.trace_start"() <{level = 10 : i32, message = "bli,bio->blo"}> : () -> ()
    %cst_51 = arith.constant dense<0.000000e+00> : vector<2x8x32xf32>
    %95 = tpu.matmul %92, %94, %cst_51 {dimension_numbers = #tpu.dot_dimension_numbers<[2], [1], [1], [2], [0, 0, 0, 1, 1, 2], [0], [0]>} : vector<2x8x64xf32>, vector<2x64x32xf32>, vector<2x8x32xf32> -> vector<2x8x32xf32>
    "tpu.trace_stop"() : () -> ()
    %c0_52 = arith.constant 0 : index
    %c0_53 = arith.constant 0 : index
    %c0_54 = arith.constant 0 : index
    %96 = vector.load %arg9[%c0_52, %c0_53, %c0_54] : memref<2x1x32xf32, #tpu.memory_space<vmem>>, vector<1x1x32xf32>
    %97 = vector.shape_cast %96 : vector<1x1x32xf32> to vector<1x32xf32>
    %98 = vector.shape_cast %97 : vector<1x32xf32> to vector<1x1x32xf32>
    %99 = vector.broadcast %98 : vector<1x1x32xf32> to vector<2x8x32xf32>
    %100 = arith.addf %95, %99 : vector<2x8x32xf32>
    %101 = arith.addf %76, %100 : vector<2x8x32xf32>
    %cst_55 = arith.constant dense<0.000000e+00> : vector<2x8xf32>
    %102 = vector.multi_reduction <add>, %101, %cst_55 [2] : vector<2x8x32xf32> to vector<2x8xf32>
    %103 = vector.shape_cast %102 : vector<2x8xf32> to vector<2x8x1xf32>
    %cst_56 = arith.constant 3.200000e+01 : f32
    %104 = vector.broadcast %cst_56 : f32 to vector<2x8x1xf32>
    %105 = arith.divf %103, %104 : vector<2x8x1xf32>
    %106 = vector.broadcast %105 : vector<2x8x1xf32> to vector<2x8x32xf32>
    %107 = arith.subf %101, %106 : vector<2x8x32xf32>
    %108 = arith.mulf %107, %107 : vector<2x8x32xf32>
    %cst_57 = arith.constant dense<0.000000e+00> : vector<2x8xf32>
    %109 = vector.multi_reduction <add>, %108, %cst_57 [2] : vector<2x8x32xf32> to vector<2x8xf32>
    %110 = vector.shape_cast %109 : vector<2x8xf32> to vector<2x8x1xf32>
    %cst_58 = arith.constant 3.200000e+01 : f32
    %111 = vector.broadcast %cst_58 : f32 to vector<2x8x1xf32>
    %112 = arith.divf %110, %111 : vector<2x8x1xf32>
    %113 = vector.broadcast %105 : vector<2x8x1xf32> to vector<2x8x32xf32>
    %114 = arith.subf %101, %113 : vector<2x8x32xf32>
    %cst_59 = arith.constant 9.99999974E-6 : f32
    %115 = vector.broadcast %cst_59 : f32 to vector<2x8x1xf32>
    %116 = arith.addf %112, %115 : vector<2x8x1xf32>
    %117 = math.rsqrt %116 : vector<2x8x1xf32>
    %118 = vector.broadcast %117 : vector<2x8x1xf32> to vector<2x8x32xf32>
    %119 = arith.mulf %114, %118 : vector<2x8x32xf32>
    %120 = vector.shape_cast %3 : vector<1x32xf32> to vector<1x1x32xf32>
    %121 = vector.broadcast %120 : vector<1x1x32xf32> to vector<2x8x32xf32>
    %122 = arith.mulf %119, %121 : vector<2x8x32xf32>
    %123 = vector.shape_cast %5 : vector<1x32xf32> to vector<1x1x32xf32>
    %124 = vector.broadcast %123 : vector<1x1x32xf32> to vector<2x8x32xf32>
    %125 = arith.addf %122, %124 : vector<2x8x32xf32>
    %c1 = arith.constant 1 : index
    %c0_60 = arith.constant 0 : index
    %c0_61 = arith.constant 0 : index
    %126 = vector.load %arg10[%c1, %c0_60, %c0_61] : memref<2x1x32xf32, #tpu.memory_space<vmem>>, vector<1x1x32xf32>
    %127 = vector.shape_cast %126 : vector<1x1x32xf32> to vector<1x32xf32>
    %c1_62 = arith.constant 1 : index
    %c0_63 = arith.constant 0 : index
    %c0_64 = arith.constant 0 : index
    %128 = vector.load %arg11[%c1_62, %c0_63, %c0_64] : memref<2x1x32xf32, #tpu.memory_space<vmem>>, vector<1x1x32xf32>
    %129 = vector.shape_cast %128 : vector<1x1x32xf32> to vector<1x32xf32>
    %130 = vector.shape_cast %125 : vector<2x8x32xf32> to vector<2x1x8x32xf32>
    %131 = vector.shape_cast %130 : vector<2x1x8x32xf32> to vector<2x1x8x32xf32>
    %132 = vector.broadcast %131 : vector<2x1x8x32xf32> to vector<2x4x8x32xf32>
    %133 = vector.shape_cast %132 : vector<2x4x8x32xf32> to vector<8x8x32xf32>
    %c1_65 = arith.constant 1 : index
    %c0_66 = arith.constant 0 : index
    %c0_67 = arith.constant 0 : index
    %c0_68 = arith.constant 0 : index
    %134 = vector.load %arg2[%c1_65, %c0_66, %c0_67, %c0_68] : memref<2x8x32x24xf32, #tpu.memory_space<vmem>>, vector<1x8x32x24xf32>
    %135 = vector.shape_cast %134 : vector<1x8x32x24xf32> to vector<8x32x24xf32>
    "tpu.trace_start"() <{level = 10 : i32, message = "nlc,ncd->nld"}> : () -> ()
    %cst_69 = arith.constant dense<0.000000e+00> : vector<8x8x24xf32>
    %136 = tpu.matmul %133, %135, %cst_69 {dimension_numbers = #tpu.dot_dimension_numbers<[2], [1], [1], [2], [0, 0, 0, 1, 1, 2], [0], [0]>} : vector<8x8x32xf32>, vector<8x32x24xf32>, vector<8x8x24xf32> -> vector<8x8x24xf32>
    "tpu.trace_stop"() : () -> ()
    %c1_70 = arith.constant 1 : index
    %c0_71 = arith.constant 0 : index
    %c0_72 = arith.constant 0 : index
    %c0_73 = arith.constant 0 : index
    %137 = vector.load %arg3[%c1_70, %c0_71, %c0_72, %c0_73] : memref<2x8x1x24xf32, #tpu.memory_space<vmem>>, vector<1x8x1x24xf32>
    %138 = vector.shape_cast %137 : vector<1x8x1x24xf32> to vector<8x1x24xf32>
    %139 = vector.broadcast %138 : vector<8x1x24xf32> to vector<8x8x24xf32>
    %140 = arith.addf %136, %139 : vector<8x8x24xf32>
    %141 = vector.extract_strided_slice %140 {offsets = [0, 0, 0], sizes = [8, 8, 8], strides = [1, 1, 1]} : vector<8x8x24xf32> to vector<8x8x8xf32>
    %142 = vector.extract_strided_slice %140 {offsets = [0, 0, 8], sizes = [8, 8, 8], strides = [1, 1, 1]} : vector<8x8x24xf32> to vector<8x8x8xf32>
    %143 = vector.extract_strided_slice %140 {offsets = [0, 0, 16], sizes = [8, 8, 8], strides = [1, 1, 1]} : vector<8x8x24xf32> to vector<8x8x8xf32>
    "tpu.trace_start"() <{level = 10 : i32, message = "nqd,nkd->nqk"}> : () -> ()
    %cst_74 = arith.constant dense<0.000000e+00> : vector<8x8x8xf32>
    %144 = tpu.matmul %141, %142, %cst_74 {dimension_numbers = #tpu.dot_dimension_numbers<[2], [2], [1], [1], [0, 0, 0, 1, 1, 1], [0], [0]>} : vector<8x8x8xf32>, vector<8x8x8xf32>, vector<8x8x8xf32> -> vector<8x8x8xf32>
    "tpu.trace_stop"() : () -> ()
    %145 = arith.addf %144, %1 : vector<8x8x8xf32>
    %cst_75 = arith.constant dense<0xFF800000> : vector<8x8xf32>
    %146 = vector.multi_reduction <maximumf>, %145, %cst_75 [2] : vector<8x8x8xf32> to vector<8x8xf32>
    %147 = vector.shape_cast %146 : vector<8x8xf32> to vector<8x8x1xf32>
    %148 = vector.broadcast %147 : vector<8x8x1xf32> to vector<8x8x8xf32>
    %149 = arith.subf %145, %148 : vector<8x8x8xf32>
    %150 = math.exp %149 : vector<8x8x8xf32>
    %cst_76 = arith.constant dense<0.000000e+00> : vector<8x8xf32>
    %151 = vector.multi_reduction <add>, %150, %cst_76 [2] : vector<8x8x8xf32> to vector<8x8xf32>
    %152 = vector.shape_cast %151 : vector<8x8xf32> to vector<8x8x1xf32>
    %153 = vector.broadcast %152 : vector<8x8x1xf32> to vector<8x8x8xf32>
    %154 = arith.divf %150, %153 : vector<8x8x8xf32>
    "tpu.trace_start"() <{level = 10 : i32, message = "nqk,nkd->nqd"}> : () -> ()
    %cst_77 = arith.constant dense<0.000000e+00> : vector<8x8x8xf32>
    %155 = tpu.matmul %154, %143, %cst_77 {dimension_numbers = #tpu.dot_dimension_numbers<[2], [1], [1], [2], [0, 0, 0, 1, 1, 2], [0], [0]>} : vector<8x8x8xf32>, vector<8x8x8xf32>, vector<8x8x8xf32> -> vector<8x8x8xf32>
    "tpu.trace_stop"() : () -> ()
    %c1_78 = arith.constant 1 : index
    %c0_79 = arith.constant 0 : index
    %c0_80 = arith.constant 0 : index
    %c0_81 = arith.constant 0 : index
    %156 = vector.load %arg4[%c1_78, %c0_79, %c0_80, %c0_81] : memref<2x8x8x32xf32, #tpu.memory_space<vmem>>, vector<1x8x8x32xf32>
    %157 = vector.shape_cast %156 : vector<1x8x8x32xf32> to vector<8x8x32xf32>
    "tpu.trace_start"() <{level = 10 : i32, message = "nqd,ndo->nqo"}> : () -> ()
    %cst_82 = arith.constant dense<0.000000e+00> : vector<8x8x32xf32>
    %158 = tpu.matmul %155, %157, %cst_82 {dimension_numbers = #tpu.dot_dimension_numbers<[2], [1], [1], [2], [0, 0, 0, 1, 1, 2], [0], [0]>} : vector<8x8x8xf32>, vector<8x8x32xf32>, vector<8x8x32xf32> -> vector<8x8x32xf32>
    "tpu.trace_stop"() : () -> ()
    %159 = vector.shape_cast %158 : vector<8x8x32xf32> to vector<2x4x8x32xf32>
    %160 = vector.extract_strided_slice %159 {offsets = [0, 0, 0, 0], sizes = [2, 1, 8, 32], strides = [1, 1, 1, 1]} : vector<2x4x8x32xf32> to vector<2x1x8x32xf32>
    %161 = vector.shape_cast %160 : vector<2x1x8x32xf32> to vector<2x8x32xf32>
    %162 = vector.extract_strided_slice %159 {offsets = [0, 1, 0, 0], sizes = [2, 1, 8, 32], strides = [1, 1, 1, 1]} : vector<2x4x8x32xf32> to vector<2x1x8x32xf32>
    %163 = vector.shape_cast %162 : vector<2x1x8x32xf32> to vector<2x8x32xf32>
    %164 = arith.addf %161, %163 : vector<2x8x32xf32>
    %165 = vector.extract_strided_slice %159 {offsets = [0, 2, 0, 0], sizes = [2, 1, 8, 32], strides = [1, 1, 1, 1]} : vector<2x4x8x32xf32> to vector<2x1x8x32xf32>
    %166 = vector.shape_cast %165 : vector<2x1x8x32xf32> to vector<2x8x32xf32>
    %167 = arith.addf %164, %166 : vector<2x8x32xf32>
    %168 = vector.extract_strided_slice %159 {offsets = [0, 3, 0, 0], sizes = [2, 1, 8, 32], strides = [1, 1, 1, 1]} : vector<2x4x8x32xf32> to vector<2x1x8x32xf32>
    %169 = vector.shape_cast %168 : vector<2x1x8x32xf32> to vector<2x8x32xf32>
    %170 = arith.addf %167, %169 : vector<2x8x32xf32>
    %c1_83 = arith.constant 1 : index
    %c0_84 = arith.constant 0 : index
    %c0_85 = arith.constant 0 : index
    %171 = vector.load %arg5[%c1_83, %c0_84, %c0_85] : memref<2x1x32xf32, #tpu.memory_space<vmem>>, vector<1x1x32xf32>
    %172 = vector.shape_cast %171 : vector<1x1x32xf32> to vector<1x32xf32>
    %173 = vector.shape_cast %172 : vector<1x32xf32> to vector<1x1x32xf32>
    %174 = vector.broadcast %173 : vector<1x1x32xf32> to vector<2x8x32xf32>
    %175 = arith.addf %170, %174 : vector<2x8x32xf32>
    %176 = arith.addf %125, %175 : vector<2x8x32xf32>
    %cst_86 = arith.constant dense<0.000000e+00> : vector<2x8xf32>
    %177 = vector.multi_reduction <add>, %176, %cst_86 [2] : vector<2x8x32xf32> to vector<2x8xf32>
    %178 = vector.shape_cast %177 : vector<2x8xf32> to vector<2x8x1xf32>
    %cst_87 = arith.constant 3.200000e+01 : f32
    %179 = vector.broadcast %cst_87 : f32 to vector<2x8x1xf32>
    %180 = arith.divf %178, %179 : vector<2x8x1xf32>
    %181 = vector.broadcast %180 : vector<2x8x1xf32> to vector<2x8x32xf32>
    %182 = arith.subf %176, %181 : vector<2x8x32xf32>
    %183 = arith.mulf %182, %182 : vector<2x8x32xf32>
    %cst_88 = arith.constant dense<0.000000e+00> : vector<2x8xf32>
    %184 = vector.multi_reduction <add>, %183, %cst_88 [2] : vector<2x8x32xf32> to vector<2x8xf32>
    %185 = vector.shape_cast %184 : vector<2x8xf32> to vector<2x8x1xf32>
    %cst_89 = arith.constant 3.200000e+01 : f32
    %186 = vector.broadcast %cst_89 : f32 to vector<2x8x1xf32>
    %187 = arith.divf %185, %186 : vector<2x8x1xf32>
    %188 = vector.broadcast %180 : vector<2x8x1xf32> to vector<2x8x32xf32>
    %189 = arith.subf %176, %188 : vector<2x8x32xf32>
    %cst_90 = arith.constant 9.99999974E-6 : f32
    %190 = vector.broadcast %cst_90 : f32 to vector<2x8x1xf32>
    %191 = arith.addf %187, %190 : vector<2x8x1xf32>
    %192 = math.rsqrt %191 : vector<2x8x1xf32>
    %193 = vector.broadcast %192 : vector<2x8x1xf32> to vector<2x8x32xf32>
    %194 = arith.mulf %189, %193 : vector<2x8x32xf32>
    %195 = vector.shape_cast %127 : vector<1x32xf32> to vector<1x1x32xf32>
    %196 = vector.broadcast %195 : vector<1x1x32xf32> to vector<2x8x32xf32>
    %197 = arith.mulf %194, %196 : vector<2x8x32xf32>
    %198 = vector.shape_cast %129 : vector<1x32xf32> to vector<1x1x32xf32>
    %199 = vector.broadcast %198 : vector<1x1x32xf32> to vector<2x8x32xf32>
    %200 = arith.addf %197, %199 : vector<2x8x32xf32>
    %c1_91 = arith.constant 1 : index
    %c0_92 = arith.constant 0 : index
    %c0_93 = arith.constant 0 : index
    %c0_94 = arith.constant 0 : index
    %201 = vector.load %arg6[%c1_91, %c0_92, %c0_93, %c0_94] : memref<2x2x32x64xf32, #tpu.memory_space<vmem>>, vector<1x2x32x64xf32>
    %202 = vector.shape_cast %201 : vector<1x2x32x64xf32> to vector<2x32x64xf32>
    "tpu.trace_start"() <{level = 10 : i32, message = "blh,bhi->bli"}> : () -> ()
    %cst_95 = arith.constant dense<0.000000e+00> : vector<2x8x64xf32>
    %203 = tpu.matmul %200, %202, %cst_95 {dimension_numbers = #tpu.dot_dimension_numbers<[2], [1], [1], [2], [0, 0, 0, 1, 1, 2], [0], [0]>} : vector<2x8x32xf32>, vector<2x32x64xf32>, vector<2x8x64xf32> -> vector<2x8x64xf32>
    "tpu.trace_stop"() : () -> ()
    %c1_96 = arith.constant 1 : index
    %c0_97 = arith.constant 0 : index
    %c0_98 = arith.constant 0 : index
    %204 = vector.load %arg7[%c1_96, %c0_97, %c0_98] : memref<2x1x64xf32, #tpu.memory_space<vmem>>, vector<1x1x64xf32>
    %205 = vector.shape_cast %204 : vector<1x1x64xf32> to vector<1x64xf32>
    %206 = vector.shape_cast %205 : vector<1x64xf32> to vector<1x1x64xf32>
    %207 = vector.broadcast %206 : vector<1x1x64xf32> to vector<2x8x64xf32>
    %208 = arith.addf %203, %207 : vector<2x8x64xf32>
    %cst_99 = arith.constant 5.000000e-01 : f32
    %209 = vector.broadcast %cst_99 : f32 to vector<2x8x64xf32>
    %210 = arith.mulf %209, %208 : vector<2x8x64xf32>
    %cst_100 = arith.constant 0.707106769 : f32
    %211 = vector.broadcast %cst_100 : f32 to vector<2x8x64xf32>
    %212 = arith.mulf %208, %211 : vector<2x8x64xf32>
    %213 = math.erf %212 : vector<2x8x64xf32>
    %cst_101 = arith.constant 1.000000e+00 : f32
    %214 = vector.broadcast %cst_101 : f32 to vector<2x8x64xf32>
    %215 = arith.addf %214, %213 : vector<2x8x64xf32>
    %216 = arith.mulf %210, %215 : vector<2x8x64xf32>
    %c1_102 = arith.constant 1 : index
    %c0_103 = arith.constant 0 : index
    %c0_104 = arith.constant 0 : index
    %c0_105 = arith.constant 0 : index
    %217 = vector.load %arg8[%c1_102, %c0_103, %c0_104, %c0_105] : memref<2x2x64x32xf32, #tpu.memory_space<vmem>>, vector<1x2x64x32xf32>
    %218 = vector.shape_cast %217 : vector<1x2x64x32xf32> to vector<2x64x32xf32>
    "tpu.trace_start"() <{level = 10 : i32, message = "bli,bio->blo"}> : () -> ()
    %cst_106 = arith.constant dense<0.000000e+00> : vector<2x8x32xf32>
    %219 = tpu.matmul %216, %218, %cst_106 {dimension_numbers = #tpu.dot_dimension_numbers<[2], [1], [1], [2], [0, 0, 0, 1, 1, 2], [0], [0]>} : vector<2x8x64xf32>, vector<2x64x32xf32>, vector<2x8x32xf32> -> vector<2x8x32xf32>
    "tpu.trace_stop"() : () -> ()
    %c1_107 = arith.constant 1 : index
    %c0_108 = arith.constant 0 : index
    %c0_109 = arith.constant 0 : index
    %220 = vector.load %arg9[%c1_107, %c0_108, %c0_109] : memref<2x1x32xf32, #tpu.memory_space<vmem>>, vector<1x1x32xf32>
    %221 = vector.shape_cast %220 : vector<1x1x32xf32> to vector<1x32xf32>
    %222 = vector.shape_cast %221 : vector<1x32xf32> to vector<1x1x32xf32>
    %223 = vector.broadcast %222 : vector<1x1x32xf32> to vector<2x8x32xf32>
    %224 = arith.addf %219, %223 : vector<2x8x32xf32>
    %225 = arith.addf %200, %224 : vector<2x8x32xf32>
    %cst_110 = arith.constant dense<0.000000e+00> : vector<2x8xf32>
    %226 = vector.multi_reduction <add>, %225, %cst_110 [2] : vector<2x8x32xf32> to vector<2x8xf32>
    %227 = vector.shape_cast %226 : vector<2x8xf32> to vector<2x8x1xf32>
    %cst_111 = arith.constant 3.200000e+01 : f32
    %228 = vector.broadcast %cst_111 : f32 to vector<2x8x1xf32>
    %229 = arith.divf %227, %228 : vector<2x8x1xf32>
    %230 = vector.broadcast %229 : vector<2x8x1xf32> to vector<2x8x32xf32>
    %231 = arith.subf %225, %230 : vector<2x8x32xf32>
    %232 = arith.mulf %231, %231 : vector<2x8x32xf32>
    %cst_112 = arith.constant dense<0.000000e+00> : vector<2x8xf32>
    %233 = vector.multi_reduction <add>, %232, %cst_112 [2] : vector<2x8x32xf32> to vector<2x8xf32>
    %234 = vector.shape_cast %233 : vector<2x8xf32> to vector<2x8x1xf32>
    %cst_113 = arith.constant 3.200000e+01 : f32
    %235 = vector.broadcast %cst_113 : f32 to vector<2x8x1xf32>
    %236 = arith.divf %234, %235 : vector<2x8x1xf32>
    %237 = vector.broadcast %229 : vector<2x8x1xf32> to vector<2x8x32xf32>
    %238 = arith.subf %225, %237 : vector<2x8x32xf32>
    %cst_114 = arith.constant 9.99999974E-6 : f32
    %239 = vector.broadcast %cst_114 : f32 to vector<2x8x1xf32>
    %240 = arith.addf %236, %239 : vector<2x8x1xf32>
    %241 = math.rsqrt %240 : vector<2x8x1xf32>
    %242 = vector.broadcast %241 : vector<2x8x1xf32> to vector<2x8x32xf32>
    %243 = arith.mulf %238, %242 : vector<2x8x32xf32>
    %244 = vector.shape_cast %127 : vector<1x32xf32> to vector<1x1x32xf32>
    %245 = vector.broadcast %244 : vector<1x1x32xf32> to vector<2x8x32xf32>
    %246 = arith.mulf %243, %245 : vector<2x8x32xf32>
    %247 = vector.shape_cast %129 : vector<1x32xf32> to vector<1x1x32xf32>
    %248 = vector.broadcast %247 : vector<1x1x32xf32> to vector<2x8x32xf32>
    %249 = arith.addf %246, %248 : vector<2x8x32xf32>
    %c0_115 = arith.constant 0 : index
    %c0_116 = arith.constant 0 : index
    %c0_117 = arith.constant 0 : index
    %250 = vector.load %arg12[%c0_115, %c0_116, %c0_117] : memref<2x8x32xf32, #tpu.memory_space<vmem>>, vector<2x8x32xf32>
    tpu.vector_store %arg12[%c0_115, %c0_116, %c0_117], %249 {strides = array<i32>} : memref<2x8x32xf32, #tpu.memory_space<vmem>>, vector<2x8x32xf32>,
    return
  }
}

</mosaic_0001>

<llo_original>
// kernel: tpu_custom_call.1
$region0: #{tpu_custom_call.1}
  #allocation0 [shape = 'u32[]', space=smem, size = 0x4, offset = 0x4, fixed_abs, tag = 'smem constant byte address 0x4 - core index']
  #allocation1 [shape = 'u32[144,128]{1,0:T(1,128)}', space=vmem, size = 0x12000, scoped, tag = 'internal scratch']
  %s0 = inlined_call_operand.vmem [shape: f32[2,8,32], index: 0, kind: input, shape index: {}]
  %s1 = inlined_call_operand.vmem [shape: f32[8,8,8], index: 1, kind: input, shape index: {}]
  %s2 = inlined_call_operand.vmem [shape: f32[2,8,32,24], index: 2, kind: input, shape index: {}]
  %s3 = inlined_call_operand.vmem [shape: f32[2,8,1,24], index: 3, kind: input, shape index: {}]
  %s4 = inlined_call_operand.vmem [shape: f32[2,8,8,32], index: 4, kind: input, shape index: {}]
  %s5 = inlined_call_operand.vmem [shape: f32[2,1,32], index: 5, kind: input, shape index: {}]
  %s6 = inlined_call_operand.vmem [shape: f32[2,2,32,64], index: 6, kind: input, shape index: {}]
  %s7 = inlined_call_operand.vmem [shape: f32[2,1,64], index: 7, kind: input, shape index: {}]
  %s8 = inlined_call_operand.vmem [shape: f32[2,2,64,32], index: 8, kind: input, shape index: {}]
  %s9 = inlined_call_operand.vmem [shape: f32[2,1,32], index: 9, kind: input, shape index: {}]
  %s10 = inlined_call_operand.vmem [shape: f32[2,1,32], index: 10, kind: input, shape index: {}]
  %s11 = inlined_call_operand.vmem [shape: f32[2,1,32], index: 11, kind: input, shape index: {}]
  %s12 = inlined_call_operand.hbm [shape: f32[2,8,32], index: 12, kind: output, shape index: {}]
  %s13 = sld [smem:[#allocation0]]
  $region58: #{tpu_custom_call.1} parent=0
    _
  %s15 = ssub.s32 1, %s13
  %s16 = scalar_select 0, %s15, %s13
  $region1: #{tpu_custom_call.1} parent=0
    #allocation2 [shape = 'u8[8192]{0}', space=vmem, size = 0x2000, scoped, tag = 'output window, operand 0, single buffered']
    #allocation3 [shape = 's32[1]{0}', space=sflag, size = 0x4, scoped, tag = 'scoped memory for tpu_custom_call.1']
    %17 = vsyncpa [#allocation3], 0
    // Predicated region
    $region2: #{tpu_custom_call.1} parent=1 // pred_check
      _
    $region3: #{tpu_custom_call.1} parent=1 // pred_check_branch
      %19 = sbr.rel (0) target = $region5
    $region4: #{tpu_custom_call.1} parent=1 // pred_region
      _
    $region5: #{tpu_custom_call.1} parent=1 // pred_fallthru
      _
    // Predicated region
    $region6: #{tpu_custom_call.1} parent=1 // pred_check
      _
    $region7: #{tpu_custom_call.1} parent=1 // pred_check_branch
      %21 = sbr.rel (0) target = $region9
    $region8: #{tpu_custom_call.1} parent=1 // pred_region
      _
    $region9: #{tpu_custom_call.1} parent=1 // pred_fallthru
      _
    // Predicated region
    $region10: #{tpu_custom_call.1} parent=1 // pred_check
      _
    $region11: #{tpu_custom_call.1} parent=1 // pred_check_branch
      %23 = sbr.rel (0) target = $region13
    $region12: #{tpu_custom_call.1} parent=1 // pred_region
      _
    $region13: #{tpu_custom_call.1} parent=1 // pred_fallthru
      _
    // Predicated region
    $region14: #{tpu_custom_call.1} parent=1 // pred_check
      _
    $region15: #{tpu_custom_call.1} parent=1 // pred_check_branch
      %25 = sbr.rel (0) target = $region17
    $region16: #{tpu_custom_call.1} parent=1 // pred_region
      _
    $region17: #{tpu_custom_call.1} parent=1 // pred_fallthru
      _
    // Predicated region
    $region18: #{tpu_custom_call.1} parent=1 // pred_check
      _
    $region19: #{tpu_custom_call.1} parent=1 // pred_check_branch
      %27 = sbr.rel (0) target = $region21
    $region20: #{tpu_custom_call.1} parent=1 // pred_region
      _
    $region21: #{tpu_custom_call.1} parent=1 // pred_fallthru
      _
    // Predicated region
    $region22: #{tpu_custom_call.1} parent=1 // pred_check
      _
    $region23: #{tpu_custom_call.1} parent=1 // pred_check_branch
      %29 = sbr.rel (0) target = $region25
    $region24: #{tpu_custom_call.1} parent=1 // pred_region
      _
    $region25: #{tpu_custom_call.1} parent=1 // pred_fallthru
      _
    // Predicated region
    $region26: #{tpu_custom_call.1} parent=1 // pred_check
      _
    $region27: #{tpu_custom_call.1} parent=1 // pred_check_branch
      %31 = sbr.rel (0) target = $region29
    $region28: #{tpu_custom_call.1} parent=1 // pred_region
      _
    $region29: #{tpu_custom_call.1} parent=1 // pred_fallthru
      _
    // Predicated region
    $region30: #{tpu_custom_call.1} parent=1 // pred_check
      _
    $region31: #{tpu_custom_call.1} parent=1 // pred_check_branch
      %33 = sbr.rel (0) target = $region33
    $region32: #{tpu_custom_call.1} parent=1 // pred_region
      _
    $region33: #{tpu_custom_call.1} parent=1 // pred_fallthru
      _
    // Predicated region
    $region34: #{tpu_custom_call.1} parent=1 // pred_check
      _
    $region35: #{tpu_custom_call.1} parent=1 // pred_check_branch
      %35 = sbr.rel (0) target = $region37
    $region36: #{tpu_custom_call.1} parent=1 // pred_region
      _
    $region37: #{tpu_custom_call.1} parent=1 // pred_fallthru
      _
    // Predicated region
    $region38: #{tpu_custom_call.1} parent=1 // pred_check
      _
    $region39: #{tpu_custom_call.1} parent=1 // pred_check_branch
      %37 = sbr.rel (0) target = $region41
    $region40: #{tpu_custom_call.1} parent=1 // pred_region
      _
    $region41: #{tpu_custom_call.1} parent=1 // pred_fallthru
      _
    // Predicated region
    $region42: #{tpu_custom_call.1} parent=1 // pred_check
      _
    $region43: #{tpu_custom_call.1} parent=1 // pred_check_branch
      %39 = sbr.rel (0) target = $region45
    $region44: #{tpu_custom_call.1} parent=1 // pred_region
      _
    $region45: #{tpu_custom_call.1} parent=1 // pred_fallthru
      _
    // Predicated region
    $region46: #{tpu_custom_call.1} parent=1 // pred_check
      _
    $region47: #{tpu_custom_call.1} parent=1 // pred_check_branch
      %41 = sbr.rel (0) target = $region49
    $region48: #{tpu_custom_call.1} parent=1 // pred_region
      _
    $region49: #{tpu_custom_call.1} parent=1 // pred_fallthru
      _
    %v42 = vld [vmem:[%s0] sm:$0xff]
    %v43 = vld [vmem:[%s0 + $0x8] sm:$0xff]
    %v44 = vld [vmem:[%s1] sm:$0xff]
    %v45 = vld [vmem:[%s1 + $0x8] sm:$0xff]
    %v46 = vld [vmem:[%s1 + $0x10] sm:$0xff]
    %v47 = vld [vmem:[%s1 + $0x18] sm:$0xff]
    %v48 = vld [vmem:[%s1 + $0x20] sm:$0xff]
    %v49 = vld [vmem:[%s1 + $0x28] sm:$0xff]
    %v50 = vld [vmem:[%s1 + $0x30] sm:$0xff]
    %v51 = vld [vmem:[%s1 + $0x38] sm:$0xff]
    %v52 = vld [vmem:[%s10] sm:$0x1]
    %v53 = vld [vmem:[%s11] sm:$0x1]
    %v54 = vld [vmem:[%s2] sm:$0xff]
    %v55 = vld [vmem:[%s2 + $0x8] sm:$0xff]
    %v56 = vld [vmem:[%s2 + $0x10] sm:$0xff]
    %v57 = vld [vmem:[%s2 + $0x18] sm:$0xff]
    %v58 = vld [vmem:[%s2 + $0x20] sm:$0xff]
    %v59 = vld [vmem:[%s2 + $0x28] sm:$0xff]
    %v60 = vld [vmem:[%s2 + $0x30] sm:$0xff]
    %v61 = vld [vmem:[%s2 + $0x38] sm:$0xff]
    %v62 = vld [vmem:[%s2 + $0x40] sm:$0xff]
    %v63 = vld [vmem:[%s2 + $0x48] sm:$0xff]
    %v64 = vld [vmem:[%s2 + $0x50] sm:$0xff]
    %v65 = vld [vmem:[%s2 + $0x58] sm:$0xff]
    %v66 = vld [vmem:[%s2 + $0x60] sm:$0xff]
    %v67 = vld [vmem:[%s2 + $0x68] sm:$0xff]
    %v68 = vld [vmem:[%s2 + $0x70] sm:$0xff]
    %v69 = vld [vmem:[%s2 + $0x78] sm:$0xff]
    %v70 = vld [vmem:[%s2 + $0x80] sm:$0xff]
    %v71 = vld [vmem:[%s2 + $0x88] sm:$0xff]
    %v72 = vld [vmem:[%s2 + $0x90] sm:$0xff]
    %v73 = vld [vmem:[%s2 + $0x98] sm:$0xff]
    %v74 = vld [vmem:[%s2 + $0xa0] sm:$0xff]
    %v75 = vld [vmem:[%s2 + $0xa8] sm:$0xff]
    %v76 = vld [vmem:[%s2 + $0xb0] sm:$0xff]
    %v77 = vld [vmem:[%s2 + $0xb8] sm:$0xff]
    %v78 = vld [vmem:[%s2 + $0xc0] sm:$0xff]
    %v79 = vld [vmem:[%s2 + $0xc8] sm:$0xff]
    %v80 = vld [vmem:[%s2 + $0xd0] sm:$0xff]
    %v81 = vld [vmem:[%s2 + $0xd8] sm:$0xff]
    %v82 = vld [vmem:[%s2 + $0xe0] sm:$0xff]
    %v83 = vld [vmem:[%s2 + $0xe8] sm:$0xff]
    %v84 = vld [vmem:[%s2 + $0xf0] sm:$0xff]
    %v85 = vld [vmem:[%s2 + $0xf8] sm:$0xff]
    %v86 = vld [vmem:[%s3] sm:$0x1]
    %v87 = vld [vmem:[%s3 + $0x1] sm:$0x1]
    %v88 = vld [vmem:[%s3 + $0x2] sm:$0x1]
    %v89 = vld [vmem:[%s3 + $0x3] sm:$0x1]
    %v90 = vld [vmem:[%s3 + $0x4] sm:$0x1]
    %v91 = vld [vmem:[%s3 + $0x5] sm:$0x1]
    %v92 = vld [vmem:[%s3 + $0x6] sm:$0x1]
    %v93 = vld [vmem:[%s3 + $0x7] sm:$0x1]
    %v102 = vlaneseq
    %v103 = vshrl.u32 %v102, 7
    %v104 = vsub.s32 0, %v103
    %v105 = vrot.slane %v86, %v104
    %v106 = vlaneseq
    %v107 = vshrl.u32 %v106, 7
    %v108 = vsub.s32 0, %v107
    %v109 = vrot.slane %v87, %v108
    %v110 = vlaneseq
    %v111 = vshrl.u32 %v110, 7
    %v112 = vsub.s32 0, %v111
    %v113 = vrot.slane %v88, %v112
    %v114 = vlaneseq
    %v115 = vshrl.u32 %v114, 7
    %v116 = vsub.s32 0, %v115
    %v117 = vrot.slane %v89, %v116
    %v118 = vlaneseq
    %v119 = vshrl.u32 %v118, 7
    %v120 = vsub.s32 0, %v119
    %v121 = vrot.slane %v90, %v120
    %v122 = vlaneseq
    %v123 = vshrl.u32 %v122, 7
    %v124 = vsub.s32 0, %v123
    %v125 = vrot.slane %v91, %v124
    %v126 = vlaneseq
    %v127 = vshrl.u32 %v126, 7
    %v128 = vsub.s32 0, %v127
    %v129 = vrot.slane %v92, %v128
    %v130 = vlaneseq
    %v131 = vshrl.u32 %v130, 7
    %v132 = vsub.s32 0, %v131
    %v133 = vrot.slane %v93, %v132
    %vm142 = vcmask 261120
    %v144 = vsel %vm142, %v42, 0
    %146 = vmatprep.subr.mxu0 0.0
    %147 = vmatpush1.msra.mxu0 %v54
    %148 = vmatprep.subr.mxu0 0.0
    %149 = vmatpush1.msra.mxu0 %v55
    %150 = vmatprep.subr.mxu0 0.0
    %151 = vmatpush1.msra.mxu0 %v56
    %152 = vmatprep.subr.mxu0 0.0
    %153 = vmatpush1.msra.mxu0 %v57
    %154 = vmatprep.subr.mxu0 0.0
    %155 = vmatpush1.msra.mxu0 0.0
    %156 = vmatprep.subr.mxu0 0.0
    %157 = vmatpush1.msra.mxu0 0.0
    %158 = vmatprep.subr.mxu0 0.0
    %159 = vmatpush1.msra.mxu0 0.0
    %160 = vmatprep.subr.mxu0 0.0
    %161 = vmatpush1.msra.mxu0 0.0
    %162 = vmatprep.subr.mxu0 0.0
    %163 = vmatpush1.msra.mxu0 0.0
    %164 = vmatprep.subr.mxu0 0.0
    %165 = vmatpush1.msra.mxu0 0.0
    %166 = vmatprep.subr.mxu0 0.0
    %167 = vmatpush1.msra.mxu0 0.0
    %168 = vmatprep.subr.mxu0 0.0
    %169 = vmatpush1.msra.mxu0 0.0
    %170 = vmatprep.subr.mxu0 0.0
    %171 = vmatpush1.msra.mxu0 0.0
    %172 = vmatprep.subr.mxu0 0.0
    %173 = vmatpush1.msra.mxu0 0.0
    %174 = vmatprep.subr.mxu0 0.0
    %175 = vmatpush1.msra.mxu0 0.0
    %176 = vmatprep.subr.mxu0 0.0
    %177 = vmatpush1.msra.mxu0 0.0
    %178 = vmatprep.subr.mxu0 0.0
    %179 = vmatpush1.msra.mxu0 0.0
    %180 = vmatprep.subr.mxu0 0.0
    %181 = vmatpush1.msra.mxu0 0.0
    %182 = vmatprep.subr.mxu0 0.0
    %183 = vmatpush1.msra.mxu0 0.0
    %184 = vmatprep.subr.mxu0 0.0
    %185 = vmatpush1.msra.mxu0 0.0
    %186 = vmatprep.subr.mxu0 0.0
    %187 = vmatpush1.msra.mxu0 0.0
    %188 = vmatprep.subr.mxu0 0.0
    %189 = vmatpush1.msra.mxu0 0.0
    %190 = vmatprep.subr.mxu0 0.0
    %191 = vmatpush1.msra.mxu0 0.0
    %192 = vmatprep.subr.mxu0 0.0
    %193 = vmatpush1.msra.mxu0 0.0
    %194 = vmatprep.subr.mxu0 0.0
    %195 = vmatpush1.msra.mxu0 0.0
    %196 = vmatprep.subr.mxu0 0.0
    %197 = vmatpush1.msra.mxu0 0.0
    %198 = vmatprep.subr.mxu0 0.0
    %199 = vmatpush1.msra.mxu0 0.0
    %200 = vmatprep.subr.mxu0 0.0
    %201 = vmatpush1.msra.mxu0 0.0
    %202 = vmatprep.subr.mxu0 0.0
    %203 = vmatpush1.msra.mxu0 0.0
    %204 = vmatprep.subr.mxu0 0.0
    %205 = vmatpush1.msra.mxu0 0.0
    %206 = vmatprep.subr.mxu0 0.0
    %207 = vmatpush1.msra.mxu0 0.0
    %208 = vmatprep.subr.mxu0 0.0
    %209 = vmatpush1.msra.mxu0 0.0
    %210 = vmatprep.mubr.f32.mxu0 0.0
    %211 = vmatmul.mubr.f32.gmra.mrb[0].mxu0 %v144
    %v212 = vpop.f32.mrb[0].mxu0
    %v213 = vadd.f32 %v105, %v212
    %v214 = vpop.f32.mrb[0].mxu0
    %215 = vdwg.mxu0
    %216 = vmatprep.subr.mxu0 0.0
    %217 = vmatpush1.msra.mxu0 %v58
    %218 = vmatprep.subr.mxu0 0.0
    %219 = vmatpush1.msra.mxu0 %v59
    %220 = vmatprep.subr.mxu0 0.0
    %221 = vmatpush1.msra.mxu0 %v60
    %222 = vmatprep.subr.mxu0 0.0
    %223 = vmatpush1.msra.mxu0 %v61
    %224 = vmatprep.subr.mxu0 0.0
    %225 = vmatpush1.msra.mxu0 0.0
    %226 = vmatprep.subr.mxu0 0.0
    %227 = vmatpush1.msra.mxu0 0.0
    %228 = vmatprep.subr.mxu0 0.0
    %229 = vmatpush1.msra.mxu0 0.0
    %230 = vmatprep.subr.mxu0 0.0
    %231 = vmatpush1.msra.mxu0 0.0
    %232 = vmatprep.subr.mxu0 0.0
    %233 = vmatpush1.msra.mxu0 0.0
    %234 = vmatprep.subr.mxu0 0.0
    %235 = vmatpush1.msra.mxu0 0.0
    %236 = vmatprep.subr.mxu0 0.0
    %237 = vmatpush1.msra.mxu0 0.0
    %238 = vmatprep.subr.mxu0 0.0
    %239 = vmatpush1.msra.mxu0 0.0
    %240 = vmatprep.subr.mxu0 0.0
    %241 = vmatpush1.msra.mxu0 0.0
    %242 = vmatprep.subr.mxu0 0.0
    %243 = vmatpush1.msra.mxu0 0.0
    %244 = vmatprep.subr.mxu0 0.0
    %245 = vmatpush1.msra.mxu0 0.0
    %246 = vmatprep.subr.mxu0 0.0
    %247 = vmatpush1.msra.mxu0 0.0
    %248 = vmatprep.subr.mxu0 0.0
    %249 = vmatpush1.msra.mxu0 0.0
    %250 = vmatprep.subr.mxu0 0.0
    %251 = vmatpush1.msra.mxu0 0.0
    %252 = vmatprep.subr.mxu0 0.0
    %253 = vmatpush1.msra.mxu0 0.0
    %254 = vmatprep.subr.mxu0 0.0
    %255 = vmatpush1.msra.mxu0 0.0
    %256 = vmatprep.subr.mxu0 0.0
    %257 = vmatpush1.msra.mxu0 0.0
    %258 = vmatprep.subr.mxu0 0.0
    %259 = vmatpush1.msra.mxu0 0.0
    %260 = vmatprep.subr.mxu0 0.0
    %261 = vmatpush1.msra.mxu0 0.0
    %262 = vmatprep.subr.mxu0 0.0
    %263 = vmatpush1.msra.mxu0 0.0
    %264 = vmatprep.subr.mxu0 0.0
    %265 = vmatpush1.msra.mxu0 0.0
    %266 = vmatprep.subr.mxu0 0.0
    %267 = vmatpush1.msra.mxu0 0.0
    %268 = vmatprep.subr.mxu0 0.0
    %269 = vmatpush1.msra.mxu0 0.0
    %270 = vmatprep.subr.mxu0 0.0
    %271 = vmatpush1.msra.mxu0 0.0
    %272 = vmatprep.subr.mxu0 0.0
    %273 = vmatpush1.msra.mxu0 0.0
    %274 = vmatprep.subr.mxu0 0.0
    %275 = vmatpush1.msra.mxu0 0.0
    %276 = vmatprep.subr.mxu0 0.0
    %277 = vmatpush1.msra.mxu0 0.0
    %278 = vmatprep.subr.mxu0 0.0
    %279 = vmatpush1.msra.mxu0 0.0
    %280 = vmatprep.mubr.f32.mxu0 0.0
    %281 = vmatmul.mubr.f32.gmra.mrb[0].mxu0 %v144
    %v282 = vpop.f32.mrb[0].mxu0
    %v283 = vadd.f32 %v109, %v282
    %v284 = vpop.f32.mrb[0].mxu0
    %285 = vdwg.mxu0
    %286 = vmatprep.subr.mxu0 0.0
    %287 = vmatpush1.msra.mxu0 %v62
    %288 = vmatprep.subr.mxu0 0.0
    %289 = vmatpush1.msra.mxu0 %v63
    %290 = vmatprep.subr.mxu0 0.0
    %291 = vmatpush1.msra.mxu0 %v64
    %292 = vmatprep.subr.mxu0 0.0
    %293 = vmatpush1.msra.mxu0 %v65
    %294 = vmatprep.subr.mxu0 0.0
    %295 = vmatpush1.msra.mxu0 0.0
    %296 = vmatprep.subr.mxu0 0.0
    %297 = vmatpush1.msra.mxu0 0.0
    %298 = vmatprep.subr.mxu0 0.0
    %299 = vmatpush1.msra.mxu0 0.0
    %300 = vmatprep.subr.mxu0 0.0
    %301 = vmatpush1.msra.mxu0 0.0
    %302 = vmatprep.subr.mxu0 0.0
    %303 = vmatpush1.msra.mxu0 0.0
    %304 = vmatprep.subr.mxu0 0.0
    %305 = vmatpush1.msra.mxu0 0.0
    %306 = vmatprep.subr.mxu0 0.0
    %307 = vmatpush1.msra.mxu0 0.0
    %308 = vmatprep.subr.mxu0 0.0
    %309 = vmatpush1.msra.mxu0 0.0
    %310 = vmatprep.subr.mxu0 0.0
    %311 = vmatpush1.msra.mxu0 0.0
    %312 = vmatprep.subr.mxu0 0.0
    %313 = vmatpush1.msra.mxu0 0.0
    %314 = vmatprep.subr.mxu0 0.0
    %315 = vmatpush1.msra.mxu0 0.0
    %316 = vmatprep.subr.mxu0 0.0
    %317 = vmatpush1.msra.mxu0 0.0
    %318 = vmatprep.subr.mxu0 0.0
    %319 = vmatpush1.msra.mxu0 0.0
    %320 = vmatprep.subr.mxu0 0.0
    %321 = vmatpush1.msra.mxu0 0.0
    %322 = vmatprep.subr.mxu0 0.0
    %323 = vmatpush1.msra.mxu0 0.0
    %324 = vmatprep.subr.mxu0 0.0
    %325 = vmatpush1.msra.mxu0 0.0
    %326 = vmatprep.subr.mxu0 0.0
    %327 = vmatpush1.msra.mxu0 0.0
    %328 = vmatprep.subr.mxu0 0.0
    %329 = vmatpush1.msra.mxu0 0.0
    %330 = vmatprep.subr.mxu0 0.0
    %331 = vmatpush1.msra.mxu0 0.0
    %332 = vmatprep.subr.mxu0 0.0
    %333 = vmatpush1.msra.mxu0 0.0
    %334 = vmatprep.subr.mxu0 0.0
    %335 = vmatpush1.msra.mxu0 0.0
    %336 = vmatprep.subr.mxu0 0.0
    %337 = vmatpush1.msra.mxu0 0.0
    %338 = vmatprep.subr.mxu0 0.0
    %339 = vmatpush1.msra.mxu0 0.0
    %340 = vmatprep.subr.mxu0 0.0
    %341 = vmatpush1.msra.mxu0 0.0
    %342 = vmatprep.subr.mxu0 0.0
    %343 = vmatpush1.msra.mxu0 0.0
    %344 = vmatprep.subr.mxu0 0.0
    %345 = vmatpush1.msra.mxu0 0.0
    %346 = vmatprep.subr.mxu0 0.0
    %347 = vmatpush1.msra.mxu0 0.0
    %348 = vmatprep.subr.mxu0 0.0
    %349 = vmatpush1.msra.mxu0 0.0
    %350 = vmatprep.mubr.f32.mxu0 0.0
    %351 = vmatmul.mubr.f32.gmra.mrb[0].mxu0 %v144
    %v352 = vpop.f32.mrb[0].mxu0
    %v353 = vadd.f32 %v113, %v352
    %v354 = vpop.f32.mrb[0].mxu0
    %355 = vdwg.mxu0
    %356 = vmatprep.subr.mxu0 0.0
    %357 = vmatpush1.msra.mxu0 %v66
    %358 = vmatprep.subr.mxu0 0.0
    %359 = vmatpush1.msra.mxu0 %v67
    %360 = vmatprep.subr.mxu0 0.0
    %361 = vmatpush1.msra.mxu0 %v68
    %362 = vmatprep.subr.mxu0 0.0
    %363 = vmatpush1.msra.mxu0 %v69
    %364 = vmatprep.subr.mxu0 0.0
    %365 = vmatpush1.msra.mxu0 0.0
    %366 = vmatprep.subr.mxu0 0.0
    %367 = vmatpush1.msra.mxu0 0.0
    %368 = vmatprep.subr.mxu0 0.0
    %369 = vmatpush1.msra.mxu0 0.0
    %370 = vmatprep.subr.mxu0 0.0
    %371 = vmatpush1.msra.mxu0 0.0
    %372 = vmatprep.subr.mxu0 0.0
    %373 = vmatpush1.msra.mxu0 0.0
    %374 = vmatprep.subr.mxu0 0.0
    %375 = vmatpush1.msra.mxu0 0.0
    %376 = vmatprep.subr.mxu0 0.0
    %377 = vmatpush1.msra.mxu0 0.0
    %378 = vmatprep.subr.mxu0 0.0
    %379 = vmatpush1.msra.mxu0 0.0
    %380 = vmatprep.subr.mxu0 0.0
    %381 = vmatpush1.msra.mxu0 0.0
    %382 = vmatprep.subr.mxu0 0.0
    %383 = vmatpush1.msra.mxu0 0.0
    %384 = vmatprep.subr.mxu0 0.0
    %385 = vmatpush1.msra.mxu0 0.0
    %386 = vmatprep.subr.mxu0 0.0
    %387 = vmatpush1.msra.mxu0 0.0
    %388 = vmatprep.subr.mxu0 0.0
    %389 = vmatpush1.msra.mxu0 0.0
    %390 = vmatprep.subr.mxu0 0.0
    %391 = vmatpush1.msra.mxu0 0.0
    %392 = vmatprep.subr.mxu0 0.0
    %393 = vmatpush1.msra.mxu0 0.0
    %394 = vmatprep.subr.mxu0 0.0
    %395 = vmatpush1.msra.mxu0 0.0
    %396 = vmatprep.subr.mxu0 0.0
    %397 = vmatpush1.msra.mxu0 0.0
    %398 = vmatprep.subr.mxu0 0.0
    %399 = vmatpush1.msra.mxu0 0.0
    %400 = vmatprep.subr.mxu0 0.0
    %401 = vmatpush1.msra.mxu0 0.0
    %402 = vmatprep.subr.mxu0 0.0
    %403 = vmatpush1.msra.mxu0 0.0
    %404 = vmatprep.subr.mxu0 0.0
    %405 = vmatpush1.msra.mxu0 0.0
    %406 = vmatprep.subr.mxu0 0.0
    %407 = vmatpush1.msra.mxu0 0.0
    %408 = vmatprep.subr.mxu0 0.0
    %409 = vmatpush1.msra.mxu0 0.0
    %410 = vmatprep.subr.mxu0 0.0
    %411 = vmatpush1.msra.mxu0 0.0
    %412 = vmatprep.subr.mxu0 0.0
    %413 = vmatpush1.msra.mxu0 0.0
    %414 = vmatprep.subr.mxu0 0.0
    %415 = vmatpush1.msra.mxu0 0.0
    %416 = vmatprep.subr.mxu0 0.0
    %417 = vmatpush1.msra.mxu0 0.0
    %418 = vmatprep.subr.mxu0 0.0
    %419 = vmatpush1.msra.mxu0 0.0
    %420 = vmatprep.mubr.f32.mxu0 0.0
    %421 = vmatmul.mubr.f32.gmra.mrb[0].mxu0 %v144
    %v422 = vpop.f32.mrb[0].mxu0
    %v423 = vadd.f32 %v117, %v422
    %v424 = vpop.f32.mrb[0].mxu0
    %425 = vdwg.mxu0
    %v427 = vsel %vm142, %v43, 0
    %429 = vmatprep.subr.mxu0 0.0
    %430 = vmatpush1.msra.mxu0 %v70
    %431 = vmatprep.subr.mxu0 0.0
    %432 = vmatpush1.msra.mxu0 %v71
    %433 = vmatprep.subr.mxu0 0.0
    %434 = vmatpush1.msra.mxu0 %v72
    %435 = vmatprep.subr.mxu0 0.0
    %436 = vmatpush1.msra.mxu0 %v73
    %437 = vmatprep.subr.mxu0 0.0
    %438 = vmatpush1.msra.mxu0 0.0
    %439 = vmatprep.subr.mxu0 0.0
    %440 = vmatpush1.msra.mxu0 0.0
    %441 = vmatprep.subr.mxu0 0.0
    %442 = vmatpush1.msra.mxu0 0.0
    %443 = vmatprep.subr.mxu0 0.0
    %444 = vmatpush1.msra.mxu0 0.0
    %445 = vmatprep.subr.mxu0 0.0
    %446 = vmatpush1.msra.mxu0 0.0
    %447 = vmatprep.subr.mxu0 0.0
    %448 = vmatpush1.msra.mxu0 0.0
    %449 = vmatprep.subr.mxu0 0.0
    %450 = vmatpush1.msra.mxu0 0.0
    %451 = vmatprep.subr.mxu0 0.0
    %452 = vmatpush1.msra.mxu0 0.0
    %453 = vmatprep.subr.mxu0 0.0
    %454 = vmatpush1.msra.mxu0 0.0
    %455 = vmatprep.subr.mxu0 0.0
    %456 = vmatpush1.msra.mxu0 0.0
    %457 = vmatprep.subr.mxu0 0.0
    %458 = vmatpush1.msra.mxu0 0.0
    %459 = vmatprep.subr.mxu0 0.0
    %460 = vmatpush1.msra.mxu0 0.0
    %461 = vmatprep.subr.mxu0 0.0
    %462 = vmatpush1.msra.mxu0 0.0
    %463 = vmatprep.subr.mxu0 0.0
    %464 = vmatpush1.msra.mxu0 0.0
    %465 = vmatprep.subr.mxu0 0.0
    %466 = vmatpush1.msra.mxu0 0.0
    %467 = vmatprep.subr.mxu0 0.0
    %468 = vmatpush1.msra.mxu0 0.0
    %469 = vmatprep.subr.mxu0 0.0
    %470 = vmatpush1.msra.mxu0 0.0
    %471 = vmatprep.subr.mxu0 0.0
    %472 = vmatpush1.msra.mxu0 0.0
    %473 = vmatprep.subr.mxu0 0.0
    %474 = vmatpush1.msra.mxu0 0.0
    %475 = vmatprep.subr.mxu0 0.0
    %476 = vmatpush1.msra.mxu0 0.0
    %477 = vmatprep.subr.mxu0 0.0
    %478 = vmatpush1.msra.mxu0 0.0
    %479 = vmatprep.subr.mxu0 0.0
    %480 = vmatpush1.msra.mxu0 0.0
    %481 = vmatprep.subr.mxu0 0.0
    %482 = vmatpush1.msra.mxu0 0.0
    %483 = vmatprep.subr.mxu0 0.0
    %484 = vmatpush1.msra.mxu0 0.0
    %485 = vmatprep.subr.mxu0 0.0
    %486 = vmatpush1.msra.mxu0 0.0
    %487 = vmatprep.subr.mxu0 0.0
    %488 = vmatpush1.msra.mxu0 0.0
    %489 = vmatprep.subr.mxu0 0.0
    %490 = vmatpush1.msra.mxu0 0.0
    %491 = vmatprep.subr.mxu0 0.0
    %492 = vmatpush1.msra.mxu0 0.0
    %493 = vmatprep.mubr.f32.mxu0 0.0
    %494 = vmatmul.mubr.f32.gmra.mrb[0].mxu0 %v427
    %v495 = vpop.f32.mrb[0].mxu0
    %v496 = vadd.f32 %v121, %v495
    %v497 = vpop.f32.mrb[0].mxu0
    %498 = vdwg.mxu0
    %499 = vmatprep.subr.mxu0 0.0
    %500 = vmatpush1.msra.mxu0 %v74
    %501 = vmatprep.subr.mxu0 0.0
    %502 = vmatpush1.msra.mxu0 %v75
    %503 = vmatprep.subr.mxu0 0.0
    %504 = vmatpush1.msra.mxu0 %v76
    %505 = vmatprep.subr.mxu0 0.0
    %506 = vmatpush1.msra.mxu0 %v77
    %507 = vmatprep.subr.mxu0 0.0
    %508 = vmatpush1.msra.mxu0 0.0
    %509 = vmatprep.subr.mxu0 0.0
    %510 = vmatpush1.msra.mxu0 0.0
    %511 = vmatprep.subr.mxu0 0.0
    %512 = vmatpush1.msra.mxu0 0.0
    %513 = vmatprep.subr.mxu0 0.0
    %514 = vmatpush1.msra.mxu0 0.0
    %515 = vmatprep.subr.mxu0 0.0
    %516 = vmatpush1.msra.mxu0 0.0
    %517 = vmatprep.subr.mxu0 0.0
    %518 = vmatpush1.msra.mxu0 0.0
    %519 = vmatprep.subr.mxu0 0.0
    %520 = vmatpush1.msra.mxu0 0.0
    %521 = vmatprep.subr.mxu0 0.0
    %522 = vmatpush1.msra.mxu0 0.0
    %523 = vmatprep.subr.mxu0 0.0
    %524 = vmatpush1.msra.mxu0 0.0
    %525 = vmatprep.subr.mxu0 0.0
    %526 = vmatpush1.msra.mxu0 0.0
    %527 = vmatprep.subr.mxu0 0.0
    %528 = vmatpush1.msra.mxu0 0.0
    %529 = vmatprep.subr.mxu0 0.0
    %530 = vmatpush1.msra.mxu0 0.0
    %531 = vmatprep.subr.mxu0 0.0
    %532 = vmatpush1.msra.mxu0 0.0
    %533 = vmatprep.subr.mxu0 0.0
    %534 = vmatpush1.msra.mxu0 0.0
    %535 = vmatprep.subr.mxu0 0.0
    %536 = vmatpush1.msra.mxu0 0.0
    %537 = vmatprep.subr.mxu0 0.0
    %538 = vmatpush1.msra.mxu0 0.0
    %539 = vmatprep.subr.mxu0 0.0
    %540 = vmatpush1.msra.mxu0 0.0
    %541 = vmatprep.subr.mxu0 0.0
    %542 = vmatpush1.msra.mxu0 0.0
    %543 = vmatprep.subr.mxu0 0.0
    %544 = vmatpush1.msra.mxu0 0.0
    %545 = vmatprep.subr.mxu0 0.0
    %546 = vmatpush1.msra.mxu0 0.0
    %547 = vmatprep.subr.mxu0 0.0
    %548 = vmatpush1.msra.mxu0 0.0
    %549 = vmatprep.subr.mxu0 0.0
    %550 = vmatpush1.msra.mxu0 0.0
    %551 = vmatprep.subr.mxu0 0.0
    %552 = vmatpush1.msra.mxu0 0.0
    %553 = vmatprep.subr.mxu0 0.0
    %554 = vmatpush1.msra.mxu0 0.0
    %555 = vmatprep.subr.mxu0 0.0
    %556 = vmatpush1.msra.mxu0 0.0
    %557 = vmatprep.subr.mxu0 0.0
    %558 = vmatpush1.msra.mxu0 0.0
    %559 = vmatprep.subr.mxu0 0.0
    %560 = vmatpush1.msra.mxu0 0.0
    %561 = vmatprep.subr.mxu0 0.0
    %562 = vmatpush1.msra.mxu0 0.0
    %563 = vmatprep.mubr.f32.mxu0 0.0
    %564 = vmatmul.mubr.f32.gmra.mrb[0].mxu0 %v427
    %v565 = vpop.f32.mrb[0].mxu0
    %v566 = vadd.f32 %v125, %v565
    %v567 = vpop.f32.mrb[0].mxu0
    %568 = vdwg.mxu0
    %569 = vmatprep.subr.mxu0 0.0
    %570 = vmatpush1.msra.mxu0 %v78
    %571 = vmatprep.subr.mxu0 0.0
    %572 = vmatpush1.msra.mxu0 %v79
    %573 = vmatprep.subr.mxu0 0.0
    %574 = vmatpush1.msra.mxu0 %v80
    %575 = vmatprep.subr.mxu0 0.0
    %576 = vmatpush1.msra.mxu0 %v81
    %577 = vmatprep.subr.mxu0 0.0
    %578 = vmatpush1.msra.mxu0 0.0
    %579 = vmatprep.subr.mxu0 0.0
    %580 = vmatpush1.msra.mxu0 0.0
    %581 = vmatprep.subr.mxu0 0.0
    %582 = vmatpush1.msra.mxu0 0.0
    %583 = vmatprep.subr.mxu0 0.0
    %584 = vmatpush1.msra.mxu0 0.0
    %585 = vmatprep.subr.mxu0 0.0
    %586 = vmatpush1.msra.mxu0 0.0
    %587 = vmatprep.subr.mxu0 0.0
    %588 = vmatpush1.msra.mxu0 0.0
    %589 = vmatprep.subr.mxu0 0.0
    %590 = vmatpush1.msra.mxu0 0.0
    %591 = vmatprep.subr.mxu0 0.0
    %592 = vmatpush1.msra.mxu0 0.0
    %593 = vmatprep.subr.mxu0 0.0
    %594 = vmatpush1.msra.mxu0 0.0
    %595 = vmatprep.subr.mxu0 0.0
    %596 = vmatpush1.msra.mxu0 0.0
    %597 = vmatprep.subr.mxu0 0.0
    %598 = vmatpush1.msra.mxu0 0.0
    %599 = vmatprep.subr.mxu0 0.0
    %600 = vmatpush1.msra.mxu0 0.0
    %601 = vmatprep.subr.mxu0 0.0
    %602 = vmatpush1.msra.mxu0 0.0
    %603 = vmatprep.subr.mxu0 0.0
    %604 = vmatpush1.msra.mxu0 0.0
    %605 = vmatprep.subr.mxu0 0.0
    %606 = vmatpush1.msra.mxu0 0.0
    %607 = vmatprep.subr.mxu0 0.0
    %608 = vmatpush1.msra.mxu0 0.0
    %609 = vmatprep.subr.mxu0 0.0
    %610 = vmatpush1.msra.mxu0 0.0
    %611 = vmatprep.subr.mxu0 0.0
    %612 = vmatpush1.msra.mxu0 0.0
    %613 = vmatprep.subr.mxu0 0.0
    %614 = vmatpush1.msra.mxu0 0.0
    %615 = vmatprep.subr.mxu0 0.0
    %616 = vmatpush1.msra.mxu0 0.0
    %617 = vmatprep.subr.mxu0 0.0
    %618 = vmatpush1.msra.mxu0 0.0
    %619 = vmatprep.subr.mxu0 0.0
    %620 = vmatpush1.msra.mxu0 0.0
    %621 = vmatprep.subr.mxu0 0.0
    %622 = vmatpush1.msra.mxu0 0.0
    %623 = vmatprep.subr.mxu0 0.0
    %624 = vmatpush1.msra.mxu0 0.0
    %625 = vmatprep.subr.mxu0 0.0
    %626 = vmatpush1.msra.mxu0 0.0
    %627 = vmatprep.subr.mxu0 0.0
    %628 = vmatpush1.msra.mxu0 0.0
    %629 = vmatprep.subr.mxu0 0.0
    %630 = vmatpush1.msra.mxu0 0.0
    %631 = vmatprep.subr.mxu0 0.0
    %632 = vmatpush1.msra.mxu0 0.0
    %633 = vmatprep.mubr.f32.mxu0 0.0
    %634 = vmatmul.mubr.f32.gmra.mrb[0].mxu0 %v427
    %v635 = vpop.f32.mrb[0].mxu0
    %v636 = vadd.f32 %v129, %v635
    %v637 = vpop.f32.mrb[0].mxu0
    %638 = vdwg.mxu0
    %639 = vmatprep.subr.mxu0 0.0
    %640 = vmatpush1.msra.mxu0 %v82
    %641 = vmatprep.subr.mxu0 0.0
    %642 = vmatpush1.msra.mxu0 %v83
    %643 = vmatprep.subr.mxu0 0.0
    %644 = vmatpush1.msra.mxu0 %v84
    %645 = vmatprep.subr.mxu0 0.0
    %646 = vmatpush1.msra.mxu0 %v85
    %647 = vmatprep.subr.mxu0 0.0
    %648 = vmatpush1.msra.mxu0 0.0
    %649 = vmatprep.subr.mxu0 0.0
    %650 = vmatpush1.msra.mxu0 0.0
    %651 = vmatprep.subr.mxu0 0.0
    %652 = vmatpush1.msra.mxu0 0.0
    %653 = vmatprep.subr.mxu0 0.0
    %654 = vmatpush1.msra.mxu0 0.0
    %655 = vmatprep.subr.mxu0 0.0
    %656 = vmatpush1.msra.mxu0 0.0
    %657 = vmatprep.subr.mxu0 0.0
    %658 = vmatpush1.msra.mxu0 0.0
    %659 = vmatprep.subr.mxu0 0.0
    %660 = vmatpush1.msra.mxu0 0.0
    %661 = vmatprep.subr.mxu0 0.0
    %662 = vmatpush1.msra.mxu0 0.0
    %663 = vmatprep.subr.mxu0 0.0
    %664 = vmatpush1.msra.mxu0 0.0
    %665 = vmatprep.subr.mxu0 0.0
    %666 = vmatpush1.msra.mxu0 0.0
    %667 = vmatprep.subr.mxu0 0.0
    %668 = vmatpush1.msra.mxu0 0.0
    %669 = vmatprep.subr.mxu0 0.0
    %670 = vmatpush1.msra.mxu0 0.0
    %671 = vmatprep.subr.mxu0 0.0
    %672 = vmatpush1.msra.mxu0 0.0
    %673 = vmatprep.subr.mxu0 0.0
    %674 = vmatpush1.msra.mxu0 0.0
    %675 = vmatprep.subr.mxu0 0.0
    %676 = vmatpush1.msra.mxu0 0.0
    %677 = vmatprep.subr.mxu0 0.0
    %678 = vmatpush1.msra.mxu0 0.0
    %679 = vmatprep.subr.mxu0 0.0
    %680 = vmatpush1.msra.mxu0 0.0
    %681 = vmatprep.subr.mxu0 0.0
    %682 = vmatpush1.msra.mxu0 0.0
    %683 = vmatprep.subr.mxu0 0.0
    %684 = vmatpush1.msra.mxu0 0.0
    %685 = vmatprep.subr.mxu0 0.0
    %686 = vmatpush1.msra.mxu0 0.0
    %687 = vmatprep.subr.mxu0 0.0
    %688 = vmatpush1.msra.mxu0 0.0
    %689 = vmatprep.subr.mxu0 0.0
    %690 = vmatpush1.msra.mxu0 0.0
    %691 = vmatprep.subr.mxu0 0.0
    %692 = vmatpush1.msra.mxu0 0.0
    %693 = vmatprep.subr.mxu0 0.0
    %694 = vmatpush1.msra.mxu0 0.0
    %695 = vmatprep.subr.mxu0 0.0
    %696 = vmatpush1.msra.mxu0 0.0
    %697 = vmatprep.subr.mxu0 0.0
    %698 = vmatpush1.msra.mxu0 0.0
    %699 = vmatprep.subr.mxu0 0.0
    %700 = vmatpush1.msra.mxu0 0.0
    %701 = vmatprep.subr.mxu0 0.0
    %702 = vmatpush1.msra.mxu0 0.0
    %703 = vmatprep.mubr.f32.mxu0 0.0
    %704 = vmatmul.mubr.f32.gmra.mrb[0].mxu0 %v427
    %v705 = vpop.f32.mrb[0].mxu0
    %v706 = vadd.f32 %v133, %v705
    %v707 = vpop.f32.mrb[0].mxu0
    %708 = vdwg.mxu0
    %710 = vrot.lane.b32.xlu0 %v213, 120
    %v711 = vpop.permute.xlu0 %710
    %vm712 = vcmask 64512
    %v713 = vsel %vm712, %v213, 0
    %v715 = vsel %vm712, %v711, 0
    %717 = vmatprep.subr.mxu0 0.0
    %718 = vmatpush1.xpose.msra.mxu0 %v715
    %719 = vmatprep.subr.mxu0 0.0
    %720 = vmatpush1.xpose.msra.mxu0 0.0
    %721 = vmatprep.subr.mxu0 0.0
    %722 = vmatpush1.xpose.msra.mxu0 0.0
    %723 = vmatprep.subr.mxu0 0.0
    %724 = vmatpush1.xpose.msra.mxu0 0.0
    %725 = vmatprep.subr.mxu0 0.0
    %726 = vmatpush1.xpose.msra.mxu0 0.0
    %727 = vmatprep.subr.mxu0 0.0
    %728 = vmatpush1.xpose.msra.mxu0 0.0
    %729 = vmatprep.subr.mxu0 0.0
    %730 = vmatpush1.xpose.msra.mxu0 0.0
    %731 = vmatprep.subr.mxu0 0.0
    %732 = vmatpush1.xpose.msra.mxu0 0.0
    %733 = vmatprep.subr.mxu0 0.0
    %734 = vmatpush1.xpose.msra.mxu0 0.0
    %735 = vmatprep.subr.mxu0 0.0
    %736 = vmatpush1.xpose.msra.mxu0 0.0
    %737 = vmatprep.subr.mxu0 0.0
    %738 = vmatpush1.xpose.msra.mxu0 0.0
    %739 = vmatprep.subr.mxu0 0.0
    %740 = vmatpush1.xpose.msra.mxu0 0.0
    %741 = vmatprep.subr.mxu0 0.0
    %742 = vmatpush1.xpose.msra.mxu0 0.0
    %743 = vmatprep.subr.mxu0 0.0
    %744 = vmatpush1.xpose.msra.mxu0 0.0
    %745 = vmatprep.subr.mxu0 0.0
    %746 = vmatpush1.xpose.msra.mxu0 0.0
    %747 = vmatprep.subr.mxu0 0.0
    %748 = vmatpush1.xpose.msra.mxu0 0.0
    %749 = vmatprep.subr.mxu0 0.0
    %750 = vmatpush1.xpose.msra.mxu0 0.0
    %751 = vmatprep.subr.mxu0 0.0
    %752 = vmatpush1.xpose.msra.mxu0 0.0
    %753 = vmatprep.subr.mxu0 0.0
    %754 = vmatpush1.xpose.msra.mxu0 0.0
    %755 = vmatprep.subr.mxu0 0.0
    %756 = vmatpush1.xpose.msra.mxu0 0.0
    %757 = vmatprep.subr.mxu0 0.0
    %758 = vmatpush1.xpose.msra.mxu0 0.0
    %759 = vmatprep.subr.mxu0 0.0
    %760 = vmatpush1.xpose.msra.mxu0 0.0
    %761 = vmatprep.subr.mxu0 0.0
    %762 = vmatpush1.xpose.msra.mxu0 0.0
    %763 = vmatprep.subr.mxu0 0.0
    %764 = vmatpush1.xpose.msra.mxu0 0.0
    %765 = vmatprep.subr.mxu0 0.0
    %766 = vmatpush1.xpose.msra.mxu0 0.0
    %767 = vmatprep.subr.mxu0 0.0
    %768 = vmatpush1.xpose.msra.mxu0 0.0
    %769 = vmatprep.subr.mxu0 0.0
    %770 = vmatpush1.xpose.msra.mxu0 0.0
    %771 = vmatprep.subr.mxu0 0.0
    %772 = vmatpush1.xpose.msra.mxu0 0.0
    %773 = vmatprep.subr.mxu0 0.0
    %774 = vmatpush1.xpose.msra.mxu0 0.0
    %775 = vmatprep.subr.mxu0 0.0
    %776 = vmatpush1.xpose.msra.mxu0 0.0
    %777 = vmatprep.subr.mxu0 0.0
    %778 = vmatpush1.xpose.msra.mxu0 0.0
    %779 = vmatprep.subr.mxu0 0.0
    %780 = vmatpush1.xpose.msra.mxu0 0.0
    %781 = vmatprep.mubr.f32.mxu0 0.0
    %782 = vmatmul.mubr.f32.gmra.mrb[0].mxu0 %v713
    %v783 = vpop.f32.mrb[0].mxu0
    %v784 = vadd.f32 %v44, %v783
    %v785 = vpop.f32.mrb[0].mxu0
    %786 = vdwg.mxu0
    %788 = vrot.lane.b32.xlu0 %v283, 120
    %v789 = vpop.permute.xlu0 %788
    %v790 = vsel %vm712, %v283, 0
    %v792 = vsel %vm712, %v789, 0
    %794 = vmatprep.subr.mxu0 0.0
    %795 = vmatpush1.xpose.msra.mxu0 %v792
    %796 = vmatprep.subr.mxu0 0.0
    %797 = vmatpush1.xpose.msra.mxu0 0.0
    %798 = vmatprep.subr.mxu0 0.0
    %799 = vmatpush1.xpose.msra.mxu0 0.0
    %800 = vmatprep.subr.mxu0 0.0
    %801 = vmatpush1.xpose.msra.mxu0 0.0
    %802 = vmatprep.subr.mxu0 0.0
    %803 = vmatpush1.xpose.msra.mxu0 0.0
    %804 = vmatprep.subr.mxu0 0.0
    %805 = vmatpush1.xpose.msra.mxu0 0.0
    %806 = vmatprep.subr.mxu0 0.0
    %807 = vmatpush1.xpose.msra.mxu0 0.0
    %808 = vmatprep.subr.mxu0 0.0
    %809 = vmatpush1.xpose.msra.mxu0 0.0
    %810 = vmatprep.subr.mxu0 0.0
    %811 = vmatpush1.xpose.msra.mxu0 0.0
    %812 = vmatprep.subr.mxu0 0.0
    %813 = vmatpush1.xpose.msra.mxu0 0.0
    %814 = vmatprep.subr.mxu0 0.0
    %815 = vmatpush1.xpose.msra.mxu0 0.0
    %816 = vmatprep.subr.mxu0 0.0
    %817 = vmatpush1.xpose.msra.mxu0 0.0
    %818 = vmatprep.subr.mxu0 0.0
    %819 = vmatpush1.xpose.msra.mxu0 0.0
    %820 = vmatprep.subr.mxu0 0.0
    %821 = vmatpush1.xpose.msra.mxu0 0.0
    %822 = vmatprep.subr.mxu0 0.0
    %823 = vmatpush1.xpose.msra.mxu0 0.0
    %824 = vmatprep.subr.mxu0 0.0
    %825 = vmatpush1.xpose.msra.mxu0 0.0
    %826 = vmatprep.subr.mxu0 0.0
    %827 = vmatpush1.xpose.msra.mxu0 0.0
    %828 = vmatprep.subr.mxu0 0.0
    %829 = vmatpush1.xpose.msra.mxu0 0.0
    %830 = vmatprep.subr.mxu0 0.0
    %831 = vmatpush1.xpose.msra.mxu0 0.0
    %832 = vmatprep.subr.mxu0 0.0
    %833 = vmatpush1.xpose.msra.mxu0 0.0
    %834 = vmatprep.subr.mxu0 0.0
    %835 = vmatpush1.xpose.msra.mxu0 0.0
    %836 = vmatprep.subr.mxu0 0.0
    %837 = vmatpush1.xpose.msra.mxu0 0.0
    %838 = vmatprep.subr.mxu0 0.0
    %839 = vmatpush1.xpose.msra.mxu0 0.0
    %840 = vmatprep.subr.mxu0 0.0
    %841 = vmatpush1.xpose.msra.mxu0 0.0
    %842 = vmatprep.subr.mxu0 0.0
    %843 = vmatpush1.xpose.msra.mxu0 0.0
    %844 = vmatprep.subr.mxu0 0.0
    %845 = vmatpush1.xpose.msra.mxu0 0.0
    %846 = vmatprep.subr.mxu0 0.0
    %847 = vmatpush1.xpose.msra.mxu0 0.0
    %848 = vmatprep.subr.mxu0 0.0
    %849 = vmatpush1.xpose.msra.mxu0 0.0
    %850 = vmatprep.subr.mxu0 0.0
    %851 = vmatpush1.xpose.msra.mxu0 0.0
    %852 = vmatprep.subr.mxu0 0.0
    %853 = vmatpush1.xpose.msra.mxu0 0.0
    %854 = vmatprep.subr.mxu0 0.0
    %855 = vmatpush1.xpose.msra.mxu0 0.0
    %856 = vmatprep.subr.mxu0 0.0
    %857 = vmatpush1.xpose.msra.mxu0 0.0
    %858 = vmatprep.mubr.f32.mxu0 0.0
    %859 = vmatmul.mubr.f32.gmra.mrb[0].mxu0 %v790
    %v860 = vpop.f32.mrb[0].mxu0
    %v861 = vadd.f32 %v45, %v860
    %v862 = vpop.f32.mrb[0].mxu0
    %863 = vdwg.mxu0
    %865 = vrot.lane.b32.xlu0 %v353, 120
    %v866 = vpop.permute.xlu0 %865
    %v867 = vsel %vm712, %v353, 0
    %v869 = vsel %vm712, %v866, 0
    %871 = vmatprep.subr.mxu0 0.0
    %872 = vmatpush1.xpose.msra.mxu0 %v869
    %873 = vmatprep.subr.mxu0 0.0
    %874 = vmatpush1.xpose.msra.mxu0 0.0
    %875 = vmatprep.subr.mxu0 0.0
    %876 = vmatpush1.xpose.msra.mxu0 0.0
    %877 = vmatprep.subr.mxu0 0.0
    %878 = vmatpush1.xpose.msra.mxu0 0.0
    %879 = vmatprep.subr.mxu0 0.0
    %880 = vmatpush1.xpose.msra.mxu0 0.0
    %881 = vmatprep.subr.mxu0 0.0
    %882 = vmatpush1.xpose.msra.mxu0 0.0
    %883 = vmatprep.subr.mxu0 0.0
    %884 = vmatpush1.xpose.msra.mxu0 0.0
    %885 = vmatprep.subr.mxu0 0.0
    %886 = vmatpush1.xpose.msra.mxu0 0.0
    %887 = vmatprep.subr.mxu0 0.0
    %888 = vmatpush1.xpose.msra.mxu0 0.0
    %889 = vmatprep.subr.mxu0 0.0
    %890 = vmatpush1.xpose.msra.mxu0 0.0
    %891 = vmatprep.subr.mxu0 0.0
    %892 = vmatpush1.xpose.msra.mxu0 0.0
    %893 = vmatprep.subr.mxu0 0.0
    %894 = vmatpush1.xpose.msra.mxu0 0.0
    %895 = vmatprep.subr.mxu0 0.0
    %896 = vmatpush1.xpose.msra.mxu0 0.0
    %897 = vmatprep.subr.mxu0 0.0
    %898 = vmatpush1.xpose.msra.mxu0 0.0
    %899 = vmatprep.subr.mxu0 0.0
    %900 = vmatpush1.xpose.msra.mxu0 0.0
    %901 = vmatprep.subr.mxu0 0.0
    %902 = vmatpush1.xpose.msra.mxu0 0.0
    %903 = vmatprep.subr.mxu0 0.0
    %904 = vmatpush1.xpose.msra.mxu0 0.0
    %905 = vmatprep.subr.mxu0 0.0
    %906 = vmatpush1.xpose.msra.mxu0 0.0
    %907 = vmatprep.subr.mxu0 0.0
    %908 = vmatpush1.xpose.msra.mxu0 0.0
    %909 = vmatprep.subr.mxu0 0.0
    %910 = vmatpush1.xpose.msra.mxu0 0.0
    %911 = vmatprep.subr.mxu0 0.0
    %912 = vmatpush1.xpose.msra.mxu0 0.0
    %913 = vmatprep.subr.mxu0 0.0
    %914 = vmatpush1.xpose.msra.mxu0 0.0
    %915 = vmatprep.subr.mxu0 0.0
    %916 = vmatpush1.xpose.msra.mxu0 0.0
    %917 = vmatprep.subr.mxu0 0.0
    %918 = vmatpush1.xpose.msra.mxu0 0.0
    %919 = vmatprep.subr.mxu0 0.0
    %920 = vmatpush1.xpose.msra.mxu0 0.0
    %921 = vmatprep.subr.mxu0 0.0
    %922 = vmatpush1.xpose.msra.mxu0 0.0
    %923 = vmatprep.subr.mxu0 0.0
    %924 = vmatpush1.xpose.msra.mxu0 0.0
    %925 = vmatprep.subr.mxu0 0.0
    %926 = vmatpush1.xpose.msra.mxu0 0.0
    %927 = vmatprep.subr.mxu0 0.0
    %928 = vmatpush1.xpose.msra.mxu0 0.0
    %929 = vmatprep.subr.mxu0 0.0
    %930 = vmatpush1.xpose.msra.mxu0 0.0
    %931 = vmatprep.subr.mxu0 0.0
    %932 = vmatpush1.xpose.msra.mxu0 0.0
    %933 = vmatprep.subr.mxu0 0.0
    %934 = vmatpush1.xpose.msra.mxu0 0.0
    %935 = vmatprep.mubr.f32.mxu0 0.0
    %936 = vmatmul.mubr.f32.gmra.mrb[0].mxu0 %v867
    %v937 = vpop.f32.mrb[0].mxu0
    %v938 = vadd.f32 %v46, %v937
    %v939 = vpop.f32.mrb[0].mxu0
    %940 = vdwg.mxu0
    %942 = vrot.lane.b32.xlu0 %v423, 120
    %v943 = vpop.permute.xlu0 %942
    %v944 = vsel %vm712, %v423, 0
    %v946 = vsel %vm712, %v943, 0
    %948 = vmatprep.subr.mxu0 0.0
    %949 = vmatpush1.xpose.msra.mxu0 %v946
    %950 = vmatprep.subr.mxu0 0.0
    %951 = vmatpush1.xpose.msra.mxu0 0.0
    %952 = vmatprep.subr.mxu0 0.0
    %953 = vmatpush1.xpose.msra.mxu0 0.0
    %954 = vmatprep.subr.mxu0 0.0
    %955 = vmatpush1.xpose.msra.mxu0 0.0
    %956 = vmatprep.subr.mxu0 0.0
    %957 = vmatpush1.xpose.msra.mxu0 0.0
    %958 = vmatprep.subr.mxu0 0.0
    %959 = vmatpush1.xpose.msra.mxu0 0.0
    %960 = vmatprep.subr.mxu0 0.0
    %961 = vmatpush1.xpose.msra.mxu0 0.0
    %962 = vmatprep.subr.mxu0 0.0
    %963 = vmatpush1.xpose.msra.mxu0 0.0
    %964 = vmatprep.subr.mxu0 0.0
    %965 = vmatpush1.xpose.msra.mxu0 0.0
    %966 = vmatprep.subr.mxu0 0.0
    %967 = vmatpush1.xpose.msra.mxu0 0.0
    %968 = vmatprep.subr.mxu0 0.0
    %969 = vmatpush1.xpose.msra.mxu0 0.0
    %970 = vmatprep.subr.mxu0 0.0
    %971 = vmatpush1.xpose.msra.mxu0 0.0
    %972 = vmatprep.subr.mxu0 0.0
    %973 = vmatpush1.xpose.msra.mxu0 0.0
    %974 = vmatprep.subr.mxu0 0.0
    %975 = vmatpush1.xpose.msra.mxu0 0.0
    %976 = vmatprep.subr.mxu0 0.0
    %977 = vmatpush1.xpose.msra.mxu0 0.0
    %978 = vmatprep.subr.mxu0 0.0
    %979 = vmatpush1.xpose.msra.mxu0 0.0
    %980 = vmatprep.subr.mxu0 0.0
    %981 = vmatpush1.xpose.msra.mxu0 0.0
    %982 = vmatprep.subr.mxu0 0.0
    %983 = vmatpush1.xpose.msra.mxu0 0.0
    %984 = vmatprep.subr.mxu0 0.0
    %985 = vmatpush1.xpose.msra.mxu0 0.0
    %986 = vmatprep.subr.mxu0 0.0
    %987 = vmatpush1.xpose.msra.mxu0 0.0
    %988 = vmatprep.subr.mxu0 0.0
    %989 = vmatpush1.xpose.msra.mxu0 0.0
    %990 = vmatprep.subr.mxu0 0.0
    %991 = vmatpush1.xpose.msra.mxu0 0.0
    %992 = vmatprep.subr.mxu0 0.0
    %993 = vmatpush1.xpose.msra.mxu0 0.0
    %994 = vmatprep.subr.mxu0 0.0
    %995 = vmatpush1.xpose.msra.mxu0 0.0
    %996 = vmatprep.subr.mxu0 0.0
    %997 = vmatpush1.xpose.msra.mxu0 0.0
    %998 = vmatprep.subr.mxu0 0.0
    %999 = vmatpush1.xpose.msra.mxu0 0.0
    %1000 = vmatprep.subr.mxu0 0.0
    %1001 = vmatpush1.xpose.msra.mxu0 0.0
    %1002 = vmatprep.subr.mxu0 0.0
    %1003 = vmatpush1.xpose.msra.mxu0 0.0
    %1004 = vmatprep.subr.mxu0 0.0
    %1005 = vmatpush1.xpose.msra.mxu0 0.0
    %1006 = vmatprep.subr.mxu0 0.0
    %1007 = vmatpush1.xpose.msra.mxu0 0.0
    %1008 = vmatprep.subr.mxu0 0.0
    %1009 = vmatpush1.xpose.msra.mxu0 0.0
    %1010 = vmatprep.subr.mxu0 0.0
    %1011 = vmatpush1.xpose.msra.mxu0 0.0
    %1012 = vmatprep.mubr.f32.mxu0 0.0
    %1013 = vmatmul.mubr.f32.gmra.mrb[0].mxu0 %v944
    %v1014 = vpop.f32.mrb[0].mxu0
    %v1015 = vadd.f32 %v47, %v1014
    %v1016 = vpop.f32.mrb[0].mxu0
    %1017 = vdwg.mxu0
    %1019 = vrot.lane.b32.xlu0 %v496, 120
    %v1020 = vpop.permute.xlu0 %1019
    %v1021 = vsel %vm712, %v496, 0
    %v1023 = vsel %vm712, %v1020, 0
    %1025 = vmatprep.subr.mxu0 0.0
    %1026 = vmatpush1.xpose.msra.mxu0 %v1023
    %1027 = vmatprep.subr.mxu0 0.0
    %1028 = vmatpush1.xpose.msra.mxu0 0.0
    %1029 = vmatprep.subr.mxu0 0.0
    %1030 = vmatpush1.xpose.msra.mxu0 0.0
    %1031 = vmatprep.subr.mxu0 0.0
    %1032 = vmatpush1.xpose.msra.mxu0 0.0
    %1033 = vmatprep.subr.mxu0 0.0
    %1034 = vmatpush1.xpose.msra.mxu0 0.0
    %1035 = vmatprep.subr.mxu0 0.0
    %1036 = vmatpush1.xpose.msra.mxu0 0.0
    %1037 = vmatprep.subr.mxu0 0.0
    %1038 = vmatpush1.xpose.msra.mxu0 0.0
    %1039 = vmatprep.subr.mxu0 0.0
    %1040 = vmatpush1.xpose.msra.mxu0 0.0
    %1041 = vmatprep.subr.mxu0 0.0
    %1042 = vmatpush1.xpose.msra.mxu0 0.0
    %1043 = vmatprep.subr.mxu0 0.0
    %1044 = vmatpush1.xpose.msra.mxu0 0.0
    %1045 = vmatprep.subr.mxu0 0.0
    %1046 = vmatpush1.xpose.msra.mxu0 0.0
    %1047 = vmatprep.subr.mxu0 0.0
    %1048 = vmatpush1.xpose.msra.mxu0 0.0
    %1049 = vmatprep.subr.mxu0 0.0
    %1050 = vmatpush1.xpose.msra.mxu0 0.0
    %1051 = vmatprep.subr.mxu0 0.0
    %1052 = vmatpush1.xpose.msra.mxu0 0.0
    %1053 = vmatprep.subr.mxu0 0.0
    %1054 = vmatpush1.xpose.msra.mxu0 0.0
    %1055 = vmatprep.subr.mxu0 0.0
    %1056 = vmatpush1.xpose.msra.mxu0 0.0
    %1057 = vmatprep.subr.mxu0 0.0
    %1058 = vmatpush1.xpose.msra.mxu0 0.0
    %1059 = vmatprep.subr.mxu0 0.0
    %1060 = vmatpush1.xpose.msra.mxu0 0.0
    %1061 = vmatprep.subr.mxu0 0.0
    %1062 = vmatpush1.xpose.msra.mxu0 0.0
    %1063 = vmatprep.subr.mxu0 0.0
    %1064 = vmatpush1.xpose.msra.mxu0 0.0
    %1065 = vmatprep.subr.mxu0 0.0
    %1066 = vmatpush1.xpose.msra.mxu0 0.0
    %1067 = vmatprep.subr.mxu0 0.0
    %1068 = vmatpush1.xpose.msra.mxu0 0.0
    %1069 = vmatprep.subr.mxu0 0.0
    %1070 = vmatpush1.xpose.msra.mxu0 0.0
    %1071 = vmatprep.subr.mxu0 0.0
    %1072 = vmatpush1.xpose.msra.mxu0 0.0
    %1073 = vmatprep.subr.mxu0 0.0
    %1074 = vmatpush1.xpose.msra.mxu0 0.0
    %1075 = vmatprep.subr.mxu0 0.0
    %1076 = vmatpush1.xpose.msra.mxu0 0.0
    %1077 = vmatprep.subr.mxu0 0.0
    %1078 = vmatpush1.xpose.msra.mxu0 0.0
    %1079 = vmatprep.subr.mxu0 0.0
    %1080 = vmatpush1.xpose.msra.mxu0 0.0
    %1081 = vmatprep.subr.mxu0 0.0
    %1082 = vmatpush1.xpose.msra.mxu0 0.0
    %1083 = vmatprep.subr.mxu0 0.0
    %1084 = vmatpush1.xpose.msra.mxu0 0.0
    %1085 = vmatprep.subr.mxu0 0.0
    %1086 = vmatpush1.xpose.msra.mxu0 0.0
    %1087 = vmatprep.subr.mxu0 0.0
    %1088 = vmatpush1.xpose.msra.mxu0 0.0
    %1089 = vmatprep.mubr.f32.mxu0 0.0
    %1090 = vmatmul.mubr.f32.gmra.mrb[0].mxu0 %v1021
    %v1091 = vpop.f32.mrb[0].mxu0
    %v1092 = vadd.f32 %v48, %v1091
    %v1093 = vpop.f32.mrb[0].mxu0
    %1094 = vdwg.mxu0
    %1096 = vrot.lane.b32.xlu0 %v566, 120
    %v1097 = vpop.permute.xlu0 %1096
    %v1098 = vsel %vm712, %v566, 0
    %v1100 = vsel %vm712, %v1097, 0
    %1102 = vmatprep.subr.mxu0 0.0
    %1103 = vmatpush1.xpose.msra.mxu0 %v1100
    %1104 = vmatprep.subr.mxu0 0.0
    %1105 = vmatpush1.xpose.msra.mxu0 0.0
    %1106 = vmatprep.subr.mxu0 0.0
    %1107 = vmatpush1.xpose.msra.mxu0 0.0
    %1108 = vmatprep.subr.mxu0 0.0
    %1109 = vmatpush1.xpose.msra.mxu0 0.0
    %1110 = vmatprep.subr.mxu0 0.0
    %1111 = vmatpush1.xpose.msra.mxu0 0.0
    %1112 = vmatprep.subr.mxu0 0.0
    %1113 = vmatpush1.xpose.msra.mxu0 0.0
    %1114 = vmatprep.subr.mxu0 0.0
    %1115 = vmatpush1.xpose.msra.mxu0 0.0
    %1116 = vmatprep.subr.mxu0 0.0
    %1117 = vmatpush1.xpose.msra.mxu0 0.0
    %1118 = vmatprep.subr.mxu0 0.0
    %1119 = vmatpush1.xpose.msra.mxu0 0.0
    %1120 = vmatprep.subr.mxu0 0.0
    %1121 = vmatpush1.xpose.msra.mxu0 0.0
    %1122 = vmatprep.subr.mxu0 0.0
    %1123 = vmatpush1.xpose.msra.mxu0 0.0
    %1124 = vmatprep.subr.mxu0 0.0
    %1125 = vmatpush1.xpose.msra.mxu0 0.0
    %1126 = vmatprep.subr.mxu0 0.0
    %1127 = vmatpush1.xpose.msra.mxu0 0.0
    %1128 = vmatprep.subr.mxu0 0.0
    %1129 = vmatpush1.xpose.msra.mxu0 0.0
    %1130 = vmatprep.subr.mxu0 0.0
    %1131 = vmatpush1.xpose.msra.mxu0 0.0
    %1132 = vmatprep.subr.mxu0 0.0
    %1133 = vmatpush1.xpose.msra.mxu0 0.0
    %1134 = vmatprep.subr.mxu0 0.0
    %1135 = vmatpush1.xpose.msra.mxu0 0.0
    %1136 = vmatprep.subr.mxu0 0.0
    %1137 = vmatpush1.xpose.msra.mxu0 0.0
    %1138 = vmatprep.subr.mxu0 0.0
    %1139 = vmatpush1.xpose.msra.mxu0 0.0
    %1140 = vmatprep.subr.mxu0 0.0
    %1141 = vmatpush1.xpose.msra.mxu0 0.0
    %1142 = vmatprep.subr.mxu0 0.0
    %1143 = vmatpush1.xpose.msra.mxu0 0.0
    %1144 = vmatprep.subr.mxu0 0.0
    %1145 = vmatpush1.xpose.msra.mxu0 0.0
    %1146 = vmatprep.subr.mxu0 0.0
    %1147 = vmatpush1.xpose.msra.mxu0 0.0
    %1148 = vmatprep.subr.mxu0 0.0
    %1149 = vmatpush1.xpose.msra.mxu0 0.0
    %1150 = vmatprep.subr.mxu0 0.0
    %1151 = vmatpush1.xpose.msra.mxu0 0.0
    %1152 = vmatprep.subr.mxu0 0.0
    %1153 = vmatpush1.xpose.msra.mxu0 0.0
    %1154 = vmatprep.subr.mxu0 0.0
    %1155 = vmatpush1.xpose.msra.mxu0 0.0
    %1156 = vmatprep.subr.mxu0 0.0
    %1157 = vmatpush1.xpose.msra.mxu0 0.0
    %1158 = vmatprep.subr.mxu0 0.0
    %1159 = vmatpush1.xpose.msra.mxu0 0.0
    %1160 = vmatprep.subr.mxu0 0.0
    %1161 = vmatpush1.xpose.msra.mxu0 0.0
    %1162 = vmatprep.subr.mxu0 0.0
    %1163 = vmatpush1.xpose.msra.mxu0 0.0
    %1164 = vmatprep.subr.mxu0 0.0
    %1165 = vmatpush1.xpose.msra.mxu0 0.0
    %1166 = vmatprep.mubr.f32.mxu0 0.0
    %1167 = vmatmul.mubr.f32.gmra.mrb[0].mxu0 %v1098
    %v1168 = vpop.f32.mrb[0].mxu0
    %v1169 = vadd.f32 %v49, %v1168
    %v1170 = vpop.f32.mrb[0].mxu0
    %1171 = vdwg.mxu0
    %1173 = vrot.lane.b32.xlu0 %v636, 120
    %v1174 = vpop.permute.xlu0 %1173
    %v1175 = vsel %vm712, %v636, 0
    %v1177 = vsel %vm712, %v1174, 0
    %1179 = vmatprep.subr.mxu0 0.0
    %1180 = vmatpush1.xpose.msra.mxu0 %v1177
    %1181 = vmatprep.subr.mxu0 0.0
    %1182 = vmatpush1.xpose.msra.mxu0 0.0
    %1183 = vmatprep.subr.mxu0 0.0
    %1184 = vmatpush1.xpose.msra.mxu0 0.0
    %1185 = vmatprep.subr.mxu0 0.0
    %1186 = vmatpush1.xpose.msra.mxu0 0.0
    %1187 = vmatprep.subr.mxu0 0.0
    %1188 = vmatpush1.xpose.msra.mxu0 0.0
    %1189 = vmatprep.subr.mxu0 0.0
    %1190 = vmatpush1.xpose.msra.mxu0 0.0
    %1191 = vmatprep.subr.mxu0 0.0
    %1192 = vmatpush1.xpose.msra.mxu0 0.0
    %1193 = vmatprep.subr.mxu0 0.0
    %1194 = vmatpush1.xpose.msra.mxu0 0.0
    %1195 = vmatprep.subr.mxu0 0.0
    %1196 = vmatpush1.xpose.msra.mxu0 0.0
    %1197 = vmatprep.subr.mxu0 0.0
    %1198 = vmatpush1.xpose.msra.mxu0 0.0
    %1199 = vmatprep.subr.mxu0 0.0
    %1200 = vmatpush1.xpose.msra.mxu0 0.0
    %1201 = vmatprep.subr.mxu0 0.0
    %1202 = vmatpush1.xpose.msra.mxu0 0.0
    %1203 = vmatprep.subr.mxu0 0.0
    %1204 = vmatpush1.xpose.msra.mxu0 0.0
    %1205 = vmatprep.subr.mxu0 0.0
    %1206 = vmatpush1.xpose.msra.mxu0 0.0
    %1207 = vmatprep.subr.mxu0 0.0
    %1208 = vmatpush1.xpose.msra.mxu0 0.0
    %1209 = vmatprep.subr.mxu0 0.0
    %1210 = vmatpush1.xpose.msra.mxu0 0.0
    %1211 = vmatprep.subr.mxu0 0.0
    %1212 = vmatpush1.xpose.msra.mxu0 0.0
    %1213 = vmatprep.subr.mxu0 0.0
    %1214 = vmatpush1.xpose.msra.mxu0 0.0
    %1215 = vmatprep.subr.mxu0 0.0
    %1216 = vmatpush1.xpose.msra.mxu0 0.0
    %1217 = vmatprep.subr.mxu0 0.0
    %1218 = vmatpush1.xpose.msra.mxu0 0.0
    %1219 = vmatprep.subr.mxu0 0.0
    %1220 = vmatpush1.xpose.msra.mxu0 0.0
    %1221 = vmatprep.subr.mxu0 0.0
    %1222 = vmatpush1.xpose.msra.mxu0 0.0
    %1223 = vmatprep.subr.mxu0 0.0
    %1224 = vmatpush1.xpose.msra.mxu0 0.0
    %1225 = vmatprep.subr.mxu0 0.0
    %1226 = vmatpush1.xpose.msra.mxu0 0.0
    %1227 = vmatprep.subr.mxu0 0.0
    %1228 = vmatpush1.xpose.msra.mxu0 0.0
    %1229 = vmatprep.subr.mxu0 0.0
    %1230 = vmatpush1.xpose.msra.mxu0 0.0
    %1231 = vmatprep.subr.mxu0 0.0
    %1232 = vmatpush1.xpose.msra.mxu0 0.0
    %1233 = vmatprep.subr.mxu0 0.0
    %1234 = vmatpush1.xpose.msra.mxu0 0.0
    %1235 = vmatprep.subr.mxu0 0.0
    %1236 = vmatpush1.xpose.msra.mxu0 0.0
    %1237 = vmatprep.subr.mxu0 0.0
    %1238 = vmatpush1.xpose.msra.mxu0 0.0
    %1239 = vmatprep.subr.mxu0 0.0
    %1240 = vmatpush1.xpose.msra.mxu0 0.0
    %1241 = vmatprep.subr.mxu0 0.0
    %1242 = vmatpush1.xpose.msra.mxu0 0.0
    %1243 = vmatprep.mubr.f32.mxu0 0.0
    %1244 = vmatmul.mubr.f32.gmra.mrb[0].mxu0 %v1175
    %v1245 = vpop.f32.mrb[0].mxu0
    %v1246 = vadd.f32 %v50, %v1245
    %v1247 = vpop.f32.mrb[0].mxu0
    %1248 = vdwg.mxu0
    %1250 = vrot.lane.b32.xlu0 %v706, 120
    %v1251 = vpop.permute.xlu0 %1250
    %v1252 = vsel %vm712, %v706, 0
    %v1254 = vsel %vm712, %v1251, 0
    %1256 = vmatprep.subr.mxu0 0.0
    %1257 = vmatpush1.xpose.msra.mxu0 %v1254
    %1258 = vmatprep.subr.mxu0 0.0
    %1259 = vmatpush1.xpose.msra.mxu0 0.0
    %1260 = vmatprep.subr.mxu0 0.0
    %1261 = vmatpush1.xpose.msra.mxu0 0.0
    %1262 = vmatprep.subr.mxu0 0.0
    %1263 = vmatpush1.xpose.msra.mxu0 0.0
    %1264 = vmatprep.subr.mxu0 0.0
    %1265 = vmatpush1.xpose.msra.mxu0 0.0
    %1266 = vmatprep.subr.mxu0 0.0
    %1267 = vmatpush1.xpose.msra.mxu0 0.0
    %1268 = vmatprep.subr.mxu0 0.0
    %1269 = vmatpush1.xpose.msra.mxu0 0.0
    %1270 = vmatprep.subr.mxu0 0.0
    %1271 = vmatpush1.xpose.msra.mxu0 0.0
    %1272 = vmatprep.subr.mxu0 0.0
    %1273 = vmatpush1.xpose.msra.mxu0 0.0
    %1274 = vmatprep.subr.mxu0 0.0
    %1275 = vmatpush1.xpose.msra.mxu0 0.0
    %1276 = vmatprep.subr.mxu0 0.0
    %1277 = vmatpush1.xpose.msra.mxu0 0.0
    %1278 = vmatprep.subr.mxu0 0.0
    %1279 = vmatpush1.xpose.msra.mxu0 0.0
    %1280 = vmatprep.subr.mxu0 0.0
    %1281 = vmatpush1.xpose.msra.mxu0 0.0
    %1282 = vmatprep.subr.mxu0 0.0
    %1283 = vmatpush1.xpose.msra.mxu0 0.0
    %1284 = vmatprep.subr.mxu0 0.0
    %1285 = vmatpush1.xpose.msra.mxu0 0.0
    %1286 = vmatprep.subr.mxu0 0.0
    %1287 = vmatpush1.xpose.msra.mxu0 0.0
    %1288 = vmatprep.subr.mxu0 0.0
    %1289 = vmatpush1.xpose.msra.mxu0 0.0
    %1290 = vmatprep.subr.mxu0 0.0
    %1291 = vmatpush1.xpose.msra.mxu0 0.0
    %1292 = vmatprep.subr.mxu0 0.0
    %1293 = vmatpush1.xpose.msra.mxu0 0.0
    %1294 = vmatprep.subr.mxu0 0.0
    %1295 = vmatpush1.xpose.msra.mxu0 0.0
    %1296 = vmatprep.subr.mxu0 0.0
    %1297 = vmatpush1.xpose.msra.mxu0 0.0
    %1298 = vmatprep.subr.mxu0 0.0
    %1299 = vmatpush1.xpose.msra.mxu0 0.0
    %1300 = vmatprep.subr.mxu0 0.0
    %1301 = vmatpush1.xpose.msra.mxu0 0.0
    %1302 = vmatprep.subr.mxu0 0.0
    %1303 = vmatpush1.xpose.msra.mxu0 0.0
    %1304 = vmatprep.subr.mxu0 0.0
    %1305 = vmatpush1.xpose.msra.mxu0 0.0
    %1306 = vmatprep.subr.mxu0 0.0
    %1307 = vmatpush1.xpose.msra.mxu0 0.0
    %1308 = vmatprep.subr.mxu0 0.0
    %1309 = vmatpush1.xpose.msra.mxu0 0.0
    %1310 = vmatprep.subr.mxu0 0.0
    %1311 = vmatpush1.xpose.msra.mxu0 0.0
    %1312 = vmatprep.subr.mxu0 0.0
    %1313 = vmatpush1.xpose.msra.mxu0 0.0
    %1314 = vmatprep.subr.mxu0 0.0
    %1315 = vmatpush1.xpose.msra.mxu0 0.0
    %1316 = vmatprep.subr.mxu0 0.0
    %1317 = vmatpush1.xpose.msra.mxu0 0.0
    %1318 = vmatprep.subr.mxu0 0.0
    %1319 = vmatpush1.xpose.msra.mxu0 0.0
    %1320 = vmatprep.mubr.f32.mxu0 0.0
    %1321 = vmatmul.mubr.f32.gmra.mrb[0].mxu0 %v1252
    %v1322 = vpop.f32.mrb[0].mxu0
    %v1323 = vadd.f32 %v51, %v1322
    %v1324 = vpop.f32.mrb[0].mxu0
    %1325 = vdwg.mxu0
    %v1326 = vsel %vm712, %v784, -inf
    %1327 = vmax.xlane.f32.xlu0 %v1326
    %v1328 = vpop.xlane.xlu0 %1327
    %v1329 = vsel %vm712, %v861, -inf
    %1330 = vmax.xlane.f32.xlu0 %v1329
    %v1331 = vpop.xlane.xlu0 %1330
    %v1332 = vsel %vm712, %v938, -inf
    %1333 = vmax.xlane.f32.xlu0 %v1332
    %v1334 = vpop.xlane.xlu0 %1333
    %v1335 = vsel %vm712, %v1015, -inf
    %1336 = vmax.xlane.f32.xlu0 %v1335
    %v1337 = vpop.xlane.xlu0 %1336
    %v1338 = vsel %vm712, %v1092, -inf
    %1339 = vmax.xlane.f32.xlu0 %v1338
    %v1340 = vpop.xlane.xlu0 %1339
    %v1341 = vsel %vm712, %v1169, -inf
    %1342 = vmax.xlane.f32.xlu0 %v1341
    %v1343 = vpop.xlane.xlu0 %1342
    %v1344 = vsel %vm712, %v1246, -inf
    %1345 = vmax.xlane.f32.xlu0 %v1344
    %v1346 = vpop.xlane.xlu0 %1345
    %v1347 = vsel %vm712, %v1323, -inf
    %1348 = vmax.xlane.f32.xlu0 %v1347
    %v1349 = vpop.xlane.xlu0 %1348
    %v1350 = vsub.f32 %v784, %v1328
    %v1351 = vsub.f32 %v861, %v1331
    %v1352 = vsub.f32 %v938, %v1334
    %v1353 = vsub.f32 %v1015, %v1337
    %v1354 = vsub.f32 %v1092, %v1340
    %v1355 = vsub.f32 %v1169, %v1343
    %v1356 = vsub.f32 %v1246, %v1346
    %v1357 = vsub.f32 %v1323, %v1349
    %v1358 = vmul.f32 %v1350, 1.442695
    %v1359 = vpow.pop %v1358
    %v1360 = vmul.f32 %v1351, 1.442695
    %v1361 = vpow.pop %v1360
    %v1362 = vmul.f32 %v1352, 1.442695
    %v1363 = vpow.pop %v1362
    %v1364 = vmul.f32 %v1353, 1.442695
    %v1365 = vpow.pop %v1364
    %v1366 = vmul.f32 %v1354, 1.442695
    %v1367 = vpow.pop %v1366
    %v1368 = vmul.f32 %v1355, 1.442695
    %v1369 = vpow.pop %v1368
    %v1370 = vmul.f32 %v1356, 1.442695
    %v1371 = vpow.pop %v1370
    %v1372 = vmul.f32 %v1357, 1.442695
    %v1373 = vpow.pop %v1372
    %v1374 = vsel %vm712, %v1359, 0.0
    %1375 = vadd.xlane.f32.xlu0 %v1374
    %v1376 = vpop.xlane.xlu0 %1375
    %v1377 = vsel %vm712, %v1361, 0.0
    %1378 = vadd.xlane.f32.xlu0 %v1377
    %v1379 = vpop.xlane.xlu0 %1378
    %v1380 = vsel %vm712, %v1363, 0.0
    %1381 = vadd.xlane.f32.xlu0 %v1380
    %v1382 = vpop.xlane.xlu0 %1381
    %v1383 = vsel %vm712, %v1365, 0.0
    %1384 = vadd.xlane.f32.xlu0 %v1383
    %v1385 = vpop.xlane.xlu0 %1384
    %v1386 = vsel %vm712, %v1367, 0.0
    %1387 = vadd.xlane.f32.xlu0 %v1386
    %v1388 = vpop.xlane.xlu0 %1387
    %v1389 = vsel %vm712, %v1369, 0.0
    %1390 = vadd.xlane.f32.xlu0 %v1389
    %v1391 = vpop.xlane.xlu0 %1390
    %v1392 = vsel %vm712, %v1371, 0.0
    %1393 = vadd.xlane.f32.xlu0 %v1392
    %v1394 = vpop.xlane.xlu0 %1393
    %v1395 = vsel %vm712, %v1373, 0.0
    %1396 = vadd.xlane.f32.xlu0 %v1395
    %v1397 = vpop.xlane.xlu0 %1396
    %v1398 = vrcp.pop %v1376
    %v1399 = vmul.f32 %v1359, %v1398
    %v1400 = vrcp.pop %v1379
    %v1401 = vmul.f32 %v1361, %v1400
    %v1402 = vrcp.pop %v1382
    %v1403 = vmul.f32 %v1363, %v1402
    %v1404 = vrcp.pop %v1385
    %v1405 = vmul.f32 %v1365, %v1404
    %v1406 = vrcp.pop %v1388
    %v1407 = vmul.f32 %v1367, %v1406
    %v1408 = vrcp.pop %v1391
    %v1409 = vmul.f32 %v1369, %v1408
    %v1410 = vrcp.pop %v1394
    %v1411 = vmul.f32 %v1371, %v1410
    %v1412 = vrcp.pop %v1397
    %v1413 = vmul.f32 %v1373, %v1412
    %1414 = vrot.lane.b32.xlu0 %v213, 112
    %v1415 = vpop.permute.xlu0 %1414
    %v1418 = vsel %vm712, %v1399, 0
    %1420 = vmatprep.subr.mxu0 0.0
    %1421 = vmatpush1.msra.mxu0 %v1415
    %1422 = vmatprep.subr.mxu0 0.0
    %1423 = vmatpush1.msra.mxu0 0.0
    %1424 = vmatprep.subr.mxu0 0.0
    %1425 = vmatpush1.msra.mxu0 0.0
    %1426 = vmatprep.subr.mxu0 0.0
    %1427 = vmatpush1.msra.mxu0 0.0
    %1428 = vmatprep.subr.mxu0 0.0
    %1429 = vmatpush1.msra.mxu0 0.0
    %1430 = vmatprep.subr.mxu0 0.0
    %1431 = vmatpush1.msra.mxu0 0.0
    %1432 = vmatprep.subr.mxu0 0.0
    %1433 = vmatpush1.msra.mxu0 0.0
    %1434 = vmatprep.subr.mxu0 0.0
    %1435 = vmatpush1.msra.mxu0 0.0
    %1436 = vmatprep.subr.mxu0 0.0
    %1437 = vmatpush1.msra.mxu0 0.0
    %1438 = vmatprep.subr.mxu0 0.0
    %1439 = vmatpush1.msra.mxu0 0.0
    %1440 = vmatprep.subr.mxu0 0.0
    %1441 = vmatpush1.msra.mxu0 0.0
    %1442 = vmatprep.subr.mxu0 0.0
    %1443 = vmatpush1.msra.mxu0 0.0
    %1444 = vmatprep.subr.mxu0 0.0
    %1445 = vmatpush1.msra.mxu0 0.0
    %1446 = vmatprep.subr.mxu0 0.0
    %1447 = vmatpush1.msra.mxu0 0.0
    %1448 = vmatprep.subr.mxu0 0.0
    %1449 = vmatpush1.msra.mxu0 0.0
    %1450 = vmatprep.subr.mxu0 0.0
    %1451 = vmatpush1.msra.mxu0 0.0
    %1452 = vmatprep.subr.mxu0 0.0
    %1453 = vmatpush1.msra.mxu0 0.0
    %1454 = vmatprep.subr.mxu0 0.0
    %1455 = vmatpush1.msra.mxu0 0.0
    %1456 = vmatprep.subr.mxu0 0.0
    %1457 = vmatpush1.msra.mxu0 0.0
    %1458 = vmatprep.subr.mxu0 0.0
    %1459 = vmatpush1.msra.mxu0 0.0
    %1460 = vmatprep.subr.mxu0 0.0
    %1461 = vmatpush1.msra.mxu0 0.0
    %1462 = vmatprep.subr.mxu0 0.0
    %1463 = vmatpush1.msra.mxu0 0.0
    %1464 = vmatprep.subr.mxu0 0.0
    %1465 = vmatpush1.msra.mxu0 0.0
    %1466 = vmatprep.subr.mxu0 0.0
    %1467 = vmatpush1.msra.mxu0 0.0
    %1468 = vmatprep.subr.mxu0 0.0
    %1469 = vmatpush1.msra.mxu0 0.0
    %1470 = vmatprep.subr.mxu0 0.0
    %1471 = vmatpush1.msra.mxu0 0.0
    %1472 = vmatprep.subr.mxu0 0.0
    %1473 = vmatpush1.msra.mxu0 0.0
    %1474 = vmatprep.subr.mxu0 0.0
    %1475 = vmatpush1.msra.mxu0 0.0
    %1476 = vmatprep.subr.mxu0 0.0
    %1477 = vmatpush1.msra.mxu0 0.0
    %1478 = vmatprep.subr.mxu0 0.0
    %1479 = vmatpush1.msra.mxu0 0.0
    %1480 = vmatprep.subr.mxu0 0.0
    %1481 = vmatpush1.msra.mxu0 0.0
    %1482 = vmatprep.subr.mxu0 0.0
    %1483 = vmatpush1.msra.mxu0 0.0
    %1484 = vmatprep.mubr.f32.mxu0 0.0
    %1485 = vmatmul.mubr.f32.gmra.mrb[0].mxu0 %v1418
    %v1486 = vpop.f32.mrb[0].mxu0
    %v1487 = vadd.f32 0.0, %v1486
    %v1488 = vpop.f32.mrb[0].mxu0
    %1489 = vdwg.mxu0
    %1490 = vrot.lane.b32.xlu0 %v283, 112
    %v1491 = vpop.permute.xlu0 %1490
    %v1494 = vsel %vm712, %v1401, 0
    %1496 = vmatprep.subr.mxu0 0.0
    %1497 = vmatpush1.msra.mxu0 %v1491
    %1498 = vmatprep.subr.mxu0 0.0
    %1499 = vmatpush1.msra.mxu0 0.0
    %1500 = vmatprep.subr.mxu0 0.0
    %1501 = vmatpush1.msra.mxu0 0.0
    %1502 = vmatprep.subr.mxu0 0.0
    %1503 = vmatpush1.msra.mxu0 0.0
    %1504 = vmatprep.subr.mxu0 0.0
    %1505 = vmatpush1.msra.mxu0 0.0
    %1506 = vmatprep.subr.mxu0 0.0
    %1507 = vmatpush1.msra.mxu0 0.0
    %1508 = vmatprep.subr.mxu0 0.0
    %1509 = vmatpush1.msra.mxu0 0.0
    %1510 = vmatprep.subr.mxu0 0.0
    %1511 = vmatpush1.msra.mxu0 0.0
    %1512 = vmatprep.subr.mxu0 0.0
    %1513 = vmatpush1.msra.mxu0 0.0
    %1514 = vmatprep.subr.mxu0 0.0
    %1515 = vmatpush1.msra.mxu0 0.0
    %1516 = vmatprep.subr.mxu0 0.0
    %1517 = vmatpush1.msra.mxu0 0.0
    %1518 = vmatprep.subr.mxu0 0.0
    %1519 = vmatpush1.msra.mxu0 0.0
    %1520 = vmatprep.subr.mxu0 0.0
    %1521 = vmatpush1.msra.mxu0 0.0
    %1522 = vmatprep.subr.mxu0 0.0
    %1523 = vmatpush1.msra.mxu0 0.0
    %1524 = vmatprep.subr.mxu0 0.0
    %1525 = vmatpush1.msra.mxu0 0.0
    %1526 = vmatprep.subr.mxu0 0.0
    %1527 = vmatpush1.msra.mxu0 0.0
    %1528 = vmatprep.subr.mxu0 0.0
    %1529 = vmatpush1.msra.mxu0 0.0
    %1530 = vmatprep.subr.mxu0 0.0
    %1531 = vmatpush1.msra.mxu0 0.0
    %1532 = vmatprep.subr.mxu0 0.0
    %1533 = vmatpush1.msra.mxu0 0.0
    %1534 = vmatprep.subr.mxu0 0.0
    %1535 = vmatpush1.msra.mxu0 0.0
    %1536 = vmatprep.subr.mxu0 0.0
    %1537 = vmatpush1.msra.mxu0 0.0
    %1538 = vmatprep.subr.mxu0 0.0
    %1539 = vmatpush1.msra.mxu0 0.0
    %1540 = vmatprep.subr.mxu0 0.0
    %1541 = vmatpush1.msra.mxu0 0.0
    %1542 = vmatprep.subr.mxu0 0.0
    %1543 = vmatpush1.msra.mxu0 0.0
    %1544 = vmatprep.subr.mxu0 0.0
    %1545 = vmatpush1.msra.mxu0 0.0
    %1546 = vmatprep.subr.mxu0 0.0
    %1547 = vmatpush1.msra.mxu0 0.0
    %1548 = vmatprep.subr.mxu0 0.0
    %1549 = vmatpush1.msra.mxu0 0.0
    %1550 = vmatprep.subr.mxu0 0.0
    %1551 = vmatpush1.msra.mxu0 0.0
    %1552 = vmatprep.subr.mxu0 0.0
    %1553 = vmatpush1.msra.mxu0 0.0
    %1554 = vmatprep.subr.mxu0 0.0
    %1555 = vmatpush1.msra.mxu0 0.0
    %1556 = vmatprep.subr.mxu0 0.0
    %1557 = vmatpush1.msra.mxu0 0.0
    %1558 = vmatprep.subr.mxu0 0.0
    %1559 = vmatpush1.msra.mxu0 0.0
    %1560 = vmatprep.mubr.f32.mxu0 0.0
    %1561 = vmatmul.mubr.f32.gmra.mrb[0].mxu0 %v1494
    %v1562 = vpop.f32.mrb[0].mxu0
    %v1563 = vadd.f32 0.0, %v1562
    %v1564 = vpop.f32.mrb[0].mxu0
    %1565 = vdwg.mxu0
    %1566 = vrot.lane.b32.xlu0 %v353, 112
    %v1567 = vpop.permute.xlu0 %1566
    %v1570 = vsel %vm712, %v1403, 0
    %1572 = vmatprep.subr.mxu0 0.0
    %1573 = vmatpush1.msra.mxu0 %v1567
    %1574 = vmatprep.subr.mxu0 0.0
    %1575 = vmatpush1.msra.mxu0 0.0
    %1576 = vmatprep.subr.mxu0 0.0
    %1577 = vmatpush1.msra.mxu0 0.0
    %1578 = vmatprep.subr.mxu0 0.0
    %1579 = vmatpush1.msra.mxu0 0.0
    %1580 = vmatprep.subr.mxu0 0.0
    %1581 = vmatpush1.msra.mxu0 0.0
    %1582 = vmatprep.subr.mxu0 0.0
    %1583 = vmatpush1.msra.mxu0 0.0
    %1584 = vmatprep.subr.mxu0 0.0
    %1585 = vmatpush1.msra.mxu0 0.0
    %1586 = vmatprep.subr.mxu0 0.0
    %1587 = vmatpush1.msra.mxu0 0.0
    %1588 = vmatprep.subr.mxu0 0.0
    %1589 = vmatpush1.msra.mxu0 0.0
    %1590 = vmatprep.subr.mxu0 0.0
    %1591 = vmatpush1.msra.mxu0 0.0
    %1592 = vmatprep.subr.mxu0 0.0
    %1593 = vmatpush1.msra.mxu0 0.0
    %1594 = vmatprep.subr.mxu0 0.0
    %1595 = vmatpush1.msra.mxu0 0.0
    %1596 = vmatprep.subr.mxu0 0.0
    %1597 = vmatpush1.msra.mxu0 0.0
    %1598 = vmatprep.subr.mxu0 0.0
    %1599 = vmatpush1.msra.mxu0 0.0
    %1600 = vmatprep.subr.mxu0 0.0
    %1601 = vmatpush1.msra.mxu0 0.0
    %1602 = vmatprep.subr.mxu0 0.0
    %1603 = vmatpush1.msra.mxu0 0.0
    %1604 = vmatprep.subr.mxu0 0.0
    %1605 = vmatpush1.msra.mxu0 0.0
    %1606 = vmatprep.subr.mxu0 0.0
    %1607 = vmatpush1.msra.mxu0 0.0
    %1608 = vmatprep.subr.mxu0 0.0
    %1609 = vmatpush1.msra.mxu0 0.0
    %1610 = vmatprep.subr.mxu0 0.0
    %1611 = vmatpush1.msra.mxu0 0.0
    %1612 = vmatprep.subr.mxu0 0.0
    %1613 = vmatpush1.msra.mxu0 0.0
    %1614 = vmatprep.subr.mxu0 0.0
    %1615 = vmatpush1.msra.mxu0 0.0
    %1616 = vmatprep.subr.mxu0 0.0
    %1617 = vmatpush1.msra.mxu0 0.0
    %1618 = vmatprep.subr.mxu0 0.0
    %1619 = vmatpush1.msra.mxu0 0.0
    %1620 = vmatprep.subr.mxu0 0.0
    %1621 = vmatpush1.msra.mxu0 0.0
    %1622 = vmatprep.subr.mxu0 0.0
    %1623 = vmatpush1.msra.mxu0 0.0
    %1624 = vmatprep.subr.mxu0 0.0
    %1625 = vmatpush1.msra.mxu0 0.0
    %1626 = vmatprep.subr.mxu0 0.0
    %1627 = vmatpush1.msra.mxu0 0.0
    %1628 = vmatprep.subr.mxu0 0.0
    %1629 = vmatpush1.msra.mxu0 0.0
    %1630 = vmatprep.subr.mxu0 0.0
    %1631 = vmatpush1.msra.mxu0 0.0
    %1632 = vmatprep.subr.mxu0 0.0
    %1633 = vmatpush1.msra.mxu0 0.0
    %1634 = vmatprep.subr.mxu0 0.0
    %1635 = vmatpush1.msra.mxu0 0.0
    %1636 = vmatprep.mubr.f32.mxu0 0.0
    %1637 = vmatmul.mubr.f32.gmra.mrb[0].mxu0 %v1570
    %v1638 = vpop.f32.mrb[0].mxu0
    %v1639 = vadd.f32 0.0, %v1638
    %v1640 = vpop.f32.mrb[0].mxu0
    %1641 = vdwg.mxu0
    %1642 = vrot.lane.b32.xlu0 %v423, 112
    %v1643 = vpop.permute.xlu0 %1642
    %v1646 = vsel %vm712, %v1405, 0
    %1648 = vmatprep.subr.mxu0 0.0
    %1649 = vmatpush1.msra.mxu0 %v1643
    %1650 = vmatprep.subr.mxu0 0.0
    %1651 = vmatpush1.msra.mxu0 0.0
    %1652 = vmatprep.subr.mxu0 0.0
    %1653 = vmatpush1.msra.mxu0 0.0
    %1654 = vmatprep.subr.mxu0 0.0
    %1655 = vmatpush1.msra.mxu0 0.0
    %1656 = vmatprep.subr.mxu0 0.0
    %1657 = vmatpush1.msra.mxu0 0.0
    %1658 = vmatprep.subr.mxu0 0.0
    %1659 = vmatpush1.msra.mxu0 0.0
    %1660 = vmatprep.subr.mxu0 0.0
    %1661 = vmatpush1.msra.mxu0 0.0
    %1662 = vmatprep.subr.mxu0 0.0
    %1663 = vmatpush1.msra.mxu0 0.0
    %1664 = vmatprep.subr.mxu0 0.0
    %1665 = vmatpush1.msra.mxu0 0.0
    %1666 = vmatprep.subr.mxu0 0.0
    %1667 = vmatpush1.msra.mxu0 0.0
    %1668 = vmatprep.subr.mxu0 0.0
    %1669 = vmatpush1.msra.mxu0 0.0
    %1670 = vmatprep.subr.mxu0 0.0
    %1671 = vmatpush1.msra.mxu0 0.0
    %1672 = vmatprep.subr.mxu0 0.0
    %1673 = vmatpush1.msra.mxu0 0.0
    %1674 = vmatprep.subr.mxu0 0.0
    %1675 = vmatpush1.msra.mxu0 0.0
    %1676 = vmatprep.subr.mxu0 0.0
    %1677 = vmatpush1.msra.mxu0 0.0
    %1678 = vmatprep.subr.mxu0 0.0
    %1679 = vmatpush1.msra.mxu0 0.0
    %1680 = vmatprep.subr.mxu0 0.0
    %1681 = vmatpush1.msra.mxu0 0.0
    %1682 = vmatprep.subr.mxu0 0.0
    %1683 = vmatpush1.msra.mxu0 0.0
    %1684 = vmatprep.subr.mxu0 0.0
    %1685 = vmatpush1.msra.mxu0 0.0
    %1686 = vmatprep.subr.mxu0 0.0
    %1687 = vmatpush1.msra.mxu0 0.0
    %1688 = vmatprep.subr.mxu0 0.0
    %1689 = vmatpush1.msra.mxu0 0.0
    %1690 = vmatprep.subr.mxu0 0.0
    %1691 = vmatpush1.msra.mxu0 0.0
    %1692 = vmatprep.subr.mxu0 0.0
    %1693 = vmatpush1.msra.mxu0 0.0
    %1694 = vmatprep.subr.mxu0 0.0
    %1695 = vmatpush1.msra.mxu0 0.0
    %1696 = vmatprep.subr.mxu0 0.0
    %1697 = vmatpush1.msra.mxu0 0.0
    %1698 = vmatprep.subr.mxu0 0.0
    %1699 = vmatpush1.msra.mxu0 0.0
    %1700 = vmatprep.subr.mxu0 0.0
    %1701 = vmatpush1.msra.mxu0 0.0
    %1702 = vmatprep.subr.mxu0 0.0
    %1703 = vmatpush1.msra.mxu0 0.0
    %1704 = vmatprep.subr.mxu0 0.0
    %1705 = vmatpush1.msra.mxu0 0.0
    %1706 = vmatprep.subr.mxu0 0.0
    %1707 = vmatpush1.msra.mxu0 0.0
    %1708 = vmatprep.subr.mxu0 0.0
    %1709 = vmatpush1.msra.mxu0 0.0
    %1710 = vmatprep.subr.mxu0 0.0
    %1711 = vmatpush1.msra.mxu0 0.0
    %1712 = vmatprep.mubr.f32.mxu0 0.0
    %1713 = vmatmul.mubr.f32.gmra.mrb[0].mxu0 %v1646
    %v1714 = vpop.f32.mrb[0].mxu0
    %v1715 = vadd.f32 0.0, %v1714
    %v1716 = vpop.f32.mrb[0].mxu0
    %1717 = vdwg.mxu0
    %1718 = vrot.lane.b32.xlu0 %v496, 112
    %v1719 = vpop.permute.xlu0 %1718
    %v1722 = vsel %vm712, %v1407, 0
    %1724 = vmatprep.subr.mxu0 0.0
    %1725 = vmatpush1.msra.mxu0 %v1719
    %1726 = vmatprep.subr.mxu0 0.0
    %1727 = vmatpush1.msra.mxu0 0.0
    %1728 = vmatprep.subr.mxu0 0.0
    %1729 = vmatpush1.msra.mxu0 0.0
    %1730 = vmatprep.subr.mxu0 0.0
    %1731 = vmatpush1.msra.mxu0 0.0
    %1732 = vmatprep.subr.mxu0 0.0
    %1733 = vmatpush1.msra.mxu0 0.0
    %1734 = vmatprep.subr.mxu0 0.0
    %1735 = vmatpush1.msra.mxu0 0.0
    %1736 = vmatprep.subr.mxu0 0.0
    %1737 = vmatpush1.msra.mxu0 0.0
    %1738 = vmatprep.subr.mxu0 0.0
    %1739 = vmatpush1.msra.mxu0 0.0
    %1740 = vmatprep.subr.mxu0 0.0
    %1741 = vmatpush1.msra.mxu0 0.0
    %1742 = vmatprep.subr.mxu0 0.0
    %1743 = vmatpush1.msra.mxu0 0.0
    %1744 = vmatprep.subr.mxu0 0.0
    %1745 = vmatpush1.msra.mxu0 0.0
    %1746 = vmatprep.subr.mxu0 0.0
    %1747 = vmatpush1.msra.mxu0 0.0
    %1748 = vmatprep.subr.mxu0 0.0
    %1749 = vmatpush1.msra.mxu0 0.0
    %1750 = vmatprep.subr.mxu0 0.0
    %1751 = vmatpush1.msra.mxu0 0.0
    %1752 = vmatprep.subr.mxu0 0.0
    %1753 = vmatpush1.msra.mxu0 0.0
    %1754 = vmatprep.subr.mxu0 0.0
    %1755 = vmatpush1.msra.mxu0 0.0
    %1756 = vmatprep.subr.mxu0 0.0
    %1757 = vmatpush1.msra.mxu0 0.0
    %1758 = vmatprep.subr.mxu0 0.0
    %1759 = vmatpush1.msra.mxu0 0.0
    %1760 = vmatprep.subr.mxu0 0.0
    %1761 = vmatpush1.msra.mxu0 0.0
    %1762 = vmatprep.subr.mxu0 0.0
    %1763 = vmatpush1.msra.mxu0 0.0
    %1764 = vmatprep.subr.mxu0 0.0
    %1765 = vmatpush1.msra.mxu0 0.0
    %1766 = vmatprep.subr.mxu0 0.0
    %1767 = vmatpush1.msra.mxu0 0.0
    %1768 = vmatprep.subr.mxu0 0.0
    %1769 = vmatpush1.msra.mxu0 0.0
    %1770 = vmatprep.subr.mxu0 0.0
    %1771 = vmatpush1.msra.mxu0 0.0
    %1772 = vmatprep.subr.mxu0 0.0
    %1773 = vmatpush1.msra.mxu0 0.0
    %1774 = vmatprep.subr.mxu0 0.0
    %1775 = vmatpush1.msra.mxu0 0.0
    %1776 = vmatprep.subr.mxu0 0.0
    %1777 = vmatpush1.msra.mxu0 0.0
    %1778 = vmatprep.subr.mxu0 0.0
    %1779 = vmatpush1.msra.mxu0 0.0
    %1780 = vmatprep.subr.mxu0 0.0
    %1781 = vmatpush1.msra.mxu0 0.0
    %1782 = vmatprep.subr.mxu0 0.0
    %1783 = vmatpush1.msra.mxu0 0.0
    %1784 = vmatprep.subr.mxu0 0.0
    %1785 = vmatpush1.msra.mxu0 0.0
    %1786 = vmatprep.subr.mxu0 0.0
    %1787 = vmatpush1.msra.mxu0 0.0
    %1788 = vmatprep.mubr.f32.mxu0 0.0
    %1789 = vmatmul.mubr.f32.gmra.mrb[0].mxu0 %v1722
    %v1790 = vpop.f32.mrb[0].mxu0
    %v1791 = vadd.f32 0.0, %v1790
    %v1792 = vpop.f32.mrb[0].mxu0
    %1793 = vdwg.mxu0
    %1794 = vrot.lane.b32.xlu0 %v566, 112
    %v1795 = vpop.permute.xlu0 %1794
    %v1798 = vsel %vm712, %v1409, 0
    %1800 = vmatprep.subr.mxu0 0.0
    %1801 = vmatpush1.msra.mxu0 %v1795
    %1802 = vmatprep.subr.mxu0 0.0
    %1803 = vmatpush1.msra.mxu0 0.0
    %1804 = vmatprep.subr.mxu0 0.0
    %1805 = vmatpush1.msra.mxu0 0.0
    %1806 = vmatprep.subr.mxu0 0.0
    %1807 = vmatpush1.msra.mxu0 0.0
    %1808 = vmatprep.subr.mxu0 0.0
    %1809 = vmatpush1.msra.mxu0 0.0
    %1810 = vmatprep.subr.mxu0 0.0
    %1811 = vmatpush1.msra.mxu0 0.0
    %1812 = vmatprep.subr.mxu0 0.0
    %1813 = vmatpush1.msra.mxu0 0.0
    %1814 = vmatprep.subr.mxu0 0.0
    %1815 = vmatpush1.msra.mxu0 0.0
    %1816 = vmatprep.subr.mxu0 0.0
    %1817 = vmatpush1.msra.mxu0 0.0
    %1818 = vmatprep.subr.mxu0 0.0
    %1819 = vmatpush1.msra.mxu0 0.0
    %1820 = vmatprep.subr.mxu0 0.0
    %1821 = vmatpush1.msra.mxu0 0.0
    %1822 = vmatprep.subr.mxu0 0.0
    %1823 = vmatpush1.msra.mxu0 0.0
    %1824 = vmatprep.subr.mxu0 0.0
    %1825 = vmatpush1.msra.mxu0 0.0
    %1826 = vmatprep.subr.mxu0 0.0
    %1827 = vmatpush1.msra.mxu0 0.0
    %1828 = vmatprep.subr.mxu0 0.0
    %1829 = vmatpush1.msra.mxu0 0.0
    %1830 = vmatprep.subr.mxu0 0.0
    %1831 = vmatpush1.msra.mxu0 0.0
    %1832 = vmatprep.subr.mxu0 0.0
    %1833 = vmatpush1.msra.mxu0 0.0
    %1834 = vmatprep.subr.mxu0 0.0
    %1835 = vmatpush1.msra.mxu0 0.0
    %1836 = vmatprep.subr.mxu0 0.0
    %1837 = vmatpush1.msra.mxu0 0.0
    %1838 = vmatprep.subr.mxu0 0.0
    %1839 = vmatpush1.msra.mxu0 0.0
    %1840 = vmatprep.subr.mxu0 0.0
    %1841 = vmatpush1.msra.mxu0 0.0
    %1842 = vmatprep.subr.mxu0 0.0
    %1843 = vmatpush1.msra.mxu0 0.0
    %1844 = vmatprep.subr.mxu0 0.0
    %1845 = vmatpush1.msra.mxu0 0.0
    %1846 = vmatprep.subr.mxu0 0.0
    %1847 = vmatpush1.msra.mxu0 0.0
    %1848 = vmatprep.subr.mxu0 0.0
    %1849 = vmatpush1.msra.mxu0 0.0
    %1850 = vmatprep.subr.mxu0 0.0
    %1851 = vmatpush1.msra.mxu0 0.0
    %1852 = vmatprep.subr.mxu0 0.0
    %1853 = vmatpush1.msra.mxu0 0.0
    %1854 = vmatprep.subr.mxu0 0.0
    %1855 = vmatpush1.msra.mxu0 0.0
    %1856 = vmatprep.subr.mxu0 0.0
    %1857 = vmatpush1.msra.mxu0 0.0
    %1858 = vmatprep.subr.mxu0 0.0
    %1859 = vmatpush1.msra.mxu0 0.0
    %1860 = vmatprep.subr.mxu0 0.0
    %1861 = vmatpush1.msra.mxu0 0.0
    %1862 = vmatprep.subr.mxu0 0.0
    %1863 = vmatpush1.msra.mxu0 0.0
    %1864 = vmatprep.mubr.f32.mxu0 0.0
    %1865 = vmatmul.mubr.f32.gmra.mrb[0].mxu0 %v1798
    %v1866 = vpop.f32.mrb[0].mxu0
    %v1867 = vadd.f32 0.0, %v1866
    %v1868 = vpop.f32.mrb[0].mxu0
    %1869 = vdwg.mxu0
    %1870 = vrot.lane.b32.xlu0 %v636, 112
    %v1871 = vpop.permute.xlu0 %1870
    %v1874 = vsel %vm712, %v1411, 0
    %1876 = vmatprep.subr.mxu0 0.0
    %1877 = vmatpush1.msra.mxu0 %v1871
    %1878 = vmatprep.subr.mxu0 0.0
    %1879 = vmatpush1.msra.mxu0 0.0
    %1880 = vmatprep.subr.mxu0 0.0
    %1881 = vmatpush1.msra.mxu0 0.0
    %1882 = vmatprep.subr.mxu0 0.0
    %1883 = vmatpush1.msra.mxu0 0.0
    %1884 = vmatprep.subr.mxu0 0.0
    %1885 = vmatpush1.msra.mxu0 0.0
    %1886 = vmatprep.subr.mxu0 0.0
    %1887 = vmatpush1.msra.mxu0 0.0
    %1888 = vmatprep.subr.mxu0 0.0
    %1889 = vmatpush1.msra.mxu0 0.0
    %1890 = vmatprep.subr.mxu0 0.0
    %1891 = vmatpush1.msra.mxu0 0.0
    %1892 = vmatprep.subr.mxu0 0.0
    %1893 = vmatpush1.msra.mxu0 0.0
    %1894 = vmatprep.subr.mxu0 0.0
    %1895 = vmatpush1.msra.mxu0 0.0
    %1896 = vmatprep.subr.mxu0 0.0
    %1897 = vmatpush1.msra.mxu0 0.0
    %1898 = vmatprep.subr.mxu0 0.0
    %1899 = vmatpush1.msra.mxu0 0.0
    %1900 = vmatprep.subr.mxu0 0.0
    %1901 = vmatpush1.msra.mxu0 0.0
    %1902 = vmatprep.subr.mxu0 0.0
    %1903 = vmatpush1.msra.mxu0 0.0
    %1904 = vmatprep.subr.mxu0 0.0
    %1905 = vmatpush1.msra.mxu0 0.0
    %1906 = vmatprep.subr.mxu0 0.0
    %1907 = vmatpush1.msra.mxu0 0.0
    %1908 = vmatprep.subr.mxu0 0.0
    %1909 = vmatpush1.msra.mxu0 0.0
    %1910 = vmatprep.subr.mxu0 0.0
    %1911 = vmatpush1.msra.mxu0 0.0
    %1912 = vmatprep.subr.mxu0 0.0
    %1913 = vmatpush1.msra.mxu0 0.0
    %1914 = vmatprep.subr.mxu0 0.0
    %1915 = vmatpush1.msra.mxu0 0.0
    %1916 = vmatprep.subr.mxu0 0.0
    %1917 = vmatpush1.msra.mxu0 0.0
    %1918 = vmatprep.subr.mxu0 0.0
    %1919 = vmatpush1.msra.mxu0 0.0
    %1920 = vmatprep.subr.mxu0 0.0
    %1921 = vmatpush1.msra.mxu0 0.0
    %1922 = vmatprep.subr.mxu0 0.0
    %1923 = vmatpush1.msra.mxu0 0.0
    %1924 = vmatprep.subr.mxu0 0.0
    %1925 = vmatpush1.msra.mxu0 0.0
    %1926 = vmatprep.subr.mxu0 0.0
    %1927 = vmatpush1.msra.mxu0 0.0
    %1928 = vmatprep.subr.mxu0 0.0
    %1929 = vmatpush1.msra.mxu0 0.0
    %1930 = vmatprep.subr.mxu0 0.0
    %1931 = vmatpush1.msra.mxu0 0.0
    %1932 = vmatprep.subr.mxu0 0.0
    %1933 = vmatpush1.msra.mxu0 0.0
    %1934 = vmatprep.subr.mxu0 0.0
    %1935 = vmatpush1.msra.mxu0 0.0
    %1936 = vmatprep.subr.mxu0 0.0
    %1937 = vmatpush1.msra.mxu0 0.0
    %1938 = vmatprep.subr.mxu0 0.0
    %1939 = vmatpush1.msra.mxu0 0.0
    %1940 = vmatprep.mubr.f32.mxu0 0.0
    %1941 = vmatmul.mubr.f32.gmra.mrb[0].mxu0 %v1874
    %v1942 = vpop.f32.mrb[0].mxu0
    %v1943 = vadd.f32 0.0, %v1942
    %v1944 = vpop.f32.mrb[0].mxu0
    %1945 = vdwg.mxu0
    %1946 = vrot.lane.b32.xlu0 %v706, 112
    %v1947 = vpop.permute.xlu0 %1946
    %v1950 = vsel %vm712, %v1413, 0
    %1952 = vmatprep.subr.mxu0 0.0
    %1953 = vmatpush1.msra.mxu0 %v1947
    %1954 = vmatprep.subr.mxu0 0.0
    %1955 = vmatpush1.msra.mxu0 0.0
    %1956 = vmatprep.subr.mxu0 0.0
    %1957 = vmatpush1.msra.mxu0 0.0
    %1958 = vmatprep.subr.mxu0 0.0
    %1959 = vmatpush1.msra.mxu0 0.0
    %1960 = vmatprep.subr.mxu0 0.0
    %1961 = vmatpush1.msra.mxu0 0.0
    %1962 = vmatprep.subr.mxu0 0.0
    %1963 = vmatpush1.msra.mxu0 0.0
    %1964 = vmatprep.subr.mxu0 0.0
    %1965 = vmatpush1.msra.mxu0 0.0
    %1966 = vmatprep.subr.mxu0 0.0
    %1967 = vmatpush1.msra.mxu0 0.0
    %1968 = vmatprep.subr.mxu0 0.0
    %1969 = vmatpush1.msra.mxu0 0.0
    %1970 = vmatprep.subr.mxu0 0.0
    %1971 = vmatpush1.msra.mxu0 0.0
    %1972 = vmatprep.subr.mxu0 0.0
    %1973 = vmatpush1.msra.mxu0 0.0
    %1974 = vmatprep.subr.mxu0 0.0
    %1975 = vmatpush1.msra.mxu0 0.0
    %1976 = vmatprep.subr.mxu0 0.0
    %1977 = vmatpush1.msra.mxu0 0.0
    %1978 = vmatprep.subr.mxu0 0.0
    %1979 = vmatpush1.msra.mxu0 0.0
    %1980 = vmatprep.subr.mxu0 0.0
    %1981 = vmatpush1.msra.mxu0 0.0
    %1982 = vmatprep.subr.mxu0 0.0
    %1983 = vmatpush1.msra.mxu0 0.0
    %1984 = vmatprep.subr.mxu0 0.0
    %1985 = vmatpush1.msra.mxu0 0.0
    %1986 = vmatprep.subr.mxu0 0.0
    %1987 = vmatpush1.msra.mxu0 0.0
    %1988 = vmatprep.subr.mxu0 0.0
    %1989 = vmatpush1.msra.mxu0 0.0
    %1990 = vmatprep.subr.mxu0 0.0
    %1991 = vmatpush1.msra.mxu0 0.0
    %1992 = vmatprep.subr.mxu0 0.0
    %1993 = vmatpush1.msra.mxu0 0.0
    %1994 = vmatprep.subr.mxu0 0.0
    %1995 = vmatpush1.msra.mxu0 0.0
    %1996 = vmatprep.subr.mxu0 0.0
    %1997 = vmatpush1.msra.mxu0 0.0
    %1998 = vmatprep.subr.mxu0 0.0
    %1999 = vmatpush1.msra.mxu0 0.0
    %2000 = vmatprep.subr.mxu0 0.0
    %2001 = vmatpush1.msra.mxu0 0.0
    %2002 = vmatprep.subr.mxu0 0.0
    %2003 = vmatpush1.msra.mxu0 0.0
    %2004 = vmatprep.subr.mxu0 0.0
    %2005 = vmatpush1.msra.mxu0 0.0
    %2006 = vmatprep.subr.mxu0 0.0
    %2007 = vmatpush1.msra.mxu0 0.0
    %2008 = vmatprep.subr.mxu0 0.0
    %2009 = vmatpush1.msra.mxu0 0.0
    %2010 = vmatprep.subr.mxu0 0.0
    %2011 = vmatpush1.msra.mxu0 0.0
    %2012 = vmatprep.subr.mxu0 0.0
    %2013 = vmatpush1.msra.mxu0 0.0
    %2014 = vmatprep.subr.mxu0 0.0
    %2015 = vmatpush1.msra.mxu0 0.0
    %2016 = vmatprep.mubr.f32.mxu0 0.0
    %2017 = vmatmul.mubr.f32.gmra.mrb[0].mxu0 %v1950
    %v2018 = vpop.f32.mrb[0].mxu0
    %v2019 = vadd.f32 0.0, %v2018
    %v2020 = vpop.f32.mrb[0].mxu0
    %2021 = vdwg.mxu0
    %v2022 = vld [vmem:[%s4] sm:$0xff]
    %v2023 = vld [vmem:[%s4 + $0x8] sm:$0xff]
    %v2024 = vld [vmem:[%s4 + $0x10] sm:$0xff]
    %v2025 = vld [vmem:[%s4 + $0x18] sm:$0xff]
    %v2026 = vld [vmem:[%s4 + $0x20] sm:$0xff]
    %v2027 = vld [vmem:[%s4 + $0x28] sm:$0xff]
    %v2028 = vld [vmem:[%s4 + $0x30] sm:$0xff]
    %v2029 = vld [vmem:[%s4 + $0x38] sm:$0xff]
    %v2031 = vsel %vm712, %v1487, 0
    %2033 = vmatprep.subr.mxu0 0.0
    %2034 = vmatpush1.msra.mxu0 %v2022
    %2035 = vmatprep.subr.mxu0 0.0
    %2036 = vmatpush1.msra.mxu0 0.0
    %2037 = vmatprep.subr.mxu0 0.0
    %2038 = vmatpush1.msra.mxu0 0.0
    %2039 = vmatprep.subr.mxu0 0.0
    %2040 = vmatpush1.msra.mxu0 0.0
    %2041 = vmatprep.subr.mxu0 0.0
    %2042 = vmatpush1.msra.mxu0 0.0
    %2043 = vmatprep.subr.mxu0 0.0
    %2044 = vmatpush1.msra.mxu0 0.0
    %2045 = vmatprep.subr.mxu0 0.0
    %2046 = vmatpush1.msra.mxu0 0.0
    %2047 = vmatprep.subr.mxu0 0.0
    %2048 = vmatpush1.msra.mxu0 0.0
    %2049 = vmatprep.subr.mxu0 0.0
    %2050 = vmatpush1.msra.mxu0 0.0
    %2051 = vmatprep.subr.mxu0 0.0
    %2052 = vmatpush1.msra.mxu0 0.0
    %2053 = vmatprep.subr.mxu0 0.0
    %2054 = vmatpush1.msra.mxu0 0.0
    %2055 = vmatprep.subr.mxu0 0.0
    %2056 = vmatpush1.msra.mxu0 0.0
    %2057 = vmatprep.subr.mxu0 0.0
    %2058 = vmatpush1.msra.mxu0 0.0
    %2059 = vmatprep.subr.mxu0 0.0
    %2060 = vmatpush1.msra.mxu0 0.0
    %2061 = vmatprep.subr.mxu0 0.0
    %2062 = vmatpush1.msra.mxu0 0.0
    %2063 = vmatprep.subr.mxu0 0.0
    %2064 = vmatpush1.msra.mxu0 0.0
    %2065 = vmatprep.subr.mxu0 0.0
    %2066 = vmatpush1.msra.mxu0 0.0
    %2067 = vmatprep.subr.mxu0 0.0
    %2068 = vmatpush1.msra.mxu0 0.0
    %2069 = vmatprep.subr.mxu0 0.0
    %2070 = vmatpush1.msra.mxu0 0.0
    %2071 = vmatprep.subr.mxu0 0.0
    %2072 = vmatpush1.msra.mxu0 0.0
    %2073 = vmatprep.subr.mxu0 0.0
    %2074 = vmatpush1.msra.mxu0 0.0
    %2075 = vmatprep.subr.mxu0 0.0
    %2076 = vmatpush1.msra.mxu0 0.0
    %2077 = vmatprep.subr.mxu0 0.0
    %2078 = vmatpush1.msra.mxu0 0.0
    %2079 = vmatprep.subr.mxu0 0.0
    %2080 = vmatpush1.msra.mxu0 0.0
    %2081 = vmatprep.subr.mxu0 0.0
    %2082 = vmatpush1.msra.mxu0 0.0
    %2083 = vmatprep.subr.mxu0 0.0
    %2084 = vmatpush1.msra.mxu0 0.0
    %2085 = vmatprep.subr.mxu0 0.0
    %2086 = vmatpush1.msra.mxu0 0.0
    %2087 = vmatprep.subr.mxu0 0.0
    %2088 = vmatpush1.msra.mxu0 0.0
    %2089 = vmatprep.subr.mxu0 0.0
    %2090 = vmatpush1.msra.mxu0 0.0
    %2091 = vmatprep.subr.mxu0 0.0
    %2092 = vmatpush1.msra.mxu0 0.0
    %2093 = vmatprep.subr.mxu0 0.0
    %2094 = vmatpush1.msra.mxu0 0.0
    %2095 = vmatprep.subr.mxu0 0.0
    %2096 = vmatpush1.msra.mxu0 0.0
    %2097 = vmatprep.mubr.f32.mxu0 0.0
    %2098 = vmatmul.mubr.f32.gmra.mrb[0].mxu0 %v2031
    %v2099 = vpop.f32.mrb[0].mxu0
    %v2100 = vadd.f32 0.0, %v2099
    %v2101 = vpop.f32.mrb[0].mxu0
    %2102 = vdwg.mxu0
    %v2104 = vsel %vm712, %v1563, 0
    %2106 = vmatprep.subr.mxu0 0.0
    %2107 = vmatpush1.msra.mxu0 %v2023
    %2108 = vmatprep.subr.mxu0 0.0
    %2109 = vmatpush1.msra.mxu0 0.0
    %2110 = vmatprep.subr.mxu0 0.0
    %2111 = vmatpush1.msra.mxu0 0.0
    %2112 = vmatprep.subr.mxu0 0.0
    %2113 = vmatpush1.msra.mxu0 0.0
    %2114 = vmatprep.subr.mxu0 0.0
    %2115 = vmatpush1.msra.mxu0 0.0
    %2116 = vmatprep.subr.mxu0 0.0
    %2117 = vmatpush1.msra.mxu0 0.0
    %2118 = vmatprep.subr.mxu0 0.0
    %2119 = vmatpush1.msra.mxu0 0.0
    %2120 = vmatprep.subr.mxu0 0.0
    %2121 = vmatpush1.msra.mxu0 0.0
    %2122 = vmatprep.subr.mxu0 0.0
    %2123 = vmatpush1.msra.mxu0 0.0
    %2124 = vmatprep.subr.mxu0 0.0
    %2125 = vmatpush1.msra.mxu0 0.0
    %2126 = vmatprep.subr.mxu0 0.0
    %2127 = vmatpush1.msra.mxu0 0.0
    %2128 = vmatprep.subr.mxu0 0.0
    %2129 = vmatpush1.msra.mxu0 0.0
    %2130 = vmatprep.subr.mxu0 0.0
    %2131 = vmatpush1.msra.mxu0 0.0
    %2132 = vmatprep.subr.mxu0 0.0
    %2133 = vmatpush1.msra.mxu0 0.0
    %2134 = vmatprep.subr.mxu0 0.0
    %2135 = vmatpush1.msra.mxu0 0.0
    %2136 = vmatprep.subr.mxu0 0.0
    %2137 = vmatpush1.msra.mxu0 0.0
    %2138 = vmatprep.subr.mxu0 0.0
    %2139 = vmatpush1.msra.mxu0 0.0
    %2140 = vmatprep.subr.mxu0 0.0
    %2141 = vmatpush1.msra.mxu0 0.0
    %2142 = vmatprep.subr.mxu0 0.0
    %2143 = vmatpush1.msra.mxu0 0.0
    %2144 = vmatprep.subr.mxu0 0.0
    %2145 = vmatpush1.msra.mxu0 0.0
    %2146 = vmatprep.subr.mxu0 0.0
    %2147 = vmatpush1.msra.mxu0 0.0
    %2148 = vmatprep.subr.mxu0 0.0
    %2149 = vmatpush1.msra.mxu0 0.0
    %2150 = vmatprep.subr.mxu0 0.0
    %2151 = vmatpush1.msra.mxu0 0.0
    %2152 = vmatprep.subr.mxu0 0.0
    %2153 = vmatpush1.msra.mxu0 0.0
    %2154 = vmatprep.subr.mxu0 0.0
    %2155 = vmatpush1.msra.mxu0 0.0
    %2156 = vmatprep.subr.mxu0 0.0
    %2157 = vmatpush1.msra.mxu0 0.0
    %2158 = vmatprep.subr.mxu0 0.0
    %2159 = vmatpush1.msra.mxu0 0.0
    %2160 = vmatprep.subr.mxu0 0.0
    %2161 = vmatpush1.msra.mxu0 0.0
    %2162 = vmatprep.subr.mxu0 0.0
    %2163 = vmatpush1.msra.mxu0 0.0
    %2164 = vmatprep.subr.mxu0 0.0
    %2165 = vmatpush1.msra.mxu0 0.0
    %2166 = vmatprep.subr.mxu0 0.0
    %2167 = vmatpush1.msra.mxu0 0.0
    %2168 = vmatprep.subr.mxu0 0.0
    %2169 = vmatpush1.msra.mxu0 0.0
    %2170 = vmatprep.mubr.f32.mxu0 0.0
    %2171 = vmatmul.mubr.f32.gmra.mrb[0].mxu0 %v2104
    %v2172 = vpop.f32.mrb[0].mxu0
    %v2173 = vadd.f32 0.0, %v2172
    %v2174 = vpop.f32.mrb[0].mxu0
    %2175 = vdwg.mxu0
    %v2177 = vsel %vm712, %v1639, 0
    %2179 = vmatprep.subr.mxu0 0.0
    %2180 = vmatpush1.msra.mxu0 %v2024
    %2181 = vmatprep.subr.mxu0 0.0
    %2182 = vmatpush1.msra.mxu0 0.0
    %2183 = vmatprep.subr.mxu0 0.0
    %2184 = vmatpush1.msra.mxu0 0.0
    %2185 = vmatprep.subr.mxu0 0.0
    %2186 = vmatpush1.msra.mxu0 0.0
    %2187 = vmatprep.subr.mxu0 0.0
    %2188 = vmatpush1.msra.mxu0 0.0
    %2189 = vmatprep.subr.mxu0 0.0
    %2190 = vmatpush1.msra.mxu0 0.0
    %2191 = vmatprep.subr.mxu0 0.0
    %2192 = vmatpush1.msra.mxu0 0.0
    %2193 = vmatprep.subr.mxu0 0.0
    %2194 = vmatpush1.msra.mxu0 0.0
    %2195 = vmatprep.subr.mxu0 0.0
    %2196 = vmatpush1.msra.mxu0 0.0
    %2197 = vmatprep.subr.mxu0 0.0
    %2198 = vmatpush1.msra.mxu0 0.0
    %2199 = vmatprep.subr.mxu0 0.0
    %2200 = vmatpush1.msra.mxu0 0.0
    %2201 = vmatprep.subr.mxu0 0.0
    %2202 = vmatpush1.msra.mxu0 0.0
    %2203 = vmatprep.subr.mxu0 0.0
    %2204 = vmatpush1.msra.mxu0 0.0
    %2205 = vmatprep.subr.mxu0 0.0
    %2206 = vmatpush1.msra.mxu0 0.0
    %2207 = vmatprep.subr.mxu0 0.0
    %2208 = vmatpush1.msra.mxu0 0.0
    %2209 = vmatprep.subr.mxu0 0.0
    %2210 = vmatpush1.msra.mxu0 0.0
    %2211 = vmatprep.subr.mxu0 0.0
    %2212 = vmatpush1.msra.mxu0 0.0
    %2213 = vmatprep.subr.mxu0 0.0
    %2214 = vmatpush1.msra.mxu0 0.0
    %2215 = vmatprep.subr.mxu0 0.0
    %2216 = vmatpush1.msra.mxu0 0.0
    %2217 = vmatprep.subr.mxu0 0.0
    %2218 = vmatpush1.msra.mxu0 0.0
    %2219 = vmatprep.subr.mxu0 0.0
    %2220 = vmatpush1.msra.mxu0 0.0
    %2221 = vmatprep.subr.mxu0 0.0
    %2222 = vmatpush1.msra.mxu0 0.0
    %2223 = vmatprep.subr.mxu0 0.0
    %2224 = vmatpush1.msra.mxu0 0.0
    %2225 = vmatprep.subr.mxu0 0.0
    %2226 = vmatpush1.msra.mxu0 0.0
    %2227 = vmatprep.subr.mxu0 0.0
    %2228 = vmatpush1.msra.mxu0 0.0
    %2229 = vmatprep.subr.mxu0 0.0
    %2230 = vmatpush1.msra.mxu0 0.0
    %2231 = vmatprep.subr.mxu0 0.0
    %2232 = vmatpush1.msra.mxu0 0.0
    %2233 = vmatprep.subr.mxu0 0.0
    %2234 = vmatpush1.msra.mxu0 0.0
    %2235 = vmatprep.subr.mxu0 0.0
    %2236 = vmatpush1.msra.mxu0 0.0
    %2237 = vmatprep.subr.mxu0 0.0
    %2238 = vmatpush1.msra.mxu0 0.0
    %2239 = vmatprep.subr.mxu0 0.0
    %2240 = vmatpush1.msra.mxu0 0.0
    %2241 = vmatprep.subr.mxu0 0.0
    %2242 = vmatpush1.msra.mxu0 0.0
    %2243 = vmatprep.mubr.f32.mxu0 0.0
    %2244 = vmatmul.mubr.f32.gmra.mrb[0].mxu0 %v2177
    %v2245 = vpop.f32.mrb[0].mxu0
    %v2246 = vadd.f32 0.0, %v2245
    %v2247 = vpop.f32.mrb[0].mxu0
    %2248 = vdwg.mxu0
    %v2250 = vsel %vm712, %v1715, 0
    %2252 = vmatprep.subr.mxu0 0.0
    %2253 = vmatpush1.msra.mxu0 %v2025
    %2254 = vmatprep.subr.mxu0 0.0
    %2255 = vmatpush1.msra.mxu0 0.0
    %2256 = vmatprep.subr.mxu0 0.0
    %2257 = vmatpush1.msra.mxu0 0.0
    %2258 = vmatprep.subr.mxu0 0.0
    %2259 = vmatpush1.msra.mxu0 0.0
    %2260 = vmatprep.subr.mxu0 0.0
    %2261 = vmatpush1.msra.mxu0 0.0
    %2262 = vmatprep.subr.mxu0 0.0
    %2263 = vmatpush1.msra.mxu0 0.0
    %2264 = vmatprep.subr.mxu0 0.0
    %2265 = vmatpush1.msra.mxu0 0.0
    %2266 = vmatprep.subr.mxu0 0.0
    %2267 = vmatpush1.msra.mxu0 0.0
    %2268 = vmatprep.subr.mxu0 0.0
    %2269 = vmatpush1.msra.mxu0 0.0
    %2270 = vmatprep.subr.mxu0 0.0
    %2271 = vmatpush1.msra.mxu0 0.0
    %2272 = vmatprep.subr.mxu0 0.0
    %2273 = vmatpush1.msra.mxu0 0.0
    %2274 = vmatprep.subr.mxu0 0.0
    %2275 = vmatpush1.msra.mxu0 0.0
    %2276 = vmatprep.subr.mxu0 0.0
    %2277 = vmatpush1.msra.mxu0 0.0
    %2278 = vmatprep.subr.mxu0 0.0
    %2279 = vmatpush1.msra.mxu0 0.0
    %2280 = vmatprep.subr.mxu0 0.0
    %2281 = vmatpush1.msra.mxu0 0.0
    %2282 = vmatprep.subr.mxu0 0.0
    %2283 = vmatpush1.msra.mxu0 0.0
    %2284 = vmatprep.subr.mxu0 0.0
    %2285 = vmatpush1.msra.mxu0 0.0
    %2286 = vmatprep.subr.mxu0 0.0
    %2287 = vmatpush1.msra.mxu0 0.0
    %2288 = vmatprep.subr.mxu0 0.0
    %2289 = vmatpush1.msra.mxu0 0.0
    %2290 = vmatprep.subr.mxu0 0.0
    %2291 = vmatpush1.msra.mxu0 0.0
    %2292 = vmatprep.subr.mxu0 0.0
    %2293 = vmatpush1.msra.mxu0 0.0
    %2294 = vmatprep.subr.mxu0 0.0
    %2295 = vmatpush1.msra.mxu0 0.0
    %2296 = vmatprep.subr.mxu0 0.0
    %2297 = vmatpush1.msra.mxu0 0.0
    %2298 = vmatprep.subr.mxu0 0.0
    %2299 = vmatpush1.msra.mxu0 0.0
    %2300 = vmatprep.subr.mxu0 0.0
    %2301 = vmatpush1.msra.mxu0 0.0
    %2302 = vmatprep.subr.mxu0 0.0
    %2303 = vmatpush1.msra.mxu0 0.0
    %2304 = vmatprep.subr.mxu0 0.0
    %2305 = vmatpush1.msra.mxu0 0.0
    %2306 = vmatprep.subr.mxu0 0.0
    %2307 = vmatpush1.msra.mxu0 0.0
    %2308 = vmatprep.subr.mxu0 0.0
    %2309 = vmatpush1.msra.mxu0 0.0
    %2310 = vmatprep.subr.mxu0 0.0
    %2311 = vmatpush1.msra.mxu0 0.0
    %2312 = vmatprep.subr.mxu0 0.0
    %2313 = vmatpush1.msra.mxu0 0.0
    %2314 = vmatprep.subr.mxu0 0.0
    %2315 = vmatpush1.msra.mxu0 0.0
    %2316 = vmatprep.mubr.f32.mxu0 0.0
    %2317 = vmatmul.mubr.f32.gmra.mrb[0].mxu0 %v2250
    %v2318 = vpop.f32.mrb[0].mxu0
    %v2319 = vadd.f32 0.0, %v2318
    %v2320 = vpop.f32.mrb[0].mxu0
    %2321 = vdwg.mxu0
    %v2323 = vsel %vm712, %v1791, 0
    %2325 = vmatprep.subr.mxu0 0.0
    %2326 = vmatpush1.msra.mxu0 %v2026
    %2327 = vmatprep.subr.mxu0 0.0
    %2328 = vmatpush1.msra.mxu0 0.0
    %2329 = vmatprep.subr.mxu0 0.0
    %2330 = vmatpush1.msra.mxu0 0.0
    %2331 = vmatprep.subr.mxu0 0.0
    %2332 = vmatpush1.msra.mxu0 0.0
    %2333 = vmatprep.subr.mxu0 0.0
    %2334 = vmatpush1.msra.mxu0 0.0
    %2335 = vmatprep.subr.mxu0 0.0
    %2336 = vmatpush1.msra.mxu0 0.0
    %2337 = vmatprep.subr.mxu0 0.0
    %2338 = vmatpush1.msra.mxu0 0.0
    %2339 = vmatprep.subr.mxu0 0.0
    %2340 = vmatpush1.msra.mxu0 0.0
    %2341 = vmatprep.subr.mxu0 0.0
    %2342 = vmatpush1.msra.mxu0 0.0
    %2343 = vmatprep.subr.mxu0 0.0
    %2344 = vmatpush1.msra.mxu0 0.0
    %2345 = vmatprep.subr.mxu0 0.0
    %2346 = vmatpush1.msra.mxu0 0.0
    %2347 = vmatprep.subr.mxu0 0.0
    %2348 = vmatpush1.msra.mxu0 0.0
    %2349 = vmatprep.subr.mxu0 0.0
    %2350 = vmatpush1.msra.mxu0 0.0
    %2351 = vmatprep.subr.mxu0 0.0
    %2352 = vmatpush1.msra.mxu0 0.0
    %2353 = vmatprep.subr.mxu0 0.0
    %2354 = vmatpush1.msra.mxu0 0.0
    %2355 = vmatprep.subr.mxu0 0.0
    %2356 = vmatpush1.msra.mxu0 0.0
    %2357 = vmatprep.subr.mxu0 0.0
    %2358 = vmatpush1.msra.mxu0 0.0
    %2359 = vmatprep.subr.mxu0 0.0
    %2360 = vmatpush1.msra.mxu0 0.0
    %2361 = vmatprep.subr.mxu0 0.0
    %2362 = vmatpush1.msra.mxu0 0.0
    %2363 = vmatprep.subr.mxu0 0.0
    %2364 = vmatpush1.msra.mxu0 0.0
    %2365 = vmatprep.subr.mxu0 0.0
    %2366 = vmatpush1.msra.mxu0 0.0
    %2367 = vmatprep.subr.mxu0 0.0
    %2368 = vmatpush1.msra.mxu0 0.0
    %2369 = vmatprep.subr.mxu0 0.0
    %2370 = vmatpush1.msra.mxu0 0.0
    %2371 = vmatprep.subr.mxu0 0.0
    %2372 = vmatpush1.msra.mxu0 0.0
    %2373 = vmatprep.subr.mxu0 0.0
    %2374 = vmatpush1.msra.mxu0 0.0
    %2375 = vmatprep.subr.mxu0 0.0
    %2376 = vmatpush1.msra.mxu0 0.0
    %2377 = vmatprep.subr.mxu0 0.0
    %2378 = vmatpush1.msra.mxu0 0.0
    %2379 = vmatprep.subr.mxu0 0.0
    %2380 = vmatpush1.msra.mxu0 0.0
    %2381 = vmatprep.subr.mxu0 0.0
    %2382 = vmatpush1.msra.mxu0 0.0
    %2383 = vmatprep.subr.mxu0 0.0
    %2384 = vmatpush1.msra.mxu0 0.0
    %2385 = vmatprep.subr.mxu0 0.0
    %2386 = vmatpush1.msra.mxu0 0.0
    %2387 = vmatprep.subr.mxu0 0.0
    %2388 = vmatpush1.msra.mxu0 0.0
    %2389 = vmatprep.mubr.f32.mxu0 0.0
    %2390 = vmatmul.mubr.f32.gmra.mrb[0].mxu0 %v2323
    %v2391 = vpop.f32.mrb[0].mxu0
    %v2392 = vadd.f32 0.0, %v2391
    %v2393 = vpop.f32.mrb[0].mxu0
    %2394 = vdwg.mxu0
    %v2396 = vsel %vm712, %v1867, 0
    %2398 = vmatprep.subr.mxu0 0.0
    %2399 = vmatpush1.msra.mxu0 %v2027
    %2400 = vmatprep.subr.mxu0 0.0
    %2401 = vmatpush1.msra.mxu0 0.0
    %2402 = vmatprep.subr.mxu0 0.0
    %2403 = vmatpush1.msra.mxu0 0.0
    %2404 = vmatprep.subr.mxu0 0.0
    %2405 = vmatpush1.msra.mxu0 0.0
    %2406 = vmatprep.subr.mxu0 0.0
    %2407 = vmatpush1.msra.mxu0 0.0
    %2408 = vmatprep.subr.mxu0 0.0
    %2409 = vmatpush1.msra.mxu0 0.0
    %2410 = vmatprep.subr.mxu0 0.0
    %2411 = vmatpush1.msra.mxu0 0.0
    %2412 = vmatprep.subr.mxu0 0.0
    %2413 = vmatpush1.msra.mxu0 0.0
    %2414 = vmatprep.subr.mxu0 0.0
    %2415 = vmatpush1.msra.mxu0 0.0
    %2416 = vmatprep.subr.mxu0 0.0
    %2417 = vmatpush1.msra.mxu0 0.0
    %2418 = vmatprep.subr.mxu0 0.0
    %2419 = vmatpush1.msra.mxu0 0.0
    %2420 = vmatprep.subr.mxu0 0.0
    %2421 = vmatpush1.msra.mxu0 0.0
    %2422 = vmatprep.subr.mxu0 0.0
    %2423 = vmatpush1.msra.mxu0 0.0
    %2424 = vmatprep.subr.mxu0 0.0
    %2425 = vmatpush1.msra.mxu0 0.0
    %2426 = vmatprep.subr.mxu0 0.0
    %2427 = vmatpush1.msra.mxu0 0.0
    %2428 = vmatprep.subr.mxu0 0.0
    %2429 = vmatpush1.msra.mxu0 0.0
    %2430 = vmatprep.subr.mxu0 0.0
    %2431 = vmatpush1.msra.mxu0 0.0
    %2432 = vmatprep.subr.mxu0 0.0
    %2433 = vmatpush1.msra.mxu0 0.0
    %2434 = vmatprep.subr.mxu0 0.0
    %2435 = vmatpush1.msra.mxu0 0.0
    %2436 = vmatprep.subr.mxu0 0.0
    %2437 = vmatpush1.msra.mxu0 0.0
    %2438 = vmatprep.subr.mxu0 0.0
    %2439 = vmatpush1.msra.mxu0 0.0
    %2440 = vmatprep.subr.mxu0 0.0
    %2441 = vmatpush1.msra.mxu0 0.0
    %2442 = vmatprep.subr.mxu0 0.0
    %2443 = vmatpush1.msra.mxu0 0.0
    %2444 = vmatprep.subr.mxu0 0.0
    %2445 = vmatpush1.msra.mxu0 0.0
    %2446 = vmatprep.subr.mxu0 0.0
    %2447 = vmatpush1.msra.mxu0 0.0
    %2448 = vmatprep.subr.mxu0 0.0
    %2449 = vmatpush1.msra.mxu0 0.0
    %2450 = vmatprep.subr.mxu0 0.0
    %2451 = vmatpush1.msra.mxu0 0.0
    %2452 = vmatprep.subr.mxu0 0.0
    %2453 = vmatpush1.msra.mxu0 0.0
    %2454 = vmatprep.subr.mxu0 0.0
    %2455 = vmatpush1.msra.mxu0 0.0
    %2456 = vmatprep.subr.mxu0 0.0
    %2457 = vmatpush1.msra.mxu0 0.0
    %2458 = vmatprep.subr.mxu0 0.0
    %2459 = vmatpush1.msra.mxu0 0.0
    %2460 = vmatprep.subr.mxu0 0.0
    %2461 = vmatpush1.msra.mxu0 0.0
    %2462 = vmatprep.mubr.f32.mxu0 0.0
    %2463 = vmatmul.mubr.f32.gmra.mrb[0].mxu0 %v2396
    %v2464 = vpop.f32.mrb[0].mxu0
    %v2465 = vadd.f32 0.0, %v2464
    %v2466 = vpop.f32.mrb[0].mxu0
    %2467 = vdwg.mxu0
    %v2469 = vsel %vm712, %v1943, 0
    %2471 = vmatprep.subr.mxu0 0.0
    %2472 = vmatpush1.msra.mxu0 %v2028
    %2473 = vmatprep.subr.mxu0 0.0
    %2474 = vmatpush1.msra.mxu0 0.0
    %2475 = vmatprep.subr.mxu0 0.0
    %2476 = vmatpush1.msra.mxu0 0.0
    %2477 = vmatprep.subr.mxu0 0.0
    %2478 = vmatpush1.msra.mxu0 0.0
    %2479 = vmatprep.subr.mxu0 0.0
    %2480 = vmatpush1.msra.mxu0 0.0
    %2481 = vmatprep.subr.mxu0 0.0
    %2482 = vmatpush1.msra.mxu0 0.0
    %2483 = vmatprep.subr.mxu0 0.0
    %2484 = vmatpush1.msra.mxu0 0.0
    %2485 = vmatprep.subr.mxu0 0.0
    %2486 = vmatpush1.msra.mxu0 0.0
    %2487 = vmatprep.subr.mxu0 0.0
    %2488 = vmatpush1.msra.mxu0 0.0
    %2489 = vmatprep.subr.mxu0 0.0
    %2490 = vmatpush1.msra.mxu0 0.0
    %2491 = vmatprep.subr.mxu0 0.0
    %2492 = vmatpush1.msra.mxu0 0.0
    %2493 = vmatprep.subr.mxu0 0.0
    %2494 = vmatpush1.msra.mxu0 0.0
    %2495 = vmatprep.subr.mxu0 0.0
    %2496 = vmatpush1.msra.mxu0 0.0
    %2497 = vmatprep.subr.mxu0 0.0
    %2498 = vmatpush1.msra.mxu0 0.0
    %2499 = vmatprep.subr.mxu0 0.0
    %2500 = vmatpush1.msra.mxu0 0.0
    %2501 = vmatprep.subr.mxu0 0.0
    %2502 = vmatpush1.msra.mxu0 0.0
    %2503 = vmatprep.subr.mxu0 0.0
    %2504 = vmatpush1.msra.mxu0 0.0
    %2505 = vmatprep.subr.mxu0 0.0
    %2506 = vmatpush1.msra.mxu0 0.0
    %2507 = vmatprep.subr.mxu0 0.0
    %2508 = vmatpush1.msra.mxu0 0.0
    %2509 = vmatprep.subr.mxu0 0.0
    %2510 = vmatpush1.msra.mxu0 0.0
    %2511 = vmatprep.subr.mxu0 0.0
    %2512 = vmatpush1.msra.mxu0 0.0
    %2513 = vmatprep.subr.mxu0 0.0
    %2514 = vmatpush1.msra.mxu0 0.0
    %2515 = vmatprep.subr.mxu0 0.0
    %2516 = vmatpush1.msra.mxu0 0.0
    %2517 = vmatprep.subr.mxu0 0.0
    %2518 = vmatpush1.msra.mxu0 0.0
    %2519 = vmatprep.subr.mxu0 0.0
    %2520 = vmatpush1.msra.mxu0 0.0
    %2521 = vmatprep.subr.mxu0 0.0
    %2522 = vmatpush1.msra.mxu0 0.0
    %2523 = vmatprep.subr.mxu0 0.0
    %2524 = vmatpush1.msra.mxu0 0.0
    %2525 = vmatprep.subr.mxu0 0.0
    %2526 = vmatpush1.msra.mxu0 0.0
    %2527 = vmatprep.subr.mxu0 0.0
    %2528 = vmatpush1.msra.mxu0 0.0
    %2529 = vmatprep.subr.mxu0 0.0
    %2530 = vmatpush1.msra.mxu0 0.0
    %2531 = vmatprep.subr.mxu0 0.0
    %2532 = vmatpush1.msra.mxu0 0.0
    %2533 = vmatprep.subr.mxu0 0.0
    %2534 = vmatpush1.msra.mxu0 0.0
    %2535 = vmatprep.mubr.f32.mxu0 0.0
    %2536 = vmatmul.mubr.f32.gmra.mrb[0].mxu0 %v2469
    %v2537 = vpop.f32.mrb[0].mxu0
    %v2538 = vadd.f32 0.0, %v2537
    %v2539 = vpop.f32.mrb[0].mxu0
    %2540 = vdwg.mxu0
    %v2542 = vsel %vm712, %v2019, 0
    %2544 = vmatprep.subr.mxu0 0.0
    %2545 = vmatpush1.msra.mxu0 %v2029
    %2546 = vmatprep.subr.mxu0 0.0
    %2547 = vmatpush1.msra.mxu0 0.0
    %2548 = vmatprep.subr.mxu0 0.0
    %2549 = vmatpush1.msra.mxu0 0.0
    %2550 = vmatprep.subr.mxu0 0.0
    %2551 = vmatpush1.msra.mxu0 0.0
    %2552 = vmatprep.subr.mxu0 0.0
    %2553 = vmatpush1.msra.mxu0 0.0
    %2554 = vmatprep.subr.mxu0 0.0
    %2555 = vmatpush1.msra.mxu0 0.0
    %2556 = vmatprep.subr.mxu0 0.0
    %2557 = vmatpush1.msra.mxu0 0.0
    %2558 = vmatprep.subr.mxu0 0.0
    %2559 = vmatpush1.msra.mxu0 0.0
    %2560 = vmatprep.subr.mxu0 0.0
    %2561 = vmatpush1.msra.mxu0 0.0
    %2562 = vmatprep.subr.mxu0 0.0
    %2563 = vmatpush1.msra.mxu0 0.0
    %2564 = vmatprep.subr.mxu0 0.0
    %2565 = vmatpush1.msra.mxu0 0.0
    %2566 = vmatprep.subr.mxu0 0.0
    %2567 = vmatpush1.msra.mxu0 0.0
    %2568 = vmatprep.subr.mxu0 0.0
    %2569 = vmatpush1.msra.mxu0 0.0
    %2570 = vmatprep.subr.mxu0 0.0
    %2571 = vmatpush1.msra.mxu0 0.0
    %2572 = vmatprep.subr.mxu0 0.0
    %2573 = vmatpush1.msra.mxu0 0.0
    %2574 = vmatprep.subr.mxu0 0.0
    %2575 = vmatpush1.msra.mxu0 0.0
    %2576 = vmatprep.subr.mxu0 0.0
    %2577 = vmatpush1.msra.mxu0 0.0
    %2578 = vmatprep.subr.mxu0 0.0
    %2579 = vmatpush1.msra.mxu0 0.0
    %2580 = vmatprep.subr.mxu0 0.0
    %2581 = vmatpush1.msra.mxu0 0.0
    %2582 = vmatprep.subr.mxu0 0.0
    %2583 = vmatpush1.msra.mxu0 0.0
    %2584 = vmatprep.subr.mxu0 0.0
    %2585 = vmatpush1.msra.mxu0 0.0
    %2586 = vmatprep.subr.mxu0 0.0
    %2587 = vmatpush1.msra.mxu0 0.0
    %2588 = vmatprep.subr.mxu0 0.0
    %2589 = vmatpush1.msra.mxu0 0.0
    %2590 = vmatprep.subr.mxu0 0.0
    %2591 = vmatpush1.msra.mxu0 0.0
    %2592 = vmatprep.subr.mxu0 0.0
    %2593 = vmatpush1.msra.mxu0 0.0
    %2594 = vmatprep.subr.mxu0 0.0
    %2595 = vmatpush1.msra.mxu0 0.0
    %2596 = vmatprep.subr.mxu0 0.0
    %2597 = vmatpush1.msra.mxu0 0.0
    %2598 = vmatprep.subr.mxu0 0.0
    %2599 = vmatpush1.msra.mxu0 0.0
    %2600 = vmatprep.subr.mxu0 0.0
    %2601 = vmatpush1.msra.mxu0 0.0
    %2602 = vmatprep.subr.mxu0 0.0
    %2603 = vmatpush1.msra.mxu0 0.0
    %2604 = vmatprep.subr.mxu0 0.0
    %2605 = vmatpush1.msra.mxu0 0.0
    %2606 = vmatprep.subr.mxu0 0.0
    %2607 = vmatpush1.msra.mxu0 0.0
    %2608 = vmatprep.mubr.f32.mxu0 0.0
    %2609 = vmatmul.mubr.f32.gmra.mrb[0].mxu0 %v2542
    %v2610 = vpop.f32.mrb[0].mxu0
    %v2611 = vadd.f32 0.0, %v2610
    %v2612 = vpop.f32.mrb[0].mxu0
    %2613 = vdwg.mxu0
    %v2614 = vadd.f32 %v2100, %v2173
    %v2615 = vadd.f32 %v2392, %v2465
    %v2616 = vadd.f32 %v2614, %v2246
    %v2617 = vadd.f32 %v2615, %v2538
    %v2618 = vadd.f32 %v2616, %v2319
    %v2619 = vadd.f32 %v2617, %v2611
    %v2620 = vld [vmem:[%s5] sm:$0x1]
    %v2622 = vlaneseq
    %v2623 = vshrl.u32 %v2622, 7
    %v2624 = vsub.s32 0, %v2623
    %v2625 = vrot.slane %v2620, %v2624
    %v2627 = vadd.f32 %v2618, %v2625
    %v2628 = vadd.f32 %v2619, %v2625
    %v2629 = vadd.f32 %v42, %v2627
    %v2630 = vadd.f32 %v43, %v2628
    %v2631 = vsel %vm142, %v2629, 0.0
    %2632 = vadd.xlane.f32.xlu0 %v2631
    %v2633 = vpop.xlane.xlu0 %2632
    %v2634 = vsel %vm142, %v2630, 0.0
    %2635 = vadd.xlane.f32.xlu0 %v2634
    %v2636 = vpop.xlane.xlu0 %2635
    %v2637 = vrcp.pop 32.0
    %v2638 = vmul.f32 %v2633, %v2637
    %v2639 = vmul.f32 %v2636, %v2637
    %v2640 = vsub.f32 %v2629, %v2638
    %v2641 = vsub.f32 %v2630, %v2639
    %v2642 = vmul.f32 %v2640, %v2640
    %v2643 = vmul.f32 %v2641, %v2641
    %v2644 = vsel %vm142, %v2642, 0.0
    %2645 = vadd.xlane.f32.xlu0 %v2644
    %v2646 = vpop.xlane.xlu0 %2645
    %v2647 = vsel %vm142, %v2643, 0.0
    %2648 = vadd.xlane.f32.xlu0 %v2647
    %v2649 = vpop.xlane.xlu0 %2648
    %v2650 = vmul.f32 %v2646, %v2637
    %v2651 = vmul.f32 %v2649, %v2637
    %v2652 = vadd.f32 %v2650, 1e-05
    %v2653 = vadd.f32 %v2651, 1e-05
    %v2654 = vrsqrt.pop %v2652
    %v2655 = vrsqrt.pop %v2653
    %v2656 = vmul.f32 %v2640, %v2654
    %v2657 = vmul.f32 %v2641, %v2655
    %v2659 = vlaneseq
    %v2660 = vshrl.u32 %v2659, 7
    %v2661 = vsub.s32 0, %v2660
    %v2662 = vrot.slane %v52, %v2661
    %v2664 = vmul.f32 %v2656, %v2662
    %v2665 = vmul.f32 %v2657, %v2662
    %v2667 = vlaneseq
    %v2668 = vshrl.u32 %v2667, 7
    %v2669 = vsub.s32 0, %v2668
    %v2670 = vrot.slane %v53, %v2669
    %v2672 = vadd.f32 %v2664, %v2670
    %v2673 = vadd.f32 %v2665, %v2670
    %v2674 = vld [vmem:[%s6] sm:$0xff]
    %v2675 = vld [vmem:[%s6 + $0x8] sm:$0xff]
    %v2676 = vld [vmem:[%s6 + $0x10] sm:$0xff]
    %v2677 = vld [vmem:[%s6 + $0x18] sm:$0xff]
    %v2678 = vld [vmem:[%s6 + $0x20] sm:$0xff]
    %v2679 = vld [vmem:[%s6 + $0x28] sm:$0xff]
    %v2680 = vld [vmem:[%s6 + $0x30] sm:$0xff]
    %v2681 = vld [vmem:[%s6 + $0x38] sm:$0xff]
    %v2682 = vld [vmem:[%s7] sm:$0x1]
    %v2684 = vlaneseq
    %v2685 = vshrl.u32 %v2684, 7
    %v2686 = vsub.s32 0, %v2685
    %v2687 = vrot.slane %v2682, %v2686
    %v2690 = vsel %vm142, %v2672, 0
    %2692 = vmatprep.subr.mxu0 0.0
    %2693 = vmatpush1.msra.mxu0 %v2674
    %2694 = vmatprep.subr.mxu0 0.0
    %2695 = vmatpush1.msra.mxu0 %v2675
    %2696 = vmatprep.subr.mxu0 0.0
    %2697 = vmatpush1.msra.mxu0 %v2676
    %2698 = vmatprep.subr.mxu0 0.0
    %2699 = vmatpush1.msra.mxu0 %v2677
    %2700 = vmatprep.subr.mxu0 0.0
    %2701 = vmatpush1.msra.mxu0 0.0
    %2702 = vmatprep.subr.mxu0 0.0
    %2703 = vmatpush1.msra.mxu0 0.0
    %2704 = vmatprep.subr.mxu0 0.0
    %2705 = vmatpush1.msra.mxu0 0.0
    %2706 = vmatprep.subr.mxu0 0.0
    %2707 = vmatpush1.msra.mxu0 0.0
    %2708 = vmatprep.subr.mxu0 0.0
    %2709 = vmatpush1.msra.mxu0 0.0
    %2710 = vmatprep.subr.mxu0 0.0
    %2711 = vmatpush1.msra.mxu0 0.0
    %2712 = vmatprep.subr.mxu0 0.0
    %2713 = vmatpush1.msra.mxu0 0.0
    %2714 = vmatprep.subr.mxu0 0.0
    %2715 = vmatpush1.msra.mxu0 0.0
    %2716 = vmatprep.subr.mxu0 0.0
    %2717 = vmatpush1.msra.mxu0 0.0
    %2718 = vmatprep.subr.mxu0 0.0
    %2719 = vmatpush1.msra.mxu0 0.0
    %2720 = vmatprep.subr.mxu0 0.0
    %2721 = vmatpush1.msra.mxu0 0.0
    %2722 = vmatprep.subr.mxu0 0.0
    %2723 = vmatpush1.msra.mxu0 0.0
    %2724 = vmatprep.subr.mxu0 0.0
    %2725 = vmatpush1.msra.mxu0 0.0
    %2726 = vmatprep.subr.mxu0 0.0
    %2727 = vmatpush1.msra.mxu0 0.0
    %2728 = vmatprep.subr.mxu0 0.0
    %2729 = vmatpush1.msra.mxu0 0.0
    %2730 = vmatprep.subr.mxu0 0.0
    %2731 = vmatpush1.msra.mxu0 0.0
    %2732 = vmatprep.subr.mxu0 0.0
    %2733 = vmatpush1.msra.mxu0 0.0
    %2734 = vmatprep.subr.mxu0 0.0
    %2735 = vmatpush1.msra.mxu0 0.0
    %2736 = vmatprep.subr.mxu0 0.0
    %2737 = vmatpush1.msra.mxu0 0.0
    %2738 = vmatprep.subr.mxu0 0.0
    %2739 = vmatpush1.msra.mxu0 0.0
    %2740 = vmatprep.subr.mxu0 0.0
    %2741 = vmatpush1.msra.mxu0 0.0
    %2742 = vmatprep.subr.mxu0 0.0
    %2743 = vmatpush1.msra.mxu0 0.0
    %2744 = vmatprep.subr.mxu0 0.0
    %2745 = vmatpush1.msra.mxu0 0.0
    %2746 = vmatprep.subr.mxu0 0.0
    %2747 = vmatpush1.msra.mxu0 0.0
    %2748 = vmatprep.subr.mxu0 0.0
    %2749 = vmatpush1.msra.mxu0 0.0
    %2750 = vmatprep.subr.mxu0 0.0
    %2751 = vmatpush1.msra.mxu0 0.0
    %2752 = vmatprep.subr.mxu0 0.0
    %2753 = vmatpush1.msra.mxu0 0.0
    %2754 = vmatprep.subr.mxu0 0.0
    %2755 = vmatpush1.msra.mxu0 0.0
    %2756 = vmatprep.mubr.f32.mxu0 0.0
    %2757 = vmatmul.mubr.f32.gmra.mrb[0].mxu0 %v2690
    %v2758 = vpop.f32.mrb[0].mxu0
    %v2759 = vadd.f32 %v2687, %v2758
    %v2760 = vpop.f32.mrb[0].mxu0
    %2761 = vdwg.mxu0
    %v2763 = vsel %vm142, %v2673, 0
    %2765 = vmatprep.subr.mxu0 0.0
    %2766 = vmatpush1.msra.mxu0 %v2678
    %2767 = vmatprep.subr.mxu0 0.0
    %2768 = vmatpush1.msra.mxu0 %v2679
    %2769 = vmatprep.subr.mxu0 0.0
    %2770 = vmatpush1.msra.mxu0 %v2680
    %2771 = vmatprep.subr.mxu0 0.0
    %2772 = vmatpush1.msra.mxu0 %v2681
    %2773 = vmatprep.subr.mxu0 0.0
    %2774 = vmatpush1.msra.mxu0 0.0
    %2775 = vmatprep.subr.mxu0 0.0
    %2776 = vmatpush1.msra.mxu0 0.0
    %2777 = vmatprep.subr.mxu0 0.0
    %2778 = vmatpush1.msra.mxu0 0.0
    %2779 = vmatprep.subr.mxu0 0.0
    %2780 = vmatpush1.msra.mxu0 0.0
    %2781 = vmatprep.subr.mxu0 0.0
    %2782 = vmatpush1.msra.mxu0 0.0
    %2783 = vmatprep.subr.mxu0 0.0
    %2784 = vmatpush1.msra.mxu0 0.0
    %2785 = vmatprep.subr.mxu0 0.0
    %2786 = vmatpush1.msra.mxu0 0.0
    %2787 = vmatprep.subr.mxu0 0.0
    %2788 = vmatpush1.msra.mxu0 0.0
    %2789 = vmatprep.subr.mxu0 0.0
    %2790 = vmatpush1.msra.mxu0 0.0
    %2791 = vmatprep.subr.mxu0 0.0
    %2792 = vmatpush1.msra.mxu0 0.0
    %2793 = vmatprep.subr.mxu0 0.0
    %2794 = vmatpush1.msra.mxu0 0.0
    %2795 = vmatprep.subr.mxu0 0.0
    %2796 = vmatpush1.msra.mxu0 0.0
    %2797 = vmatprep.subr.mxu0 0.0
    %2798 = vmatpush1.msra.mxu0 0.0
    %2799 = vmatprep.subr.mxu0 0.0
    %2800 = vmatpush1.msra.mxu0 0.0
    %2801 = vmatprep.subr.mxu0 0.0
    %2802 = vmatpush1.msra.mxu0 0.0
    %2803 = vmatprep.subr.mxu0 0.0
    %2804 = vmatpush1.msra.mxu0 0.0
    %2805 = vmatprep.subr.mxu0 0.0
    %2806 = vmatpush1.msra.mxu0 0.0
    %2807 = vmatprep.subr.mxu0 0.0
    %2808 = vmatpush1.msra.mxu0 0.0
    %2809 = vmatprep.subr.mxu0 0.0
    %2810 = vmatpush1.msra.mxu0 0.0
    %2811 = vmatprep.subr.mxu0 0.0
    %2812 = vmatpush1.msra.mxu0 0.0
    %2813 = vmatprep.subr.mxu0 0.0
    %2814 = vmatpush1.msra.mxu0 0.0
    %2815 = vmatprep.subr.mxu0 0.0
    %2816 = vmatpush1.msra.mxu0 0.0
    %2817 = vmatprep.subr.mxu0 0.0
    %2818 = vmatpush1.msra.mxu0 0.0
    %2819 = vmatprep.subr.mxu0 0.0
    %2820 = vmatpush1.msra.mxu0 0.0
    %2821 = vmatprep.subr.mxu0 0.0
    %2822 = vmatpush1.msra.mxu0 0.0
    %2823 = vmatprep.subr.mxu0 0.0
    %2824 = vmatpush1.msra.mxu0 0.0
    %2825 = vmatprep.subr.mxu0 0.0
    %2826 = vmatpush1.msra.mxu0 0.0
    %2827 = vmatprep.subr.mxu0 0.0
    %2828 = vmatpush1.msra.mxu0 0.0
    %2829 = vmatprep.mubr.f32.mxu0 0.0
    %2830 = vmatmul.mubr.f32.gmra.mrb[0].mxu0 %v2763
    %v2831 = vpop.f32.mrb[0].mxu0
    %v2832 = vadd.f32 %v2687, %v2831
    %v2833 = vpop.f32.mrb[0].mxu0
    %2834 = vdwg.mxu0
    %v2835 = vmul.f32 %v2759, 0.5
    %v2836 = vmul.f32 %v2832, 0.5
    %v2837 = vmul.f32 %v2759, 0.70710677
    %v2838 = vmul.f32 %v2832, 0.70710677
    %v2839 = verf.f32.pop %v2837
    %v2840 = verf.f32.pop %v2838
    %v2841 = vadd.f32 %v2839, 1.0
    %v2842 = vadd.f32 %v2840, 1.0
    %v2843 = vmul.f32 %v2835, %v2841
    %v2844 = vmul.f32 %v2836, %v2842
    %v2845 = vld [vmem:[%s8] sm:$0xff]
    %v2846 = vld [vmem:[%s8 + $0x8] sm:$0xff]
    %v2847 = vld [vmem:[%s8 + $0x10] sm:$0xff]
    %v2848 = vld [vmem:[%s8 + $0x18] sm:$0xff]
    %v2849 = vld [vmem:[%s8 + $0x20] sm:$0xff]
    %v2850 = vld [vmem:[%s8 + $0x28] sm:$0xff]
    %v2851 = vld [vmem:[%s8 + $0x30] sm:$0xff]
    %v2852 = vld [vmem:[%s8 + $0x38] sm:$0xff]
    %v2853 = vld [vmem:[%s8 + $0x40] sm:$0xff]
    %v2854 = vld [vmem:[%s8 + $0x48] sm:$0xff]
    %v2855 = vld [vmem:[%s8 + $0x50] sm:$0xff]
    %v2856 = vld [vmem:[%s8 + $0x58] sm:$0xff]
    %v2857 = vld [vmem:[%s8 + $0x60] sm:$0xff]
    %v2858 = vld [vmem:[%s8 + $0x68] sm:$0xff]
    %v2859 = vld [vmem:[%s8 + $0x70] sm:$0xff]
    %v2860 = vld [vmem:[%s8 + $0x78] sm:$0xff]
    %v2861 = vld [vmem:[%s9] sm:$0x1]
    %v2863 = vlaneseq
    %v2864 = vshrl.u32 %v2863, 7
    %v2865 = vsub.s32 0, %v2864
    %v2866 = vrot.slane %v2861, %v2865
    %vm2868 = vcmask 523264
    %v2870 = vsel %vm2868, %v2843, 0
    %2872 = vmatprep.subr.mxu0 0.0
    %2873 = vmatpush1.msra.mxu0 %v2845
    %2874 = vmatprep.subr.mxu0 0.0
    %2875 = vmatpush1.msra.mxu0 %v2846
    %2876 = vmatprep.subr.mxu0 0.0
    %2877 = vmatpush1.msra.mxu0 %v2847
    %2878 = vmatprep.subr.mxu0 0.0
    %2879 = vmatpush1.msra.mxu0 %v2848
    %2880 = vmatprep.subr.mxu0 0.0
    %2881 = vmatpush1.msra.mxu0 %v2849
    %2882 = vmatprep.subr.mxu0 0.0
    %2883 = vmatpush1.msra.mxu0 %v2850
    %2884 = vmatprep.subr.mxu0 0.0
    %2885 = vmatpush1.msra.mxu0 %v2851
    %2886 = vmatprep.subr.mxu0 0.0
    %2887 = vmatpush1.msra.mxu0 %v2852
    %2888 = vmatprep.subr.mxu0 0.0
    %2889 = vmatpush1.msra.mxu0 0.0
    %2890 = vmatprep.subr.mxu0 0.0
    %2891 = vmatpush1.msra.mxu0 0.0
    %2892 = vmatprep.subr.mxu0 0.0
    %2893 = vmatpush1.msra.mxu0 0.0
    %2894 = vmatprep.subr.mxu0 0.0
    %2895 = vmatpush1.msra.mxu0 0.0
    %2896 = vmatprep.subr.mxu0 0.0
    %2897 = vmatpush1.msra.mxu0 0.0
    %2898 = vmatprep.subr.mxu0 0.0
    %2899 = vmatpush1.msra.mxu0 0.0
    %2900 = vmatprep.subr.mxu0 0.0
    %2901 = vmatpush1.msra.mxu0 0.0
    %2902 = vmatprep.subr.mxu0 0.0
    %2903 = vmatpush1.msra.mxu0 0.0
    %2904 = vmatprep.subr.mxu0 0.0
    %2905 = vmatpush1.msra.mxu0 0.0
    %2906 = vmatprep.subr.mxu0 0.0
    %2907 = vmatpush1.msra.mxu0 0.0
    %2908 = vmatprep.subr.mxu0 0.0
    %2909 = vmatpush1.msra.mxu0 0.0
    %2910 = vmatprep.subr.mxu0 0.0
    %2911 = vmatpush1.msra.mxu0 0.0
    %2912 = vmatprep.subr.mxu0 0.0
    %2913 = vmatpush1.msra.mxu0 0.0
    %2914 = vmatprep.subr.mxu0 0.0
    %2915 = vmatpush1.msra.mxu0 0.0
    %2916 = vmatprep.subr.mxu0 0.0
    %2917 = vmatpush1.msra.mxu0 0.0
    %2918 = vmatprep.subr.mxu0 0.0
    %2919 = vmatpush1.msra.mxu0 0.0
    %2920 = vmatprep.subr.mxu0 0.0
    %2921 = vmatpush1.msra.mxu0 0.0
    %2922 = vmatprep.subr.mxu0 0.0
    %2923 = vmatpush1.msra.mxu0 0.0
    %2924 = vmatprep.subr.mxu0 0.0
    %2925 = vmatpush1.msra.mxu0 0.0
    %2926 = vmatprep.subr.mxu0 0.0
    %2927 = vmatpush1.msra.mxu0 0.0
    %2928 = vmatprep.subr.mxu0 0.0
    %2929 = vmatpush1.msra.mxu0 0.0
    %2930 = vmatprep.subr.mxu0 0.0
    %2931 = vmatpush1.msra.mxu0 0.0
    %2932 = vmatprep.subr.mxu0 0.0
    %2933 = vmatpush1.msra.mxu0 0.0
    %2934 = vmatprep.subr.mxu0 0.0
    %2935 = vmatpush1.msra.mxu0 0.0
    %2936 = vmatprep.mubr.f32.mxu0 0.0
    %2937 = vmatmul.mubr.f32.gmra.mrb[0].mxu0 %v2870
    %v2938 = vpop.f32.mrb[0].mxu0
    %v2939 = vadd.f32 %v2866, %v2938
    %v2940 = vpop.f32.mrb[0].mxu0
    %2941 = vdwg.mxu0
    %v2943 = vsel %vm2868, %v2844, 0
    %2945 = vmatprep.subr.mxu0 0.0
    %2946 = vmatpush1.msra.mxu0 %v2853
    %2947 = vmatprep.subr.mxu0 0.0
    %2948 = vmatpush1.msra.mxu0 %v2854
    %2949 = vmatprep.subr.mxu0 0.0
    %2950 = vmatpush1.msra.mxu0 %v2855
    %2951 = vmatprep.subr.mxu0 0.0
    %2952 = vmatpush1.msra.mxu0 %v2856
    %2953 = vmatprep.subr.mxu0 0.0
    %2954 = vmatpush1.msra.mxu0 %v2857
    %2955 = vmatprep.subr.mxu0 0.0
    %2956 = vmatpush1.msra.mxu0 %v2858
    %2957 = vmatprep.subr.mxu0 0.0
    %2958 = vmatpush1.msra.mxu0 %v2859
    %2959 = vmatprep.subr.mxu0 0.0
    %2960 = vmatpush1.msra.mxu0 %v2860
    %2961 = vmatprep.subr.mxu0 0.0
    %2962 = vmatpush1.msra.mxu0 0.0
    %2963 = vmatprep.subr.mxu0 0.0
    %2964 = vmatpush1.msra.mxu0 0.0
    %2965 = vmatprep.subr.mxu0 0.0
    %2966 = vmatpush1.msra.mxu0 0.0
    %2967 = vmatprep.subr.mxu0 0.0
    %2968 = vmatpush1.msra.mxu0 0.0
    %2969 = vmatprep.subr.mxu0 0.0
    %2970 = vmatpush1.msra.mxu0 0.0
    %2971 = vmatprep.subr.mxu0 0.0
    %2972 = vmatpush1.msra.mxu0 0.0
    %2973 = vmatprep.subr.mxu0 0.0
    %2974 = vmatpush1.msra.mxu0 0.0
    %2975 = vmatprep.subr.mxu0 0.0
    %2976 = vmatpush1.msra.mxu0 0.0
    %2977 = vmatprep.subr.mxu0 0.0
    %2978 = vmatpush1.msra.mxu0 0.0
    %2979 = vmatprep.subr.mxu0 0.0
    %2980 = vmatpush1.msra.mxu0 0.0
    %2981 = vmatprep.subr.mxu0 0.0
    %2982 = vmatpush1.msra.mxu0 0.0
    %2983 = vmatprep.subr.mxu0 0.0
    %2984 = vmatpush1.msra.mxu0 0.0
    %2985 = vmatprep.subr.mxu0 0.0
    %2986 = vmatpush1.msra.mxu0 0.0
    %2987 = vmatprep.subr.mxu0 0.0
    %2988 = vmatpush1.msra.mxu0 0.0
    %2989 = vmatprep.subr.mxu0 0.0
    %2990 = vmatpush1.msra.mxu0 0.0
    %2991 = vmatprep.subr.mxu0 0.0
    %2992 = vmatpush1.msra.mxu0 0.0
    %2993 = vmatprep.subr.mxu0 0.0
    %2994 = vmatpush1.msra.mxu0 0.0
    %2995 = vmatprep.subr.mxu0 0.0
    %2996 = vmatpush1.msra.mxu0 0.0
    %2997 = vmatprep.subr.mxu0 0.0
    %2998 = vmatpush1.msra.mxu0 0.0
    %2999 = vmatprep.subr.mxu0 0.0
    %3000 = vmatpush1.msra.mxu0 0.0
    %3001 = vmatprep.subr.mxu0 0.0
    %3002 = vmatpush1.msra.mxu0 0.0
    %3003 = vmatprep.subr.mxu0 0.0
    %3004 = vmatpush1.msra.mxu0 0.0
    %3005 = vmatprep.subr.mxu0 0.0
    %3006 = vmatpush1.msra.mxu0 0.0
    %3007 = vmatprep.subr.mxu0 0.0
    %3008 = vmatpush1.msra.mxu0 0.0
    %3009 = vmatprep.mubr.f32.mxu0 0.0
    %3010 = vmatmul.mubr.f32.gmra.mrb[0].mxu0 %v2943
    %v3011 = vpop.f32.mrb[0].mxu0
    %v3012 = vadd.f32 %v2866, %v3011
    %v3013 = vpop.f32.mrb[0].mxu0
    %3014 = vdwg.mxu0
    %v3015 = vadd.f32 %v2672, %v2939
    %v3016 = vadd.f32 %v2673, %v3012
    %v3017 = vsel %vm142, %v3015, 0.0
    %3018 = vadd.xlane.f32.xlu0 %v3017
    %v3019 = vpop.xlane.xlu0 %3018
    %v3020 = vsel %vm142, %v3016, 0.0
    %3021 = vadd.xlane.f32.xlu0 %v3020
    %v3022 = vpop.xlane.xlu0 %3021
    %v3023 = vmul.f32 %v3019, %v2637
    %v3024 = vmul.f32 %v3022, %v2637
    %v3025 = vsub.f32 %v3015, %v3023
    %v3026 = vsub.f32 %v3016, %v3024
    %v3027 = vmul.f32 %v3025, %v3025
    %v3028 = vmul.f32 %v3026, %v3026
    %v3029 = vsel %vm142, %v3027, 0.0
    %3030 = vadd.xlane.f32.xlu0 %v3029
    %v3031 = vpop.xlane.xlu0 %3030
    %v3032 = vsel %vm142, %v3028, 0.0
    %3033 = vadd.xlane.f32.xlu0 %v3032
    %v3034 = vpop.xlane.xlu0 %3033
    %v3035 = vmul.f32 %v3031, %v2637
    %v3036 = vmul.f32 %v3034, %v2637
    %v3037 = vadd.f32 %v3035, 1e-05
    %v3038 = vadd.f32 %v3036, 1e-05
    %v3039 = vrsqrt.pop %v3037
    %v3040 = vrsqrt.pop %v3038
    %v3041 = vmul.f32 %v3025, %v3039
    %v3042 = vmul.f32 %v3026, %v3040
    %v3043 = vmul.f32 %v3041, %v2662
    %v3044 = vmul.f32 %v3042, %v2662
    %v3045 = vadd.f32 %v3043, %v2670
    %v3046 = vadd.f32 %v3044, %v2670
    %s3047 = scalar_lea.vmem %s10, 1
    %v3048 = vld [vmem:[%s3047] sm:$0x1]
    %s3049 = scalar_lea.vmem %s11, 1
    %v3050 = vld [vmem:[%s3049] sm:$0x1]
    %s3051 = scalar_lea.vmem %s2, 256
    %v3052 = vld [vmem:[%s3051] sm:$0xff]
    %v3053 = vld [vmem:[%s3051 + $0x8] sm:$0xff]
    %v3054 = vld [vmem:[%s3051 + $0x10] sm:$0xff]
    %v3055 = vld [vmem:[%s3051 + $0x18] sm:$0xff]
    %v3056 = vld [vmem:[%s3051 + $0x20] sm:$0xff]
    %v3057 = vld [vmem:[%s3051 + $0x28] sm:$0xff]
    %v3058 = vld [vmem:[%s3051 + $0x30] sm:$0xff]
    %v3059 = vld [vmem:[%s3051 + $0x38] sm:$0xff]
    %v3060 = vld [vmem:[%s3051 + $0x40] sm:$0xff]
    %v3061 = vld [vmem:[%s3051 + $0x48] sm:$0xff]
    %v3062 = vld [vmem:[%s3051 + $0x50] sm:$0xff]
    %v3063 = vld [vmem:[%s3051 + $0x58] sm:$0xff]
    %v3064 = vld [vmem:[%s3051 + $0x60] sm:$0xff]
    %v3065 = vld [vmem:[%s3051 + $0x68] sm:$0xff]
    %v3066 = vld [vmem:[%s3051 + $0x70] sm:$0xff]
    %v3067 = vld [vmem:[%s3051 + $0x78] sm:$0xff]
    %v3068 = vld [vmem:[%s3051 + $0x80] sm:$0xff]
    %v3069 = vld [vmem:[%s3051 + $0x88] sm:$0xff]
    %v3070 = vld [vmem:[%s3051 + $0x90] sm:$0xff]
    %v3071 = vld [vmem:[%s3051 + $0x98] sm:$0xff]
    %v3072 = vld [vmem:[%s3051 + $0xa0] sm:$0xff]
    %v3073 = vld [vmem:[%s3051 + $0xa8] sm:$0xff]
    %v3074 = vld [vmem:[%s3051 + $0xb0] sm:$0xff]
    %v3075 = vld [vmem:[%s3051 + $0xb8] sm:$0xff]
    %v3076 = vld [vmem:[%s3051 + $0xc0] sm:$0xff]
    %v3077 = vld [vmem:[%s3051 + $0xc8] sm:$0xff]
    %v3078 = vld [vmem:[%s3051 + $0xd0] sm:$0xff]
    %v3079 = vld [vmem:[%s3051 + $0xd8] sm:$0xff]
    %v3080 = vld [vmem:[%s3051 + $0xe0] sm:$0xff]
    %v3081 = vld [vmem:[%s3051 + $0xe8] sm:$0xff]
    %v3082 = vld [vmem:[%s3051 + $0xf0] sm:$0xff]
    %v3083 = vld [vmem:[%s3051 + $0xf8] sm:$0xff]
    %s3084 = scalar_lea.vmem %s3, 8
    %v3085 = vld [vmem:[%s3084] sm:$0x1]
    %v3086 = vld [vmem:[%s3084 + $0x1] sm:$0x1]
    %v3087 = vld [vmem:[%s3084 + $0x2] sm:$0x1]
    %v3088 = vld [vmem:[%s3084 + $0x3] sm:$0x1]
    %v3089 = vld [vmem:[%s3084 + $0x4] sm:$0x1]
    %v3090 = vld [vmem:[%s3084 + $0x5] sm:$0x1]
    %v3091 = vld [vmem:[%s3084 + $0x6] sm:$0x1]
    %v3092 = vld [vmem:[%s3084 + $0x7] sm:$0x1]
    %v3101 = vlaneseq
    %v3102 = vshrl.u32 %v3101, 7
    %v3103 = vsub.s32 0, %v3102
    %v3104 = vrot.slane %v3085, %v3103
    %v3105 = vlaneseq
    %v3106 = vshrl.u32 %v3105, 7
    %v3107 = vsub.s32 0, %v3106
    %v3108 = vrot.slane %v3086, %v3107
    %v3109 = vlaneseq
    %v3110 = vshrl.u32 %v3109, 7
    %v3111 = vsub.s32 0, %v3110
    %v3112 = vrot.slane %v3087, %v3111
    %v3113 = vlaneseq
    %v3114 = vshrl.u32 %v3113, 7
    %v3115 = vsub.s32 0, %v3114
    %v3116 = vrot.slane %v3088, %v3115
    %v3117 = vlaneseq
    %v3118 = vshrl.u32 %v3117, 7
    %v3119 = vsub.s32 0, %v3118
    %v3120 = vrot.slane %v3089, %v3119
    %v3121 = vlaneseq
    %v3122 = vshrl.u32 %v3121, 7
    %v3123 = vsub.s32 0, %v3122
    %v3124 = vrot.slane %v3090, %v3123
    %v3125 = vlaneseq
    %v3126 = vshrl.u32 %v3125, 7
    %v3127 = vsub.s32 0, %v3126
    %v3128 = vrot.slane %v3091, %v3127
    %v3129 = vlaneseq
    %v3130 = vshrl.u32 %v3129, 7
    %v3131 = vsub.s32 0, %v3130
    %v3132 = vrot.slane %v3092, %v3131
    %v3142 = vsel %vm142, %v3045, 0
    %3144 = vmatprep.subr.mxu0 0.0
    %3145 = vmatpush1.msra.mxu0 %v3052
    %3146 = vmatprep.subr.mxu0 0.0
    %3147 = vmatpush1.msra.mxu0 %v3053
    %3148 = vmatprep.subr.mxu0 0.0
    %3149 = vmatpush1.msra.mxu0 %v3054
    %3150 = vmatprep.subr.mxu0 0.0
    %3151 = vmatpush1.msra.mxu0 %v3055
    %3152 = vmatprep.subr.mxu0 0.0
    %3153 = vmatpush1.msra.mxu0 0.0
    %3154 = vmatprep.subr.mxu0 0.0
    %3155 = vmatpush1.msra.mxu0 0.0
    %3156 = vmatprep.subr.mxu0 0.0
    %3157 = vmatpush1.msra.mxu0 0.0
    %3158 = vmatprep.subr.mxu0 0.0
    %3159 = vmatpush1.msra.mxu0 0.0
    %3160 = vmatprep.subr.mxu0 0.0
    %3161 = vmatpush1.msra.mxu0 0.0
    %3162 = vmatprep.subr.mxu0 0.0
    %3163 = vmatpush1.msra.mxu0 0.0
    %3164 = vmatprep.subr.mxu0 0.0
    %3165 = vmatpush1.msra.mxu0 0.0
    %3166 = vmatprep.subr.mxu0 0.0
    %3167 = vmatpush1.msra.mxu0 0.0
    %3168 = vmatprep.subr.mxu0 0.0
    %3169 = vmatpush1.msra.mxu0 0.0
    %3170 = vmatprep.subr.mxu0 0.0
    %3171 = vmatpush1.msra.mxu0 0.0
    %3172 = vmatprep.subr.mxu0 0.0
    %3173 = vmatpush1.msra.mxu0 0.0
    %3174 = vmatprep.subr.mxu0 0.0
    %3175 = vmatpush1.msra.mxu0 0.0
    %3176 = vmatprep.subr.mxu0 0.0
    %3177 = vmatpush1.msra.mxu0 0.0
    %3178 = vmatprep.subr.mxu0 0.0
    %3179 = vmatpush1.msra.mxu0 0.0
    %3180 = vmatprep.subr.mxu0 0.0
    %3181 = vmatpush1.msra.mxu0 0.0
    %3182 = vmatprep.subr.mxu0 0.0
    %3183 = vmatpush1.msra.mxu0 0.0
    %3184 = vmatprep.subr.mxu0 0.0
    %3185 = vmatpush1.msra.mxu0 0.0
    %3186 = vmatprep.subr.mxu0 0.0
    %3187 = vmatpush1.msra.mxu0 0.0
    %3188 = vmatprep.subr.mxu0 0.0
    %3189 = vmatpush1.msra.mxu0 0.0
    %3190 = vmatprep.subr.mxu0 0.0
    %3191 = vmatpush1.msra.mxu0 0.0
    %3192 = vmatprep.subr.mxu0 0.0
    %3193 = vmatpush1.msra.mxu0 0.0
    %3194 = vmatprep.subr.mxu0 0.0
    %3195 = vmatpush1.msra.mxu0 0.0
    %3196 = vmatprep.subr.mxu0 0.0
    %3197 = vmatpush1.msra.mxu0 0.0
    %3198 = vmatprep.subr.mxu0 0.0
    %3199 = vmatpush1.msra.mxu0 0.0
    %3200 = vmatprep.subr.mxu0 0.0
    %3201 = vmatpush1.msra.mxu0 0.0
    %3202 = vmatprep.subr.mxu0 0.0
    %3203 = vmatpush1.msra.mxu0 0.0
    %3204 = vmatprep.subr.mxu0 0.0
    %3205 = vmatpush1.msra.mxu0 0.0
    %3206 = vmatprep.subr.mxu0 0.0
    %3207 = vmatpush1.msra.mxu0 0.0
    %3208 = vmatprep.mubr.f32.mxu0 0.0
    %3209 = vmatmul.mubr.f32.gmra.mrb[0].mxu0 %v3142
    %v3210 = vpop.f32.mrb[0].mxu0
    %v3211 = vadd.f32 %v3104, %v3210
    %v3212 = vpop.f32.mrb[0].mxu0
    %3213 = vdwg.mxu0
    %3214 = vmatprep.subr.mxu0 0.0
    %3215 = vmatpush1.msra.mxu0 %v3056
    %3216 = vmatprep.subr.mxu0 0.0
    %3217 = vmatpush1.msra.mxu0 %v3057
    %3218 = vmatprep.subr.mxu0 0.0
    %3219 = vmatpush1.msra.mxu0 %v3058
    %3220 = vmatprep.subr.mxu0 0.0
    %3221 = vmatpush1.msra.mxu0 %v3059
    %3222 = vmatprep.subr.mxu0 0.0
    %3223 = vmatpush1.msra.mxu0 0.0
    %3224 = vmatprep.subr.mxu0 0.0
    %3225 = vmatpush1.msra.mxu0 0.0
    %3226 = vmatprep.subr.mxu0 0.0
    %3227 = vmatpush1.msra.mxu0 0.0
    %3228 = vmatprep.subr.mxu0 0.0
    %3229 = vmatpush1.msra.mxu0 0.0
    %3230 = vmatprep.subr.mxu0 0.0
    %3231 = vmatpush1.msra.mxu0 0.0
    %3232 = vmatprep.subr.mxu0 0.0
    %3233 = vmatpush1.msra.mxu0 0.0
    %3234 = vmatprep.subr.mxu0 0.0
    %3235 = vmatpush1.msra.mxu0 0.0
    %3236 = vmatprep.subr.mxu0 0.0
    %3237 = vmatpush1.msra.mxu0 0.0
    %3238 = vmatprep.subr.mxu0 0.0
    %3239 = vmatpush1.msra.mxu0 0.0
    %3240 = vmatprep.subr.mxu0 0.0
    %3241 = vmatpush1.msra.mxu0 0.0
    %3242 = vmatprep.subr.mxu0 0.0
    %3243 = vmatpush1.msra.mxu0 0.0
    %3244 = vmatprep.subr.mxu0 0.0
    %3245 = vmatpush1.msra.mxu0 0.0
    %3246 = vmatprep.subr.mxu0 0.0
    %3247 = vmatpush1.msra.mxu0 0.0
    %3248 = vmatprep.subr.mxu0 0.0
    %3249 = vmatpush1.msra.mxu0 0.0
    %3250 = vmatprep.subr.mxu0 0.0
    %3251 = vmatpush1.msra.mxu0 0.0
    %3252 = vmatprep.subr.mxu0 0.0
    %3253 = vmatpush1.msra.mxu0 0.0
    %3254 = vmatprep.subr.mxu0 0.0
    %3255 = vmatpush1.msra.mxu0 0.0
    %3256 = vmatprep.subr.mxu0 0.0
    %3257 = vmatpush1.msra.mxu0 0.0
    %3258 = vmatprep.subr.mxu0 0.0
    %3259 = vmatpush1.msra.mxu0 0.0
    %3260 = vmatprep.subr.mxu0 0.0
    %3261 = vmatpush1.msra.mxu0 0.0
    %3262 = vmatprep.subr.mxu0 0.0
    %3263 = vmatpush1.msra.mxu0 0.0
    %3264 = vmatprep.subr.mxu0 0.0
    %3265 = vmatpush1.msra.mxu0 0.0
    %3266 = vmatprep.subr.mxu0 0.0
    %3267 = vmatpush1.msra.mxu0 0.0
    %3268 = vmatprep.subr.mxu0 0.0
    %3269 = vmatpush1.msra.mxu0 0.0
    %3270 = vmatprep.subr.mxu0 0.0
    %3271 = vmatpush1.msra.mxu0 0.0
    %3272 = vmatprep.subr.mxu0 0.0
    %3273 = vmatpush1.msra.mxu0 0.0
    %3274 = vmatprep.subr.mxu0 0.0
    %3275 = vmatpush1.msra.mxu0 0.0
    %3276 = vmatprep.subr.mxu0 0.0
    %3277 = vmatpush1.msra.mxu0 0.0
    %3278 = vmatprep.mubr.f32.mxu0 0.0
    %3279 = vmatmul.mubr.f32.gmra.mrb[0].mxu0 %v3142
    %v3280 = vpop.f32.mrb[0].mxu0
    %v3281 = vadd.f32 %v3108, %v3280
    %v3282 = vpop.f32.mrb[0].mxu0
    %3283 = vdwg.mxu0
    %3284 = vmatprep.subr.mxu0 0.0
    %3285 = vmatpush1.msra.mxu0 %v3060
    %3286 = vmatprep.subr.mxu0 0.0
    %3287 = vmatpush1.msra.mxu0 %v3061
    %3288 = vmatprep.subr.mxu0 0.0
    %3289 = vmatpush1.msra.mxu0 %v3062
    %3290 = vmatprep.subr.mxu0 0.0
    %3291 = vmatpush1.msra.mxu0 %v3063
    %3292 = vmatprep.subr.mxu0 0.0
    %3293 = vmatpush1.msra.mxu0 0.0
    %3294 = vmatprep.subr.mxu0 0.0
    %3295 = vmatpush1.msra.mxu0 0.0
    %3296 = vmatprep.subr.mxu0 0.0
    %3297 = vmatpush1.msra.mxu0 0.0
    %3298 = vmatprep.subr.mxu0 0.0
    %3299 = vmatpush1.msra.mxu0 0.0
    %3300 = vmatprep.subr.mxu0 0.0
    %3301 = vmatpush1.msra.mxu0 0.0
    %3302 = vmatprep.subr.mxu0 0.0
    %3303 = vmatpush1.msra.mxu0 0.0
    %3304 = vmatprep.subr.mxu0 0.0
    %3305 = vmatpush1.msra.mxu0 0.0
    %3306 = vmatprep.subr.mxu0 0.0
    %3307 = vmatpush1.msra.mxu0 0.0
    %3308 = vmatprep.subr.mxu0 0.0
    %3309 = vmatpush1.msra.mxu0 0.0
    %3310 = vmatprep.subr.mxu0 0.0
    %3311 = vmatpush1.msra.mxu0 0.0
    %3312 = vmatprep.subr.mxu0 0.0
    %3313 = vmatpush1.msra.mxu0 0.0
    %3314 = vmatprep.subr.mxu0 0.0
    %3315 = vmatpush1.msra.mxu0 0.0
    %3316 = vmatprep.subr.mxu0 0.0
    %3317 = vmatpush1.msra.mxu0 0.0
    %3318 = vmatprep.subr.mxu0 0.0
    %3319 = vmatpush1.msra.mxu0 0.0
    %3320 = vmatprep.subr.mxu0 0.0
    %3321 = vmatpush1.msra.mxu0 0.0
    %3322 = vmatprep.subr.mxu0 0.0
    %3323 = vmatpush1.msra.mxu0 0.0
    %3324 = vmatprep.subr.mxu0 0.0
    %3325 = vmatpush1.msra.mxu0 0.0
    %3326 = vmatprep.subr.mxu0 0.0
    %3327 = vmatpush1.msra.mxu0 0.0
    %3328 = vmatprep.subr.mxu0 0.0
    %3329 = vmatpush1.msra.mxu0 0.0
    %3330 = vmatprep.subr.mxu0 0.0
    %3331 = vmatpush1.msra.mxu0 0.0
    %3332 = vmatprep.subr.mxu0 0.0
    %3333 = vmatpush1.msra.mxu0 0.0
    %3334 = vmatprep.subr.mxu0 0.0
    %3335 = vmatpush1.msra.mxu0 0.0
    %3336 = vmatprep.subr.mxu0 0.0
    %3337 = vmatpush1.msra.mxu0 0.0
    %3338 = vmatprep.subr.mxu0 0.0
    %3339 = vmatpush1.msra.mxu0 0.0
    %3340 = vmatprep.subr.mxu0 0.0
    %3341 = vmatpush1.msra.mxu0 0.0
    %3342 = vmatprep.subr.mxu0 0.0
    %3343 = vmatpush1.msra.mxu0 0.0
    %3344 = vmatprep.subr.mxu0 0.0
    %3345 = vmatpush1.msra.mxu0 0.0
    %3346 = vmatprep.subr.mxu0 0.0
    %3347 = vmatpush1.msra.mxu0 0.0
    %3348 = vmatprep.mubr.f32.mxu0 0.0
    %3349 = vmatmul.mubr.f32.gmra.mrb[0].mxu0 %v3142
    %v3350 = vpop.f32.mrb[0].mxu0
    %v3351 = vadd.f32 %v3112, %v3350
    %v3352 = vpop.f32.mrb[0].mxu0
    %3353 = vdwg.mxu0
    %3354 = vmatprep.subr.mxu0 0.0
    %3355 = vmatpush1.msra.mxu0 %v3064
    %3356 = vmatprep.subr.mxu0 0.0
    %3357 = vmatpush1.msra.mxu0 %v3065
    %3358 = vmatprep.subr.mxu0 0.0
    %3359 = vmatpush1.msra.mxu0 %v3066
    %3360 = vmatprep.subr.mxu0 0.0
    %3361 = vmatpush1.msra.mxu0 %v3067
    %3362 = vmatprep.subr.mxu0 0.0
    %3363 = vmatpush1.msra.mxu0 0.0
    %3364 = vmatprep.subr.mxu0 0.0
    %3365 = vmatpush1.msra.mxu0 0.0
    %3366 = vmatprep.subr.mxu0 0.0
    %3367 = vmatpush1.msra.mxu0 0.0
    %3368 = vmatprep.subr.mxu0 0.0
    %3369 = vmatpush1.msra.mxu0 0.0
    %3370 = vmatprep.subr.mxu0 0.0
    %3371 = vmatpush1.msra.mxu0 0.0
    %3372 = vmatprep.subr.mxu0 0.0
    %3373 = vmatpush1.msra.mxu0 0.0
    %3374 = vmatprep.subr.mxu0 0.0
    %3375 = vmatpush1.msra.mxu0 0.0
    %3376 = vmatprep.subr.mxu0 0.0
    %3377 = vmatpush1.msra.mxu0 0.0
    %3378 = vmatprep.subr.mxu0 0.0
    %3379 = vmatpush1.msra.mxu0 0.0
    %3380 = vmatprep.subr.mxu0 0.0
    %3381 = vmatpush1.msra.mxu0 0.0
    %3382 = vmatprep.subr.mxu0 0.0
    %3383 = vmatpush1.msra.mxu0 0.0
    %3384 = vmatprep.subr.mxu0 0.0
    %3385 = vmatpush1.msra.mxu0 0.0
    %3386 = vmatprep.subr.mxu0 0.0
    %3387 = vmatpush1.msra.mxu0 0.0
    %3388 = vmatprep.subr.mxu0 0.0
    %3389 = vmatpush1.msra.mxu0 0.0
    %3390 = vmatprep.subr.mxu0 0.0
    %3391 = vmatpush1.msra.mxu0 0.0
    %3392 = vmatprep.subr.mxu0 0.0
    %3393 = vmatpush1.msra.mxu0 0.0
    %3394 = vmatprep.subr.mxu0 0.0
    %3395 = vmatpush1.msra.mxu0 0.0
    %3396 = vmatprep.subr.mxu0 0.0
    %3397 = vmatpush1.msra.mxu0 0.0
    %3398 = vmatprep.subr.mxu0 0.0
    %3399 = vmatpush1.msra.mxu0 0.0
    %3400 = vmatprep.subr.mxu0 0.0
    %3401 = vmatpush1.msra.mxu0 0.0
    %3402 = vmatprep.subr.mxu0 0.0
    %3403 = vmatpush1.msra.mxu0 0.0
    %3404 = vmatprep.subr.mxu0 0.0
    %3405 = vmatpush1.msra.mxu0 0.0
    %3406 = vmatprep.subr.mxu0 0.0
    %3407 = vmatpush1.msra.mxu0 0.0
    %3408 = vmatprep.subr.mxu0 0.0
    %3409 = vmatpush1.msra.mxu0 0.0
    %3410 = vmatprep.subr.mxu0 0.0
    %3411 = vmatpush1.msra.mxu0 0.0
    %3412 = vmatprep.subr.mxu0 0.0
    %3413 = vmatpush1.msra.mxu0 0.0
    %3414 = vmatprep.subr.mxu0 0.0
    %3415 = vmatpush1.msra.mxu0 0.0
    %3416 = vmatprep.subr.mxu0 0.0
    %3417 = vmatpush1.msra.mxu0 0.0
    %3418 = vmatprep.mubr.f32.mxu0 0.0
    %3419 = vmatmul.mubr.f32.gmra.mrb[0].mxu0 %v3142
    %v3420 = vpop.f32.mrb[0].mxu0
    %v3421 = vadd.f32 %v3116, %v3420
    %v3422 = vpop.f32.mrb[0].mxu0
    %3423 = vdwg.mxu0
    %v3425 = vsel %vm142, %v3046, 0
    %3427 = vmatprep.subr.mxu0 0.0
    %3428 = vmatpush1.msra.mxu0 %v3068
    %3429 = vmatprep.subr.mxu0 0.0
    %3430 = vmatpush1.msra.mxu0 %v3069
    %3431 = vmatprep.subr.mxu0 0.0
    %3432 = vmatpush1.msra.mxu0 %v3070
    %3433 = vmatprep.subr.mxu0 0.0
    %3434 = vmatpush1.msra.mxu0 %v3071
    %3435 = vmatprep.subr.mxu0 0.0
    %3436 = vmatpush1.msra.mxu0 0.0
    %3437 = vmatprep.subr.mxu0 0.0
    %3438 = vmatpush1.msra.mxu0 0.0
    %3439 = vmatprep.subr.mxu0 0.0
    %3440 = vmatpush1.msra.mxu0 0.0
    %3441 = vmatprep.subr.mxu0 0.0
    %3442 = vmatpush1.msra.mxu0 0.0
    %3443 = vmatprep.subr.mxu0 0.0
    %3444 = vmatpush1.msra.mxu0 0.0
    %3445 = vmatprep.subr.mxu0 0.0
    %3446 = vmatpush1.msra.mxu0 0.0
    %3447 = vmatprep.subr.mxu0 0.0
    %3448 = vmatpush1.msra.mxu0 0.0
    %3449 = vmatprep.subr.mxu0 0.0
    %3450 = vmatpush1.msra.mxu0 0.0
    %3451 = vmatprep.subr.mxu0 0.0
    %3452 = vmatpush1.msra.mxu0 0.0
    %3453 = vmatprep.subr.mxu0 0.0
    %3454 = vmatpush1.msra.mxu0 0.0
    %3455 = vmatprep.subr.mxu0 0.0
    %3456 = vmatpush1.msra.mxu0 0.0
    %3457 = vmatprep.subr.mxu0 0.0
    %3458 = vmatpush1.msra.mxu0 0.0
    %3459 = vmatprep.subr.mxu0 0.0
    %3460 = vmatpush1.msra.mxu0 0.0
    %3461 = vmatprep.subr.mxu0 0.0
    %3462 = vmatpush1.msra.mxu0 0.0
    %3463 = vmatprep.subr.mxu0 0.0
    %3464 = vmatpush1.msra.mxu0 0.0
    %3465 = vmatprep.subr.mxu0 0.0
    %3466 = vmatpush1.msra.mxu0 0.0
    %3467 = vmatprep.subr.mxu0 0.0
    %3468 = vmatpush1.msra.mxu0 0.0
    %3469 = vmatprep.subr.mxu0 0.0
    %3470 = vmatpush1.msra.mxu0 0.0
    %3471 = vmatprep.subr.mxu0 0.0
    %3472 = vmatpush1.msra.mxu0 0.0
    %3473 = vmatprep.subr.mxu0 0.0
    %3474 = vmatpush1.msra.mxu0 0.0
    %3475 = vmatprep.subr.mxu0 0.0
    %3476 = vmatpush1.msra.mxu0 0.0
    %3477 = vmatprep.subr.mxu0 0.0
    %3478 = vmatpush1.msra.mxu0 0.0
    %3479 = vmatprep.subr.mxu0 0.0
    %3480 = vmatpush1.msra.mxu0 0.0
    %3481 = vmatprep.subr.mxu0 0.0
    %3482 = vmatpush1.msra.mxu0 0.0
    %3483 = vmatprep.subr.mxu0 0.0
    %3484 = vmatpush1.msra.mxu0 0.0
    %3485 = vmatprep.subr.mxu0 0.0
    %3486 = vmatpush1.msra.mxu0 0.0
    %3487 = vmatprep.subr.mxu0 0.0
    %3488 = vmatpush1.msra.mxu0 0.0
    %3489 = vmatprep.subr.mxu0 0.0
    %3490 = vmatpush1.msra.mxu0 0.0
    %3491 = vmatprep.mubr.f32.mxu0 0.0
    %3492 = vmatmul.mubr.f32.gmra.mrb[0].mxu0 %v3425
    %v3493 = vpop.f32.mrb[0].mxu0
    %v3494 = vadd.f32 %v3120, %v3493
    %v3495 = vpop.f32.mrb[0].mxu0
    %3496 = vdwg.mxu0
    %3497 = vmatprep.subr.mxu0 0.0
    %3498 = vmatpush1.msra.mxu0 %v3072
    %3499 = vmatprep.subr.mxu0 0.0
    %3500 = vmatpush1.msra.mxu0 %v3073
    %3501 = vmatprep.subr.mxu0 0.0
    %3502 = vmatpush1.msra.mxu0 %v3074
    %3503 = vmatprep.subr.mxu0 0.0
    %3504 = vmatpush1.msra.mxu0 %v3075
    %3505 = vmatprep.subr.mxu0 0.0
    %3506 = vmatpush1.msra.mxu0 0.0
    %3507 = vmatprep.subr.mxu0 0.0
    %3508 = vmatpush1.msra.mxu0 0.0
    %3509 = vmatprep.subr.mxu0 0.0
    %3510 = vmatpush1.msra.mxu0 0.0
    %3511 = vmatprep.subr.mxu0 0.0
    %3512 = vmatpush1.msra.mxu0 0.0
    %3513 = vmatprep.subr.mxu0 0.0
    %3514 = vmatpush1.msra.mxu0 0.0
    %3515 = vmatprep.subr.mxu0 0.0
    %3516 = vmatpush1.msra.mxu0 0.0
    %3517 = vmatprep.subr.mxu0 0.0
    %3518 = vmatpush1.msra.mxu0 0.0
    %3519 = vmatprep.subr.mxu0 0.0
    %3520 = vmatpush1.msra.mxu0 0.0
    %3521 = vmatprep.subr.mxu0 0.0
    %3522 = vmatpush1.msra.mxu0 0.0
    %3523 = vmatprep.subr.mxu0 0.0
    %3524 = vmatpush1.msra.mxu0 0.0
    %3525 = vmatprep.subr.mxu0 0.0
    %3526 = vmatpush1.msra.mxu0 0.0
    %3527 = vmatprep.subr.mxu0 0.0
    %3528 = vmatpush1.msra.mxu0 0.0
    %3529 = vmatprep.subr.mxu0 0.0
    %3530 = vmatpush1.msra.mxu0 0.0
    %3531 = vmatprep.subr.mxu0 0.0
    %3532 = vmatpush1.msra.mxu0 0.0
    %3533 = vmatprep.subr.mxu0 0.0
    %3534 = vmatpush1.msra.mxu0 0.0
    %3535 = vmatprep.subr.mxu0 0.0
    %3536 = vmatpush1.msra.mxu0 0.0
    %3537 = vmatprep.subr.mxu0 0.0
    %3538 = vmatpush1.msra.mxu0 0.0
    %3539 = vmatprep.subr.mxu0 0.0
    %3540 = vmatpush1.msra.mxu0 0.0
    %3541 = vmatprep.subr.mxu0 0.0
    %3542 = vmatpush1.msra.mxu0 0.0
    %3543 = vmatprep.subr.mxu0 0.0
    %3544 = vmatpush1.msra.mxu0 0.0
    %3545 = vmatprep.subr.mxu0 0.0
    %3546 = vmatpush1.msra.mxu0 0.0
    %3547 = vmatprep.subr.mxu0 0.0
    %3548 = vmatpush1.msra.mxu0 0.0
    %3549 = vmatprep.subr.mxu0 0.0
    %3550 = vmatpush1.msra.mxu0 0.0
    %3551 = vmatprep.subr.mxu0 0.0
    %3552 = vmatpush1.msra.mxu0 0.0
    %3553 = vmatprep.subr.mxu0 0.0
    %3554 = vmatpush1.msra.mxu0 0.0
    %3555 = vmatprep.subr.mxu0 0.0
    %3556 = vmatpush1.msra.mxu0 0.0
    %3557 = vmatprep.subr.mxu0 0.0
    %3558 = vmatpush1.msra.mxu0 0.0
    %3559 = vmatprep.subr.mxu0 0.0
    %3560 = vmatpush1.msra.mxu0 0.0
    %3561 = vmatprep.mubr.f32.mxu0 0.0
    %3562 = vmatmul.mubr.f32.gmra.mrb[0].mxu0 %v3425
    %v3563 = vpop.f32.mrb[0].mxu0
    %v3564 = vadd.f32 %v3124, %v3563
    %v3565 = vpop.f32.mrb[0].mxu0
    %3566 = vdwg.mxu0
    %3567 = vmatprep.subr.mxu0 0.0
    %3568 = vmatpush1.msra.mxu0 %v3076
    %3569 = vmatprep.subr.mxu0 0.0
    %3570 = vmatpush1.msra.mxu0 %v3077
    %3571 = vmatprep.subr.mxu0 0.0
    %3572 = vmatpush1.msra.mxu0 %v3078
    %3573 = vmatprep.subr.mxu0 0.0
    %3574 = vmatpush1.msra.mxu0 %v3079
    %3575 = vmatprep.subr.mxu0 0.0
    %3576 = vmatpush1.msra.mxu0 0.0
    %3577 = vmatprep.subr.mxu0 0.0
    %3578 = vmatpush1.msra.mxu0 0.0
    %3579 = vmatprep.subr.mxu0 0.0
    %3580 = vmatpush1.msra.mxu0 0.0
    %3581 = vmatprep.subr.mxu0 0.0
    %3582 = vmatpush1.msra.mxu0 0.0
    %3583 = vmatprep.subr.mxu0 0.0
    %3584 = vmatpush1.msra.mxu0 0.0
    %3585 = vmatprep.subr.mxu0 0.0
    %3586 = vmatpush1.msra.mxu0 0.0
    %3587 = vmatprep.subr.mxu0 0.0
    %3588 = vmatpush1.msra.mxu0 0.0
    %3589 = vmatprep.subr.mxu0 0.0
    %3590 = vmatpush1.msra.mxu0 0.0
    %3591 = vmatprep.subr.mxu0 0.0
    %3592 = vmatpush1.msra.mxu0 0.0
    %3593 = vmatprep.subr.mxu0 0.0
    %3594 = vmatpush1.msra.mxu0 0.0
    %3595 = vmatprep.subr.mxu0 0.0
    %3596 = vmatpush1.msra.mxu0 0.0
    %3597 = vmatprep.subr.mxu0 0.0
    %3598 = vmatpush1.msra.mxu0 0.0
    %3599 = vmatprep.subr.mxu0 0.0
    %3600 = vmatpush1.msra.mxu0 0.0
    %3601 = vmatprep.subr.mxu0 0.0
    %3602 = vmatpush1.msra.mxu0 0.0
    %3603 = vmatprep.subr.mxu0 0.0
    %3604 = vmatpush1.msra.mxu0 0.0
    %3605 = vmatprep.subr.mxu0 0.0
    %3606 = vmatpush1.msra.mxu0 0.0
    %3607 = vmatprep.subr.mxu0 0.0
    %3608 = vmatpush1.msra.mxu0 0.0
    %3609 = vmatprep.subr.mxu0 0.0
    %3610 = vmatpush1.msra.mxu0 0.0
    %3611 = vmatprep.subr.mxu0 0.0
    %3612 = vmatpush1.msra.mxu0 0.0
    %3613 = vmatprep.subr.mxu0 0.0
    %3614 = vmatpush1.msra.mxu0 0.0
    %3615 = vmatprep.subr.mxu0 0.0
    %3616 = vmatpush1.msra.mxu0 0.0
    %3617 = vmatprep.subr.mxu0 0.0
    %3618 = vmatpush1.msra.mxu0 0.0
    %3619 = vmatprep.subr.mxu0 0.0
    %3620 = vmatpush1.msra.mxu0 0.0
    %3621 = vmatprep.subr.mxu0 0.0
    %3622 = vmatpush1.msra.mxu0 0.0
    %3623 = vmatprep.subr.mxu0 0.0
    %3624 = vmatpush1.msra.mxu0 0.0
    %3625 = vmatprep.subr.mxu0 0.0
    %3626 = vmatpush1.msra.mxu0 0.0
    %3627 = vmatprep.subr.mxu0 0.0
    %3628 = vmatpush1.msra.mxu0 0.0
    %3629 = vmatprep.subr.mxu0 0.0
    %3630 = vmatpush1.msra.mxu0 0.0
    %3631 = vmatprep.mubr.f32.mxu0 0.0
    %3632 = vmatmul.mubr.f32.gmra.mrb[0].mxu0 %v3425
    %v3633 = vpop.f32.mrb[0].mxu0
    %v3634 = vadd.f32 %v3128, %v3633
    %v3635 = vpop.f32.mrb[0].mxu0
    %3636 = vdwg.mxu0
    %3637 = vmatprep.subr.mxu0 0.0
    %3638 = vmatpush1.msra.mxu0 %v3080
    %3639 = vmatprep.subr.mxu0 0.0
    %3640 = vmatpush1.msra.mxu0 %v3081
    %3641 = vmatprep.subr.mxu0 0.0
    %3642 = vmatpush1.msra.mxu0 %v3082
    %3643 = vmatprep.subr.mxu0 0.0
    %3644 = vmatpush1.msra.mxu0 %v3083
    %3645 = vmatprep.subr.mxu0 0.0
    %3646 = vmatpush1.msra.mxu0 0.0
    %3647 = vmatprep.subr.mxu0 0.0
    %3648 = vmatpush1.msra.mxu0 0.0
    %3649 = vmatprep.subr.mxu0 0.0
    %3650 = vmatpush1.msra.mxu0 0.0
    %3651 = vmatprep.subr.mxu0 0.0
    %3652 = vmatpush1.msra.mxu0 0.0
    %3653 = vmatprep.subr.mxu0 0.0
    %3654 = vmatpush1.msra.mxu0 0.0
    %3655 = vmatprep.subr.mxu0 0.0
    %3656 = vmatpush1.msra.mxu0 0.0
    %3657 = vmatprep.subr.mxu0 0.0
    %3658 = vmatpush1.msra.mxu0 0.0
    %3659 = vmatprep.subr.mxu0 0.0
    %3660 = vmatpush1.msra.mxu0 0.0
    %3661 = vmatprep.subr.mxu0 0.0
    %3662 = vmatpush1.msra.mxu0 0.0
    %3663 = vmatprep.subr.mxu0 0.0
    %3664 = vmatpush1.msra.mxu0 0.0
    %3665 = vmatprep.subr.mxu0 0.0
    %3666 = vmatpush1.msra.mxu0 0.0
    %3667 = vmatprep.subr.mxu0 0.0
    %3668 = vmatpush1.msra.mxu0 0.0
    %3669 = vmatprep.subr.mxu0 0.0
    %3670 = vmatpush1.msra.mxu0 0.0
    %3671 = vmatprep.subr.mxu0 0.0
    %3672 = vmatpush1.msra.mxu0 0.0
    %3673 = vmatprep.subr.mxu0 0.0
    %3674 = vmatpush1.msra.mxu0 0.0
    %3675 = vmatprep.subr.mxu0 0.0
    %3676 = vmatpush1.msra.mxu0 0.0
    %3677 = vmatprep.subr.mxu0 0.0
    %3678 = vmatpush1.msra.mxu0 0.0
    %3679 = vmatprep.subr.mxu0 0.0
    %3680 = vmatpush1.msra.mxu0 0.0
    %3681 = vmatprep.subr.mxu0 0.0
    %3682 = vmatpush1.msra.mxu0 0.0
    %3683 = vmatprep.subr.mxu0 0.0
    %3684 = vmatpush1.msra.mxu0 0.0
    %3685 = vmatprep.subr.mxu0 0.0
    %3686 = vmatpush1.msra.mxu0 0.0
    %3687 = vmatprep.subr.mxu0 0.0
    %3688 = vmatpush1.msra.mxu0 0.0
    %3689 = vmatprep.subr.mxu0 0.0
    %3690 = vmatpush1.msra.mxu0 0.0
    %3691 = vmatprep.subr.mxu0 0.0
    %3692 = vmatpush1.msra.mxu0 0.0
    %3693 = vmatprep.subr.mxu0 0.0
    %3694 = vmatpush1.msra.mxu0 0.0
    %3695 = vmatprep.subr.mxu0 0.0
    %3696 = vmatpush1.msra.mxu0 0.0
    %3697 = vmatprep.subr.mxu0 0.0
    %3698 = vmatpush1.msra.mxu0 0.0
    %3699 = vmatprep.subr.mxu0 0.0
    %3700 = vmatpush1.msra.mxu0 0.0
    %3701 = vmatprep.mubr.f32.mxu0 0.0
    %3702 = vmatmul.mubr.f32.gmra.mrb[0].mxu0 %v3425
    %v3703 = vpop.f32.mrb[0].mxu0
    %v3704 = vadd.f32 %v3132, %v3703
    %v3705 = vpop.f32.mrb[0].mxu0
    %3706 = vdwg.mxu0
    %3708 = vrot.lane.b32.xlu0 %v3211, 120
    %v3709 = vpop.permute.xlu0 %3708
    %v3710 = vsel %vm712, %v3211, 0
    %v3712 = vsel %vm712, %v3709, 0
    %3714 = vmatprep.subr.mxu0 0.0
    %3715 = vmatpush1.xpose.msra.mxu0 %v3712
    %3716 = vmatprep.subr.mxu0 0.0
    %3717 = vmatpush1.xpose.msra.mxu0 0.0
    %3718 = vmatprep.subr.mxu0 0.0
    %3719 = vmatpush1.xpose.msra.mxu0 0.0
    %3720 = vmatprep.subr.mxu0 0.0
    %3721 = vmatpush1.xpose.msra.mxu0 0.0
    %3722 = vmatprep.subr.mxu0 0.0
    %3723 = vmatpush1.xpose.msra.mxu0 0.0
    %3724 = vmatprep.subr.mxu0 0.0
    %3725 = vmatpush1.xpose.msra.mxu0 0.0
    %3726 = vmatprep.subr.mxu0 0.0
    %3727 = vmatpush1.xpose.msra.mxu0 0.0
    %3728 = vmatprep.subr.mxu0 0.0
    %3729 = vmatpush1.xpose.msra.mxu0 0.0
    %3730 = vmatprep.subr.mxu0 0.0
    %3731 = vmatpush1.xpose.msra.mxu0 0.0
    %3732 = vmatprep.subr.mxu0 0.0
    %3733 = vmatpush1.xpose.msra.mxu0 0.0
    %3734 = vmatprep.subr.mxu0 0.0
    %3735 = vmatpush1.xpose.msra.mxu0 0.0
    %3736 = vmatprep.subr.mxu0 0.0
    %3737 = vmatpush1.xpose.msra.mxu0 0.0
    %3738 = vmatprep.subr.mxu0 0.0
    %3739 = vmatpush1.xpose.msra.mxu0 0.0
    %3740 = vmatprep.subr.mxu0 0.0
    %3741 = vmatpush1.xpose.msra.mxu0 0.0
    %3742 = vmatprep.subr.mxu0 0.0
    %3743 = vmatpush1.xpose.msra.mxu0 0.0
    %3744 = vmatprep.subr.mxu0 0.0
    %3745 = vmatpush1.xpose.msra.mxu0 0.0
    %3746 = vmatprep.subr.mxu0 0.0
    %3747 = vmatpush1.xpose.msra.mxu0 0.0
    %3748 = vmatprep.subr.mxu0 0.0
    %3749 = vmatpush1.xpose.msra.mxu0 0.0
    %3750 = vmatprep.subr.mxu0 0.0
    %3751 = vmatpush1.xpose.msra.mxu0 0.0
    %3752 = vmatprep.subr.mxu0 0.0
    %3753 = vmatpush1.xpose.msra.mxu0 0.0
    %3754 = vmatprep.subr.mxu0 0.0
    %3755 = vmatpush1.xpose.msra.mxu0 0.0
    %3756 = vmatprep.subr.mxu0 0.0
    %3757 = vmatpush1.xpose.msra.mxu0 0.0
    %3758 = vmatprep.subr.mxu0 0.0
    %3759 = vmatpush1.xpose.msra.mxu0 0.0
    %3760 = vmatprep.subr.mxu0 0.0
    %3761 = vmatpush1.xpose.msra.mxu0 0.0
    %3762 = vmatprep.subr.mxu0 0.0
    %3763 = vmatpush1.xpose.msra.mxu0 0.0
    %3764 = vmatprep.subr.mxu0 0.0
    %3765 = vmatpush1.xpose.msra.mxu0 0.0
    %3766 = vmatprep.subr.mxu0 0.0
    %3767 = vmatpush1.xpose.msra.mxu0 0.0
    %3768 = vmatprep.subr.mxu0 0.0
    %3769 = vmatpush1.xpose.msra.mxu0 0.0
    %3770 = vmatprep.subr.mxu0 0.0
    %3771 = vmatpush1.xpose.msra.mxu0 0.0
    %3772 = vmatprep.subr.mxu0 0.0
    %3773 = vmatpush1.xpose.msra.mxu0 0.0
    %3774 = vmatprep.subr.mxu0 0.0
    %3775 = vmatpush1.xpose.msra.mxu0 0.0
    %3776 = vmatprep.subr.mxu0 0.0
    %3777 = vmatpush1.xpose.msra.mxu0 0.0
    %3778 = vmatprep.mubr.f32.mxu0 0.0
    %3779 = vmatmul.mubr.f32.gmra.mrb[0].mxu0 %v3710
    %v3780 = vpop.f32.mrb[0].mxu0
    %v3781 = vadd.f32 %v44, %v3780
    %v3782 = vpop.f32.mrb[0].mxu0
    %3783 = vdwg.mxu0
    %3785 = vrot.lane.b32.xlu0 %v3281, 120
    %v3786 = vpop.permute.xlu0 %3785
    %v3787 = vsel %vm712, %v3281, 0
    %v3789 = vsel %vm712, %v3786, 0
    %3791 = vmatprep.subr.mxu0 0.0
    %3792 = vmatpush1.xpose.msra.mxu0 %v3789
    %3793 = vmatprep.subr.mxu0 0.0
    %3794 = vmatpush1.xpose.msra.mxu0 0.0
    %3795 = vmatprep.subr.mxu0 0.0
    %3796 = vmatpush1.xpose.msra.mxu0 0.0
    %3797 = vmatprep.subr.mxu0 0.0
    %3798 = vmatpush1.xpose.msra.mxu0 0.0
    %3799 = vmatprep.subr.mxu0 0.0
    %3800 = vmatpush1.xpose.msra.mxu0 0.0
    %3801 = vmatprep.subr.mxu0 0.0
    %3802 = vmatpush1.xpose.msra.mxu0 0.0
    %3803 = vmatprep.subr.mxu0 0.0
    %3804 = vmatpush1.xpose.msra.mxu0 0.0
    %3805 = vmatprep.subr.mxu0 0.0
    %3806 = vmatpush1.xpose.msra.mxu0 0.0
    %3807 = vmatprep.subr.mxu0 0.0
    %3808 = vmatpush1.xpose.msra.mxu0 0.0
    %3809 = vmatprep.subr.mxu0 0.0
    %3810 = vmatpush1.xpose.msra.mxu0 0.0
    %3811 = vmatprep.subr.mxu0 0.0
    %3812 = vmatpush1.xpose.msra.mxu0 0.0
    %3813 = vmatprep.subr.mxu0 0.0
    %3814 = vmatpush1.xpose.msra.mxu0 0.0
    %3815 = vmatprep.subr.mxu0 0.0
    %3816 = vmatpush1.xpose.msra.mxu0 0.0
    %3817 = vmatprep.subr.mxu0 0.0
    %3818 = vmatpush1.xpose.msra.mxu0 0.0
    %3819 = vmatprep.subr.mxu0 0.0
    %3820 = vmatpush1.xpose.msra.mxu0 0.0
    %3821 = vmatprep.subr.mxu0 0.0
    %3822 = vmatpush1.xpose.msra.mxu0 0.0
    %3823 = vmatprep.subr.mxu0 0.0
    %3824 = vmatpush1.xpose.msra.mxu0 0.0
    %3825 = vmatprep.subr.mxu0 0.0
    %3826 = vmatpush1.xpose.msra.mxu0 0.0
    %3827 = vmatprep.subr.mxu0 0.0
    %3828 = vmatpush1.xpose.msra.mxu0 0.0
    %3829 = vmatprep.subr.mxu0 0.0
    %3830 = vmatpush1.xpose.msra.mxu0 0.0
    %3831 = vmatprep.subr.mxu0 0.0
    %3832 = vmatpush1.xpose.msra.mxu0 0.0
    %3833 = vmatprep.subr.mxu0 0.0
    %3834 = vmatpush1.xpose.msra.mxu0 0.0
    %3835 = vmatprep.subr.mxu0 0.0
    %3836 = vmatpush1.xpose.msra.mxu0 0.0
    %3837 = vmatprep.subr.mxu0 0.0
    %3838 = vmatpush1.xpose.msra.mxu0 0.0
    %3839 = vmatprep.subr.mxu0 0.0
    %3840 = vmatpush1.xpose.msra.mxu0 0.0
    %3841 = vmatprep.subr.mxu0 0.0
    %3842 = vmatpush1.xpose.msra.mxu0 0.0
    %3843 = vmatprep.subr.mxu0 0.0
    %3844 = vmatpush1.xpose.msra.mxu0 0.0
    %3845 = vmatprep.subr.mxu0 0.0
    %3846 = vmatpush1.xpose.msra.mxu0 0.0
    %3847 = vmatprep.subr.mxu0 0.0
    %3848 = vmatpush1.xpose.msra.mxu0 0.0
    %3849 = vmatprep.subr.mxu0 0.0
    %3850 = vmatpush1.xpose.msra.mxu0 0.0
    %3851 = vmatprep.subr.mxu0 0.0
    %3852 = vmatpush1.xpose.msra.mxu0 0.0
    %3853 = vmatprep.subr.mxu0 0.0
    %3854 = vmatpush1.xpose.msra.mxu0 0.0
    %3855 = vmatprep.mubr.f32.mxu0 0.0
    %3856 = vmatmul.mubr.f32.gmra.mrb[0].mxu0 %v3787
    %v3857 = vpop.f32.mrb[0].mxu0
    %v3858 = vadd.f32 %v45, %v3857
    %v3859 = vpop.f32.mrb[0].mxu0
    %3860 = vdwg.mxu0
    %3862 = vrot.lane.b32.xlu0 %v3351, 120
    %v3863 = vpop.permute.xlu0 %3862
    %v3864 = vsel %vm712, %v3351, 0
    %v3866 = vsel %vm712, %v3863, 0
    %3868 = vmatprep.subr.mxu0 0.0
    %3869 = vmatpush1.xpose.msra.mxu0 %v3866
    %3870 = vmatprep.subr.mxu0 0.0
    %3871 = vmatpush1.xpose.msra.mxu0 0.0
    %3872 = vmatprep.subr.mxu0 0.0
    %3873 = vmatpush1.xpose.msra.mxu0 0.0
    %3874 = vmatprep.subr.mxu0 0.0
    %3875 = vmatpush1.xpose.msra.mxu0 0.0
    %3876 = vmatprep.subr.mxu0 0.0
    %3877 = vmatpush1.xpose.msra.mxu0 0.0
    %3878 = vmatprep.subr.mxu0 0.0
    %3879 = vmatpush1.xpose.msra.mxu0 0.0
    %3880 = vmatprep.subr.mxu0 0.0
    %3881 = vmatpush1.xpose.msra.mxu0 0.0
    %3882 = vmatprep.subr.mxu0 0.0
    %3883 = vmatpush1.xpose.msra.mxu0 0.0
    %3884 = vmatprep.subr.mxu0 0.0
    %3885 = vmatpush1.xpose.msra.mxu0 0.0
    %3886 = vmatprep.subr.mxu0 0.0
    %3887 = vmatpush1.xpose.msra.mxu0 0.0
    %3888 = vmatprep.subr.mxu0 0.0
    %3889 = vmatpush1.xpose.msra.mxu0 0.0
    %3890 = vmatprep.subr.mxu0 0.0
    %3891 = vmatpush1.xpose.msra.mxu0 0.0
    %3892 = vmatprep.subr.mxu0 0.0
    %3893 = vmatpush1.xpose.msra.mxu0 0.0
    %3894 = vmatprep.subr.mxu0 0.0
    %3895 = vmatpush1.xpose.msra.mxu0 0.0
    %3896 = vmatprep.subr.mxu0 0.0
    %3897 = vmatpush1.xpose.msra.mxu0 0.0
    %3898 = vmatprep.subr.mxu0 0.0
    %3899 = vmatpush1.xpose.msra.mxu0 0.0
    %3900 = vmatprep.subr.mxu0 0.0
    %3901 = vmatpush1.xpose.msra.mxu0 0.0
    %3902 = vmatprep.subr.mxu0 0.0
    %3903 = vmatpush1.xpose.msra.mxu0 0.0
    %3904 = vmatprep.subr.mxu0 0.0
    %3905 = vmatpush1.xpose.msra.mxu0 0.0
    %3906 = vmatprep.subr.mxu0 0.0
    %3907 = vmatpush1.xpose.msra.mxu0 0.0
    %3908 = vmatprep.subr.mxu0 0.0
    %3909 = vmatpush1.xpose.msra.mxu0 0.0
    %3910 = vmatprep.subr.mxu0 0.0
    %3911 = vmatpush1.xpose.msra.mxu0 0.0
    %3912 = vmatprep.subr.mxu0 0.0
    %3913 = vmatpush1.xpose.msra.mxu0 0.0
    %3914 = vmatprep.subr.mxu0 0.0
    %3915 = vmatpush1.xpose.msra.mxu0 0.0
    %3916 = vmatprep.subr.mxu0 0.0
    %3917 = vmatpush1.xpose.msra.mxu0 0.0
    %3918 = vmatprep.subr.mxu0 0.0
    %3919 = vmatpush1.xpose.msra.mxu0 0.0
    %3920 = vmatprep.subr.mxu0 0.0
    %3921 = vmatpush1.xpose.msra.mxu0 0.0
    %3922 = vmatprep.subr.mxu0 0.0
    %3923 = vmatpush1.xpose.msra.mxu0 0.0
    %3924 = vmatprep.subr.mxu0 0.0
    %3925 = vmatpush1.xpose.msra.mxu0 0.0
    %3926 = vmatprep.subr.mxu0 0.0
    %3927 = vmatpush1.xpose.msra.mxu0 0.0
    %3928 = vmatprep.subr.mxu0 0.0
    %3929 = vmatpush1.xpose.msra.mxu0 0.0
    %3930 = vmatprep.subr.mxu0 0.0
    %3931 = vmatpush1.xpose.msra.mxu0 0.0
    %3932 = vmatprep.mubr.f32.mxu0 0.0
    %3933 = vmatmul.mubr.f32.gmra.mrb[0].mxu0 %v3864
    %v3934 = vpop.f32.mrb[0].mxu0
    %v3935 = vadd.f32 %v46, %v3934
    %v3936 = vpop.f32.mrb[0].mxu0
    %3937 = vdwg.mxu0
    %3939 = vrot.lane.b32.xlu0 %v3421, 120
    %v3940 = vpop.permute.xlu0 %3939
    %v3941 = vsel %vm712, %v3421, 0
    %v3943 = vsel %vm712, %v3940, 0
    %3945 = vmatprep.subr.mxu0 0.0
    %3946 = vmatpush1.xpose.msra.mxu0 %v3943
    %3947 = vmatprep.subr.mxu0 0.0
    %3948 = vmatpush1.xpose.msra.mxu0 0.0
    %3949 = vmatprep.subr.mxu0 0.0
    %3950 = vmatpush1.xpose.msra.mxu0 0.0
    %3951 = vmatprep.subr.mxu0 0.0
    %3952 = vmatpush1.xpose.msra.mxu0 0.0
    %3953 = vmatprep.subr.mxu0 0.0
    %3954 = vmatpush1.xpose.msra.mxu0 0.0
    %3955 = vmatprep.subr.mxu0 0.0
    %3956 = vmatpush1.xpose.msra.mxu0 0.0
    %3957 = vmatprep.subr.mxu0 0.0
    %3958 = vmatpush1.xpose.msra.mxu0 0.0
    %3959 = vmatprep.subr.mxu0 0.0
    %3960 = vmatpush1.xpose.msra.mxu0 0.0
    %3961 = vmatprep.subr.mxu0 0.0
    %3962 = vmatpush1.xpose.msra.mxu0 0.0
    %3963 = vmatprep.subr.mxu0 0.0
    %3964 = vmatpush1.xpose.msra.mxu0 0.0
    %3965 = vmatprep.subr.mxu0 0.0
    %3966 = vmatpush1.xpose.msra.mxu0 0.0
    %3967 = vmatprep.subr.mxu0 0.0
    %3968 = vmatpush1.xpose.msra.mxu0 0.0
    %3969 = vmatprep.subr.mxu0 0.0
    %3970 = vmatpush1.xpose.msra.mxu0 0.0
    %3971 = vmatprep.subr.mxu0 0.0
    %3972 = vmatpush1.xpose.msra.mxu0 0.0
    %3973 = vmatprep.subr.mxu0 0.0
    %3974 = vmatpush1.xpose.msra.mxu0 0.0
    %3975 = vmatprep.subr.mxu0 0.0
    %3976 = vmatpush1.xpose.msra.mxu0 0.0
    %3977 = vmatprep.subr.mxu0 0.0
    %3978 = vmatpush1.xpose.msra.mxu0 0.0
    %3979 = vmatprep.subr.mxu0 0.0
    %3980 = vmatpush1.xpose.msra.mxu0 0.0
    %3981 = vmatprep.subr.mxu0 0.0
    %3982 = vmatpush1.xpose.msra.mxu0 0.0
    %3983 = vmatprep.subr.mxu0 0.0
    %3984 = vmatpush1.xpose.msra.mxu0 0.0
    %3985 = vmatprep.subr.mxu0 0.0
    %3986 = vmatpush1.xpose.msra.mxu0 0.0
    %3987 = vmatprep.subr.mxu0 0.0
    %3988 = vmatpush1.xpose.msra.mxu0 0.0
    %3989 = vmatprep.subr.mxu0 0.0
    %3990 = vmatpush1.xpose.msra.mxu0 0.0
    %3991 = vmatprep.subr.mxu0 0.0
    %3992 = vmatpush1.xpose.msra.mxu0 0.0
    %3993 = vmatprep.subr.mxu0 0.0
    %3994 = vmatpush1.xpose.msra.mxu0 0.0
    %3995 = vmatprep.subr.mxu0 0.0
    %3996 = vmatpush1.xpose.msra.mxu0 0.0
    %3997 = vmatprep.subr.mxu0 0.0
    %3998 = vmatpush1.xpose.msra.mxu0 0.0
    %3999 = vmatprep.subr.mxu0 0.0
    %4000 = vmatpush1.xpose.msra.mxu0 0.0
    %4001 = vmatprep.subr.mxu0 0.0
    %4002 = vmatpush1.xpose.msra.mxu0 0.0
    %4003 = vmatprep.subr.mxu0 0.0
    %4004 = vmatpush1.xpose.msra.mxu0 0.0
    %4005 = vmatprep.subr.mxu0 0.0
    %4006 = vmatpush1.xpose.msra.mxu0 0.0
    %4007 = vmatprep.subr.mxu0 0.0
    %4008 = vmatpush1.xpose.msra.mxu0 0.0
    %4009 = vmatprep.mubr.f32.mxu0 0.0
    %4010 = vmatmul.mubr.f32.gmra.mrb[0].mxu0 %v3941
    %v4011 = vpop.f32.mrb[0].mxu0
    %v4012 = vadd.f32 %v47, %v4011
    %v4013 = vpop.f32.mrb[0].mxu0
    %4014 = vdwg.mxu0
    %4016 = vrot.lane.b32.xlu0 %v3494, 120
    %v4017 = vpop.permute.xlu0 %4016
    %v4018 = vsel %vm712, %v3494, 0
    %v4020 = vsel %vm712, %v4017, 0
    %4022 = vmatprep.subr.mxu0 0.0
    %4023 = vmatpush1.xpose.msra.mxu0 %v4020
    %4024 = vmatprep.subr.mxu0 0.0
    %4025 = vmatpush1.xpose.msra.mxu0 0.0
    %4026 = vmatprep.subr.mxu0 0.0
    %4027 = vmatpush1.xpose.msra.mxu0 0.0
    %4028 = vmatprep.subr.mxu0 0.0
    %4029 = vmatpush1.xpose.msra.mxu0 0.0
    %4030 = vmatprep.subr.mxu0 0.0
    %4031 = vmatpush1.xpose.msra.mxu0 0.0
    %4032 = vmatprep.subr.mxu0 0.0
    %4033 = vmatpush1.xpose.msra.mxu0 0.0
    %4034 = vmatprep.subr.mxu0 0.0
    %4035 = vmatpush1.xpose.msra.mxu0 0.0
    %4036 = vmatprep.subr.mxu0 0.0
    %4037 = vmatpush1.xpose.msra.mxu0 0.0
    %4038 = vmatprep.subr.mxu0 0.0
    %4039 = vmatpush1.xpose.msra.mxu0 0.0
    %4040 = vmatprep.subr.mxu0 0.0
    %4041 = vmatpush1.xpose.msra.mxu0 0.0
    %4042 = vmatprep.subr.mxu0 0.0
    %4043 = vmatpush1.xpose.msra.mxu0 0.0
    %4044 = vmatprep.subr.mxu0 0.0
    %4045 = vmatpush1.xpose.msra.mxu0 0.0
    %4046 = vmatprep.subr.mxu0 0.0
    %4047 = vmatpush1.xpose.msra.mxu0 0.0
    %4048 = vmatprep.subr.mxu0 0.0
    %4049 = vmatpush1.xpose.msra.mxu0 0.0
    %4050 = vmatprep.subr.mxu0 0.0
    %4051 = vmatpush1.xpose.msra.mxu0 0.0
    %4052 = vmatprep.subr.mxu0 0.0
    %4053 = vmatpush1.xpose.msra.mxu0 0.0
    %4054 = vmatprep.subr.mxu0 0.0
    %4055 = vmatpush1.xpose.msra.mxu0 0.0
    %4056 = vmatprep.subr.mxu0 0.0
    %4057 = vmatpush1.xpose.msra.mxu0 0.0
    %4058 = vmatprep.subr.mxu0 0.0
    %4059 = vmatpush1.xpose.msra.mxu0 0.0
    %4060 = vmatprep.subr.mxu0 0.0
    %4061 = vmatpush1.xpose.msra.mxu0 0.0
    %4062 = vmatprep.subr.mxu0 0.0
    %4063 = vmatpush1.xpose.msra.mxu0 0.0
    %4064 = vmatprep.subr.mxu0 0.0
    %4065 = vmatpush1.xpose.msra.mxu0 0.0
    %4066 = vmatprep.subr.mxu0 0.0
    %4067 = vmatpush1.xpose.msra.mxu0 0.0
    %4068 = vmatprep.subr.mxu0 0.0
    %4069 = vmatpush1.xpose.msra.mxu0 0.0
    %4070 = vmatprep.subr.mxu0 0.0
    %4071 = vmatpush1.xpose.msra.mxu0 0.0
    %4072 = vmatprep.subr.mxu0 0.0
    %4073 = vmatpush1.xpose.msra.mxu0 0.0
    %4074 = vmatprep.subr.mxu0 0.0
    %4075 = vmatpush1.xpose.msra.mxu0 0.0
    %4076 = vmatprep.subr.mxu0 0.0
    %4077 = vmatpush1.xpose.msra.mxu0 0.0
    %4078 = vmatprep.subr.mxu0 0.0
    %4079 = vmatpush1.xpose.msra.mxu0 0.0
    %4080 = vmatprep.subr.mxu0 0.0
    %4081 = vmatpush1.xpose.msra.mxu0 0.0
    %4082 = vmatprep.subr.mxu0 0.0
    %4083 = vmatpush1.xpose.msra.mxu0 0.0
    %4084 = vmatprep.subr.mxu0 0.0
    %4085 = vmatpush1.xpose.msra.mxu0 0.0
    %4086 = vmatprep.mubr.f32.mxu0 0.0
    %4087 = vmatmul.mubr.f32.gmra.mrb[0].mxu0 %v4018
    %v4088 = vpop.f32.mrb[0].mxu0
    %v4089 = vadd.f32 %v48, %v4088
    %v4090 = vpop.f32.mrb[0].mxu0
    %4091 = vdwg.mxu0
    %4093 = vrot.lane.b32.xlu0 %v3564, 120
    %v4094 = vpop.permute.xlu0 %4093
    %v4095 = vsel %vm712, %v3564, 0
    %v4097 = vsel %vm712, %v4094, 0
    %4099 = vmatprep.subr.mxu0 0.0
    %4100 = vmatpush1.xpose.msra.mxu0 %v4097
    %4101 = vmatprep.subr.mxu0 0.0
    %4102 = vmatpush1.xpose.msra.mxu0 0.0
    %4103 = vmatprep.subr.mxu0 0.0
    %4104 = vmatpush1.xpose.msra.mxu0 0.0
    %4105 = vmatprep.subr.mxu0 0.0
    %4106 = vmatpush1.xpose.msra.mxu0 0.0
    %4107 = vmatprep.subr.mxu0 0.0
    %4108 = vmatpush1.xpose.msra.mxu0 0.0
    %4109 = vmatprep.subr.mxu0 0.0
    %4110 = vmatpush1.xpose.msra.mxu0 0.0
    %4111 = vmatprep.subr.mxu0 0.0
    %4112 = vmatpush1.xpose.msra.mxu0 0.0
    %4113 = vmatprep.subr.mxu0 0.0
    %4114 = vmatpush1.xpose.msra.mxu0 0.0
    %4115 = vmatprep.subr.mxu0 0.0
    %4116 = vmatpush1.xpose.msra.mxu0 0.0
    %4117 = vmatprep.subr.mxu0 0.0
    %4118 = vmatpush1.xpose.msra.mxu0 0.0
    %4119 = vmatprep.subr.mxu0 0.0
    %4120 = vmatpush1.xpose.msra.mxu0 0.0
    %4121 = vmatprep.subr.mxu0 0.0
    %4122 = vmatpush1.xpose.msra.mxu0 0.0
    %4123 = vmatprep.subr.mxu0 0.0
    %4124 = vmatpush1.xpose.msra.mxu0 0.0
    %4125 = vmatprep.subr.mxu0 0.0
    %4126 = vmatpush1.xpose.msra.mxu0 0.0
    %4127 = vmatprep.subr.mxu0 0.0
    %4128 = vmatpush1.xpose.msra.mxu0 0.0
    %4129 = vmatprep.subr.mxu0 0.0
    %4130 = vmatpush1.xpose.msra.mxu0 0.0
    %4131 = vmatprep.subr.mxu0 0.0
    %4132 = vmatpush1.xpose.msra.mxu0 0.0
    %4133 = vmatprep.subr.mxu0 0.0
    %4134 = vmatpush1.xpose.msra.mxu0 0.0
    %4135 = vmatprep.subr.mxu0 0.0
    %4136 = vmatpush1.xpose.msra.mxu0 0.0
    %4137 = vmatprep.subr.mxu0 0.0
    %4138 = vmatpush1.xpose.msra.mxu0 0.0
    %4139 = vmatprep.subr.mxu0 0.0
    %4140 = vmatpush1.xpose.msra.mxu0 0.0
    %4141 = vmatprep.subr.mxu0 0.0
    %4142 = vmatpush1.xpose.msra.mxu0 0.0
    %4143 = vmatprep.subr.mxu0 0.0
    %4144 = vmatpush1.xpose.msra.mxu0 0.0
    %4145 = vmatprep.subr.mxu0 0.0
    %4146 = vmatpush1.xpose.msra.mxu0 0.0
    %4147 = vmatprep.subr.mxu0 0.0
    %4148 = vmatpush1.xpose.msra.mxu0 0.0
    %4149 = vmatprep.subr.mxu0 0.0
    %4150 = vmatpush1.xpose.msra.mxu0 0.0
    %4151 = vmatprep.subr.mxu0 0.0
    %4152 = vmatpush1.xpose.msra.mxu0 0.0
    %4153 = vmatprep.subr.mxu0 0.0
    %4154 = vmatpush1.xpose.msra.mxu0 0.0
    %4155 = vmatprep.subr.mxu0 0.0
    %4156 = vmatpush1.xpose.msra.mxu0 0.0
    %4157 = vmatprep.subr.mxu0 0.0
    %4158 = vmatpush1.xpose.msra.mxu0 0.0
    %4159 = vmatprep.subr.mxu0 0.0
    %4160 = vmatpush1.xpose.msra.mxu0 0.0
    %4161 = vmatprep.subr.mxu0 0.0
    %4162 = vmatpush1.xpose.msra.mxu0 0.0
    %4163 = vmatprep.mubr.f32.mxu0 0.0
    %4164 = vmatmul.mubr.f32.gmra.mrb[0].mxu0 %v4095
    %v4165 = vpop.f32.mrb[0].mxu0
    %v4166 = vadd.f32 %v49, %v4165
    %v4167 = vpop.f32.mrb[0].mxu0
    %4168 = vdwg.mxu0
    %4170 = vrot.lane.b32.xlu0 %v3634, 120
    %v4171 = vpop.permute.xlu0 %4170
    %v4172 = vsel %vm712, %v3634, 0
    %v4174 = vsel %vm712, %v4171, 0
    %4176 = vmatprep.subr.mxu0 0.0
    %4177 = vmatpush1.xpose.msra.mxu0 %v4174
    %4178 = vmatprep.subr.mxu0 0.0
    %4179 = vmatpush1.xpose.msra.mxu0 0.0
    %4180 = vmatprep.subr.mxu0 0.0
    %4181 = vmatpush1.xpose.msra.mxu0 0.0
    %4182 = vmatprep.subr.mxu0 0.0
    %4183 = vmatpush1.xpose.msra.mxu0 0.0
    %4184 = vmatprep.subr.mxu0 0.0
    %4185 = vmatpush1.xpose.msra.mxu0 0.0
    %4186 = vmatprep.subr.mxu0 0.0
    %4187 = vmatpush1.xpose.msra.mxu0 0.0
    %4188 = vmatprep.subr.mxu0 0.0
    %4189 = vmatpush1.xpose.msra.mxu0 0.0
    %4190 = vmatprep.subr.mxu0 0.0
    %4191 = vmatpush1.xpose.msra.mxu0 0.0
    %4192 = vmatprep.subr.mxu0 0.0
    %4193 = vmatpush1.xpose.msra.mxu0 0.0
    %4194 = vmatprep.subr.mxu0 0.0
    %4195 = vmatpush1.xpose.msra.mxu0 0.0
    %4196 = vmatprep.subr.mxu0 0.0
    %4197 = vmatpush1.xpose.msra.mxu0 0.0
    %4198 = vmatprep.subr.mxu0 0.0
    %4199 = vmatpush1.xpose.msra.mxu0 0.0
    %4200 = vmatprep.subr.mxu0 0.0
    %4201 = vmatpush1.xpose.msra.mxu0 0.0
    %4202 = vmatprep.subr.mxu0 0.0
    %4203 = vmatpush1.xpose.msra.mxu0 0.0
    %4204 = vmatprep.subr.mxu0 0.0
    %4205 = vmatpush1.xpose.msra.mxu0 0.0
    %4206 = vmatprep.subr.mxu0 0.0
    %4207 = vmatpush1.xpose.msra.mxu0 0.0
    %4208 = vmatprep.subr.mxu0 0.0
    %4209 = vmatpush1.xpose.msra.mxu0 0.0
    %4210 = vmatprep.subr.mxu0 0.0
    %4211 = vmatpush1.xpose.msra.mxu0 0.0
    %4212 = vmatprep.subr.mxu0 0.0
    %4213 = vmatpush1.xpose.msra.mxu0 0.0
    %4214 = vmatprep.subr.mxu0 0.0
    %4215 = vmatpush1.xpose.msra.mxu0 0.0
    %4216 = vmatprep.subr.mxu0 0.0
    %4217 = vmatpush1.xpose.msra.mxu0 0.0
    %4218 = vmatprep.subr.mxu0 0.0
    %4219 = vmatpush1.xpose.msra.mxu0 0.0
    %4220 = vmatprep.subr.mxu0 0.0
    %4221 = vmatpush1.xpose.msra.mxu0 0.0
    %4222 = vmatprep.subr.mxu0 0.0
    %4223 = vmatpush1.xpose.msra.mxu0 0.0
    %4224 = vmatprep.subr.mxu0 0.0
    %4225 = vmatpush1.xpose.msra.mxu0 0.0
    %4226 = vmatprep.subr.mxu0 0.0
    %4227 = vmatpush1.xpose.msra.mxu0 0.0
    %4228 = vmatprep.subr.mxu0 0.0
    %4229 = vmatpush1.xpose.msra.mxu0 0.0
    %4230 = vmatprep.subr.mxu0 0.0
    %4231 = vmatpush1.xpose.msra.mxu0 0.0
    %4232 = vmatprep.subr.mxu0 0.0
    %4233 = vmatpush1.xpose.msra.mxu0 0.0
    %4234 = vmatprep.subr.mxu0 0.0
    %4235 = vmatpush1.xpose.msra.mxu0 0.0
    %4236 = vmatprep.subr.mxu0 0.0
    %4237 = vmatpush1.xpose.msra.mxu0 0.0
    %4238 = vmatprep.subr.mxu0 0.0
    %4239 = vmatpush1.xpose.msra.mxu0 0.0
    %4240 = vmatprep.mubr.f32.mxu0 0.0
    %4241 = vmatmul.mubr.f32.gmra.mrb[0].mxu0 %v4172
    %v4242 = vpop.f32.mrb[0].mxu0
    %v4243 = vadd.f32 %v50, %v4242
    %v4244 = vpop.f32.mrb[0].mxu0
    %4245 = vdwg.mxu0
    %4247 = vrot.lane.b32.xlu0 %v3704, 120
    %v4248 = vpop.permute.xlu0 %4247
    %v4249 = vsel %vm712, %v3704, 0
    %v4251 = vsel %vm712, %v4248, 0
    %4253 = vmatprep.subr.mxu0 0.0
    %4254 = vmatpush1.xpose.msra.mxu0 %v4251
    %4255 = vmatprep.subr.mxu0 0.0
    %4256 = vmatpush1.xpose.msra.mxu0 0.0
    %4257 = vmatprep.subr.mxu0 0.0
    %4258 = vmatpush1.xpose.msra.mxu0 0.0
    %4259 = vmatprep.subr.mxu0 0.0
    %4260 = vmatpush1.xpose.msra.mxu0 0.0
    %4261 = vmatprep.subr.mxu0 0.0
    %4262 = vmatpush1.xpose.msra.mxu0 0.0
    %4263 = vmatprep.subr.mxu0 0.0
    %4264 = vmatpush1.xpose.msra.mxu0 0.0
    %4265 = vmatprep.subr.mxu0 0.0
    %4266 = vmatpush1.xpose.msra.mxu0 0.0
    %4267 = vmatprep.subr.mxu0 0.0
    %4268 = vmatpush1.xpose.msra.mxu0 0.0
    %4269 = vmatprep.subr.mxu0 0.0
    %4270 = vmatpush1.xpose.msra.mxu0 0.0
    %4271 = vmatprep.subr.mxu0 0.0
    %4272 = vmatpush1.xpose.msra.mxu0 0.0
    %4273 = vmatprep.subr.mxu0 0.0
    %4274 = vmatpush1.xpose.msra.mxu0 0.0
    %4275 = vmatprep.subr.mxu0 0.0
    %4276 = vmatpush1.xpose.msra.mxu0 0.0
    %4277 = vmatprep.subr.mxu0 0.0
    %4278 = vmatpush1.xpose.msra.mxu0 0.0
    %4279 = vmatprep.subr.mxu0 0.0
    %4280 = vmatpush1.xpose.msra.mxu0 0.0
    %4281 = vmatprep.subr.mxu0 0.0
    %4282 = vmatpush1.xpose.msra.mxu0 0.0
    %4283 = vmatprep.subr.mxu0 0.0
    %4284 = vmatpush1.xpose.msra.mxu0 0.0
    %4285 = vmatprep.subr.mxu0 0.0
    %4286 = vmatpush1.xpose.msra.mxu0 0.0
    %4287 = vmatprep.subr.mxu0 0.0
    %4288 = vmatpush1.xpose.msra.mxu0 0.0
    %4289 = vmatprep.subr.mxu0 0.0
    %4290 = vmatpush1.xpose.msra.mxu0 0.0
    %4291 = vmatprep.subr.mxu0 0.0
    %4292 = vmatpush1.xpose.msra.mxu0 0.0
    %4293 = vmatprep.subr.mxu0 0.0
    %4294 = vmatpush1.xpose.msra.mxu0 0.0
    %4295 = vmatprep.subr.mxu0 0.0
    %4296 = vmatpush1.xpose.msra.mxu0 0.0
    %4297 = vmatprep.subr.mxu0 0.0
    %4298 = vmatpush1.xpose.msra.mxu0 0.0
    %4299 = vmatprep.subr.mxu0 0.0
    %4300 = vmatpush1.xpose.msra.mxu0 0.0
    %4301 = vmatprep.subr.mxu0 0.0
    %4302 = vmatpush1.xpose.msra.mxu0 0.0
    %4303 = vmatprep.subr.mxu0 0.0
    %4304 = vmatpush1.xpose.msra.mxu0 0.0
    %4305 = vmatprep.subr.mxu0 0.0
    %4306 = vmatpush1.xpose.msra.mxu0 0.0
    %4307 = vmatprep.subr.mxu0 0.0
    %4308 = vmatpush1.xpose.msra.mxu0 0.0
    %4309 = vmatprep.subr.mxu0 0.0
    %4310 = vmatpush1.xpose.msra.mxu0 0.0
    %4311 = vmatprep.subr.mxu0 0.0
    %4312 = vmatpush1.xpose.msra.mxu0 0.0
    %4313 = vmatprep.subr.mxu0 0.0
    %4314 = vmatpush1.xpose.msra.mxu0 0.0
    %4315 = vmatprep.subr.mxu0 0.0
    %4316 = vmatpush1.xpose.msra.mxu0 0.0
    %4317 = vmatprep.mubr.f32.mxu0 0.0
    %4318 = vmatmul.mubr.f32.gmra.mrb[0].mxu0 %v4249
    %v4319 = vpop.f32.mrb[0].mxu0
    %v4320 = vadd.f32 %v51, %v4319
    %v4321 = vpop.f32.mrb[0].mxu0
    %4322 = vdwg.mxu0
    %v4323 = vsel %vm712, %v3781, -inf
    %4324 = vmax.xlane.f32.xlu0 %v4323
    %v4325 = vpop.xlane.xlu0 %4324
    %v4326 = vsel %vm712, %v3858, -inf
    %4327 = vmax.xlane.f32.xlu0 %v4326
    %v4328 = vpop.xlane.xlu0 %4327
    %v4329 = vsel %vm712, %v3935, -inf
    %4330 = vmax.xlane.f32.xlu0 %v4329
    %v4331 = vpop.xlane.xlu0 %4330
    %v4332 = vsel %vm712, %v4012, -inf
    %4333 = vmax.xlane.f32.xlu0 %v4332
    %v4334 = vpop.xlane.xlu0 %4333
    %v4335 = vsel %vm712, %v4089, -inf
    %4336 = vmax.xlane.f32.xlu0 %v4335
    %v4337 = vpop.xlane.xlu0 %4336
    %v4338 = vsel %vm712, %v4166, -inf
    %4339 = vmax.xlane.f32.xlu0 %v4338
    %v4340 = vpop.xlane.xlu0 %4339
    %v4341 = vsel %vm712, %v4243, -inf
    %4342 = vmax.xlane.f32.xlu0 %v4341
    %v4343 = vpop.xlane.xlu0 %4342
    %v4344 = vsel %vm712, %v4320, -inf
    %4345 = vmax.xlane.f32.xlu0 %v4344
    %v4346 = vpop.xlane.xlu0 %4345
    %v4347 = vsub.f32 %v3781, %v4325
    %v4348 = vsub.f32 %v3858, %v4328
    %v4349 = vsub.f32 %v3935, %v4331
    %v4350 = vsub.f32 %v4012, %v4334
    %v4351 = vsub.f32 %v4089, %v4337
    %v4352 = vsub.f32 %v4166, %v4340
    %v4353 = vsub.f32 %v4243, %v4343
    %v4354 = vsub.f32 %v4320, %v4346
    %v4355 = vmul.f32 %v4347, 1.442695
    %v4356 = vpow.pop %v4355
    %v4357 = vmul.f32 %v4348, 1.442695
    %v4358 = vpow.pop %v4357
    %v4359 = vmul.f32 %v4349, 1.442695
    %v4360 = vpow.pop %v4359
    %v4361 = vmul.f32 %v4350, 1.442695
    %v4362 = vpow.pop %v4361
    %v4363 = vmul.f32 %v4351, 1.442695
    %v4364 = vpow.pop %v4363
    %v4365 = vmul.f32 %v4352, 1.442695
    %v4366 = vpow.pop %v4365
    %v4367 = vmul.f32 %v4353, 1.442695
    %v4368 = vpow.pop %v4367
    %v4369 = vmul.f32 %v4354, 1.442695
    %v4370 = vpow.pop %v4369
    %v4371 = vsel %vm712, %v4356, 0.0
    %4372 = vadd.xlane.f32.xlu0 %v4371
    %v4373 = vpop.xlane.xlu0 %4372
    %v4374 = vsel %vm712, %v4358, 0.0
    %4375 = vadd.xlane.f32.xlu0 %v4374
    %v4376 = vpop.xlane.xlu0 %4375
    %v4377 = vsel %vm712, %v4360, 0.0
    %4378 = vadd.xlane.f32.xlu0 %v4377
    %v4379 = vpop.xlane.xlu0 %4378
    %v4380 = vsel %vm712, %v4362, 0.0
    %4381 = vadd.xlane.f32.xlu0 %v4380
    %v4382 = vpop.xlane.xlu0 %4381
    %v4383 = vsel %vm712, %v4364, 0.0
    %4384 = vadd.xlane.f32.xlu0 %v4383
    %v4385 = vpop.xlane.xlu0 %4384
    %v4386 = vsel %vm712, %v4366, 0.0
    %4387 = vadd.xlane.f32.xlu0 %v4386
    %v4388 = vpop.xlane.xlu0 %4387
    %v4389 = vsel %vm712, %v4368, 0.0
    %4390 = vadd.xlane.f32.xlu0 %v4389
    %v4391 = vpop.xlane.xlu0 %4390
    %v4392 = vsel %vm712, %v4370, 0.0
    %4393 = vadd.xlane.f32.xlu0 %v4392
    %v4394 = vpop.xlane.xlu0 %4393
    %v4395 = vrcp.pop %v4373
    %v4396 = vmul.f32 %v4356, %v4395
    %v4397 = vrcp.pop %v4376
    %v4398 = vmul.f32 %v4358, %v4397
    %v4399 = vrcp.pop %v4379
    %v4400 = vmul.f32 %v4360, %v4399
    %v4401 = vrcp.pop %v4382
    %v4402 = vmul.f32 %v4362, %v4401
    %v4403 = vrcp.pop %v4385
    %v4404 = vmul.f32 %v4364, %v4403
    %v4405 = vrcp.pop %v4388
    %v4406 = vmul.f32 %v4366, %v4405
    %v4407 = vrcp.pop %v4391
    %v4408 = vmul.f32 %v4368, %v4407
    %v4409 = vrcp.pop %v4394
    %v4410 = vmul.f32 %v4370, %v4409
    %4411 = vrot.lane.b32.xlu0 %v3211, 112
    %v4412 = vpop.permute.xlu0 %4411
    %v4415 = vsel %vm712, %v4396, 0
    %4417 = vmatprep.subr.mxu0 0.0
    %4418 = vmatpush1.msra.mxu0 %v4412
    %4419 = vmatprep.subr.mxu0 0.0
    %4420 = vmatpush1.msra.mxu0 0.0
    %4421 = vmatprep.subr.mxu0 0.0
    %4422 = vmatpush1.msra.mxu0 0.0
    %4423 = vmatprep.subr.mxu0 0.0
    %4424 = vmatpush1.msra.mxu0 0.0
    %4425 = vmatprep.subr.mxu0 0.0
    %4426 = vmatpush1.msra.mxu0 0.0
    %4427 = vmatprep.subr.mxu0 0.0
    %4428 = vmatpush1.msra.mxu0 0.0
    %4429 = vmatprep.subr.mxu0 0.0
    %4430 = vmatpush1.msra.mxu0 0.0
    %4431 = vmatprep.subr.mxu0 0.0
    %4432 = vmatpush1.msra.mxu0 0.0
    %4433 = vmatprep.subr.mxu0 0.0
    %4434 = vmatpush1.msra.mxu0 0.0
    %4435 = vmatprep.subr.mxu0 0.0
    %4436 = vmatpush1.msra.mxu0 0.0
    %4437 = vmatprep.subr.mxu0 0.0
    %4438 = vmatpush1.msra.mxu0 0.0
    %4439 = vmatprep.subr.mxu0 0.0
    %4440 = vmatpush1.msra.mxu0 0.0
    %4441 = vmatprep.subr.mxu0 0.0
    %4442 = vmatpush1.msra.mxu0 0.0
    %4443 = vmatprep.subr.mxu0 0.0
    %4444 = vmatpush1.msra.mxu0 0.0
    %4445 = vmatprep.subr.mxu0 0.0
    %4446 = vmatpush1.msra.mxu0 0.0
    %4447 = vmatprep.subr.mxu0 0.0
    %4448 = vmatpush1.msra.mxu0 0.0
    %4449 = vmatprep.subr.mxu0 0.0
    %4450 = vmatpush1.msra.mxu0 0.0
    %4451 = vmatprep.subr.mxu0 0.0
    %4452 = vmatpush1.msra.mxu0 0.0
    %4453 = vmatprep.subr.mxu0 0.0
    %4454 = vmatpush1.msra.mxu0 0.0
    %4455 = vmatprep.subr.mxu0 0.0
    %4456 = vmatpush1.msra.mxu0 0.0
    %4457 = vmatprep.subr.mxu0 0.0
    %4458 = vmatpush1.msra.mxu0 0.0
    %4459 = vmatprep.subr.mxu0 0.0
    %4460 = vmatpush1.msra.mxu0 0.0
    %4461 = vmatprep.subr.mxu0 0.0
    %4462 = vmatpush1.msra.mxu0 0.0
    %4463 = vmatprep.subr.mxu0 0.0
    %4464 = vmatpush1.msra.mxu0 0.0
    %4465 = vmatprep.subr.mxu0 0.0
    %4466 = vmatpush1.msra.mxu0 0.0
    %4467 = vmatprep.subr.mxu0 0.0
    %4468 = vmatpush1.msra.mxu0 0.0
    %4469 = vmatprep.subr.mxu0 0.0
    %4470 = vmatpush1.msra.mxu0 0.0
    %4471 = vmatprep.subr.mxu0 0.0
    %4472 = vmatpush1.msra.mxu0 0.0
    %4473 = vmatprep.subr.mxu0 0.0
    %4474 = vmatpush1.msra.mxu0 0.0
    %4475 = vmatprep.subr.mxu0 0.0
    %4476 = vmatpush1.msra.mxu0 0.0
    %4477 = vmatprep.subr.mxu0 0.0
    %4478 = vmatpush1.msra.mxu0 0.0
    %4479 = vmatprep.subr.mxu0 0.0
    %4480 = vmatpush1.msra.mxu0 0.0
    %4481 = vmatprep.mubr.f32.mxu0 0.0
    %4482 = vmatmul.mubr.f32.gmra.mrb[0].mxu0 %v4415
    %v4483 = vpop.f32.mrb[0].mxu0
    %v4484 = vadd.f32 0.0, %v4483
    %v4485 = vpop.f32.mrb[0].mxu0
    %4486 = vdwg.mxu0
    %4487 = vrot.lane.b32.xlu0 %v3281, 112
    %v4488 = vpop.permute.xlu0 %4487
    %v4491 = vsel %vm712, %v4398, 0
    %4493 = vmatprep.subr.mxu0 0.0
    %4494 = vmatpush1.msra.mxu0 %v4488
    %4495 = vmatprep.subr.mxu0 0.0
    %4496 = vmatpush1.msra.mxu0 0.0
    %4497 = vmatprep.subr.mxu0 0.0
    %4498 = vmatpush1.msra.mxu0 0.0
    %4499 = vmatprep.subr.mxu0 0.0
    %4500 = vmatpush1.msra.mxu0 0.0
    %4501 = vmatprep.subr.mxu0 0.0
    %4502 = vmatpush1.msra.mxu0 0.0
    %4503 = vmatprep.subr.mxu0 0.0
    %4504 = vmatpush1.msra.mxu0 0.0
    %4505 = vmatprep.subr.mxu0 0.0
    %4506 = vmatpush1.msra.mxu0 0.0
    %4507 = vmatprep.subr.mxu0 0.0
    %4508 = vmatpush1.msra.mxu0 0.0
    %4509 = vmatprep.subr.mxu0 0.0
    %4510 = vmatpush1.msra.mxu0 0.0
    %4511 = vmatprep.subr.mxu0 0.0
    %4512 = vmatpush1.msra.mxu0 0.0
    %4513 = vmatprep.subr.mxu0 0.0
    %4514 = vmatpush1.msra.mxu0 0.0
    %4515 = vmatprep.subr.mxu0 0.0
    %4516 = vmatpush1.msra.mxu0 0.0
    %4517 = vmatprep.subr.mxu0 0.0
    %4518 = vmatpush1.msra.mxu0 0.0
    %4519 = vmatprep.subr.mxu0 0.0
    %4520 = vmatpush1.msra.mxu0 0.0
    %4521 = vmatprep.subr.mxu0 0.0
    %4522 = vmatpush1.msra.mxu0 0.0
    %4523 = vmatprep.subr.mxu0 0.0
    %4524 = vmatpush1.msra.mxu0 0.0
    %4525 = vmatprep.subr.mxu0 0.0
    %4526 = vmatpush1.msra.mxu0 0.0
    %4527 = vmatprep.subr.mxu0 0.0
    %4528 = vmatpush1.msra.mxu0 0.0
    %4529 = vmatprep.subr.mxu0 0.0
    %4530 = vmatpush1.msra.mxu0 0.0
    %4531 = vmatprep.subr.mxu0 0.0
    %4532 = vmatpush1.msra.mxu0 0.0
    %4533 = vmatprep.subr.mxu0 0.0
    %4534 = vmatpush1.msra.mxu0 0.0
    %4535 = vmatprep.subr.mxu0 0.0
    %4536 = vmatpush1.msra.mxu0 0.0
    %4537 = vmatprep.subr.mxu0 0.0
    %4538 = vmatpush1.msra.mxu0 0.0
    %4539 = vmatprep.subr.mxu0 0.0
    %4540 = vmatpush1.msra.mxu0 0.0
    %4541 = vmatprep.subr.mxu0 0.0
    %4542 = vmatpush1.msra.mxu0 0.0
    %4543 = vmatprep.subr.mxu0 0.0
    %4544 = vmatpush1.msra.mxu0 0.0
    %4545 = vmatprep.subr.mxu0 0.0
    %4546 = vmatpush1.msra.mxu0 0.0
    %4547 = vmatprep.subr.mxu0 0.0
    %4548 = vmatpush1.msra.mxu0 0.0
    %4549 = vmatprep.subr.mxu0 0.0
    %4550 = vmatpush1.msra.mxu0 0.0
    %4551 = vmatprep.subr.mxu0 0.0
    %4552 = vmatpush1.msra.mxu0 0.0
    %4553 = vmatprep.subr.mxu0 0.0
    %4554 = vmatpush1.msra.mxu0 0.0
    %4555 = vmatprep.subr.mxu0 0.0
    %4556 = vmatpush1.msra.mxu0 0.0
    %4557 = vmatprep.mubr.f32.mxu0 0.0
    %4558 = vmatmul.mubr.f32.gmra.mrb[0].mxu0 %v4491
    %v4559 = vpop.f32.mrb[0].mxu0
    %v4560 = vadd.f32 0.0, %v4559
    %v4561 = vpop.f32.mrb[0].mxu0
    %4562 = vdwg.mxu0
    %4563 = vrot.lane.b32.xlu0 %v3351, 112
    %v4564 = vpop.permute.xlu0 %4563
    %v4567 = vsel %vm712, %v4400, 0
    %4569 = vmatprep.subr.mxu0 0.0
    %4570 = vmatpush1.msra.mxu0 %v4564
    %4571 = vmatprep.subr.mxu0 0.0
    %4572 = vmatpush1.msra.mxu0 0.0
    %4573 = vmatprep.subr.mxu0 0.0
    %4574 = vmatpush1.msra.mxu0 0.0
    %4575 = vmatprep.subr.mxu0 0.0
    %4576 = vmatpush1.msra.mxu0 0.0
    %4577 = vmatprep.subr.mxu0 0.0
    %4578 = vmatpush1.msra.mxu0 0.0
    %4579 = vmatprep.subr.mxu0 0.0
    %4580 = vmatpush1.msra.mxu0 0.0
    %4581 = vmatprep.subr.mxu0 0.0
    %4582 = vmatpush1.msra.mxu0 0.0
    %4583 = vmatprep.subr.mxu0 0.0
    %4584 = vmatpush1.msra.mxu0 0.0
    %4585 = vmatprep.subr.mxu0 0.0
    %4586 = vmatpush1.msra.mxu0 0.0
    %4587 = vmatprep.subr.mxu0 0.0
    %4588 = vmatpush1.msra.mxu0 0.0
    %4589 = vmatprep.subr.mxu0 0.0
    %4590 = vmatpush1.msra.mxu0 0.0
    %4591 = vmatprep.subr.mxu0 0.0
    %4592 = vmatpush1.msra.mxu0 0.0
    %4593 = vmatprep.subr.mxu0 0.0
    %4594 = vmatpush1.msra.mxu0 0.0
    %4595 = vmatprep.subr.mxu0 0.0
    %4596 = vmatpush1.msra.mxu0 0.0
    %4597 = vmatprep.subr.mxu0 0.0
    %4598 = vmatpush1.msra.mxu0 0.0
    %4599 = vmatprep.subr.mxu0 0.0
    %4600 = vmatpush1.msra.mxu0 0.0
    %4601 = vmatprep.subr.mxu0 0.0
    %4602 = vmatpush1.msra.mxu0 0.0
    %4603 = vmatprep.subr.mxu0 0.0
    %4604 = vmatpush1.msra.mxu0 0.0
    %4605 = vmatprep.subr.mxu0 0.0
    %4606 = vmatpush1.msra.mxu0 0.0
    %4607 = vmatprep.subr.mxu0 0.0
    %4608 = vmatpush1.msra.mxu0 0.0
    %4609 = vmatprep.subr.mxu0 0.0
    %4610 = vmatpush1.msra.mxu0 0.0
    %4611 = vmatprep.subr.mxu0 0.0
    %4612 = vmatpush1.msra.mxu0 0.0
    %4613 = vmatprep.subr.mxu0 0.0
    %4614 = vmatpush1.msra.mxu0 0.0
    %4615 = vmatprep.subr.mxu0 0.0
    %4616 = vmatpush1.msra.mxu0 0.0
    %4617 = vmatprep.subr.mxu0 0.0
    %4618 = vmatpush1.msra.mxu0 0.0
    %4619 = vmatprep.subr.mxu0 0.0
    %4620 = vmatpush1.msra.mxu0 0.0
    %4621 = vmatprep.subr.mxu0 0.0
    %4622 = vmatpush1.msra.mxu0 0.0
    %4623 = vmatprep.subr.mxu0 0.0
    %4624 = vmatpush1.msra.mxu0 0.0
    %4625 = vmatprep.subr.mxu0 0.0
    %4626 = vmatpush1.msra.mxu0 0.0
    %4627 = vmatprep.subr.mxu0 0.0
    %4628 = vmatpush1.msra.mxu0 0.0
    %4629 = vmatprep.subr.mxu0 0.0
    %4630 = vmatpush1.msra.mxu0 0.0
    %4631 = vmatprep.subr.mxu0 0.0
    %4632 = vmatpush1.msra.mxu0 0.0
    %4633 = vmatprep.mubr.f32.mxu0 0.0
    %4634 = vmatmul.mubr.f32.gmra.mrb[0].mxu0 %v4567
    %v4635 = vpop.f32.mrb[0].mxu0
    %v4636 = vadd.f32 0.0, %v4635
    %v4637 = vpop.f32.mrb[0].mxu0
    %4638 = vdwg.mxu0
    %4639 = vrot.lane.b32.xlu0 %v3421, 112
    %v4640 = vpop.permute.xlu0 %4639
    %v4643 = vsel %vm712, %v4402, 0
    %4645 = vmatprep.subr.mxu0 0.0
    %4646 = vmatpush1.msra.mxu0 %v4640
    %4647 = vmatprep.subr.mxu0 0.0
    %4648 = vmatpush1.msra.mxu0 0.0
    %4649 = vmatprep.subr.mxu0 0.0
    %4650 = vmatpush1.msra.mxu0 0.0
    %4651 = vmatprep.subr.mxu0 0.0
    %4652 = vmatpush1.msra.mxu0 0.0
    %4653 = vmatprep.subr.mxu0 0.0
    %4654 = vmatpush1.msra.mxu0 0.0
    %4655 = vmatprep.subr.mxu0 0.0
    %4656 = vmatpush1.msra.mxu0 0.0
    %4657 = vmatprep.subr.mxu0 0.0
    %4658 = vmatpush1.msra.mxu0 0.0
    %4659 = vmatprep.subr.mxu0 0.0
    %4660 = vmatpush1.msra.mxu0 0.0
    %4661 = vmatprep.subr.mxu0 0.0
    %4662 = vmatpush1.msra.mxu0 0.0
    %4663 = vmatprep.subr.mxu0 0.0
    %4664 = vmatpush1.msra.mxu0 0.0
    %4665 = vmatprep.subr.mxu0 0.0
    %4666 = vmatpush1.msra.mxu0 0.0
    %4667 = vmatprep.subr.mxu0 0.0
    %4668 = vmatpush1.msra.mxu0 0.0
    %4669 = vmatprep.subr.mxu0 0.0
    %4670 = vmatpush1.msra.mxu0 0.0
    %4671 = vmatprep.subr.mxu0 0.0
    %4672 = vmatpush1.msra.mxu0 0.0
    %4673 = vmatprep.subr.mxu0 0.0
    %4674 = vmatpush1.msra.mxu0 0.0
    %4675 = vmatprep.subr.mxu0 0.0
    %4676 = vmatpush1.msra.mxu0 0.0
    %4677 = vmatprep.subr.mxu0 0.0
    %4678 = vmatpush1.msra.mxu0 0.0
    %4679 = vmatprep.subr.mxu0 0.0
    %4680 = vmatpush1.msra.mxu0 0.0
    %4681 = vmatprep.subr.mxu0 0.0
    %4682 = vmatpush1.msra.mxu0 0.0
    %4683 = vmatprep.subr.mxu0 0.0
    %4684 = vmatpush1.msra.mxu0 0.0
    %4685 = vmatprep.subr.mxu0 0.0
    %4686 = vmatpush1.msra.mxu0 0.0
    %4687 = vmatprep.subr.mxu0 0.0
    %4688 = vmatpush1.msra.mxu0 0.0
    %4689 = vmatprep.subr.mxu0 0.0
    %4690 = vmatpush1.msra.mxu0 0.0
    %4691 = vmatprep.subr.mxu0 0.0
    %4692 = vmatpush1.msra.mxu0 0.0
    %4693 = vmatprep.subr.mxu0 0.0
    %4694 = vmatpush1.msra.mxu0 0.0
    %4695 = vmatprep.subr.mxu0 0.0
    %4696 = vmatpush1.msra.mxu0 0.0
    %4697 = vmatprep.subr.mxu0 0.0
    %4698 = vmatpush1.msra.mxu0 0.0
    %4699 = vmatprep.subr.mxu0 0.0
    %4700 = vmatpush1.msra.mxu0 0.0
    %4701 = vmatprep.subr.mxu0 0.0
    %4702 = vmatpush1.msra.mxu0 0.0
    %4703 = vmatprep.subr.mxu0 0.0
    %4704 = vmatpush1.msra.mxu0 0.0
    %4705 = vmatprep.subr.mxu0 0.0
    %4706 = vmatpush1.msra.mxu0 0.0
    %4707 = vmatprep.subr.mxu0 0.0
    %4708 = vmatpush1.msra.mxu0 0.0
    %4709 = vmatprep.mubr.f32.mxu0 0.0
    %4710 = vmatmul.mubr.f32.gmra.mrb[0].mxu0 %v4643
    %v4711 = vpop.f32.mrb[0].mxu0
    %v4712 = vadd.f32 0.0, %v4711
    %v4713 = vpop.f32.mrb[0].mxu0
    %4714 = vdwg.mxu0
    %4715 = vrot.lane.b32.xlu0 %v3494, 112
    %v4716 = vpop.permute.xlu0 %4715
    %v4719 = vsel %vm712, %v4404, 0
    %4721 = vmatprep.subr.mxu0 0.0
    %4722 = vmatpush1.msra.mxu0 %v4716
    %4723 = vmatprep.subr.mxu0 0.0
    %4724 = vmatpush1.msra.mxu0 0.0
    %4725 = vmatprep.subr.mxu0 0.0
    %4726 = vmatpush1.msra.mxu0 0.0
    %4727 = vmatprep.subr.mxu0 0.0
    %4728 = vmatpush1.msra.mxu0 0.0
    %4729 = vmatprep.subr.mxu0 0.0
    %4730 = vmatpush1.msra.mxu0 0.0
    %4731 = vmatprep.subr.mxu0 0.0
    %4732 = vmatpush1.msra.mxu0 0.0
    %4733 = vmatprep.subr.mxu0 0.0
    %4734 = vmatpush1.msra.mxu0 0.0
    %4735 = vmatprep.subr.mxu0 0.0
    %4736 = vmatpush1.msra.mxu0 0.0
    %4737 = vmatprep.subr.mxu0 0.0
    %4738 = vmatpush1.msra.mxu0 0.0
    %4739 = vmatprep.subr.mxu0 0.0
    %4740 = vmatpush1.msra.mxu0 0.0
    %4741 = vmatprep.subr.mxu0 0.0
    %4742 = vmatpush1.msra.mxu0 0.0
    %4743 = vmatprep.subr.mxu0 0.0
    %4744 = vmatpush1.msra.mxu0 0.0
    %4745 = vmatprep.subr.mxu0 0.0
    %4746 = vmatpush1.msra.mxu0 0.0
    %4747 = vmatprep.subr.mxu0 0.0
    %4748 = vmatpush1.msra.mxu0 0.0
    %4749 = vmatprep.subr.mxu0 0.0
    %4750 = vmatpush1.msra.mxu0 0.0
    %4751 = vmatprep.subr.mxu0 0.0
    %4752 = vmatpush1.msra.mxu0 0.0
    %4753 = vmatprep.subr.mxu0 0.0
    %4754 = vmatpush1.msra.mxu0 0.0
    %4755 = vmatprep.subr.mxu0 0.0
    %4756 = vmatpush1.msra.mxu0 0.0
    %4757 = vmatprep.subr.mxu0 0.0
    %4758 = vmatpush1.msra.mxu0 0.0
    %4759 = vmatprep.subr.mxu0 0.0
    %4760 = vmatpush1.msra.mxu0 0.0
    %4761 = vmatprep.subr.mxu0 0.0
    %4762 = vmatpush1.msra.mxu0 0.0
    %4763 = vmatprep.subr.mxu0 0.0
    %4764 = vmatpush1.msra.mxu0 0.0
    %4765 = vmatprep.subr.mxu0 0.0
    %4766 = vmatpush1.msra.mxu0 0.0
    %4767 = vmatprep.subr.mxu0 0.0
    %4768 = vmatpush1.msra.mxu0 0.0
    %4769 = vmatprep.subr.mxu0 0.0
    %4770 = vmatpush1.msra.mxu0 0.0
    %4771 = vmatprep.subr.mxu0 0.0
    %4772 = vmatpush1.msra.mxu0 0.0
    %4773 = vmatprep.subr.mxu0 0.0
    %4774 = vmatpush1.msra.mxu0 0.0
    %4775 = vmatprep.subr.mxu0 0.0
    %4776 = vmatpush1.msra.mxu0 0.0
    %4777 = vmatprep.subr.mxu0 0.0
    %4778 = vmatpush1.msra.mxu0 0.0
    %4779 = vmatprep.subr.mxu0 0.0
    %4780 = vmatpush1.msra.mxu0 0.0
    %4781 = vmatprep.subr.mxu0 0.0
    %4782 = vmatpush1.msra.mxu0 0.0
    %4783 = vmatprep.subr.mxu0 0.0
    %4784 = vmatpush1.msra.mxu0 0.0
    %4785 = vmatprep.mubr.f32.mxu0 0.0
    %4786 = vmatmul.mubr.f32.gmra.mrb[0].mxu0 %v4719
    %v4787 = vpop.f32.mrb[0].mxu0
    %v4788 = vadd.f32 0.0, %v4787
    %v4789 = vpop.f32.mrb[0].mxu0
    %4790 = vdwg.mxu0
    %4791 = vrot.lane.b32.xlu0 %v3564, 112
    %v4792 = vpop.permute.xlu0 %4791
    %v4795 = vsel %vm712, %v4406, 0
    %4797 = vmatprep.subr.mxu0 0.0
    %4798 = vmatpush1.msra.mxu0 %v4792
    %4799 = vmatprep.subr.mxu0 0.0
    %4800 = vmatpush1.msra.mxu0 0.0
    %4801 = vmatprep.subr.mxu0 0.0
    %4802 = vmatpush1.msra.mxu0 0.0
    %4803 = vmatprep.subr.mxu0 0.0
    %4804 = vmatpush1.msra.mxu0 0.0
    %4805 = vmatprep.subr.mxu0 0.0
    %4806 = vmatpush1.msra.mxu0 0.0
    %4807 = vmatprep.subr.mxu0 0.0
    %4808 = vmatpush1.msra.mxu0 0.0
    %4809 = vmatprep.subr.mxu0 0.0
    %4810 = vmatpush1.msra.mxu0 0.0
    %4811 = vmatprep.subr.mxu0 0.0
    %4812 = vmatpush1.msra.mxu0 0.0
    %4813 = vmatprep.subr.mxu0 0.0
    %4814 = vmatpush1.msra.mxu0 0.0
    %4815 = vmatprep.subr.mxu0 0.0
    %4816 = vmatpush1.msra.mxu0 0.0
    %4817 = vmatprep.subr.mxu0 0.0
    %4818 = vmatpush1.msra.mxu0 0.0
    %4819 = vmatprep.subr.mxu0 0.0
    %4820 = vmatpush1.msra.mxu0 0.0
    %4821 = vmatprep.subr.mxu0 0.0
    %4822 = vmatpush1.msra.mxu0 0.0
    %4823 = vmatprep.subr.mxu0 0.0
    %4824 = vmatpush1.msra.mxu0 0.0
    %4825 = vmatprep.subr.mxu0 0.0
    %4826 = vmatpush1.msra.mxu0 0.0
    %4827 = vmatprep.subr.mxu0 0.0
    %4828 = vmatpush1.msra.mxu0 0.0
    %4829 = vmatprep.subr.mxu0 0.0
    %4830 = vmatpush1.msra.mxu0 0.0
    %4831 = vmatprep.subr.mxu0 0.0
    %4832 = vmatpush1.msra.mxu0 0.0
    %4833 = vmatprep.subr.mxu0 0.0
    %4834 = vmatpush1.msra.mxu0 0.0
    %4835 = vmatprep.subr.mxu0 0.0
    %4836 = vmatpush1.msra.mxu0 0.0
    %4837 = vmatprep.subr.mxu0 0.0
    %4838 = vmatpush1.msra.mxu0 0.0
    %4839 = vmatprep.subr.mxu0 0.0
    %4840 = vmatpush1.msra.mxu0 0.0
    %4841 = vmatprep.subr.mxu0 0.0
    %4842 = vmatpush1.msra.mxu0 0.0
    %4843 = vmatprep.subr.mxu0 0.0
    %4844 = vmatpush1.msra.mxu0 0.0
    %4845 = vmatprep.subr.mxu0 0.0
    %4846 = vmatpush1.msra.mxu0 0.0
    %4847 = vmatprep.subr.mxu0 0.0
    %4848 = vmatpush1.msra.mxu0 0.0
    %4849 = vmatprep.subr.mxu0 0.0
    %4850 = vmatpush1.msra.mxu0 0.0
    %4851 = vmatprep.subr.mxu0 0.0
    %4852 = vmatpush1.msra.mxu0 0.0
    %4853 = vmatprep.subr.mxu0 0.0
    %4854 = vmatpush1.msra.mxu0 0.0
    %4855 = vmatprep.subr.mxu0 0.0
    %4856 = vmatpush1.msra.mxu0 0.0
    %4857 = vmatprep.subr.mxu0 0.0
    %4858 = vmatpush1.msra.mxu0 0.0
    %4859 = vmatprep.subr.mxu0 0.0
    %4860 = vmatpush1.msra.mxu0 0.0
    %4861 = vmatprep.mubr.f32.mxu0 0.0
    %4862 = vmatmul.mubr.f32.gmra.mrb[0].mxu0 %v4795
    %v4863 = vpop.f32.mrb[0].mxu0
    %v4864 = vadd.f32 0.0, %v4863
    %v4865 = vpop.f32.mrb[0].mxu0
    %4866 = vdwg.mxu0
    %4867 = vrot.lane.b32.xlu0 %v3634, 112
    %v4868 = vpop.permute.xlu0 %4867
    %v4871 = vsel %vm712, %v4408, 0
    %4873 = vmatprep.subr.mxu0 0.0
    %4874 = vmatpush1.msra.mxu0 %v4868
    %4875 = vmatprep.subr.mxu0 0.0
    %4876 = vmatpush1.msra.mxu0 0.0
    %4877 = vmatprep.subr.mxu0 0.0
    %4878 = vmatpush1.msra.mxu0 0.0
    %4879 = vmatprep.subr.mxu0 0.0
    %4880 = vmatpush1.msra.mxu0 0.0
    %4881 = vmatprep.subr.mxu0 0.0
    %4882 = vmatpush1.msra.mxu0 0.0
    %4883 = vmatprep.subr.mxu0 0.0
    %4884 = vmatpush1.msra.mxu0 0.0
    %4885 = vmatprep.subr.mxu0 0.0
    %4886 = vmatpush1.msra.mxu0 0.0
    %4887 = vmatprep.subr.mxu0 0.0
    %4888 = vmatpush1.msra.mxu0 0.0
    %4889 = vmatprep.subr.mxu0 0.0
    %4890 = vmatpush1.msra.mxu0 0.0
    %4891 = vmatprep.subr.mxu0 0.0
    %4892 = vmatpush1.msra.mxu0 0.0
    %4893 = vmatprep.subr.mxu0 0.0
    %4894 = vmatpush1.msra.mxu0 0.0
    %4895 = vmatprep.subr.mxu0 0.0
    %4896 = vmatpush1.msra.mxu0 0.0
    %4897 = vmatprep.subr.mxu0 0.0
    %4898 = vmatpush1.msra.mxu0 0.0
    %4899 = vmatprep.subr.mxu0 0.0
    %4900 = vmatpush1.msra.mxu0 0.0
    %4901 = vmatprep.subr.mxu0 0.0
    %4902 = vmatpush1.msra.mxu0 0.0
    %4903 = vmatprep.subr.mxu0 0.0
    %4904 = vmatpush1.msra.mxu0 0.0
    %4905 = vmatprep.subr.mxu0 0.0
    %4906 = vmatpush1.msra.mxu0 0.0
    %4907 = vmatprep.subr.mxu0 0.0
    %4908 = vmatpush1.msra.mxu0 0.0
    %4909 = vmatprep.subr.mxu0 0.0
    %4910 = vmatpush1.msra.mxu0 0.0
    %4911 = vmatprep.subr.mxu0 0.0
    %4912 = vmatpush1.msra.mxu0 0.0
    %4913 = vmatprep.subr.mxu0 0.0
    %4914 = vmatpush1.msra.mxu0 0.0
    %4915 = vmatprep.subr.mxu0 0.0
    %4916 = vmatpush1.msra.mxu0 0.0
    %4917 = vmatprep.subr.mxu0 0.0
    %4918 = vmatpush1.msra.mxu0 0.0
    %4919 = vmatprep.subr.mxu0 0.0
    %4920 = vmatpush1.msra.mxu0 0.0
    %4921 = vmatprep.subr.mxu0 0.0
    %4922 = vmatpush1.msra.mxu0 0.0
    %4923 = vmatprep.subr.mxu0 0.0
    %4924 = vmatpush1.msra.mxu0 0.0
    %4925 = vmatprep.subr.mxu0 0.0
    %4926 = vmatpush1.msra.mxu0 0.0
    %4927 = vmatprep.subr.mxu0 0.0
    %4928 = vmatpush1.msra.mxu0 0.0
    %4929 = vmatprep.subr.mxu0 0.0
    %4930 = vmatpush1.msra.mxu0 0.0
    %4931 = vmatprep.subr.mxu0 0.0
    %4932 = vmatpush1.msra.mxu0 0.0
    %4933 = vmatprep.subr.mxu0 0.0
    %4934 = vmatpush1.msra.mxu0 0.0
    %4935 = vmatprep.subr.mxu0 0.0
    %4936 = vmatpush1.msra.mxu0 0.0
    %4937 = vmatprep.mubr.f32.mxu0 0.0
    %4938 = vmatmul.mubr.f32.gmra.mrb[0].mxu0 %v4871
    %v4939 = vpop.f32.mrb[0].mxu0
    %v4940 = vadd.f32 0.0, %v4939
    %v4941 = vpop.f32.mrb[0].mxu0
    %4942 = vdwg.mxu0
    %4943 = vrot.lane.b32.xlu0 %v3704, 112
    %v4944 = vpop.permute.xlu0 %4943
    %v4947 = vsel %vm712, %v4410, 0
    %4949 = vmatprep.subr.mxu0 0.0
    %4950 = vmatpush1.msra.mxu0 %v4944
    %4951 = vmatprep.subr.mxu0 0.0
    %4952 = vmatpush1.msra.mxu0 0.0
    %4953 = vmatprep.subr.mxu0 0.0
    %4954 = vmatpush1.msra.mxu0 0.0
    %4955 = vmatprep.subr.mxu0 0.0
    %4956 = vmatpush1.msra.mxu0 0.0
    %4957 = vmatprep.subr.mxu0 0.0
    %4958 = vmatpush1.msra.mxu0 0.0
    %4959 = vmatprep.subr.mxu0 0.0
    %4960 = vmatpush1.msra.mxu0 0.0
    %4961 = vmatprep.subr.mxu0 0.0
    %4962 = vmatpush1.msra.mxu0 0.0
    %4963 = vmatprep.subr.mxu0 0.0
    %4964 = vmatpush1.msra.mxu0 0.0
    %4965 = vmatprep.subr.mxu0 0.0
    %4966 = vmatpush1.msra.mxu0 0.0
    %4967 = vmatprep.subr.mxu0 0.0
    %4968 = vmatpush1.msra.mxu0 0.0
    %4969 = vmatprep.subr.mxu0 0.0
    %4970 = vmatpush1.msra.mxu0 0.0
    %4971 = vmatprep.subr.mxu0 0.0
    %4972 = vmatpush1.msra.mxu0 0.0
    %4973 = vmatprep.subr.mxu0 0.0
    %4974 = vmatpush1.msra.mxu0 0.0
    %4975 = vmatprep.subr.mxu0 0.0
    %4976 = vmatpush1.msra.mxu0 0.0
    %4977 = vmatprep.subr.mxu0 0.0
    %4978 = vmatpush1.msra.mxu0 0.0
    %4979 = vmatprep.subr.mxu0 0.0
    %4980 = vmatpush1.msra.mxu0 0.0
    %4981 = vmatprep.subr.mxu0 0.0
    %4982 = vmatpush1.msra.mxu0 0.0
    %4983 = vmatprep.subr.mxu0 0.0
    %4984 = vmatpush1.msra.mxu0 0.0
    %4985 = vmatprep.subr.mxu0 0.0
    %4986 = vmatpush1.msra.mxu0 0.0
    %4987 = vmatprep.subr.mxu0 0.0
    %4988 = vmatpush1.msra.mxu0 0.0
    %4989 = vmatprep.subr.mxu0 0.0
    %4990 = vmatpush1.msra.mxu0 0.0
    %4991 = vmatprep.subr.mxu0 0.0
    %4992 = vmatpush1.msra.mxu0 0.0
    %4993 = vmatprep.subr.mxu0 0.0
    %4994 = vmatpush1.msra.mxu0 0.0
    %4995 = vmatprep.subr.mxu0 0.0
    %4996 = vmatpush1.msra.mxu0 0.0
    %4997 = vmatprep.subr.mxu0 0.0
    %4998 = vmatpush1.msra.mxu0 0.0
    %4999 = vmatprep.subr.mxu0 0.0
    %5000 = vmatpush1.msra.mxu0 0.0
    %5001 = vmatprep.subr.mxu0 0.0
    %5002 = vmatpush1.msra.mxu0 0.0
    %5003 = vmatprep.subr.mxu0 0.0
    %5004 = vmatpush1.msra.mxu0 0.0
    %5005 = vmatprep.subr.mxu0 0.0
    %5006 = vmatpush1.msra.mxu0 0.0
    %5007 = vmatprep.subr.mxu0 0.0
    %5008 = vmatpush1.msra.mxu0 0.0
    %5009 = vmatprep.subr.mxu0 0.0
    %5010 = vmatpush1.msra.mxu0 0.0
    %5011 = vmatprep.subr.mxu0 0.0
    %5012 = vmatpush1.msra.mxu0 0.0
    %5013 = vmatprep.mubr.f32.mxu0 0.0
    %5014 = vmatmul.mubr.f32.gmra.mrb[0].mxu0 %v4947
    %v5015 = vpop.f32.mrb[0].mxu0
    %v5016 = vadd.f32 0.0, %v5015
    %v5017 = vpop.f32.mrb[0].mxu0
    %5018 = vdwg.mxu0
    %s5019 = scalar_lea.vmem %s4, 64
    %v5020 = vld [vmem:[%s5019] sm:$0xff]
    %v5021 = vld [vmem:[%s5019 + $0x8] sm:$0xff]
    %v5022 = vld [vmem:[%s5019 + $0x10] sm:$0xff]
    %v5023 = vld [vmem:[%s5019 + $0x18] sm:$0xff]
    %v5024 = vld [vmem:[%s5019 + $0x20] sm:$0xff]
    %v5025 = vld [vmem:[%s5019 + $0x28] sm:$0xff]
    %v5026 = vld [vmem:[%s5019 + $0x30] sm:$0xff]
    %v5027 = vld [vmem:[%s5019 + $0x38] sm:$0xff]
    %v5029 = vsel %vm712, %v4484, 0
    %5031 = vmatprep.subr.mxu0 0.0
    %5032 = vmatpush1.msra.mxu0 %v5020
    %5033 = vmatprep.subr.mxu0 0.0
    %5034 = vmatpush1.msra.mxu0 0.0
    %5035 = vmatprep.subr.mxu0 0.0
    %5036 = vmatpush1.msra.mxu0 0.0
    %5037 = vmatprep.subr.mxu0 0.0
    %5038 = vmatpush1.msra.mxu0 0.0
    %5039 = vmatprep.subr.mxu0 0.0
    %5040 = vmatpush1.msra.mxu0 0.0
    %5041 = vmatprep.subr.mxu0 0.0
    %5042 = vmatpush1.msra.mxu0 0.0
    %5043 = vmatprep.subr.mxu0 0.0
    %5044 = vmatpush1.msra.mxu0 0.0
    %5045 = vmatprep.subr.mxu0 0.0
    %5046 = vmatpush1.msra.mxu0 0.0
    %5047 = vmatprep.subr.mxu0 0.0
    %5048 = vmatpush1.msra.mxu0 0.0
    %5049 = vmatprep.subr.mxu0 0.0
    %5050 = vmatpush1.msra.mxu0 0.0
    %5051 = vmatprep.subr.mxu0 0.0
    %5052 = vmatpush1.msra.mxu0 0.0
    %5053 = vmatprep.subr.mxu0 0.0
    %5054 = vmatpush1.msra.mxu0 0.0
    %5055 = vmatprep.subr.mxu0 0.0
    %5056 = vmatpush1.msra.mxu0 0.0
    %5057 = vmatprep.subr.mxu0 0.0
    %5058 = vmatpush1.msra.mxu0 0.0
    %5059 = vmatprep.subr.mxu0 0.0
    %5060 = vmatpush1.msra.mxu0 0.0
    %5061 = vmatprep.subr.mxu0 0.0
    %5062 = vmatpush1.msra.mxu0 0.0
    %5063 = vmatprep.subr.mxu0 0.0
    %5064 = vmatpush1.msra.mxu0 0.0
    %5065 = vmatprep.subr.mxu0 0.0
    %5066 = vmatpush1.msra.mxu0 0.0
    %5067 = vmatprep.subr.mxu0 0.0
    %5068 = vmatpush1.msra.mxu0 0.0
    %5069 = vmatprep.subr.mxu0 0.0
    %5070 = vmatpush1.msra.mxu0 0.0
    %5071 = vmatprep.subr.mxu0 0.0
    %5072 = vmatpush1.msra.mxu0 0.0
    %5073 = vmatprep.subr.mxu0 0.0
    %5074 = vmatpush1.msra.mxu0 0.0
    %5075 = vmatprep.subr.mxu0 0.0
    %5076 = vmatpush1.msra.mxu0 0.0
    %5077 = vmatprep.subr.mxu0 0.0
    %5078 = vmatpush1.msra.mxu0 0.0
    %5079 = vmatprep.subr.mxu0 0.0
    %5080 = vmatpush1.msra.mxu0 0.0
    %5081 = vmatprep.subr.mxu0 0.0
    %5082 = vmatpush1.msra.mxu0 0.0
    %5083 = vmatprep.subr.mxu0 0.0
    %5084 = vmatpush1.msra.mxu0 0.0
    %5085 = vmatprep.subr.mxu0 0.0
    %5086 = vmatpush1.msra.mxu0 0.0
    %5087 = vmatprep.subr.mxu0 0.0
    %5088 = vmatpush1.msra.mxu0 0.0
    %5089 = vmatprep.subr.mxu0 0.0
    %5090 = vmatpush1.msra.mxu0 0.0
    %5091 = vmatprep.subr.mxu0 0.0
    %5092 = vmatpush1.msra.mxu0 0.0
    %5093 = vmatprep.subr.mxu0 0.0
    %5094 = vmatpush1.msra.mxu0 0.0
    %5095 = vmatprep.mubr.f32.mxu0 0.0
    %5096 = vmatmul.mubr.f32.gmra.mrb[0].mxu0 %v5029
    %v5097 = vpop.f32.mrb[0].mxu0
    %v5098 = vadd.f32 0.0, %v5097
    %v5099 = vpop.f32.mrb[0].mxu0
    %5100 = vdwg.mxu0
    %v5102 = vsel %vm712, %v4560, 0
    %5104 = vmatprep.subr.mxu0 0.0
    %5105 = vmatpush1.msra.mxu0 %v5021
    %5106 = vmatprep.subr.mxu0 0.0
    %5107 = vmatpush1.msra.mxu0 0.0
    %5108 = vmatprep.subr.mxu0 0.0
    %5109 = vmatpush1.msra.mxu0 0.0
    %5110 = vmatprep.subr.mxu0 0.0
    %5111 = vmatpush1.msra.mxu0 0.0
    %5112 = vmatprep.subr.mxu0 0.0
    %5113 = vmatpush1.msra.mxu0 0.0
    %5114 = vmatprep.subr.mxu0 0.0
    %5115 = vmatpush1.msra.mxu0 0.0
    %5116 = vmatprep.subr.mxu0 0.0
    %5117 = vmatpush1.msra.mxu0 0.0
    %5118 = vmatprep.subr.mxu0 0.0
    %5119 = vmatpush1.msra.mxu0 0.0
    %5120 = vmatprep.subr.mxu0 0.0
    %5121 = vmatpush1.msra.mxu0 0.0
    %5122 = vmatprep.subr.mxu0 0.0
    %5123 = vmatpush1.msra.mxu0 0.0
    %5124 = vmatprep.subr.mxu0 0.0
    %5125 = vmatpush1.msra.mxu0 0.0
    %5126 = vmatprep.subr.mxu0 0.0
    %5127 = vmatpush1.msra.mxu0 0.0
    %5128 = vmatprep.subr.mxu0 0.0
    %5129 = vmatpush1.msra.mxu0 0.0
    %5130 = vmatprep.subr.mxu0 0.0
    %5131 = vmatpush1.msra.mxu0 0.0
    %5132 = vmatprep.subr.mxu0 0.0
    %5133 = vmatpush1.msra.mxu0 0.0
    %5134 = vmatprep.subr.mxu0 0.0
    %5135 = vmatpush1.msra.mxu0 0.0
    %5136 = vmatprep.subr.mxu0 0.0
    %5137 = vmatpush1.msra.mxu0 0.0
    %5138 = vmatprep.subr.mxu0 0.0
    %5139 = vmatpush1.msra.mxu0 0.0
    %5140 = vmatprep.subr.mxu0 0.0
    %5141 = vmatpush1.msra.mxu0 0.0
    %5142 = vmatprep.subr.mxu0 0.0
    %5143 = vmatpush1.msra.mxu0 0.0
    %5144 = vmatprep.subr.mxu0 0.0
    %5145 = vmatpush1.msra.mxu0 0.0
    %5146 = vmatprep.subr.mxu0 0.0
    %5147 = vmatpush1.msra.mxu0 0.0
    %5148 = vmatprep.subr.mxu0 0.0
    %5149 = vmatpush1.msra.mxu0 0.0
    %5150 = vmatprep.subr.mxu0 0.0
    %5151 = vmatpush1.msra.mxu0 0.0
    %5152 = vmatprep.subr.mxu0 0.0
    %5153 = vmatpush1.msra.mxu0 0.0
    %5154 = vmatprep.subr.mxu0 0.0
    %5155 = vmatpush1.msra.mxu0 0.0
    %5156 = vmatprep.subr.mxu0 0.0
    %5157 = vmatpush1.msra.mxu0 0.0
    %5158 = vmatprep.subr.mxu0 0.0
    %5159 = vmatpush1.msra.mxu0 0.0
    %5160 = vmatprep.subr.mxu0 0.0
    %5161 = vmatpush1.msra.mxu0 0.0
    %5162 = vmatprep.subr.mxu0 0.0
    %5163 = vmatpush1.msra.mxu0 0.0
    %5164 = vmatprep.subr.mxu0 0.0
    %5165 = vmatpush1.msra.mxu0 0.0
    %5166 = vmatprep.subr.mxu0 0.0
    %5167 = vmatpush1.msra.mxu0 0.0
    %5168 = vmatprep.mubr.f32.mxu0 0.0
    %5169 = vmatmul.mubr.f32.gmra.mrb[0].mxu0 %v5102
    %v5170 = vpop.f32.mrb[0].mxu0
    %v5171 = vadd.f32 0.0, %v5170
    %v5172 = vpop.f32.mrb[0].mxu0
    %5173 = vdwg.mxu0
    %v5175 = vsel %vm712, %v4636, 0
    %5177 = vmatprep.subr.mxu0 0.0
    %5178 = vmatpush1.msra.mxu0 %v5022
    %5179 = vmatprep.subr.mxu0 0.0
    %5180 = vmatpush1.msra.mxu0 0.0
    %5181 = vmatprep.subr.mxu0 0.0
    %5182 = vmatpush1.msra.mxu0 0.0
    %5183 = vmatprep.subr.mxu0 0.0
    %5184 = vmatpush1.msra.mxu0 0.0
    %5185 = vmatprep.subr.mxu0 0.0
    %5186 = vmatpush1.msra.mxu0 0.0
    %5187 = vmatprep.subr.mxu0 0.0
    %5188 = vmatpush1.msra.mxu0 0.0
    %5189 = vmatprep.subr.mxu0 0.0
    %5190 = vmatpush1.msra.mxu0 0.0
    %5191 = vmatprep.subr.mxu0 0.0
    %5192 = vmatpush1.msra.mxu0 0.0
    %5193 = vmatprep.subr.mxu0 0.0
    %5194 = vmatpush1.msra.mxu0 0.0
    %5195 = vmatprep.subr.mxu0 0.0
    %5196 = vmatpush1.msra.mxu0 0.0
    %5197 = vmatprep.subr.mxu0 0.0
    %5198 = vmatpush1.msra.mxu0 0.0
    %5199 = vmatprep.subr.mxu0 0.0
    %5200 = vmatpush1.msra.mxu0 0.0
    %5201 = vmatprep.subr.mxu0 0.0
    %5202 = vmatpush1.msra.mxu0 0.0
    %5203 = vmatprep.subr.mxu0 0.0
    %5204 = vmatpush1.msra.mxu0 0.0
    %5205 = vmatprep.subr.mxu0 0.0
    %5206 = vmatpush1.msra.mxu0 0.0
    %5207 = vmatprep.subr.mxu0 0.0
    %5208 = vmatpush1.msra.mxu0 0.0
    %5209 = vmatprep.subr.mxu0 0.0
    %5210 = vmatpush1.msra.mxu0 0.0
    %5211 = vmatprep.subr.mxu0 0.0
    %5212 = vmatpush1.msra.mxu0 0.0
    %5213 = vmatprep.subr.mxu0 0.0
    %5214 = vmatpush1.msra.mxu0 0.0
    %5215 = vmatprep.subr.mxu0 0.0
    %5216 = vmatpush1.msra.mxu0 0.0
    %5217 = vmatprep.subr.mxu0 0.0
    %5218 = vmatpush1.msra.mxu0 0.0
    %5219 = vmatprep.subr.mxu0 0.0
    %5220 = vmatpush1.msra.mxu0 0.0
    %5221 = vmatprep.subr.mxu0 0.0
    %5222 = vmatpush1.msra.mxu0 0.0
    %5223 = vmatprep.subr.mxu0 0.0
    %5224 = vmatpush1.msra.mxu0 0.0
    %5225 = vmatprep.subr.mxu0 0.0
    %5226 = vmatpush1.msra.mxu0 0.0
    %5227 = vmatprep.subr.mxu0 0.0
    %5228 = vmatpush1.msra.mxu0 0.0
    %5229 = vmatprep.subr.mxu0 0.0
    %5230 = vmatpush1.msra.mxu0 0.0
    %5231 = vmatprep.subr.mxu0 0.0
    %5232 = vmatpush1.msra.mxu0 0.0
    %5233 = vmatprep.subr.mxu0 0.0
    %5234 = vmatpush1.msra.mxu0 0.0
    %5235 = vmatprep.subr.mxu0 0.0
    %5236 = vmatpush1.msra.mxu0 0.0
    %5237 = vmatprep.subr.mxu0 0.0
    %5238 = vmatpush1.msra.mxu0 0.0
    %5239 = vmatprep.subr.mxu0 0.0
    %5240 = vmatpush1.msra.mxu0 0.0
    %5241 = vmatprep.mubr.f32.mxu0 0.0
    %5242 = vmatmul.mubr.f32.gmra.mrb[0].mxu0 %v5175
    %v5243 = vpop.f32.mrb[0].mxu0
    %v5244 = vadd.f32 0.0, %v5243
    %v5245 = vpop.f32.mrb[0].mxu0
    %5246 = vdwg.mxu0
    %v5248 = vsel %vm712, %v4712, 0
    %5250 = vmatprep.subr.mxu0 0.0
    %5251 = vmatpush1.msra.mxu0 %v5023
    %5252 = vmatprep.subr.mxu0 0.0
    %5253 = vmatpush1.msra.mxu0 0.0
    %5254 = vmatprep.subr.mxu0 0.0
    %5255 = vmatpush1.msra.mxu0 0.0
    %5256 = vmatprep.subr.mxu0 0.0
    %5257 = vmatpush1.msra.mxu0 0.0
    %5258 = vmatprep.subr.mxu0 0.0
    %5259 = vmatpush1.msra.mxu0 0.0
    %5260 = vmatprep.subr.mxu0 0.0
    %5261 = vmatpush1.msra.mxu0 0.0
    %5262 = vmatprep.subr.mxu0 0.0
    %5263 = vmatpush1.msra.mxu0 0.0
    %5264 = vmatprep.subr.mxu0 0.0
    %5265 = vmatpush1.msra.mxu0 0.0
    %5266 = vmatprep.subr.mxu0 0.0
    %5267 = vmatpush1.msra.mxu0 0.0
    %5268 = vmatprep.subr.mxu0 0.0
    %5269 = vmatpush1.msra.mxu0 0.0
    %5270 = vmatprep.subr.mxu0 0.0
    %5271 = vmatpush1.msra.mxu0 0.0
    %5272 = vmatprep.subr.mxu0 0.0
    %5273 = vmatpush1.msra.mxu0 0.0
    %5274 = vmatprep.subr.mxu0 0.0
    %5275 = vmatpush1.msra.mxu0 0.0
    %5276 = vmatprep.subr.mxu0 0.0
    %5277 = vmatpush1.msra.mxu0 0.0
    %5278 = vmatprep.subr.mxu0 0.0
    %5279 = vmatpush1.msra.mxu0 0.0
    %5280 = vmatprep.subr.mxu0 0.0
    %5281 = vmatpush1.msra.mxu0 0.0
    %5282 = vmatprep.subr.mxu0 0.0
    %5283 = vmatpush1.msra.mxu0 0.0
    %5284 = vmatprep.subr.mxu0 0.0
    %5285 = vmatpush1.msra.mxu0 0.0
    %5286 = vmatprep.subr.mxu0 0.0
    %5287 = vmatpush1.msra.mxu0 0.0
    %5288 = vmatprep.subr.mxu0 0.0
    %5289 = vmatpush1.msra.mxu0 0.0
    %5290 = vmatprep.subr.mxu0 0.0
    %5291 = vmatpush1.msra.mxu0 0.0
    %5292 = vmatprep.subr.mxu0 0.0
    %5293 = vmatpush1.msra.mxu0 0.0
    %5294 = vmatprep.subr.mxu0 0.0
    %5295 = vmatpush1.msra.mxu0 0.0
    %5296 = vmatprep.subr.mxu0 0.0
    %5297 = vmatpush1.msra.mxu0 0.0
    %5298 = vmatprep.subr.mxu0 0.0
    %5299 = vmatpush1.msra.mxu0 0.0
    %5300 = vmatprep.subr.mxu0 0.0
    %5301 = vmatpush1.msra.mxu0 0.0
    %5302 = vmatprep.subr.mxu0 0.0
    %5303 = vmatpush1.msra.mxu0 0.0
    %5304 = vmatprep.subr.mxu0 0.0
    %5305 = vmatpush1.msra.mxu0 0.0
    %5306 = vmatprep.subr.mxu0 0.0
    %5307 = vmatpush1.msra.mxu0 0.0
    %5308 = vmatprep.subr.mxu0 0.0
    %5309 = vmatpush1.msra.mxu0 0.0
    %5310 = vmatprep.subr.mxu0 0.0
    %5311 = vmatpush1.msra.mxu0 0.0
    %5312 = vmatprep.subr.mxu0 0.0
    %5313 = vmatpush1.msra.mxu0 0.0
    %5314 = vmatprep.mubr.f32.mxu0 0.0
    %5315 = vmatmul.mubr.f32.gmra.mrb[0].mxu0 %v5248
    %v5316 = vpop.f32.mrb[0].mxu0
    %v5317 = vadd.f32 0.0, %v5316
    %v5318 = vpop.f32.mrb[0].mxu0
    %5319 = vdwg.mxu0
    %v5321 = vsel %vm712, %v4788, 0
    %5323 = vmatprep.subr.mxu0 0.0
    %5324 = vmatpush1.msra.mxu0 %v5024
    %5325 = vmatprep.subr.mxu0 0.0
    %5326 = vmatpush1.msra.mxu0 0.0
    %5327 = vmatprep.subr.mxu0 0.0
    %5328 = vmatpush1.msra.mxu0 0.0
    %5329 = vmatprep.subr.mxu0 0.0
    %5330 = vmatpush1.msra.mxu0 0.0
    %5331 = vmatprep.subr.mxu0 0.0
    %5332 = vmatpush1.msra.mxu0 0.0
    %5333 = vmatprep.subr.mxu0 0.0
    %5334 = vmatpush1.msra.mxu0 0.0
    %5335 = vmatprep.subr.mxu0 0.0
    %5336 = vmatpush1.msra.mxu0 0.0
    %5337 = vmatprep.subr.mxu0 0.0
    %5338 = vmatpush1.msra.mxu0 0.0
    %5339 = vmatprep.subr.mxu0 0.0
    %5340 = vmatpush1.msra.mxu0 0.0
    %5341 = vmatprep.subr.mxu0 0.0
    %5342 = vmatpush1.msra.mxu0 0.0
    %5343 = vmatprep.subr.mxu0 0.0
    %5344 = vmatpush1.msra.mxu0 0.0
    %5345 = vmatprep.subr.mxu0 0.0
    %5346 = vmatpush1.msra.mxu0 0.0
    %5347 = vmatprep.subr.mxu0 0.0
    %5348 = vmatpush1.msra.mxu0 0.0
    %5349 = vmatprep.subr.mxu0 0.0
    %5350 = vmatpush1.msra.mxu0 0.0
    %5351 = vmatprep.subr.mxu0 0.0
    %5352 = vmatpush1.msra.mxu0 0.0
    %5353 = vmatprep.subr.mxu0 0.0
    %5354 = vmatpush1.msra.mxu0 0.0
    %5355 = vmatprep.subr.mxu0 0.0
    %5356 = vmatpush1.msra.mxu0 0.0
    %5357 = vmatprep.subr.mxu0 0.0
    %5358 = vmatpush1.msra.mxu0 0.0
    %5359 = vmatprep.subr.mxu0 0.0
    %5360 = vmatpush1.msra.mxu0 0.0
    %5361 = vmatprep.subr.mxu0 0.0
    %5362 = vmatpush1.msra.mxu0 0.0
    %5363 = vmatprep.subr.mxu0 0.0
    %5364 = vmatpush1.msra.mxu0 0.0
    %5365 = vmatprep.subr.mxu0 0.0
    %5366 = vmatpush1.msra.mxu0 0.0
    %5367 = vmatprep.subr.mxu0 0.0
    %5368 = vmatpush1.msra.mxu0 0.0
    %5369 = vmatprep.subr.mxu0 0.0
    %5370 = vmatpush1.msra.mxu0 0.0
    %5371 = vmatprep.subr.mxu0 0.0
    %5372 = vmatpush1.msra.mxu0 0.0
    %5373 = vmatprep.subr.mxu0 0.0
    %5374 = vmatpush1.msra.mxu0 0.0
    %5375 = vmatprep.subr.mxu0 0.0
    %5376 = vmatpush1.msra.mxu0 0.0
    %5377 = vmatprep.subr.mxu0 0.0
    %5378 = vmatpush1.msra.mxu0 0.0
    %5379 = vmatprep.subr.mxu0 0.0
    %5380 = vmatpush1.msra.mxu0 0.0
    %5381 = vmatprep.subr.mxu0 0.0
    %5382 = vmatpush1.msra.mxu0 0.0
    %5383 = vmatprep.subr.mxu0 0.0
    %5384 = vmatpush1.msra.mxu0 0.0
    %5385 = vmatprep.subr.mxu0 0.0
    %5386 = vmatpush1.msra.mxu0 0.0
    %5387 = vmatprep.mubr.f32.mxu0 0.0
    %5388 = vmatmul.mubr.f32.gmra.mrb[0].mxu0 %v5321
    %v5389 = vpop.f32.mrb[0].mxu0
    %v5390 = vadd.f32 0.0, %v5389
    %v5391 = vpop.f32.mrb[0].mxu0
    %5392 = vdwg.mxu0
    %v5394 = vsel %vm712, %v4864, 0
    %5396 = vmatprep.subr.mxu0 0.0
    %5397 = vmatpush1.msra.mxu0 %v5025
    %5398 = vmatprep.subr.mxu0 0.0
    %5399 = vmatpush1.msra.mxu0 0.0
    %5400 = vmatprep.subr.mxu0 0.0
    %5401 = vmatpush1.msra.mxu0 0.0
    %5402 = vmatprep.subr.mxu0 0.0
    %5403 = vmatpush1.msra.mxu0 0.0
    %5404 = vmatprep.subr.mxu0 0.0
    %5405 = vmatpush1.msra.mxu0 0.0
    %5406 = vmatprep.subr.mxu0 0.0
    %5407 = vmatpush1.msra.mxu0 0.0
    %5408 = vmatprep.subr.mxu0 0.0
    %5409 = vmatpush1.msra.mxu0 0.0
    %5410 = vmatprep.subr.mxu0 0.0
    %5411 = vmatpush1.msra.mxu0 0.0
    %5412 = vmatprep.subr.mxu0 0.0
    %5413 = vmatpush1.msra.mxu0 0.0
    %5414 = vmatprep.subr.mxu0 0.0
    %5415 = vmatpush1.msra.mxu0 0.0
    %5416 = vmatprep.subr.mxu0 0.0
    %5417 = vmatpush1.msra.mxu0 0.0
    %5418 = vmatprep.subr.mxu0 0.0
    %5419 = vmatpush1.msra.mxu0 0.0
    %5420 = vmatprep.subr.mxu0 0.0
    %5421 = vmatpush1.msra.mxu0 0.0
    %5422 = vmatprep.subr.mxu0 0.0
    %5423 = vmatpush1.msra.mxu0 0.0
    %5424 = vmatprep.subr.mxu0 0.0
    %5425 = vmatpush1.msra.mxu0 0.0
    %5426 = vmatprep.subr.mxu0 0.0
    %5427 = vmatpush1.msra.mxu0 0.0
    %5428 = vmatprep.subr.mxu0 0.0
    %5429 = vmatpush1.msra.mxu0 0.0
    %5430 = vmatprep.subr.mxu0 0.0
    %5431 = vmatpush1.msra.mxu0 0.0
    %5432 = vmatprep.subr.mxu0 0.0
    %5433 = vmatpush1.msra.mxu0 0.0
    %5434 = vmatprep.subr.mxu0 0.0
    %5435 = vmatpush1.msra.mxu0 0.0
    %5436 = vmatprep.subr.mxu0 0.0
    %5437 = vmatpush1.msra.mxu0 0.0
    %5438 = vmatprep.subr.mxu0 0.0
    %5439 = vmatpush1.msra.mxu0 0.0
    %5440 = vmatprep.subr.mxu0 0.0
    %5441 = vmatpush1.msra.mxu0 0.0
    %5442 = vmatprep.subr.mxu0 0.0
    %5443 = vmatpush1.msra.mxu0 0.0
    %5444 = vmatprep.subr.mxu0 0.0
    %5445 = vmatpush1.msra.mxu0 0.0
    %5446 = vmatprep.subr.mxu0 0.0
    %5447 = vmatpush1.msra.mxu0 0.0
    %5448 = vmatprep.subr.mxu0 0.0
    %5449 = vmatpush1.msra.mxu0 0.0
    %5450 = vmatprep.subr.mxu0 0.0
    %5451 = vmatpush1.msra.mxu0 0.0
    %5452 = vmatprep.subr.mxu0 0.0
    %5453 = vmatpush1.msra.mxu0 0.0
    %5454 = vmatprep.subr.mxu0 0.0
    %5455 = vmatpush1.msra.mxu0 0.0
    %5456 = vmatprep.subr.mxu0 0.0
    %5457 = vmatpush1.msra.mxu0 0.0
    %5458 = vmatprep.subr.mxu0 0.0
    %5459 = vmatpush1.msra.mxu0 0.0
    %5460 = vmatprep.mubr.f32.mxu0 0.0
    %5461 = vmatmul.mubr.f32.gmra.mrb[0].mxu0 %v5394
    %v5462 = vpop.f32.mrb[0].mxu0
    %v5463 = vadd.f32 0.0, %v5462
    %v5464 = vpop.f32.mrb[0].mxu0
    %5465 = vdwg.mxu0
    %v5467 = vsel %vm712, %v4940, 0
    %5469 = vmatprep.subr.mxu0 0.0
    %5470 = vmatpush1.msra.mxu0 %v5026
    %5471 = vmatprep.subr.mxu0 0.0
    %5472 = vmatpush1.msra.mxu0 0.0
    %5473 = vmatprep.subr.mxu0 0.0
    %5474 = vmatpush1.msra.mxu0 0.0
    %5475 = vmatprep.subr.mxu0 0.0
    %5476 = vmatpush1.msra.mxu0 0.0
    %5477 = vmatprep.subr.mxu0 0.0
    %5478 = vmatpush1.msra.mxu0 0.0
    %5479 = vmatprep.subr.mxu0 0.0
    %5480 = vmatpush1.msra.mxu0 0.0
    %5481 = vmatprep.subr.mxu0 0.0
    %5482 = vmatpush1.msra.mxu0 0.0
    %5483 = vmatprep.subr.mxu0 0.0
    %5484 = vmatpush1.msra.mxu0 0.0
    %5485 = vmatprep.subr.mxu0 0.0
    %5486 = vmatpush1.msra.mxu0 0.0
    %5487 = vmatprep.subr.mxu0 0.0
    %5488 = vmatpush1.msra.mxu0 0.0
    %5489 = vmatprep.subr.mxu0 0.0
    %5490 = vmatpush1.msra.mxu0 0.0
    %5491 = vmatprep.subr.mxu0 0.0
    %5492 = vmatpush1.msra.mxu0 0.0
    %5493 = vmatprep.subr.mxu0 0.0
    %5494 = vmatpush1.msra.mxu0 0.0
    %5495 = vmatprep.subr.mxu0 0.0
    %5496 = vmatpush1.msra.mxu0 0.0
    %5497 = vmatprep.subr.mxu0 0.0
    %5498 = vmatpush1.msra.mxu0 0.0
    %5499 = vmatprep.subr.mxu0 0.0
    %5500 = vmatpush1.msra.mxu0 0.0
    %5501 = vmatprep.subr.mxu0 0.0
    %5502 = vmatpush1.msra.mxu0 0.0
    %5503 = vmatprep.subr.mxu0 0.0
    %5504 = vmatpush1.msra.mxu0 0.0
    %5505 = vmatprep.subr.mxu0 0.0
    %5506 = vmatpush1.msra.mxu0 0.0
    %5507 = vmatprep.subr.mxu0 0.0
    %5508 = vmatpush1.msra.mxu0 0.0
    %5509 = vmatprep.subr.mxu0 0.0
    %5510 = vmatpush1.msra.mxu0 0.0
    %5511 = vmatprep.subr.mxu0 0.0
    %5512 = vmatpush1.msra.mxu0 0.0
    %5513 = vmatprep.subr.mxu0 0.0
    %5514 = vmatpush1.msra.mxu0 0.0
    %5515 = vmatprep.subr.mxu0 0.0
    %5516 = vmatpush1.msra.mxu0 0.0
    %5517 = vmatprep.subr.mxu0 0.0
    %5518 = vmatpush1.msra.mxu0 0.0
    %5519 = vmatprep.subr.mxu0 0.0
    %5520 = vmatpush1.msra.mxu0 0.0
    %5521 = vmatprep.subr.mxu0 0.0
    %5522 = vmatpush1.msra.mxu0 0.0
    %5523 = vmatprep.subr.mxu0 0.0
    %5524 = vmatpush1.msra.mxu0 0.0
    %5525 = vmatprep.subr.mxu0 0.0
    %5526 = vmatpush1.msra.mxu0 0.0
    %5527 = vmatprep.subr.mxu0 0.0
    %5528 = vmatpush1.msra.mxu0 0.0
    %5529 = vmatprep.subr.mxu0 0.0
    %5530 = vmatpush1.msra.mxu0 0.0
    %5531 = vmatprep.subr.mxu0 0.0
    %5532 = vmatpush1.msra.mxu0 0.0
    %5533 = vmatprep.mubr.f32.mxu0 0.0
    %5534 = vmatmul.mubr.f32.gmra.mrb[0].mxu0 %v5467
    %v5535 = vpop.f32.mrb[0].mxu0
    %v5536 = vadd.f32 0.0, %v5535
    %v5537 = vpop.f32.mrb[0].mxu0
    %5538 = vdwg.mxu0
    %v5540 = vsel %vm712, %v5016, 0
    %5542 = vmatprep.subr.mxu0 0.0
    %5543 = vmatpush1.msra.mxu0 %v5027
    %5544 = vmatprep.subr.mxu0 0.0
    %5545 = vmatpush1.msra.mxu0 0.0
    %5546 = vmatprep.subr.mxu0 0.0
    %5547 = vmatpush1.msra.mxu0 0.0
    %5548 = vmatprep.subr.mxu0 0.0
    %5549 = vmatpush1.msra.mxu0 0.0
    %5550 = vmatprep.subr.mxu0 0.0
    %5551 = vmatpush1.msra.mxu0 0.0
    %5552 = vmatprep.subr.mxu0 0.0
    %5553 = vmatpush1.msra.mxu0 0.0
    %5554 = vmatprep.subr.mxu0 0.0
    %5555 = vmatpush1.msra.mxu0 0.0
    %5556 = vmatprep.subr.mxu0 0.0
    %5557 = vmatpush1.msra.mxu0 0.0
    %5558 = vmatprep.subr.mxu0 0.0
    %5559 = vmatpush1.msra.mxu0 0.0
    %5560 = vmatprep.subr.mxu0 0.0
    %5561 = vmatpush1.msra.mxu0 0.0
    %5562 = vmatprep.subr.mxu0 0.0
    %5563 = vmatpush1.msra.mxu0 0.0
    %5564 = vmatprep.subr.mxu0 0.0
    %5565 = vmatpush1.msra.mxu0 0.0
    %5566 = vmatprep.subr.mxu0 0.0
    %5567 = vmatpush1.msra.mxu0 0.0
    %5568 = vmatprep.subr.mxu0 0.0
    %5569 = vmatpush1.msra.mxu0 0.0
    %5570 = vmatprep.subr.mxu0 0.0
    %5571 = vmatpush1.msra.mxu0 0.0
    %5572 = vmatprep.subr.mxu0 0.0
    %5573 = vmatpush1.msra.mxu0 0.0
    %5574 = vmatprep.subr.mxu0 0.0
    %5575 = vmatpush1.msra.mxu0 0.0
    %5576 = vmatprep.subr.mxu0 0.0
    %5577 = vmatpush1.msra.mxu0 0.0
    %5578 = vmatprep.subr.mxu0 0.0
    %5579 = vmatpush1.msra.mxu0 0.0
    %5580 = vmatprep.subr.mxu0 0.0
    %5581 = vmatpush1.msra.mxu0 0.0
    %5582 = vmatprep.subr.mxu0 0.0
    %5583 = vmatpush1.msra.mxu0 0.0
    %5584 = vmatprep.subr.mxu0 0.0
    %5585 = vmatpush1.msra.mxu0 0.0
    %5586 = vmatprep.subr.mxu0 0.0
    %5587 = vmatpush1.msra.mxu0 0.0
    %5588 = vmatprep.subr.mxu0 0.0
    %5589 = vmatpush1.msra.mxu0 0.0
    %5590 = vmatprep.subr.mxu0 0.0
    %5591 = vmatpush1.msra.mxu0 0.0
    %5592 = vmatprep.subr.mxu0 0.0
    %5593 = vmatpush1.msra.mxu0 0.0
    %5594 = vmatprep.subr.mxu0 0.0
    %5595 = vmatpush1.msra.mxu0 0.0
    %5596 = vmatprep.subr.mxu0 0.0
    %5597 = vmatpush1.msra.mxu0 0.0
    %5598 = vmatprep.subr.mxu0 0.0
    %5599 = vmatpush1.msra.mxu0 0.0
    %5600 = vmatprep.subr.mxu0 0.0
    %5601 = vmatpush1.msra.mxu0 0.0
    %5602 = vmatprep.subr.mxu0 0.0
    %5603 = vmatpush1.msra.mxu0 0.0
    %5604 = vmatprep.subr.mxu0 0.0
    %5605 = vmatpush1.msra.mxu0 0.0
    %5606 = vmatprep.mubr.f32.mxu0 0.0
    %5607 = vmatmul.mubr.f32.gmra.mrb[0].mxu0 %v5540
    %v5608 = vpop.f32.mrb[0].mxu0
    %v5609 = vadd.f32 0.0, %v5608
    %v5610 = vpop.f32.mrb[0].mxu0
    %5611 = vdwg.mxu0
    %v5612 = vadd.f32 %v5098, %v5171
    %v5613 = vadd.f32 %v5390, %v5463
    %v5614 = vadd.f32 %v5612, %v5244
    %v5615 = vadd.f32 %v5613, %v5536
    %v5616 = vadd.f32 %v5614, %v5317
    %v5617 = vadd.f32 %v5615, %v5609
    %s5618 = scalar_lea.vmem %s5, 1
    %v5619 = vld [vmem:[%s5618] sm:$0x1]
    %v5621 = vlaneseq
    %v5622 = vshrl.u32 %v5621, 7
    %v5623 = vsub.s32 0, %v5622
    %v5624 = vrot.slane %v5619, %v5623
    %v5626 = vadd.f32 %v5616, %v5624
    %v5627 = vadd.f32 %v5617, %v5624
    %v5628 = vadd.f32 %v3045, %v5626
    %v5629 = vadd.f32 %v3046, %v5627
    %v5630 = vsel %vm142, %v5628, 0.0
    %5631 = vadd.xlane.f32.xlu0 %v5630
    %v5632 = vpop.xlane.xlu0 %5631
    %v5633 = vsel %vm142, %v5629, 0.0
    %5634 = vadd.xlane.f32.xlu0 %v5633
    %v5635 = vpop.xlane.xlu0 %5634
    %v5636 = vmul.f32 %v5632, %v2637
    %v5637 = vmul.f32 %v5635, %v2637
    %v5638 = vsub.f32 %v5628, %v5636
    %v5639 = vsub.f32 %v5629, %v5637
    %v5640 = vmul.f32 %v5638, %v5638
    %v5641 = vmul.f32 %v5639, %v5639
    %v5642 = vsel %vm142, %v5640, 0.0
    %5643 = vadd.xlane.f32.xlu0 %v5642
    %v5644 = vpop.xlane.xlu0 %5643
    %v5645 = vsel %vm142, %v5641, 0.0
    %5646 = vadd.xlane.f32.xlu0 %v5645
    %v5647 = vpop.xlane.xlu0 %5646
    %v5648 = vmul.f32 %v5644, %v2637
    %v5649 = vmul.f32 %v5647, %v2637
    %v5650 = vadd.f32 %v5648, 1e-05
    %v5651 = vadd.f32 %v5649, 1e-05
    %v5652 = vrsqrt.pop %v5650
    %v5653 = vrsqrt.pop %v5651
    %v5654 = vmul.f32 %v5638, %v5652
    %v5655 = vmul.f32 %v5639, %v5653
    %v5657 = vlaneseq
    %v5658 = vshrl.u32 %v5657, 7
    %v5659 = vsub.s32 0, %v5658
    %v5660 = vrot.slane %v3048, %v5659
    %v5662 = vmul.f32 %v5654, %v5660
    %v5663 = vmul.f32 %v5655, %v5660
    %v5665 = vlaneseq
    %v5666 = vshrl.u32 %v5665, 7
    %v5667 = vsub.s32 0, %v5666
    %v5668 = vrot.slane %v3050, %v5667
    %v5670 = vadd.f32 %v5662, %v5668
    %v5671 = vadd.f32 %v5663, %v5668
    %s5672 = scalar_lea.vmem %s6, 64
    %v5673 = vld [vmem:[%s5672] sm:$0xff]
    %v5674 = vld [vmem:[%s5672 + $0x8] sm:$0xff]
    %v5675 = vld [vmem:[%s5672 + $0x10] sm:$0xff]
    %v5676 = vld [vmem:[%s5672 + $0x18] sm:$0xff]
    %v5677 = vld [vmem:[%s5672 + $0x20] sm:$0xff]
    %v5678 = vld [vmem:[%s5672 + $0x28] sm:$0xff]
    %v5679 = vld [vmem:[%s5672 + $0x30] sm:$0xff]
    %v5680 = vld [vmem:[%s5672 + $0x38] sm:$0xff]
    %s5681 = scalar_lea.vmem %s7, 1
    %v5682 = vld [vmem:[%s5681] sm:$0x1]
    %v5684 = vlaneseq
    %v5685 = vshrl.u32 %v5684, 7
    %v5686 = vsub.s32 0, %v5685
    %v5687 = vrot.slane %v5682, %v5686
    %v5690 = vsel %vm142, %v5670, 0
    %5692 = vmatprep.subr.mxu0 0.0
    %5693 = vmatpush1.msra.mxu0 %v5673
    %5694 = vmatprep.subr.mxu0 0.0
    %5695 = vmatpush1.msra.mxu0 %v5674
    %5696 = vmatprep.subr.mxu0 0.0
    %5697 = vmatpush1.msra.mxu0 %v5675
    %5698 = vmatprep.subr.mxu0 0.0
    %5699 = vmatpush1.msra.mxu0 %v5676
    %5700 = vmatprep.subr.mxu0 0.0
    %5701 = vmatpush1.msra.mxu0 0.0
    %5702 = vmatprep.subr.mxu0 0.0
    %5703 = vmatpush1.msra.mxu0 0.0
    %5704 = vmatprep.subr.mxu0 0.0
    %5705 = vmatpush1.msra.mxu0 0.0
    %5706 = vmatprep.subr.mxu0 0.0
    %5707 = vmatpush1.msra.mxu0 0.0
    %5708 = vmatprep.subr.mxu0 0.0
    %5709 = vmatpush1.msra.mxu0 0.0
    %5710 = vmatprep.subr.mxu0 0.0
    %5711 = vmatpush1.msra.mxu0 0.0
    %5712 = vmatprep.subr.mxu0 0.0
    %5713 = vmatpush1.msra.mxu0 0.0
    %5714 = vmatprep.subr.mxu0 0.0
    %5715 = vmatpush1.msra.mxu0 0.0
    %5716 = vmatprep.subr.mxu0 0.0
    %5717 = vmatpush1.msra.mxu0 0.0
    %5718 = vmatprep.subr.mxu0 0.0
    %5719 = vmatpush1.msra.mxu0 0.0
    %5720 = vmatprep.subr.mxu0 0.0
    %5721 = vmatpush1.msra.mxu0 0.0
    %5722 = vmatprep.subr.mxu0 0.0
    %5723 = vmatpush1.msra.mxu0 0.0
    %5724 = vmatprep.subr.mxu0 0.0
    %5725 = vmatpush1.msra.mxu0 0.0
    %5726 = vmatprep.subr.mxu0 0.0
    %5727 = vmatpush1.msra.mxu0 0.0
    %5728 = vmatprep.subr.mxu0 0.0
    %5729 = vmatpush1.msra.mxu0 0.0
    %5730 = vmatprep.subr.mxu0 0.0
    %5731 = vmatpush1.msra.mxu0 0.0
    %5732 = vmatprep.subr.mxu0 0.0
    %5733 = vmatpush1.msra.mxu0 0.0
    %5734 = vmatprep.subr.mxu0 0.0
    %5735 = vmatpush1.msra.mxu0 0.0
    %5736 = vmatprep.subr.mxu0 0.0
    %5737 = vmatpush1.msra.mxu0 0.0
    %5738 = vmatprep.subr.mxu0 0.0
    %5739 = vmatpush1.msra.mxu0 0.0
    %5740 = vmatprep.subr.mxu0 0.0
    %5741 = vmatpush1.msra.mxu0 0.0
    %5742 = vmatprep.subr.mxu0 0.0
    %5743 = vmatpush1.msra.mxu0 0.0
    %5744 = vmatprep.subr.mxu0 0.0
    %5745 = vmatpush1.msra.mxu0 0.0
    %5746 = vmatprep.subr.mxu0 0.0
    %5747 = vmatpush1.msra.mxu0 0.0
    %5748 = vmatprep.subr.mxu0 0.0
    %5749 = vmatpush1.msra.mxu0 0.0
    %5750 = vmatprep.subr.mxu0 0.0
    %5751 = vmatpush1.msra.mxu0 0.0
    %5752 = vmatprep.subr.mxu0 0.0
    %5753 = vmatpush1.msra.mxu0 0.0
    %5754 = vmatprep.subr.mxu0 0.0
    %5755 = vmatpush1.msra.mxu0 0.0
    %5756 = vmatprep.mubr.f32.mxu0 0.0
    %5757 = vmatmul.mubr.f32.gmra.mrb[0].mxu0 %v5690
    %v5758 = vpop.f32.mrb[0].mxu0
    %v5759 = vadd.f32 %v5687, %v5758
    %v5760 = vpop.f32.mrb[0].mxu0
    %5761 = vdwg.mxu0
    %v5763 = vsel %vm142, %v5671, 0
    %5765 = vmatprep.subr.mxu0 0.0
    %5766 = vmatpush1.msra.mxu0 %v5677
    %5767 = vmatprep.subr.mxu0 0.0
    %5768 = vmatpush1.msra.mxu0 %v5678
    %5769 = vmatprep.subr.mxu0 0.0
    %5770 = vmatpush1.msra.mxu0 %v5679
    %5771 = vmatprep.subr.mxu0 0.0
    %5772 = vmatpush1.msra.mxu0 %v5680
    %5773 = vmatprep.subr.mxu0 0.0
    %5774 = vmatpush1.msra.mxu0 0.0
    %5775 = vmatprep.subr.mxu0 0.0
    %5776 = vmatpush1.msra.mxu0 0.0
    %5777 = vmatprep.subr.mxu0 0.0
    %5778 = vmatpush1.msra.mxu0 0.0
    %5779 = vmatprep.subr.mxu0 0.0
    %5780 = vmatpush1.msra.mxu0 0.0
    %5781 = vmatprep.subr.mxu0 0.0
    %5782 = vmatpush1.msra.mxu0 0.0
    %5783 = vmatprep.subr.mxu0 0.0
    %5784 = vmatpush1.msra.mxu0 0.0
    %5785 = vmatprep.subr.mxu0 0.0
    %5786 = vmatpush1.msra.mxu0 0.0
    %5787 = vmatprep.subr.mxu0 0.0
    %5788 = vmatpush1.msra.mxu0 0.0
    %5789 = vmatprep.subr.mxu0 0.0
    %5790 = vmatpush1.msra.mxu0 0.0
    %5791 = vmatprep.subr.mxu0 0.0
    %5792 = vmatpush1.msra.mxu0 0.0
    %5793 = vmatprep.subr.mxu0 0.0
    %5794 = vmatpush1.msra.mxu0 0.0
    %5795 = vmatprep.subr.mxu0 0.0
    %5796 = vmatpush1.msra.mxu0 0.0
    %5797 = vmatprep.subr.mxu0 0.0
    %5798 = vmatpush1.msra.mxu0 0.0
    %5799 = vmatprep.subr.mxu0 0.0
    %5800 = vmatpush1.msra.mxu0 0.0
    %5801 = vmatprep.subr.mxu0 0.0
    %5802 = vmatpush1.msra.mxu0 0.0
    %5803 = vmatprep.subr.mxu0 0.0
    %5804 = vmatpush1.msra.mxu0 0.0
    %5805 = vmatprep.subr.mxu0 0.0
    %5806 = vmatpush1.msra.mxu0 0.0
    %5807 = vmatprep.subr.mxu0 0.0
    %5808 = vmatpush1.msra.mxu0 0.0
    %5809 = vmatprep.subr.mxu0 0.0
    %5810 = vmatpush1.msra.mxu0 0.0
    %5811 = vmatprep.subr.mxu0 0.0
    %5812 = vmatpush1.msra.mxu0 0.0
    %5813 = vmatprep.subr.mxu0 0.0
    %5814 = vmatpush1.msra.mxu0 0.0
    %5815 = vmatprep.subr.mxu0 0.0
    %5816 = vmatpush1.msra.mxu0 0.0
    %5817 = vmatprep.subr.mxu0 0.0
    %5818 = vmatpush1.msra.mxu0 0.0
    %5819 = vmatprep.subr.mxu0 0.0
    %5820 = vmatpush1.msra.mxu0 0.0
    %5821 = vmatprep.subr.mxu0 0.0
    %5822 = vmatpush1.msra.mxu0 0.0
    %5823 = vmatprep.subr.mxu0 0.0
    %5824 = vmatpush1.msra.mxu0 0.0
    %5825 = vmatprep.subr.mxu0 0.0
    %5826 = vmatpush1.msra.mxu0 0.0
    %5827 = vmatprep.subr.mxu0 0.0
    %5828 = vmatpush1.msra.mxu0 0.0
    %5829 = vmatprep.mubr.f32.mxu0 0.0
    %5830 = vmatmul.mubr.f32.gmra.mrb[0].mxu0 %v5763
    %v5831 = vpop.f32.mrb[0].mxu0
    %v5832 = vadd.f32 %v5687, %v5831
    %v5833 = vpop.f32.mrb[0].mxu0
    %5834 = vdwg.mxu0
    %v5835 = vmul.f32 %v5759, 0.5
    %v5836 = vmul.f32 %v5832, 0.5
    %v5837 = vmul.f32 %v5759, 0.70710677
    %v5838 = vmul.f32 %v5832, 0.70710677
    %v5839 = verf.f32.pop %v5837
    %v5840 = verf.f32.pop %v5838
    %v5841 = vadd.f32 %v5839, 1.0
    %v5842 = vadd.f32 %v5840, 1.0
    %v5843 = vmul.f32 %v5835, %v5841
    %v5844 = vmul.f32 %v5836, %v5842
    %s5845 = scalar_lea.vmem %s8, 128
    %v5846 = vld [vmem:[%s5845] sm:$0xff]
    %v5847 = vld [vmem:[%s5845 + $0x8] sm:$0xff]
    %v5848 = vld [vmem:[%s5845 + $0x10] sm:$0xff]
    %v5849 = vld [vmem:[%s5845 + $0x18] sm:$0xff]
    %v5850 = vld [vmem:[%s5845 + $0x20] sm:$0xff]
    %v5851 = vld [vmem:[%s5845 + $0x28] sm:$0xff]
    %v5852 = vld [vmem:[%s5845 + $0x30] sm:$0xff]
    %v5853 = vld [vmem:[%s5845 + $0x38] sm:$0xff]
    %v5854 = vld [vmem:[%s5845 + $0x40] sm:$0xff]
    %v5855 = vld [vmem:[%s5845 + $0x48] sm:$0xff]
    %v5856 = vld [vmem:[%s5845 + $0x50] sm:$0xff]
    %v5857 = vld [vmem:[%s5845 + $0x58] sm:$0xff]
    %v5858 = vld [vmem:[%s5845 + $0x60] sm:$0xff]
    %v5859 = vld [vmem:[%s5845 + $0x68] sm:$0xff]
    %v5860 = vld [vmem:[%s5845 + $0x70] sm:$0xff]
    %v5861 = vld [vmem:[%s5845 + $0x78] sm:$0xff]
    %s5862 = scalar_lea.vmem %s9, 1
    %v5863 = vld [vmem:[%s5862] sm:$0x1]
    %v5865 = vlaneseq
    %v5866 = vshrl.u32 %v5865, 7
    %v5867 = vsub.s32 0, %v5866
    %v5868 = vrot.slane %v5863, %v5867
    %v5871 = vsel %vm2868, %v5843, 0
    %5873 = vmatprep.subr.mxu0 0.0
    %5874 = vmatpush1.msra.mxu0 %v5846
    %5875 = vmatprep.subr.mxu0 0.0
    %5876 = vmatpush1.msra.mxu0 %v5847
    %5877 = vmatprep.subr.mxu0 0.0
    %5878 = vmatpush1.msra.mxu0 %v5848
    %5879 = vmatprep.subr.mxu0 0.0
    %5880 = vmatpush1.msra.mxu0 %v5849
    %5881 = vmatprep.subr.mxu0 0.0
    %5882 = vmatpush1.msra.mxu0 %v5850
    %5883 = vmatprep.subr.mxu0 0.0
    %5884 = vmatpush1.msra.mxu0 %v5851
    %5885 = vmatprep.subr.mxu0 0.0
    %5886 = vmatpush1.msra.mxu0 %v5852
    %5887 = vmatprep.subr.mxu0 0.0
    %5888 = vmatpush1.msra.mxu0 %v5853
    %5889 = vmatprep.subr.mxu0 0.0
    %5890 = vmatpush1.msra.mxu0 0.0
    %5891 = vmatprep.subr.mxu0 0.0
    %5892 = vmatpush1.msra.mxu0 0.0
    %5893 = vmatprep.subr.mxu0 0.0
    %5894 = vmatpush1.msra.mxu0 0.0
    %5895 = vmatprep.subr.mxu0 0.0
    %5896 = vmatpush1.msra.mxu0 0.0
    %5897 = vmatprep.subr.mxu0 0.0
    %5898 = vmatpush1.msra.mxu0 0.0
    %5899 = vmatprep.subr.mxu0 0.0
    %5900 = vmatpush1.msra.mxu0 0.0
    %5901 = vmatprep.subr.mxu0 0.0
    %5902 = vmatpush1.msra.mxu0 0.0
    %5903 = vmatprep.subr.mxu0 0.0
    %5904 = vmatpush1.msra.mxu0 0.0
    %5905 = vmatprep.subr.mxu0 0.0
    %5906 = vmatpush1.msra.mxu0 0.0
    %5907 = vmatprep.subr.mxu0 0.0
    %5908 = vmatpush1.msra.mxu0 0.0
    %5909 = vmatprep.subr.mxu0 0.0
    %5910 = vmatpush1.msra.mxu0 0.0
    %5911 = vmatprep.subr.mxu0 0.0
    %5912 = vmatpush1.msra.mxu0 0.0
    %5913 = vmatprep.subr.mxu0 0.0
    %5914 = vmatpush1.msra.mxu0 0.0
    %5915 = vmatprep.subr.mxu0 0.0
    %5916 = vmatpush1.msra.mxu0 0.0
    %5917 = vmatprep.subr.mxu0 0.0
    %5918 = vmatpush1.msra.mxu0 0.0
    %5919 = vmatprep.subr.mxu0 0.0
    %5920 = vmatpush1.msra.mxu0 0.0
    %5921 = vmatprep.subr.mxu0 0.0
    %5922 = vmatpush1.msra.mxu0 0.0
    %5923 = vmatprep.subr.mxu0 0.0
    %5924 = vmatpush1.msra.mxu0 0.0
    %5925 = vmatprep.subr.mxu0 0.0
    %5926 = vmatpush1.msra.mxu0 0.0
    %5927 = vmatprep.subr.mxu0 0.0
    %5928 = vmatpush1.msra.mxu0 0.0
    %5929 = vmatprep.subr.mxu0 0.0
    %5930 = vmatpush1.msra.mxu0 0.0
    %5931 = vmatprep.subr.mxu0 0.0
    %5932 = vmatpush1.msra.mxu0 0.0
    %5933 = vmatprep.subr.mxu0 0.0
    %5934 = vmatpush1.msra.mxu0 0.0
    %5935 = vmatprep.subr.mxu0 0.0
    %5936 = vmatpush1.msra.mxu0 0.0
    %5937 = vmatprep.mubr.f32.mxu0 0.0
    %5938 = vmatmul.mubr.f32.gmra.mrb[0].mxu0 %v5871
    %v5939 = vpop.f32.mrb[0].mxu0
    %v5940 = vadd.f32 %v5868, %v5939
    %v5941 = vpop.f32.mrb[0].mxu0
    %5942 = vdwg.mxu0
    %v5944 = vsel %vm2868, %v5844, 0
    %5946 = vmatprep.subr.mxu0 0.0
    %5947 = vmatpush1.msra.mxu0 %v5854
    %5948 = vmatprep.subr.mxu0 0.0
    %5949 = vmatpush1.msra.mxu0 %v5855
    %5950 = vmatprep.subr.mxu0 0.0
    %5951 = vmatpush1.msra.mxu0 %v5856
    %5952 = vmatprep.subr.mxu0 0.0
    %5953 = vmatpush1.msra.mxu0 %v5857
    %5954 = vmatprep.subr.mxu0 0.0
    %5955 = vmatpush1.msra.mxu0 %v5858
    %5956 = vmatprep.subr.mxu0 0.0
    %5957 = vmatpush1.msra.mxu0 %v5859
    %5958 = vmatprep.subr.mxu0 0.0
    %5959 = vmatpush1.msra.mxu0 %v5860
    %5960 = vmatprep.subr.mxu0 0.0
    %5961 = vmatpush1.msra.mxu0 %v5861
    %5962 = vmatprep.subr.mxu0 0.0
    %5963 = vmatpush1.msra.mxu0 0.0
    %5964 = vmatprep.subr.mxu0 0.0
    %5965 = vmatpush1.msra.mxu0 0.0
    %5966 = vmatprep.subr.mxu0 0.0
    %5967 = vmatpush1.msra.mxu0 0.0
    %5968 = vmatprep.subr.mxu0 0.0
    %5969 = vmatpush1.msra.mxu0 0.0
    %5970 = vmatprep.subr.mxu0 0.0
    %5971 = vmatpush1.msra.mxu0 0.0
    %5972 = vmatprep.subr.mxu0 0.0
    %5973 = vmatpush1.msra.mxu0 0.0
    %5974 = vmatprep.subr.mxu0 0.0
    %5975 = vmatpush1.msra.mxu0 0.0
    %5976 = vmatprep.subr.mxu0 0.0
    %5977 = vmatpush1.msra.mxu0 0.0
    %5978 = vmatprep.subr.mxu0 0.0
    %5979 = vmatpush1.msra.mxu0 0.0
    %5980 = vmatprep.subr.mxu0 0.0
    %5981 = vmatpush1.msra.mxu0 0.0
    %5982 = vmatprep.subr.mxu0 0.0
    %5983 = vmatpush1.msra.mxu0 0.0
    %5984 = vmatprep.subr.mxu0 0.0
    %5985 = vmatpush1.msra.mxu0 0.0
    %5986 = vmatprep.subr.mxu0 0.0
    %5987 = vmatpush1.msra.mxu0 0.0
    %5988 = vmatprep.subr.mxu0 0.0
    %5989 = vmatpush1.msra.mxu0 0.0
    %5990 = vmatprep.subr.mxu0 0.0
    %5991 = vmatpush1.msra.mxu0 0.0
    %5992 = vmatprep.subr.mxu0 0.0
    %5993 = vmatpush1.msra.mxu0 0.0
    %5994 = vmatprep.subr.mxu0 0.0
    %5995 = vmatpush1.msra.mxu0 0.0
    %5996 = vmatprep.subr.mxu0 0.0
    %5997 = vmatpush1.msra.mxu0 0.0
    %5998 = vmatprep.subr.mxu0 0.0
    %5999 = vmatpush1.msra.mxu0 0.0
    %6000 = vmatprep.subr.mxu0 0.0
    %6001 = vmatpush1.msra.mxu0 0.0
    %6002 = vmatprep.subr.mxu0 0.0
    %6003 = vmatpush1.msra.mxu0 0.0
    %6004 = vmatprep.subr.mxu0 0.0
    %6005 = vmatpush1.msra.mxu0 0.0
    %6006 = vmatprep.subr.mxu0 0.0
    %6007 = vmatpush1.msra.mxu0 0.0
    %6008 = vmatprep.subr.mxu0 0.0
    %6009 = vmatpush1.msra.mxu0 0.0
    %6010 = vmatprep.mubr.f32.mxu0 0.0
    %6011 = vmatmul.mubr.f32.gmra.mrb[0].mxu0 %v5944
    %v6012 = vpop.f32.mrb[0].mxu0
    %v6013 = vadd.f32 %v5868, %v6012
    %v6014 = vpop.f32.mrb[0].mxu0
    %6015 = vdwg.mxu0
    %v6016 = vadd.f32 %v5670, %v5940
    %v6017 = vadd.f32 %v5671, %v6013
    %v6018 = vsel %vm142, %v6016, 0.0
    %6019 = vadd.xlane.f32.xlu0 %v6018
    %v6020 = vpop.xlane.xlu0 %6019
    %v6021 = vsel %vm142, %v6017, 0.0
    %6022 = vadd.xlane.f32.xlu0 %v6021
    %v6023 = vpop.xlane.xlu0 %6022
    %v6024 = vmul.f32 %v6020, %v2637
    %v6025 = vmul.f32 %v6023, %v2637
    %v6026 = vsub.f32 %v6016, %v6024
    %v6027 = vsub.f32 %v6017, %v6025
    %v6028 = vmul.f32 %v6026, %v6026
    %v6029 = vmul.f32 %v6027, %v6027
    %v6030 = vsel %vm142, %v6028, 0.0
    %6031 = vadd.xlane.f32.xlu0 %v6030
    %v6032 = vpop.xlane.xlu0 %6031
    %v6033 = vsel %vm142, %v6029, 0.0
    %6034 = vadd.xlane.f32.xlu0 %v6033
    %v6035 = vpop.xlane.xlu0 %6034
    %v6036 = vmul.f32 %v6032, %v2637
    %v6037 = vmul.f32 %v6035, %v2637
    %v6038 = vadd.f32 %v6036, 1e-05
    %v6039 = vadd.f32 %v6037, 1e-05
    %v6040 = vrsqrt.pop %v6038
    %v6041 = vrsqrt.pop %v6039
    %v6042 = vmul.f32 %v6026, %v6040
    %v6043 = vmul.f32 %v6027, %v6041
    %v6044 = vmul.f32 %v6042, %v5660
    %v6045 = vmul.f32 %v6043, %v5660
    %v6046 = vadd.f32 %v6044, %v5668
    %v6047 = vadd.f32 %v6045, %v5668
    %6048 = vst.msk [vmem:[#allocation2] sm:$0xff] %vm142, %v6046
    %6049 = vst.msk [vmem:[#allocation2 + $0x8] sm:$0xff] %vm142, %v6047
    // Predicated region
    $region50: #{tpu_custom_call.1} parent=1 // pred_check
      _
    $region51: #{tpu_custom_call.1} parent=1 // pred_check_branch
      %6051 = sbr.rel (0) target = $region53
    $region52: #{tpu_custom_call.1} parent=1 // pred_region
      %s6053 = ssub.s32 256, 256
      %6054 = vsyncadd [#allocation3], %s6053
      %s6055 = sshll.u32 [#allocation2], 4
      %s6056 = int_to_ptr.vmem [resolvable:$true] %s6055
      %6061 = dma.vmem_to_hbm [thread:$0]  %s6056, 256, %s12, [#allocation3], 128, 128, 8
    $region53: #{tpu_custom_call.1} parent=1 // pred_fallthru
      _
    // Predicated region
    $region54: #{tpu_custom_call.1} parent=1 // pred_check
      _
    $region55: #{tpu_custom_call.1} parent=1 // pred_check_branch
      %6063 = sbr.rel (0) target = $region57
    $region56: #{tpu_custom_call.1} parent=1 // pred_region
      %6064 = dma.done [#allocation3], 256
    $region57: #{tpu_custom_call.1} parent=1 // pred_fallthru
      _
    %6065 = vsyncpa [#allocation3], 1

</llo_original>
